<compile_context>
chip_gen: v7x
topology: tpu7x:2x2x1
jax: 0.10.0
libtpu: 0.0.40
codegen_flags: <defaults>
</compile_context>

<pallas_src>
import functools
import math

import jax
import jax.numpy as jnp
from jax.experimental import pallas as pl
from jax.experimental.pallas import tpu as pltpu


def _layernorm(x, gamma, beta, eps):
    # torch.nn.LayerNorm: biased variance, eps inside rsqrt, f32 math.
    mean = jnp.mean(x, axis=-1, keepdims=True)
    xc = x - mean
    var = jnp.mean(xc * xc, axis=-1, keepdims=True)
    return xc * jax.lax.rsqrt(var + eps) * gamma + beta


def _rmsnorm(x, g, sqrt_dim):
    # torch reference: F.normalize(x, dim=-1) * g * sqrt(dim)  (eps=1e-12 on the L2 norm)
    ss = jnp.sum(x * x, axis=-1, keepdims=True)
    return x * jax.lax.rsqrt(jnp.maximum(ss, 1e-24)) * g * sqrt_dim


def _decoder_stack_kernel(
    x_ref,
    ln1_g_ref, ln1_b_ref,
    wqkv_ref, bqkv_ref,
    gq_ref, gk_ref,
    wo_ref, bo_ref, gout_ref,
    ln2_g_ref, ln2_b_ref,
    w1_ref, b1_ref, w2_ref, b2_ref,
    out_ref,
    *, num_head: int,
):
    Bt, S, D = out_ref.shape
    dh = D // num_head
    scale = dh ** -0.5
    sqrt_d = math.sqrt(D)
    layer = pl.program_id(1)

    # The residual stream lives in the revisited output block (constant block
    # index across the layer axis -> stays resident in VMEM). Seed it from x
    # once per batch block.
    @pl.when(layer == 0)
    def _():
        out_ref[...] = x_ref[...]

    x = out_ref[...].reshape(Bt * S, D).astype(jnp.float32)   # (Bt*S, D) f32

    # ---------------- LN1 + self-attention ----------------
    h = _layernorm(x, ln1_g_ref[0], ln1_b_ref[0], 1e-6)
    qkv = jnp.dot(h.astype(jnp.bfloat16), wqkv_ref[0],
                  preferred_element_type=jnp.float32) + bqkv_ref[0]     # (Bt*S, 3D)
    # RMSNorm over the full hidden dim (concat of heads), softmax scale folded
    # into q once (instead of per head).
    q = _rmsnorm(qkv[:, 0:D], gq_ref[0], sqrt_d) * scale
    k = _rmsnorm(qkv[:, D:2 * D], gk_ref[0], sqrt_d)
    v = qkv[:, 2 * D:3 * D]

    q3 = q.reshape(Bt, S, D)
    k3 = k.reshape(Bt, S, D)
    v3 = v.reshape(Bt, S, D)

    # NOTE: the reference module applies NO causal mask (plain softmax over all
    # positions), so none is applied here.
    # TODO(synk): for long sequences, replace the per-head (Bt,S,S) scores with
    # a KV-tiled online-softmax (flash) loop; at these sizes it fits in VMEM.
    o_heads = []
    for hh in range(num_head):
        sl = slice(hh * dh, (hh + 1) * dh)
        s = jnp.einsum('bqd,bkd->bqk', q3[:, :, sl], k3[:, :, sl],
                       preferred_element_type=jnp.float32)              # (Bt, S, S)
        s = s - jnp.max(s, axis=-1, keepdims=True)
        p = jnp.exp(s)
        p = p / jnp.sum(p, axis=-1, keepdims=True)                      # exact softmax
        o_heads.append(jnp.einsum('bqk,bkd->bqd', p, v3[:, :, sl],
                                  preferred_element_type=jnp.float32))  # (Bt, S, dh)
    # Concat heads -> one lane-dense (Bt*S, D) buffer, then a single K=D
    # out-projection matmul (instead of num_head K=dh matmuls).
    o = jnp.concatenate(o_heads, axis=-1).reshape(Bt * S, D)

    attn = jnp.dot(o.astype(jnp.bfloat16), wo_ref[0],
                   preferred_element_type=jnp.float32) + bo_ref[0]
    attn = _rmsnorm(attn, gout_ref[0], sqrt_d)
    x = x + attn                                   # residual (gate = 1)

    # ---------------- LN2 + MLP (SiLU) ----------------
    h2 = _layernorm(x, ln2_g_ref[0], ln2_b_ref[0], 1e-6)
    m = jnp.dot(h2.astype(jnp.bfloat16), w1_ref[0],
                preferred_element_type=jnp.float32) + b1_ref[0]
    m = m * jax.nn.sigmoid(m)                      # SiLU (EUP)
    m = jnp.dot(m.astype(jnp.bfloat16), w2_ref[0],
                preferred_element_type=jnp.float32) + b2_ref[0]
    # TODO(synk): nn.Dropout is stochastic in training mode; identity here (eval).
    x = x + m

    # Residual stream stays resident; HBM writeback happens automatically only
    # when the batch block index changes (i.e. after the last layer).
    out_ref[...] = x.reshape(Bt, S, D).astype(out_ref.dtype)


def decoder_transformer_forward(x, params, *, num_head, block_batch=None):
    """x: (B, S, D) f32. params: per-layer weights stacked on a leading L axis.

    wqkv/wo/w1/w2 are expected in bfloat16 (in, out) layout; biases and norm
    parameters in float32.
    """
    B, S, D = x.shape
    L = params["wqkv"].shape[0]
    F_ = params["w1"].shape[-1]

    if block_batch is None:
        # Largest divisor of B with Bt*S <= 256 token rows per step.
        block_batch = 1
        for bt in range(1, B + 1):
            if B % bt == 0 and bt * S <= 256:
                block_batch = bt
    Bt = block_batch

    assert B % Bt == 0, (B, Bt)
    assert D % 128 == 0 and F_ % 128 == 0, (D, F_)
    assert S % 8 == 0, S
    assert D % num_head == 0, (D, num_head)

    def vec_spec(width):        # (L, 1, width) parameters
        return pl.BlockSpec((1, 1, width), lambda b, l: (l, 0, 0))

    def mat_spec(rows, cols):   # (L, rows, cols) parameters
        return pl.BlockSpec((1, rows, cols), lambda b, l: (l, 0, 0))

    in_specs = [
        # x: constant block index across the layer axis -> fetched once per batch block.
        pl.BlockSpec((Bt, S, D), lambda b, l: (b, 0, 0)),
        vec_spec(D), vec_spec(D),                 # ln1 gamma / beta
        mat_spec(D, 3 * D), vec_spec(3 * D),      # W_qkv (bf16), b_qkv
        vec_spec(D), vec_spec(D),                 # RMSNorm g (q), g (k)
        mat_spec(D, D), vec_spec(D), vec_spec(D), # W_out (bf16), b_out, RMSNorm g (out)
        vec_spec(D), vec_spec(D),                 # ln2 gamma / beta
        mat_spec(D, F_), vec_spec(F_),            # W_mlp1 (bf16), b_mlp1
        mat_spec(F_, D), vec_spec(D),             # W_mlp2 (bf16), b_mlp2
    ]
    # Same output block index across the layer axis -> resident residual stream,
    # written back to HBM only when the batch block index changes.
    out_specs = pl.BlockSpec((Bt, S, D), lambda b, l: (b, 0, 0))

    kernel = functools.partial(_decoder_stack_kernel, num_head=num_head)
    return pl.pallas_call(
        kernel,
        out_shape=jax.ShapeDtypeStruct((B, S, D), x.dtype),
        grid_spec=pltpu.PrefetchScalarGridSpec(
            num_scalar_prefetch=0,
            grid=(B // Bt, L),
            in_specs=in_specs,
            out_specs=out_specs,
            scratch_shapes=[],
        ),
        compiler_params=pltpu.CompilerParams(
            dimension_semantics=("parallel", "arbitrary"),
            vmem_limit_bytes=32 * 1024 * 1024,
        ),
    )(
        x,
        params["ln1_g"], params["ln1_b"],
        params["wqkv"], params["bqkv"],
        params["gq"], params["gk"],
        params["wo"], params["bo"], params["gout"],
        params["ln2_g"], params["ln2_b"],
        params["w1"], params["b1"],
        params["w2"], params["b2"],
    )


def _reference_forward(x, params, *, num_head):
    """Pure-JAX mirror of the kernel math (same bf16 matmul casts)."""
    B, S, D = x.shape
    L = params["wqkv"].shape[0]
    dh = D // num_head
    scale = dh ** -0.5
    sqrt_d = math.sqrt(D)
    bf16, f32 = jnp.bfloat16, jnp.float32

    def ln(t, g, b):
        mu = jnp.mean(t, axis=-1, keepdims=True)
        tc = t - mu
        var = jnp.mean(tc * tc, axis=-1, keepdims=True)
        return tc * jax.lax.rsqrt(var + 1e-6) * g + b

    def rms(t, g):
        ss = jnp.sum(t * t, axis=-1, keepdims=True)
        return t * jax.lax.rsqrt(jnp.maximum(ss, 1e-24)) * g * sqrt_d

    x = x.astype(f32)
    for l in range(L):
        h = ln(x, params["ln1_g"][l], params["ln1_b"][l])
        qkv = jnp.dot(h.reshape(B * S, D).astype(bf16), params["wqkv"][l],
                      preferred_element_type=f32).reshape(B, S, 3 * D) + params["bqkv"][l]
        q = rms(qkv[..., 0:D], params["gq"][l]) * scale
        k = rms(qkv[..., D:2 * D], params["gk"][l])
        v = qkv[..., 2 * D:3 * D]
        q = q.reshape(B, S, num_head, dh).transpose(0, 2, 1, 3)
        k = k.reshape(B, S, num_head, dh).transpose(0, 2, 1, 3)
        v = v.reshape(B, S, num_head, dh).transpose(0, 2, 1, 3)
        s = jnp.einsum('bhqd,bhkd->bhqk', q, k)
        p = jax.nn.softmax(s, axis=-1)
        o = jnp.einsum('bhqk,bhkd->bhqd', p, v)
        o = o.transpose(0, 2, 1, 3).reshape(B, S, D)
        attn = jnp.dot(o.reshape(B * S, D).astype(bf16), params["wo"][l],
                       preferred_element_type=f32).reshape(B, S, D) + params["bo"][l]
        attn = rms(attn, params["gout"][l])
        x = x + attn
        h2 = ln(x, params["ln2_g"][l], params["ln2_b"][l])
        m = jnp.dot(h2.reshape(B * S, D).astype(bf16), params["w1"][l],
                    preferred_element_type=f32).reshape(B, S, -1) + params["b1"][l]
        m = m * jax.nn.sigmoid(m)
        m = jnp.dot(m.reshape(B * S, -1).astype(bf16), params["w2"][l],
                    preferred_element_type=f32).reshape(B, S, D) + params["b2"][l]
        x = x + m
    return x


if __name__ == "__main__":
    # Small shapes consistent with the module:
    #   dim_base=128, num_attn_head=4 (dim_head=32), dim_feedforward=256,
    #   num_layer=3, batch=16, sequence=16.  block_batch=8 -> 128 token rows
    #   per grid step and 2 batch steps (megacore-shardable on v7x).
    B, S, D = 16, 16, 128
    H, F_, L = 4, 256, 3
    Bt = 8

    key = jax.random.PRNGKey(0)
    ks = jax.random.split(key, 16)
    f32, bf16 = jnp.float32, jnp.bfloat16

    params = {
        "ln1_g": (1.0 + 0.1 * jax.random.normal(ks[0], (L, 1, D))).astype(f32),
        "ln1_b": (0.1 * jax.random.normal(ks[1], (L, 1, D))).astype(f32),
        "wqkv":  (0.05 * jax.random.normal(ks[2], (L, D, 3 * D))).astype(bf16),
        "bqkv":  (0.01 * jax.random.normal(ks[3], (L, 1, 3 * D))).astype(f32),
        "gq":    (1.0 + 0.1 * jax.random.normal(ks[4], (L, 1, D))).astype(f32),
        "gk":    (1.0 + 0.1 * jax.random.normal(ks[5], (L, 1, D))).astype(f32),
        "wo":    (0.05 * jax.random.normal(ks[6], (L, D, D))).astype(bf16),
        "bo":    (0.01 * jax.random.normal(ks[7], (L, 1, D))).astype(f32),
        "gout":  (1.0 + 0.1 * jax.random.normal(ks[8], (L, 1, D))).astype(f32),
        "ln2_g": (1.0 + 0.1 * jax.random.normal(ks[9], (L, 1, D))).astype(f32),
        "ln2_b": (0.1 * jax.random.normal(ks[10], (L, 1, D))).astype(f32),
        "w1":    (0.05 * jax.random.normal(ks[11], (L, D, F_))).astype(bf16),
        "b1":    (0.01 * jax.random.normal(ks[12], (L, 1, F_))).astype(f32),
        "w2":    (0.05 * jax.random.normal(ks[13], (L, F_, D))).astype(bf16),
        "b2":    (0.01 * jax.random.normal(ks[14], (L, 1, D))).astype(f32),
    }
    x = jax.random.normal(ks[15], (B, S, D)).astype(f32)

    out = decoder_transformer_forward(x, params, num_head=H, block_batch=Bt)
    out = jax.block_until_ready(out)

    assert out.shape == (B, S, D), out.shape
    assert bool(jnp.all(jnp.isfinite(out))), "non-finite values in kernel output"

    # Loose structural check against a pure-JAX mirror (same mixed precision).
    ref = jax.block_until_ready(_reference_forward(x, params, num_head=H))
    max_abs = float(jnp.max(jnp.abs(ref)))
    rel_err = float(jnp.max(jnp.abs(out - ref))) / max(max_abs, 1e-6)
    assert rel_err < 5e-2, f"kernel/reference mismatch: rel_err={rel_err}"

    print("KERNEL_OK")
</pallas_src>

<mosaic_0001>
module attributes {stable_mosaic.version = 11 : i64} {
  func.func @_decoder_stack_kernel(%arg0: i32, %arg1: i32, %arg2: memref<8x16x128xf32, #tpu.memory_space<vmem>>, %arg3: memref<1x1x128xf32, #tpu.memory_space<vmem>>, %arg4: memref<1x1x128xf32, #tpu.memory_space<vmem>>, %arg5: memref<1x128x384xbf16, #tpu.memory_space<vmem>>, %arg6: memref<1x1x384xf32, #tpu.memory_space<vmem>>, %arg7: memref<1x1x128xf32, #tpu.memory_space<vmem>>, %arg8: memref<1x1x128xf32, #tpu.memory_space<vmem>>, %arg9: memref<1x128x128xbf16, #tpu.memory_space<vmem>>, %arg10: memref<1x1x128xf32, #tpu.memory_space<vmem>>, %arg11: memref<1x1x128xf32, #tpu.memory_space<vmem>>, %arg12: memref<1x1x128xf32, #tpu.memory_space<vmem>>, %arg13: memref<1x1x128xf32, #tpu.memory_space<vmem>>, %arg14: memref<1x128x256xbf16, #tpu.memory_space<vmem>>, %arg15: memref<1x1x256xf32, #tpu.memory_space<vmem>>, %arg16: memref<1x256x128xbf16, #tpu.memory_space<vmem>>, %arg17: memref<1x1x128xf32, #tpu.memory_space<vmem>>, %arg18: memref<8x16x128xf32, #tpu.memory_space<vmem>>) attributes {dimension_semantics = [#tpu.dimension_semantics<parallel>, #tpu.dimension_semantics<arbitrary>], iteration_bounds = array<i64: 2, 3>, scalar_prefetch = 0 : i64, scratch_operands = 0 : i64, tpu.core_type = #tpu.core_type<tc>, window_params = [{transform_indices = @transform_0, window_bounds = array<i64: 8, 16, 128>}, {transform_indices = @transform_1, window_bounds = array<i64: 1, 1, 128>}, {transform_indices = @transform_2, window_bounds = array<i64: 1, 1, 128>}, {transform_indices = @transform_3, window_bounds = array<i64: 1, 128, 384>}, {transform_indices = @transform_4, window_bounds = array<i64: 1, 1, 384>}, {transform_indices = @transform_5, window_bounds = array<i64: 1, 1, 128>}, {transform_indices = @transform_6, window_bounds = array<i64: 1, 1, 128>}, {transform_indices = @transform_7, window_bounds = array<i64: 1, 128, 128>}, {transform_indices = @transform_8, window_bounds = array<i64: 1, 1, 128>}, {transform_indices = @transform_9, window_bounds = array<i64: 1, 1, 128>}, {transform_indices = @transform_10, window_bounds = array<i64: 1, 1, 128>}, {transform_indices = @transform_11, window_bounds = array<i64: 1, 1, 128>}, {transform_indices = @transform_12, window_bounds = array<i64: 1, 128, 256>}, {transform_indices = @transform_13, window_bounds = array<i64: 1, 1, 256>}, {transform_indices = @transform_14, window_bounds = array<i64: 1, 256, 128>}, {transform_indices = @transform_15, window_bounds = array<i64: 1, 1, 128>}, {transform_indices = @transform_16, window_bounds = array<i64: 8, 16, 128>}]} {
    %c0_i32 = arith.constant 0 : i32
    %0 = arith.cmpi eq, %arg1, %c0_i32 : i32
    %1 = arith.extui %0 : i1 to i32
    %c0_i32_0 = arith.constant 0 : i32
    %2 = arith.cmpi ne, %1, %c0_i32_0 : i32
    scf.if %2 {
      %c0_91 = arith.constant 0 : index
      %c0_92 = arith.constant 0 : index
      %c0_93 = arith.constant 0 : index
      %203 = vector.load %arg2[%c0_91, %c0_92, %c0_93] : memref<8x16x128xf32, #tpu.memory_space<vmem>>, vector<8x16x128xf32>
      %c0_94 = arith.constant 0 : index
      %c0_95 = arith.constant 0 : index
      %c0_96 = arith.constant 0 : index
      %204 = vector.load %arg18[%c0_94, %c0_95, %c0_96] : memref<8x16x128xf32, #tpu.memory_space<vmem>>, vector<8x16x128xf32>
      tpu.vector_store %arg18[%c0_94, %c0_95, %c0_96], %203 {strides = array<i32>} : memref<8x16x128xf32, #tpu.memory_space<vmem>>, vector<8x16x128xf32>,
    } else {
    }
    %c0 = arith.constant 0 : index
    %c0_1 = arith.constant 0 : index
    %c0_2 = arith.constant 0 : index
    %3 = vector.load %arg18[%c0, %c0_1, %c0_2] : memref<8x16x128xf32, #tpu.memory_space<vmem>>, vector<8x16x128xf32>
    %4 = vector.shape_cast %3 : vector<8x16x128xf32> to vector<128x128xf32>
    %c0_3 = arith.constant 0 : index
    %c0_4 = arith.constant 0 : index
    %c0_5 = arith.constant 0 : index
    %5 = vector.load %arg3[%c0_3, %c0_4, %c0_5] : memref<1x1x128xf32, #tpu.memory_space<vmem>>, vector<1x1x128xf32>
    %6 = vector.shape_cast %5 : vector<1x1x128xf32> to vector<1x128xf32>
    %c0_6 = arith.constant 0 : index
    %c0_7 = arith.constant 0 : index
    %c0_8 = arith.constant 0 : index
    %7 = vector.load %arg4[%c0_6, %c0_7, %c0_8] : memref<1x1x128xf32, #tpu.memory_space<vmem>>, vector<1x1x128xf32>
    %8 = vector.shape_cast %7 : vector<1x1x128xf32> to vector<1x128xf32>
    %cst = arith.constant dense<0.000000e+00> : vector<128xf32>
    %9 = vector.multi_reduction <add>, %4, %cst [1] : vector<128x128xf32> to vector<128xf32>
    %10 = vector.shape_cast %9 : vector<128xf32> to vector<128x1xf32>
    %cst_9 = arith.constant 1.280000e+02 : f32
    %11 = vector.broadcast %cst_9 : f32 to vector<128x1xf32>
    %12 = arith.divf %10, %11 : vector<128x1xf32>
    %13 = vector.broadcast %12 : vector<128x1xf32> to vector<128x128xf32>
    %14 = arith.subf %4, %13 : vector<128x128xf32>
    %15 = arith.mulf %14, %14 : vector<128x128xf32>
    %cst_10 = arith.constant dense<0.000000e+00> : vector<128xf32>
    %16 = vector.multi_reduction <add>, %15, %cst_10 [1] : vector<128x128xf32> to vector<128xf32>
    %17 = vector.shape_cast %16 : vector<128xf32> to vector<128x1xf32>
    %cst_11 = arith.constant 1.280000e+02 : f32
    %18 = vector.broadcast %cst_11 : f32 to vector<128x1xf32>
    %19 = arith.divf %17, %18 : vector<128x1xf32>
    %cst_12 = arith.constant 9.99999997E-7 : f32
    %20 = vector.broadcast %cst_12 : f32 to vector<128x1xf32>
    %21 = arith.addf %19, %20 : vector<128x1xf32>
    %22 = math.rsqrt %21 : vector<128x1xf32>
    %23 = vector.broadcast %22 : vector<128x1xf32> to vector<128x128xf32>
    %24 = arith.mulf %14, %23 : vector<128x128xf32>
    %25 = vector.broadcast %6 : vector<1x128xf32> to vector<128x128xf32>
    %26 = arith.mulf %24, %25 : vector<128x128xf32>
    %27 = vector.broadcast %8 : vector<1x128xf32> to vector<128x128xf32>
    %28 = arith.addf %26, %27 : vector<128x128xf32>
    %29 = arith.truncf %28 : vector<128x128xf32> to vector<128x128xbf16>
    %c0_13 = arith.constant 0 : index
    %c0_14 = arith.constant 0 : index
    %c0_15 = arith.constant 0 : index
    %30 = vector.load %arg5[%c0_13, %c0_14, %c0_15] : memref<1x128x384xbf16, #tpu.memory_space<vmem>>, vector<1x128x384xbf16>
    %31 = vector.shape_cast %30 : vector<1x128x384xbf16> to vector<128x384xbf16>
    %cst_16 = arith.constant dense<0.000000e+00> : vector<128x384xf32>
    %32 = tpu.matmul %29, %31, %cst_16 {dimension_numbers = #tpu.dot_dimension_numbers<[1], [0], [0], [1], [0, 0, 1, 1], [], []>} : vector<128x128xbf16>, vector<128x384xbf16>, vector<128x384xf32> -> vector<128x384xf32>
    %c0_17 = arith.constant 0 : index
    %c0_18 = arith.constant 0 : index
    %c0_19 = arith.constant 0 : index
    %33 = vector.load %arg6[%c0_17, %c0_18, %c0_19] : memref<1x1x384xf32, #tpu.memory_space<vmem>>, vector<1x1x384xf32>
    %34 = vector.shape_cast %33 : vector<1x1x384xf32> to vector<1x384xf32>
    %35 = vector.broadcast %34 : vector<1x384xf32> to vector<128x384xf32>
    %36 = arith.addf %32, %35 : vector<128x384xf32>
    %37 = vector.extract_strided_slice %36 {offsets = [0, 0], sizes = [128, 128], strides = [1, 1]} : vector<128x384xf32> to vector<128x128xf32>
    %c0_20 = arith.constant 0 : index
    %c0_21 = arith.constant 0 : index
    %c0_22 = arith.constant 0 : index
    %38 = vector.load %arg7[%c0_20, %c0_21, %c0_22] : memref<1x1x128xf32, #tpu.memory_space<vmem>>, vector<1x1x128xf32>
    %39 = vector.shape_cast %38 : vector<1x1x128xf32> to vector<1x128xf32>
    %40 = arith.mulf %37, %37 : vector<128x128xf32>
    %cst_23 = arith.constant dense<0.000000e+00> : vector<128xf32>
    %41 = vector.multi_reduction <add>, %40, %cst_23 [1] : vector<128x128xf32> to vector<128xf32>
    %42 = vector.shape_cast %41 : vector<128xf32> to vector<128x1xf32>
    %cst_24 = arith.constant 1.000000e-24 : f32
    %43 = vector.broadcast %cst_24 : f32 to vector<128x1xf32>
    %44 = arith.maximumf %42, %43 : vector<128x1xf32>
    %45 = math.rsqrt %44 : vector<128x1xf32>
    %46 = vector.broadcast %45 : vector<128x1xf32> to vector<128x128xf32>
    %47 = arith.mulf %37, %46 : vector<128x128xf32>
    %48 = vector.broadcast %39 : vector<1x128xf32> to vector<128x128xf32>
    %49 = arith.mulf %47, %48 : vector<128x128xf32>
    %cst_25 = arith.constant 11.3137083 : f32
    %50 = vector.broadcast %cst_25 : f32 to vector<128x128xf32>
    %51 = arith.mulf %49, %50 : vector<128x128xf32>
    %cst_26 = arith.constant 0.176776692 : f32
    %52 = vector.broadcast %cst_26 : f32 to vector<128x128xf32>
    %53 = arith.mulf %51, %52 : vector<128x128xf32>
    %54 = vector.extract_strided_slice %36 {offsets = [0, 128], sizes = [128, 128], strides = [1, 1]} : vector<128x384xf32> to vector<128x128xf32>
    %c0_27 = arith.constant 0 : index
    %c0_28 = arith.constant 0 : index
    %c0_29 = arith.constant 0 : index
    %55 = vector.load %arg8[%c0_27, %c0_28, %c0_29] : memref<1x1x128xf32, #tpu.memory_space<vmem>>, vector<1x1x128xf32>
    %56 = vector.shape_cast %55 : vector<1x1x128xf32> to vector<1x128xf32>
    %57 = arith.mulf %54, %54 : vector<128x128xf32>
    %cst_30 = arith.constant dense<0.000000e+00> : vector<128xf32>
    %58 = vector.multi_reduction <add>, %57, %cst_30 [1] : vector<128x128xf32> to vector<128xf32>
    %59 = vector.shape_cast %58 : vector<128xf32> to vector<128x1xf32>
    %cst_31 = arith.constant 1.000000e-24 : f32
    %60 = vector.broadcast %cst_31 : f32 to vector<128x1xf32>
    %61 = arith.maximumf %59, %60 : vector<128x1xf32>
    %62 = math.rsqrt %61 : vector<128x1xf32>
    %63 = vector.broadcast %62 : vector<128x1xf32> to vector<128x128xf32>
    %64 = arith.mulf %54, %63 : vector<128x128xf32>
    %65 = vector.broadcast %56 : vector<1x128xf32> to vector<128x128xf32>
    %66 = arith.mulf %64, %65 : vector<128x128xf32>
    %cst_32 = arith.constant 11.3137083 : f32
    %67 = vector.broadcast %cst_32 : f32 to vector<128x128xf32>
    %68 = arith.mulf %66, %67 : vector<128x128xf32>
    %69 = vector.extract_strided_slice %36 {offsets = [0, 256], sizes = [128, 128], strides = [1, 1]} : vector<128x384xf32> to vector<128x128xf32>
    %70 = vector.shape_cast %53 : vector<128x128xf32> to vector<8x16x128xf32>
    %71 = vector.shape_cast %68 : vector<128x128xf32> to vector<8x16x128xf32>
    %72 = vector.shape_cast %69 : vector<128x128xf32> to vector<8x16x128xf32>
    %73 = vector.extract_strided_slice %70 {offsets = [0, 0, 0], sizes = [8, 16, 32], strides = [1, 1, 1]} : vector<8x16x128xf32> to vector<8x16x32xf32>
    %74 = vector.extract_strided_slice %71 {offsets = [0, 0, 0], sizes = [8, 16, 32], strides = [1, 1, 1]} : vector<8x16x128xf32> to vector<8x16x32xf32>
    "tpu.trace_start"() <{level = 10 : i32, message = "bqd,bkd->bqk"}> : () -> ()
    %cst_33 = arith.constant dense<0.000000e+00> : vector<8x16x16xf32>
    %75 = tpu.matmul %73, %74, %cst_33 {dimension_numbers = #tpu.dot_dimension_numbers<[2], [2], [1], [1], [0, 0, 0, 1, 1, 1], [0], [0]>} : vector<8x16x32xf32>, vector<8x16x32xf32>, vector<8x16x16xf32> -> vector<8x16x16xf32>
    "tpu.trace_stop"() : () -> ()
    %cst_34 = arith.constant dense<0xFF800000> : vector<8x16xf32>
    %76 = vector.multi_reduction <maximumf>, %75, %cst_34 [2] : vector<8x16x16xf32> to vector<8x16xf32>
    %77 = vector.shape_cast %76 : vector<8x16xf32> to vector<8x16x1xf32>
    %78 = vector.broadcast %77 : vector<8x16x1xf32> to vector<8x16x16xf32>
    %79 = arith.subf %75, %78 : vector<8x16x16xf32>
    %80 = math.exp %79 : vector<8x16x16xf32>
    %cst_35 = arith.constant dense<0.000000e+00> : vector<8x16xf32>
    %81 = vector.multi_reduction <add>, %80, %cst_35 [2] : vector<8x16x16xf32> to vector<8x16xf32>
    %82 = vector.shape_cast %81 : vector<8x16xf32> to vector<8x16x1xf32>
    %83 = vector.broadcast %82 : vector<8x16x1xf32> to vector<8x16x16xf32>
    %84 = arith.divf %80, %83 : vector<8x16x16xf32>
    %85 = vector.extract_strided_slice %72 {offsets = [0, 0, 0], sizes = [8, 16, 32], strides = [1, 1, 1]} : vector<8x16x128xf32> to vector<8x16x32xf32>
    "tpu.trace_start"() <{level = 10 : i32, message = "bqk,bkd->bqd"}> : () -> ()
    %cst_36 = arith.constant dense<0.000000e+00> : vector<8x16x32xf32>
    %86 = tpu.matmul %84, %85, %cst_36 {dimension_numbers = #tpu.dot_dimension_numbers<[2], [1], [1], [2], [0, 0, 0, 1, 1, 2], [0], [0]>} : vector<8x16x16xf32>, vector<8x16x32xf32>, vector<8x16x32xf32> -> vector<8x16x32xf32>
    "tpu.trace_stop"() : () -> ()
    %87 = vector.extract_strided_slice %70 {offsets = [0, 0, 32], sizes = [8, 16, 32], strides = [1, 1, 1]} : vector<8x16x128xf32> to vector<8x16x32xf32>
    %88 = vector.extract_strided_slice %71 {offsets = [0, 0, 32], sizes = [8, 16, 32], strides = [1, 1, 1]} : vector<8x16x128xf32> to vector<8x16x32xf32>
    "tpu.trace_start"() <{level = 10 : i32, message = "bqd,bkd->bqk"}> : () -> ()
    %cst_37 = arith.constant dense<0.000000e+00> : vector<8x16x16xf32>
    %89 = tpu.matmul %87, %88, %cst_37 {dimension_numbers = #tpu.dot_dimension_numbers<[2], [2], [1], [1], [0, 0, 0, 1, 1, 1], [0], [0]>} : vector<8x16x32xf32>, vector<8x16x32xf32>, vector<8x16x16xf32> -> vector<8x16x16xf32>
    "tpu.trace_stop"() : () -> ()
    %cst_38 = arith.constant dense<0xFF800000> : vector<8x16xf32>
    %90 = vector.multi_reduction <maximumf>, %89, %cst_38 [2] : vector<8x16x16xf32> to vector<8x16xf32>
    %91 = vector.shape_cast %90 : vector<8x16xf32> to vector<8x16x1xf32>
    %92 = vector.broadcast %91 : vector<8x16x1xf32> to vector<8x16x16xf32>
    %93 = arith.subf %89, %92 : vector<8x16x16xf32>
    %94 = math.exp %93 : vector<8x16x16xf32>
    %cst_39 = arith.constant dense<0.000000e+00> : vector<8x16xf32>
    %95 = vector.multi_reduction <add>, %94, %cst_39 [2] : vector<8x16x16xf32> to vector<8x16xf32>
    %96 = vector.shape_cast %95 : vector<8x16xf32> to vector<8x16x1xf32>
    %97 = vector.broadcast %96 : vector<8x16x1xf32> to vector<8x16x16xf32>
    %98 = arith.divf %94, %97 : vector<8x16x16xf32>
    %99 = vector.extract_strided_slice %72 {offsets = [0, 0, 32], sizes = [8, 16, 32], strides = [1, 1, 1]} : vector<8x16x128xf32> to vector<8x16x32xf32>
    "tpu.trace_start"() <{level = 10 : i32, message = "bqk,bkd->bqd"}> : () -> ()
    %cst_40 = arith.constant dense<0.000000e+00> : vector<8x16x32xf32>
    %100 = tpu.matmul %98, %99, %cst_40 {dimension_numbers = #tpu.dot_dimension_numbers<[2], [1], [1], [2], [0, 0, 0, 1, 1, 2], [0], [0]>} : vector<8x16x16xf32>, vector<8x16x32xf32>, vector<8x16x32xf32> -> vector<8x16x32xf32>
    "tpu.trace_stop"() : () -> ()
    %101 = vector.extract_strided_slice %70 {offsets = [0, 0, 64], sizes = [8, 16, 32], strides = [1, 1, 1]} : vector<8x16x128xf32> to vector<8x16x32xf32>
    %102 = vector.extract_strided_slice %71 {offsets = [0, 0, 64], sizes = [8, 16, 32], strides = [1, 1, 1]} : vector<8x16x128xf32> to vector<8x16x32xf32>
    "tpu.trace_start"() <{level = 10 : i32, message = "bqd,bkd->bqk"}> : () -> ()
    %cst_41 = arith.constant dense<0.000000e+00> : vector<8x16x16xf32>
    %103 = tpu.matmul %101, %102, %cst_41 {dimension_numbers = #tpu.dot_dimension_numbers<[2], [2], [1], [1], [0, 0, 0, 1, 1, 1], [0], [0]>} : vector<8x16x32xf32>, vector<8x16x32xf32>, vector<8x16x16xf32> -> vector<8x16x16xf32>
    "tpu.trace_stop"() : () -> ()
    %cst_42 = arith.constant dense<0xFF800000> : vector<8x16xf32>
    %104 = vector.multi_reduction <maximumf>, %103, %cst_42 [2] : vector<8x16x16xf32> to vector<8x16xf32>
    %105 = vector.shape_cast %104 : vector<8x16xf32> to vector<8x16x1xf32>
    %106 = vector.broadcast %105 : vector<8x16x1xf32> to vector<8x16x16xf32>
    %107 = arith.subf %103, %106 : vector<8x16x16xf32>
    %108 = math.exp %107 : vector<8x16x16xf32>
    %cst_43 = arith.constant dense<0.000000e+00> : vector<8x16xf32>
    %109 = vector.multi_reduction <add>, %108, %cst_43 [2] : vector<8x16x16xf32> to vector<8x16xf32>
    %110 = vector.shape_cast %109 : vector<8x16xf32> to vector<8x16x1xf32>
    %111 = vector.broadcast %110 : vector<8x16x1xf32> to vector<8x16x16xf32>
    %112 = arith.divf %108, %111 : vector<8x16x16xf32>
    %113 = vector.extract_strided_slice %72 {offsets = [0, 0, 64], sizes = [8, 16, 32], strides = [1, 1, 1]} : vector<8x16x128xf32> to vector<8x16x32xf32>
    "tpu.trace_start"() <{level = 10 : i32, message = "bqk,bkd->bqd"}> : () -> ()
    %cst_44 = arith.constant dense<0.000000e+00> : vector<8x16x32xf32>
    %114 = tpu.matmul %112, %113, %cst_44 {dimension_numbers = #tpu.dot_dimension_numbers<[2], [1], [1], [2], [0, 0, 0, 1, 1, 2], [0], [0]>} : vector<8x16x16xf32>, vector<8x16x32xf32>, vector<8x16x32xf32> -> vector<8x16x32xf32>
    "tpu.trace_stop"() : () -> ()
    %115 = vector.extract_strided_slice %70 {offsets = [0, 0, 96], sizes = [8, 16, 32], strides = [1, 1, 1]} : vector<8x16x128xf32> to vector<8x16x32xf32>
    %116 = vector.extract_strided_slice %71 {offsets = [0, 0, 96], sizes = [8, 16, 32], strides = [1, 1, 1]} : vector<8x16x128xf32> to vector<8x16x32xf32>
    "tpu.trace_start"() <{level = 10 : i32, message = "bqd,bkd->bqk"}> : () -> ()
    %cst_45 = arith.constant dense<0.000000e+00> : vector<8x16x16xf32>
    %117 = tpu.matmul %115, %116, %cst_45 {dimension_numbers = #tpu.dot_dimension_numbers<[2], [2], [1], [1], [0, 0, 0, 1, 1, 1], [0], [0]>} : vector<8x16x32xf32>, vector<8x16x32xf32>, vector<8x16x16xf32> -> vector<8x16x16xf32>
    "tpu.trace_stop"() : () -> ()
    %cst_46 = arith.constant dense<0xFF800000> : vector<8x16xf32>
    %118 = vector.multi_reduction <maximumf>, %117, %cst_46 [2] : vector<8x16x16xf32> to vector<8x16xf32>
    %119 = vector.shape_cast %118 : vector<8x16xf32> to vector<8x16x1xf32>
    %120 = vector.broadcast %119 : vector<8x16x1xf32> to vector<8x16x16xf32>
    %121 = arith.subf %117, %120 : vector<8x16x16xf32>
    %122 = math.exp %121 : vector<8x16x16xf32>
    %cst_47 = arith.constant dense<0.000000e+00> : vector<8x16xf32>
    %123 = vector.multi_reduction <add>, %122, %cst_47 [2] : vector<8x16x16xf32> to vector<8x16xf32>
    %124 = vector.shape_cast %123 : vector<8x16xf32> to vector<8x16x1xf32>
    %125 = vector.broadcast %124 : vector<8x16x1xf32> to vector<8x16x16xf32>
    %126 = arith.divf %122, %125 : vector<8x16x16xf32>
    %127 = vector.extract_strided_slice %72 {offsets = [0, 0, 96], sizes = [8, 16, 32], strides = [1, 1, 1]} : vector<8x16x128xf32> to vector<8x16x32xf32>
    "tpu.trace_start"() <{level = 10 : i32, message = "bqk,bkd->bqd"}> : () -> ()
    %cst_48 = arith.constant dense<0.000000e+00> : vector<8x16x32xf32>
    %128 = tpu.matmul %126, %127, %cst_48 {dimension_numbers = #tpu.dot_dimension_numbers<[2], [1], [1], [2], [0, 0, 0, 1, 1, 2], [0], [0]>} : vector<8x16x16xf32>, vector<8x16x32xf32>, vector<8x16x32xf32> -> vector<8x16x32xf32>
    "tpu.trace_stop"() : () -> ()
    %129 = tpu.concatenate %86, %100, %114, %128 in 2 : vector<8x16x32xf32>, vector<8x16x32xf32>, vector<8x16x32xf32>, vector<8x16x32xf32> -> vector<8x16x128xf32>
    %130 = vector.shape_cast %129 : vector<8x16x128xf32> to vector<128x128xf32>
    %131 = arith.truncf %130 : vector<128x128xf32> to vector<128x128xbf16>
    %c0_49 = arith.constant 0 : index
    %c0_50 = arith.constant 0 : index
    %c0_51 = arith.constant 0 : index
    %132 = vector.load %arg9[%c0_49, %c0_50, %c0_51] : memref<1x128x128xbf16, #tpu.memory_space<vmem>>, vector<1x128x128xbf16>
    %133 = vector.shape_cast %132 : vector<1x128x128xbf16> to vector<128x128xbf16>
    %cst_52 = arith.constant dense<0.000000e+00> : vector<128x128xf32>
    %134 = tpu.matmul %131, %133, %cst_52 {dimension_numbers = #tpu.dot_dimension_numbers<[1], [0], [0], [1], [0, 0, 1, 1], [], []>} : vector<128x128xbf16>, vector<128x128xbf16>, vector<128x128xf32> -> vector<128x128xf32>
    %c0_53 = arith.constant 0 : index
    %c0_54 = arith.constant 0 : index
    %c0_55 = arith.constant 0 : index
    %135 = vector.load %arg10[%c0_53, %c0_54, %c0_55] : memref<1x1x128xf32, #tpu.memory_space<vmem>>, vector<1x1x128xf32>
    %136 = vector.shape_cast %135 : vector<1x1x128xf32> to vector<1x128xf32>
    %137 = vector.broadcast %136 : vector<1x128xf32> to vector<128x128xf32>
    %138 = arith.addf %134, %137 : vector<128x128xf32>
    %c0_56 = arith.constant 0 : index
    %c0_57 = arith.constant 0 : index
    %c0_58 = arith.constant 0 : index
    %139 = vector.load %arg11[%c0_56, %c0_57, %c0_58] : memref<1x1x128xf32, #tpu.memory_space<vmem>>, vector<1x1x128xf32>
    %140 = vector.shape_cast %139 : vector<1x1x128xf32> to vector<1x128xf32>
    %141 = arith.mulf %138, %138 : vector<128x128xf32>
    %cst_59 = arith.constant dense<0.000000e+00> : vector<128xf32>
    %142 = vector.multi_reduction <add>, %141, %cst_59 [1] : vector<128x128xf32> to vector<128xf32>
    %143 = vector.shape_cast %142 : vector<128xf32> to vector<128x1xf32>
    %cst_60 = arith.constant 1.000000e-24 : f32
    %144 = vector.broadcast %cst_60 : f32 to vector<128x1xf32>
    %145 = arith.maximumf %143, %144 : vector<128x1xf32>
    %146 = math.rsqrt %145 : vector<128x1xf32>
    %147 = vector.broadcast %146 : vector<128x1xf32> to vector<128x128xf32>
    %148 = arith.mulf %138, %147 : vector<128x128xf32>
    %149 = vector.broadcast %140 : vector<1x128xf32> to vector<128x128xf32>
    %150 = arith.mulf %148, %149 : vector<128x128xf32>
    %cst_61 = arith.constant 11.3137083 : f32
    %151 = vector.broadcast %cst_61 : f32 to vector<128x128xf32>
    %152 = arith.mulf %150, %151 : vector<128x128xf32>
    %153 = arith.addf %4, %152 : vector<128x128xf32>
    %c0_62 = arith.constant 0 : index
    %c0_63 = arith.constant 0 : index
    %c0_64 = arith.constant 0 : index
    %154 = vector.load %arg12[%c0_62, %c0_63, %c0_64] : memref<1x1x128xf32, #tpu.memory_space<vmem>>, vector<1x1x128xf32>
    %155 = vector.shape_cast %154 : vector<1x1x128xf32> to vector<1x128xf32>
    %c0_65 = arith.constant 0 : index
    %c0_66 = arith.constant 0 : index
    %c0_67 = arith.constant 0 : index
    %156 = vector.load %arg13[%c0_65, %c0_66, %c0_67] : memref<1x1x128xf32, #tpu.memory_space<vmem>>, vector<1x1x128xf32>
    %157 = vector.shape_cast %156 : vector<1x1x128xf32> to vector<1x128xf32>
    %cst_68 = arith.constant dense<0.000000e+00> : vector<128xf32>
    %158 = vector.multi_reduction <add>, %153, %cst_68 [1] : vector<128x128xf32> to vector<128xf32>
    %159 = vector.shape_cast %158 : vector<128xf32> to vector<128x1xf32>
    %cst_69 = arith.constant 1.280000e+02 : f32
    %160 = vector.broadcast %cst_69 : f32 to vector<128x1xf32>
    %161 = arith.divf %159, %160 : vector<128x1xf32>
    %162 = vector.broadcast %161 : vector<128x1xf32> to vector<128x128xf32>
    %163 = arith.subf %153, %162 : vector<128x128xf32>
    %164 = arith.mulf %163, %163 : vector<128x128xf32>
    %cst_70 = arith.constant dense<0.000000e+00> : vector<128xf32>
    %165 = vector.multi_reduction <add>, %164, %cst_70 [1] : vector<128x128xf32> to vector<128xf32>
    %166 = vector.shape_cast %165 : vector<128xf32> to vector<128x1xf32>
    %cst_71 = arith.constant 1.280000e+02 : f32
    %167 = vector.broadcast %cst_71 : f32 to vector<128x1xf32>
    %168 = arith.divf %166, %167 : vector<128x1xf32>
    %cst_72 = arith.constant 9.99999997E-7 : f32
    %169 = vector.broadcast %cst_72 : f32 to vector<128x1xf32>
    %170 = arith.addf %168, %169 : vector<128x1xf32>
    %171 = math.rsqrt %170 : vector<128x1xf32>
    %172 = vector.broadcast %171 : vector<128x1xf32> to vector<128x128xf32>
    %173 = arith.mulf %163, %172 : vector<128x128xf32>
    %174 = vector.broadcast %155 : vector<1x128xf32> to vector<128x128xf32>
    %175 = arith.mulf %173, %174 : vector<128x128xf32>
    %176 = vector.broadcast %157 : vector<1x128xf32> to vector<128x128xf32>
    %177 = arith.addf %175, %176 : vector<128x128xf32>
    %178 = arith.truncf %177 : vector<128x128xf32> to vector<128x128xbf16>
    %c0_73 = arith.constant 0 : index
    %c0_74 = arith.constant 0 : index
    %c0_75 = arith.constant 0 : index
    %179 = vector.load %arg14[%c0_73, %c0_74, %c0_75] : memref<1x128x256xbf16, #tpu.memory_space<vmem>>, vector<1x128x256xbf16>
    %180 = vector.shape_cast %179 : vector<1x128x256xbf16> to vector<128x256xbf16>
    %cst_76 = arith.constant dense<0.000000e+00> : vector<128x256xf32>
    %181 = tpu.matmul %178, %180, %cst_76 {dimension_numbers = #tpu.dot_dimension_numbers<[1], [0], [0], [1], [0, 0, 1, 1], [], []>} : vector<128x128xbf16>, vector<128x256xbf16>, vector<128x256xf32> -> vector<128x256xf32>
    %c0_77 = arith.constant 0 : index
    %c0_78 = arith.constant 0 : index
    %c0_79 = arith.constant 0 : index
    %182 = vector.load %arg15[%c0_77, %c0_78, %c0_79] : memref<1x1x256xf32, #tpu.memory_space<vmem>>, vector<1x1x256xf32>
    %183 = vector.shape_cast %182 : vector<1x1x256xf32> to vector<1x256xf32>
    %184 = vector.broadcast %183 : vector<1x256xf32> to vector<128x256xf32>
    %185 = arith.addf %181, %184 : vector<128x256xf32>
    %186 = arith.negf %185 : vector<128x256xf32>
    %187 = math.exp %186 : vector<128x256xf32>
    %cst_80 = arith.constant 1.000000e+00 : f32
    %188 = vector.broadcast %cst_80 : f32 to vector<128x256xf32>
    %189 = arith.addf %188, %187 : vector<128x256xf32>
    %190 = arith.divf %188, %189 : vector<128x256xf32>
    %191 = arith.mulf %185, %190 : vector<128x256xf32>
    %192 = arith.truncf %191 : vector<128x256xf32> to vector<128x256xbf16>
    %c0_81 = arith.constant 0 : index
    %c0_82 = arith.constant 0 : index
    %c0_83 = arith.constant 0 : index
    %193 = vector.load %arg16[%c0_81, %c0_82, %c0_83] : memref<1x256x128xbf16, #tpu.memory_space<vmem>>, vector<1x256x128xbf16>
    %194 = vector.shape_cast %193 : vector<1x256x128xbf16> to vector<256x128xbf16>
    %cst_84 = arith.constant dense<0.000000e+00> : vector<128x128xf32>
    %195 = tpu.matmul %192, %194, %cst_84 {dimension_numbers = #tpu.dot_dimension_numbers<[1], [0], [0], [1], [0, 0, 1, 1], [], []>} : vector<128x256xbf16>, vector<256x128xbf16>, vector<128x128xf32> -> vector<128x128xf32>
    %c0_85 = arith.constant 0 : index
    %c0_86 = arith.constant 0 : index
    %c0_87 = arith.constant 0 : index
    %196 = vector.load %arg17[%c0_85, %c0_86, %c0_87] : memref<1x1x128xf32, #tpu.memory_space<vmem>>, vector<1x1x128xf32>
    %197 = vector.shape_cast %196 : vector<1x1x128xf32> to vector<1x128xf32>
    %198 = vector.broadcast %197 : vector<1x128xf32> to vector<128x128xf32>
    %199 = arith.addf %195, %198 : vector<128x128xf32>
    %200 = arith.addf %153, %199 : vector<128x128xf32>
    %201 = vector.shape_cast %200 : vector<128x128xf32> to vector<8x16x128xf32>
    %c0_88 = arith.constant 0 : index
    %c0_89 = arith.constant 0 : index
    %c0_90 = arith.constant 0 : index
    %202 = vector.load %arg18[%c0_88, %c0_89, %c0_90] : memref<8x16x128xf32, #tpu.memory_space<vmem>>, vector<8x16x128xf32>
    tpu.vector_store %arg18[%c0_88, %c0_89, %c0_90], %201 {strides = array<i32>} : memref<8x16x128xf32, #tpu.memory_space<vmem>>, vector<8x16x128xf32>,
    return
  }
  func.func @transform_0(%arg0: i32, %arg1: i32) -> (i32, i32, i32) {
    %c0_i32 = arith.constant 0 : i32
    %c0_i32_0 = arith.constant 0 : i32
    %c0_i32_1 = arith.constant 0 : i32
    return %arg0, %c0_i32, %c0_i32_0 : i32, i32, i32
  }
  func.func @transform_1(%arg0: i32, %arg1: i32) -> (i32, i32, i32) {
    %c0_i32 = arith.constant 0 : i32
    %c0_i32_0 = arith.constant 0 : i32
    %c0_i32_1 = arith.constant 0 : i32
    return %arg1, %c0_i32, %c0_i32_0 : i32, i32, i32
  }
  func.func @transform_2(%arg0: i32, %arg1: i32) -> (i32, i32, i32) {
    %c0_i32 = arith.constant 0 : i32
    %c0_i32_0 = arith.constant 0 : i32
    %c0_i32_1 = arith.constant 0 : i32
    return %arg1, %c0_i32, %c0_i32_0 : i32, i32, i32
  }
  func.func @transform_3(%arg0: i32, %arg1: i32) -> (i32, i32, i32) {
    %c0_i32 = arith.constant 0 : i32
    %c0_i32_0 = arith.constant 0 : i32
    %c0_i32_1 = arith.constant 0 : i32
    return %arg1, %c0_i32, %c0_i32_0 : i32, i32, i32
  }
  func.func @transform_4(%arg0: i32, %arg1: i32) -> (i32, i32, i32) {
    %c0_i32 = arith.constant 0 : i32
    %c0_i32_0 = arith.constant 0 : i32
    %c0_i32_1 = arith.constant 0 : i32
    return %arg1, %c0_i32, %c0_i32_0 : i32, i32, i32
  }
  func.func @transform_5(%arg0: i32, %arg1: i32) -> (i32, i32, i32) {
    %c0_i32 = arith.constant 0 : i32
    %c0_i32_0 = arith.constant 0 : i32
    %c0_i32_1 = arith.constant 0 : i32
    return %arg1, %c0_i32, %c0_i32_0 : i32, i32, i32
  }
  func.func @transform_6(%arg0: i32, %arg1: i32) -> (i32, i32, i32) {
    %c0_i32 = arith.constant 0 : i32
    %c0_i32_0 = arith.constant 0 : i32
    %c0_i32_1 = arith.constant 0 : i32
    return %arg1, %c0_i32, %c0_i32_0 : i32, i32, i32
  }
  func.func @transform_7(%arg0: i32, %arg1: i32) -> (i32, i32, i32) {
    %c0_i32 = arith.constant 0 : i32
    %c0_i32_0 = arith.constant 0 : i32
    %c0_i32_1 = arith.constant 0 : i32
    return %arg1, %c0_i32, %c0_i32_0 : i32, i32, i32
  }
  func.func @transform_8(%arg0: i32, %arg1: i32) -> (i32, i32, i32) {
    %c0_i32 = arith.constant 0 : i32
    %c0_i32_0 = arith.constant 0 : i32
    %c0_i32_1 = arith.constant 0 : i32
    return %arg1, %c0_i32, %c0_i32_0 : i32, i32, i32
  }
  func.func @transform_9(%arg0: i32, %arg1: i32) -> (i32, i32, i32) {
    %c0_i32 = arith.constant 0 : i32
    %c0_i32_0 = arith.constant 0 : i32
    %c0_i32_1 = arith.constant 0 : i32
    return %arg1, %c0_i32, %c0_i32_0 : i32, i32, i32
  }
  func.func @transform_10(%arg0: i32, %arg1: i32) -> (i32, i32, i32) {
    %c0_i32 = arith.constant 0 : i32
    %c0_i32_0 = arith.constant 0 : i32
    %c0_i32_1 = arith.constant 0 : i32
    return %arg1, %c0_i32, %c0_i32_0 : i32, i32, i32
  }
  func.func @transform_11(%arg0: i32, %arg1: i32) -> (i32, i32, i32) {
    %c0_i32 = arith.constant 0 : i32
    %c0_i32_0 = arith.constant 0 : i32
    %c0_i32_1 = arith.constant 0 : i32
    return %arg1, %c0_i32, %c0_i32_0 : i32, i32, i32
  }
  func.func @transform_12(%arg0: i32, %arg1: i32) -> (i32, i32, i32) {
    %c0_i32 = arith.constant 0 : i32
    %c0_i32_0 = arith.constant 0 : i32
    %c0_i32_1 = arith.constant 0 : i32
    return %arg1, %c0_i32, %c0_i32_0 : i32, i32, i32
  }
  func.func @transform_13(%arg0: i32, %arg1: i32) -> (i32, i32, i32) {
    %c0_i32 = arith.constant 0 : i32
    %c0_i32_0 = arith.constant 0 : i32
    %c0_i32_1 = arith.constant 0 : i32
    return %arg1, %c0_i32, %c0_i32_0 : i32, i32, i32
  }
  func.func @transform_14(%arg0: i32, %arg1: i32) -> (i32, i32, i32) {
    %c0_i32 = arith.constant 0 : i32
    %c0_i32_0 = arith.constant 0 : i32
    %c0_i32_1 = arith.constant 0 : i32
    return %arg1, %c0_i32, %c0_i32_0 : i32, i32, i32
  }
  func.func @transform_15(%arg0: i32, %arg1: i32) -> (i32, i32, i32) {
    %c0_i32 = arith.constant 0 : i32
    %c0_i32_0 = arith.constant 0 : i32
    %c0_i32_1 = arith.constant 0 : i32
    return %arg1, %c0_i32, %c0_i32_0 : i32, i32, i32
  }
  func.func @transform_16(%arg0: i32, %arg1: i32) -> (i32, i32, i32) {
    %c0_i32 = arith.constant 0 : i32
    %c0_i32_0 = arith.constant 0 : i32
    %c0_i32_1 = arith.constant 0 : i32
    return %arg0, %c0_i32, %c0_i32_0 : i32, i32, i32
  }
}

</mosaic_0001>

<llo_original>
// kernel: tpu_custom_call.1
$region0: #{tpu_custom_call.1}
  #allocation0 [shape = 'u32[]', space=smem, size = 0x4, offset = 0x4, fixed_abs, tag = 'smem constant byte address 0x4 - core index']
  #allocation1 [shape = 'u32[144,128]{1,0:T(1,128)}', space=vmem, size = 0x12000, scoped, tag = 'internal scratch']
  %s0 = inlined_call_operand.hbm [shape: f32[16,16,128], index: 0, kind: input, shape index: {}]
  %s1 = inlined_call_operand.hbm [shape: f32[3,1,128], index: 1, kind: input, shape index: {}]
  %s2 = inlined_call_operand.hbm [shape: f32[3,1,128], index: 2, kind: input, shape index: {}]
  %s3 = inlined_call_operand.hbm [shape: bf16[3,128,384], index: 3, kind: input, shape index: {}]
  %s4 = inlined_call_operand.vmem [shape: f32[3,1,384], index: 4, kind: input, shape index: {}]
  %s5 = inlined_call_operand.vmem [shape: f32[3,1,128], index: 5, kind: input, shape index: {}]
  %s6 = inlined_call_operand.vmem [shape: f32[3,1,128], index: 6, kind: input, shape index: {}]
  %s7 = inlined_call_operand.hbm [shape: bf16[3,128,128], index: 7, kind: input, shape index: {}]
  %s8 = inlined_call_operand.vmem [shape: f32[3,1,128], index: 8, kind: input, shape index: {}]
  %s9 = inlined_call_operand.vmem [shape: f32[3,1,128], index: 9, kind: input, shape index: {}]
  %s10 = inlined_call_operand.vmem [shape: f32[3,1,128], index: 10, kind: input, shape index: {}]
  %s11 = inlined_call_operand.vmem [shape: f32[3,1,128], index: 11, kind: input, shape index: {}]
  %s12 = inlined_call_operand.hbm [shape: bf16[3,128,256], index: 12, kind: input, shape index: {}]
  %s13 = inlined_call_operand.vmem [shape: f32[3,1,256], index: 13, kind: input, shape index: {}]
  %s14 = inlined_call_operand.hbm [shape: bf16[3,256,128], index: 14, kind: input, shape index: {}]
  %s15 = inlined_call_operand.vmem [shape: f32[3,1,128], index: 15, kind: input, shape index: {}]
  %s16 = inlined_call_operand.hbm [shape: f32[16,16,128], index: 16, kind: output, shape index: {}]
  %s17 = sld [smem:[#allocation0]]
  $region129: #{tpu_custom_call.1} parent=0
    _
  %s19 = ssub.s32 1, %s17
  %s20 = scalar_select 0, %s19, %s17
  $region1: #{tpu_custom_call.1} parent=0
    #allocation2 [shape = 'u8[131072]{0}', space=vmem, size = 0x20000, scoped, tag = 'input window, operand 0']
    #allocation3 [shape = 's32[2]{0}', space=sflag, size = 0x8, scoped, tag = 'scoped memory for tpu_custom_call.1']
    #allocation4 [shape = 's32[2]{0}', space=sflag, size = 0x8, scoped, tag = 'scoped memory for tpu_custom_call.1']
    #allocation5 [shape = 'u8[1024]{0}', space=vmem, size = 0x400, scoped, tag = 'input window, operand 1']
    #allocation6 [shape = 's32[2]{0}', space=sflag, size = 0x8, scoped, tag = 'scoped memory for tpu_custom_call.1']
    #allocation7 [shape = 'u8[1024]{0}', space=vmem, size = 0x400, scoped, tag = 'input window, operand 2']
    #allocation8 [shape = 'u8[196608]{0}', space=vmem, size = 0x30000, scoped, tag = 'input window, operand 3']
    #allocation9 [shape = 's32[2]{0}', space=sflag, size = 0x8, scoped, tag = 'scoped memory for tpu_custom_call.1']
    #allocation10 [shape = 'u8[65536]{0}', space=vmem, size = 0x10000, scoped, tag = 'input window, operand 7']
    #allocation11 [shape = 'u8[131072]{0}', space=vmem, size = 0x20000, scoped, tag = 'input window, operand 12']
    #allocation12 [shape = 's32[2]{0}', space=sflag, size = 0x8, scoped, tag = 'scoped memory for tpu_custom_call.1']
    #allocation13 [shape = 'u8[131072]{0}', space=vmem, size = 0x20000, scoped, tag = 'input window, operand 14']
    #allocation14 [shape = 'u8[131072]{0}', space=vmem, size = 0x20000, scoped, tag = 'output window, operand 0']
    %21 = vsyncpa [#allocation3], 0
    %s22 = scalar_lea.sflag [#allocation3], 1
    %23 = vsyncpa %s22, 0
    %24 = vsyncpa [#allocation6], 0
    %s25 = scalar_lea.sflag [#allocation6], 1
    %26 = vsyncpa %s25, 0
    %27 = vsyncpa [#allocation9], 0
    %s28 = scalar_lea.sflag [#allocation9], 1
    %29 = vsyncpa %s28, 0
    %30 = vsyncpa [#allocation12], 0
    %s31 = scalar_lea.sflag [#allocation12], 1
    %32 = vsyncpa %s31, 0
    %33 = vsyncpa [#allocation4], 0
    %s34 = scalar_lea.sflag [#allocation4], 1
    %35 = vsyncpa %s34, 0
    loop: start=0, step=1, limit=8
    $region2: #{tpu_custom_call.1} parent=1 // loop_pre_header
      _
    $region3: #{tpu_custom_call.1} parent=1 // loop_header
      %s37 = sphi 0, %s41
      %p38 = scmp.ge.s32.totalorder %s37, 8
      %s44 = sphi 0, %s56
      %s45 = sphi 0, %s52
      %s46 = sphi 0, %s44
      %s47 = sphi 0, %s45
      %s48 = sphi 0, %s46
      %s49 = sphi 0, %s47
      %s59 = sphi 0, %s61
      %s62 = sphi 0, %s59
      %s63 = sphi 0, %s62
      %s79 = sphi 0, %s63
      %s85 = sphi 0, %s87
      %s88 = sphi 0, %s85
      %s89 = sphi 0, %s88
      %s105 = sphi 0, %s89
      %s111 = sphi 0, %s113
      %s114 = sphi 0, %s111
      %s115 = sphi 0, %s114
      %s131 = sphi 0, %s115
      %s137 = sphi 0, %s139
      %s140 = sphi 0, %s137
      %s141 = sphi 0, %s140
      %s157 = sphi 0, %s141
      %s163 = sphi 0, %s165
      %s166 = sphi 0, %s163
      %s167 = sphi 0, %s166
      %s183 = sphi 0, %s167
      %s189 = sphi 0, %s191
      %s192 = sphi 0, %s189
      %s193 = sphi 0, %s192
      %s209 = sphi 0, %s193
      %s215 = sphi 0, %s217
      %s218 = sphi 0, %s215
      %s219 = sphi 0, %s218
      %s235 = sphi 0, %s219
      %s241 = sphi 0, %s243
      %s244 = sphi 0, %s241
      %s245 = sphi 0, %s244
      %s261 = sphi 0, %s245
      %s267 = sphi 0, %s269
      %s270 = sphi 0, %s267
      %s271 = sphi 0, %s270
      %s287 = sphi 0, %s271
      %s293 = sphi 0, %s295
      %s296 = sphi 0, %s293
      %s297 = sphi 0, %s296
      %s313 = sphi 0, %s297
      %s319 = sphi 0, %s321
      %s322 = sphi 0, %s319
      %s323 = sphi 0, %s322
      %s339 = sphi 0, %s323
      %s345 = sphi 0, %s347
      %s348 = sphi 0, %s345
      %s349 = sphi 0, %s348
      %s365 = sphi 0, %s349
      %s371 = sphi 0, %s373
      %s374 = sphi 0, %s371
      %s375 = sphi 0, %s374
      %s391 = sphi 0, %s375
      %s397 = sphi 0, %s399
      %s400 = sphi 0, %s397
      %s401 = sphi 0, %s400
      %s417 = sphi 0, %s401
      %s423 = sphi 0, %s425
      %s426 = sphi 0, %s423
      %s427 = sphi 0, %s426
      %s443 = sphi 0, %s427
      %s449 = sphi 0, %s451
      %s452 = sphi 0, %s449
      %s453 = sphi 0, %s452
      %s469 = sphi 0, %s453
      %s475 = sphi 0, %s477
      %s478 = sphi 0, %s475
      %s479 = sphi 0, %s478
      %s495 = sphi 0, %s479
    $region4: #{tpu_custom_call.1} parent=1 // loop_header_branch
      %40 = sbr.rel (%p38) target = $region8
    $region5: #{tpu_custom_call.1} parent=1 // loop_body
      %s42 = ssub.s32 %s37, 1
      %s43 = ssub.s32 %s37, 2
      %s50 = sadd.s32 1, %s45
      %p51 = scmp.ge.s32.totalorder %s50, 3
      %s52 = scalar_select %p51, 0, %s50
      %s53 = sadd.s32 1, %s44
      %s54 = scalar_select %p51, %s53, %s44
      %p55 = scmp.ge.s32.totalorder %s54, 2
      %s56 = scalar_select %p55, 0, %s54
      %s57 = ssub.s32 %s44, %s56
      %p58 = scmp.eq.s32.totalorder %s57, 0
      %s60 = sadd.s32 %s59, 1
      %s61 = scalar_select %p58, %s59, %s60
      %p64 = pneg %p58
      %p65 = scmp.eq.s32.totalorder %s37, 5
      %p66 = por %p64, %p65
      %p67 = scmp.ne.s32.totalorder %s59, %s62
      %p68 = scmp.eq.s32.totalorder %s37, 0
      %p69 = por %p67, %p68
      %p70 = scmp.ne.s32.totalorder %s59, %s62
      %p71 = scmp.eq.s32.totalorder %s42, 5
      %p72 = por %p70, %p71
      %p73 = scmp.ne.s32.totalorder %s62, %s63
      %p74 = scmp.eq.s32.totalorder %s42, 0
      %p75 = por %p73, %p74
      %p76 = scmp.ne.s32.totalorder %s62, %s63
      %p77 = scmp.eq.s32.totalorder %s43, 5
      %p78 = por %p76, %p77
      %p80 = scmp.ne.s32.totalorder %s63, %s79
      %p81 = scmp.eq.s32.totalorder %s43, 0
      %p82 = por %p80, %p81
      %s83 = ssub.s32 %s45, %s52
      %p84 = scmp.eq.s32.totalorder %s83, 0
      %s86 = sadd.s32 %s85, 1
      %s87 = scalar_select %p84, %s85, %s86
      %p90 = pneg %p84
      %p91 = scmp.eq.s32.totalorder %s37, 5
      %p92 = por %p90, %p91
      %p93 = scmp.ne.s32.totalorder %s85, %s88
      %p94 = scmp.eq.s32.totalorder %s37, 0
      %p95 = por %p93, %p94
      %p96 = scmp.ne.s32.totalorder %s85, %s88
      %p97 = scmp.eq.s32.totalorder %s42, 5
      %p98 = por %p96, %p97
      %p99 = scmp.ne.s32.totalorder %s88, %s89
      %p100 = scmp.eq.s32.totalorder %s42, 0
      %p101 = por %p99, %p100
      %p102 = scmp.ne.s32.totalorder %s88, %s89
      %p103 = scmp.eq.s32.totalorder %s43, 5
      %p104 = por %p102, %p103
      %p106 = scmp.ne.s32.totalorder %s89, %s105
      %p107 = scmp.eq.s32.totalorder %s43, 0
      %p108 = por %p106, %p107
      %s109 = ssub.s32 %s45, %s52
      %p110 = scmp.eq.s32.totalorder %s109, 0
      %s112 = sadd.s32 %s111, 1
      %s113 = scalar_select %p110, %s111, %s112
      %p116 = pneg %p110
      %p117 = scmp.eq.s32.totalorder %s37, 5
      %p118 = por %p116, %p117
      %p119 = scmp.ne.s32.totalorder %s111, %s114
      %p120 = scmp.eq.s32.totalorder %s37, 0
      %p121 = por %p119, %p120
      %p122 = scmp.ne.s32.totalorder %s111, %s114
      %p123 = scmp.eq.s32.totalorder %s42, 5
      %p124 = por %p122, %p123
      %p125 = scmp.ne.s32.totalorder %s114, %s115
      %p126 = scmp.eq.s32.totalorder %s42, 0
      %p127 = por %p125, %p126
      %p128 = scmp.ne.s32.totalorder %s114, %s115
      %p129 = scmp.eq.s32.totalorder %s43, 5
      %p130 = por %p128, %p129
      %p132 = scmp.ne.s32.totalorder %s115, %s131
      %p133 = scmp.eq.s32.totalorder %s43, 0
      %p134 = por %p132, %p133
      %s135 = ssub.s32 %s45, %s52
      %p136 = scmp.eq.s32.totalorder %s135, 0
      %s138 = sadd.s32 %s137, 1
      %s139 = scalar_select %p136, %s137, %s138
      %p142 = pneg %p136
      %p143 = scmp.eq.s32.totalorder %s37, 5
      %p144 = por %p142, %p143
      %p145 = scmp.ne.s32.totalorder %s137, %s140
      %p146 = scmp.eq.s32.totalorder %s37, 0
      %p147 = por %p145, %p146
      %p148 = scmp.ne.s32.totalorder %s137, %s140
      %p149 = scmp.eq.s32.totalorder %s42, 5
      %p150 = por %p148, %p149
      %p151 = scmp.ne.s32.totalorder %s140, %s141
      %p152 = scmp.eq.s32.totalorder %s42, 0
      %p153 = por %p151, %p152
      %p154 = scmp.ne.s32.totalorder %s140, %s141
      %p155 = scmp.eq.s32.totalorder %s43, 5
      %p156 = por %p154, %p155
      %p158 = scmp.ne.s32.totalorder %s141, %s157
      %p159 = scmp.eq.s32.totalorder %s43, 0
      %p160 = por %p158, %p159
      %s161 = ssub.s32 %s45, %s52
      %p162 = scmp.eq.s32.totalorder %s161, 0
      %s164 = sadd.s32 %s163, 1
      %s165 = scalar_select %p162, %s163, %s164
      %p168 = pneg %p162
      %p169 = scmp.eq.s32.totalorder %s37, 5
      %p170 = por %p168, %p169
      %p171 = scmp.ne.s32.totalorder %s163, %s166
      %p172 = scmp.eq.s32.totalorder %s37, 0
      %p173 = por %p171, %p172
      %p174 = scmp.ne.s32.totalorder %s163, %s166
      %p175 = scmp.eq.s32.totalorder %s42, 5
      %p176 = por %p174, %p175
      %p177 = scmp.ne.s32.totalorder %s166, %s167
      %p178 = scmp.eq.s32.totalorder %s42, 0
      %p179 = por %p177, %p178
      %p180 = scmp.ne.s32.totalorder %s166, %s167
      %p181 = scmp.eq.s32.totalorder %s43, 5
      %p182 = por %p180, %p181
      %p184 = scmp.ne.s32.totalorder %s167, %s183
      %p185 = scmp.eq.s32.totalorder %s43, 0
      %p186 = por %p184, %p185
      %s187 = ssub.s32 %s45, %s52
      %p188 = scmp.eq.s32.totalorder %s187, 0
      %s190 = sadd.s32 %s189, 1
      %s191 = scalar_select %p188, %s189, %s190
      %p194 = pneg %p188
      %p195 = scmp.eq.s32.totalorder %s37, 5
      %p196 = por %p194, %p195
      %p197 = scmp.ne.s32.totalorder %s189, %s192
      %p198 = scmp.eq.s32.totalorder %s37, 0
      %p199 = por %p197, %p198
      %p200 = scmp.ne.s32.totalorder %s189, %s192
      %p201 = scmp.eq.s32.totalorder %s42, 5
      %p202 = por %p200, %p201
      %p203 = scmp.ne.s32.totalorder %s192, %s193
      %p204 = scmp.eq.s32.totalorder %s42, 0
      %p205 = por %p203, %p204
      %p206 = scmp.ne.s32.totalorder %s192, %s193
      %p207 = scmp.eq.s32.totalorder %s43, 5
      %p208 = por %p206, %p207
      %p210 = scmp.ne.s32.totalorder %s193, %s209
      %p211 = scmp.eq.s32.totalorder %s43, 0
      %p212 = por %p210, %p211
      %s213 = ssub.s32 %s45, %s52
      %p214 = scmp.eq.s32.totalorder %s213, 0
      %s216 = sadd.s32 %s215, 1
      %s217 = scalar_select %p214, %s215, %s216
      %p220 = pneg %p214
      %p221 = scmp.eq.s32.totalorder %s37, 5
      %p222 = por %p220, %p221
      %p223 = scmp.ne.s32.totalorder %s215, %s218
      %p224 = scmp.eq.s32.totalorder %s37, 0
      %p225 = por %p223, %p224
      %p226 = scmp.ne.s32.totalorder %s215, %s218
      %p227 = scmp.eq.s32.totalorder %s42, 5
      %p228 = por %p226, %p227
      %p229 = scmp.ne.s32.totalorder %s218, %s219
      %p230 = scmp.eq.s32.totalorder %s42, 0
      %p231 = por %p229, %p230
      %p232 = scmp.ne.s32.totalorder %s218, %s219
      %p233 = scmp.eq.s32.totalorder %s43, 5
      %p234 = por %p232, %p233
      %p236 = scmp.ne.s32.totalorder %s219, %s235
      %p237 = scmp.eq.s32.totalorder %s43, 0
      %p238 = por %p236, %p237
      %s239 = ssub.s32 %s45, %s52
      %p240 = scmp.eq.s32.totalorder %s239, 0
      %s242 = sadd.s32 %s241, 1
      %s243 = scalar_select %p240, %s241, %s242
      %p246 = pneg %p240
      %p247 = scmp.eq.s32.totalorder %s37, 5
      %p248 = por %p246, %p247
      %p249 = scmp.ne.s32.totalorder %s241, %s244
      %p250 = scmp.eq.s32.totalorder %s37, 0
      %p251 = por %p249, %p250
      %p252 = scmp.ne.s32.totalorder %s241, %s244
      %p253 = scmp.eq.s32.totalorder %s42, 5
      %p254 = por %p252, %p253
      %p255 = scmp.ne.s32.totalorder %s244, %s245
      %p256 = scmp.eq.s32.totalorder %s42, 0
      %p257 = por %p255, %p256
      %p258 = scmp.ne.s32.totalorder %s244, %s245
      %p259 = scmp.eq.s32.totalorder %s43, 5
      %p260 = por %p258, %p259
      %p262 = scmp.ne.s32.totalorder %s245, %s261
      %p263 = scmp.eq.s32.totalorder %s43, 0
      %p264 = por %p262, %p263
      %s265 = ssub.s32 %s45, %s52
      %p266 = scmp.eq.s32.totalorder %s265, 0
      %s268 = sadd.s32 %s267, 1
      %s269 = scalar_select %p266, %s267, %s268
      %p272 = pneg %p266
      %p273 = scmp.eq.s32.totalorder %s37, 5
      %p274 = por %p272, %p273
      %p275 = scmp.ne.s32.totalorder %s267, %s270
      %p276 = scmp.eq.s32.totalorder %s37, 0
      %p277 = por %p275, %p276
      %p278 = scmp.ne.s32.totalorder %s267, %s270
      %p279 = scmp.eq.s32.totalorder %s42, 5
      %p280 = por %p278, %p279
      %p281 = scmp.ne.s32.totalorder %s270, %s271
      %p282 = scmp.eq.s32.totalorder %s42, 0
      %p283 = por %p281, %p282
      %p284 = scmp.ne.s32.totalorder %s270, %s271
      %p285 = scmp.eq.s32.totalorder %s43, 5
      %p286 = por %p284, %p285
      %p288 = scmp.ne.s32.totalorder %s271, %s287
      %p289 = scmp.eq.s32.totalorder %s43, 0
      %p290 = por %p288, %p289
      %s291 = ssub.s32 %s45, %s52
      %p292 = scmp.eq.s32.totalorder %s291, 0
      %s294 = sadd.s32 %s293, 1
      %s295 = scalar_select %p292, %s293, %s294
      %p298 = pneg %p292
      %p299 = scmp.eq.s32.totalorder %s37, 5
      %p300 = por %p298, %p299
      %p301 = scmp.ne.s32.totalorder %s293, %s296
      %p302 = scmp.eq.s32.totalorder %s37, 0
      %p303 = por %p301, %p302
      %p304 = scmp.ne.s32.totalorder %s293, %s296
      %p305 = scmp.eq.s32.totalorder %s42, 5
      %p306 = por %p304, %p305
      %p307 = scmp.ne.s32.totalorder %s296, %s297
      %p308 = scmp.eq.s32.totalorder %s42, 0
      %p309 = por %p307, %p308
      %p310 = scmp.ne.s32.totalorder %s296, %s297
      %p311 = scmp.eq.s32.totalorder %s43, 5
      %p312 = por %p310, %p311
      %p314 = scmp.ne.s32.totalorder %s297, %s313
      %p315 = scmp.eq.s32.totalorder %s43, 0
      %p316 = por %p314, %p315
      %s317 = ssub.s32 %s45, %s52
      %p318 = scmp.eq.s32.totalorder %s317, 0
      %s320 = sadd.s32 %s319, 1
      %s321 = scalar_select %p318, %s319, %s320
      %p324 = pneg %p318
      %p325 = scmp.eq.s32.totalorder %s37, 5
      %p326 = por %p324, %p325
      %p327 = scmp.ne.s32.totalorder %s319, %s322
      %p328 = scmp.eq.s32.totalorder %s37, 0
      %p329 = por %p327, %p328
      %p330 = scmp.ne.s32.totalorder %s319, %s322
      %p331 = scmp.eq.s32.totalorder %s42, 5
      %p332 = por %p330, %p331
      %p333 = scmp.ne.s32.totalorder %s322, %s323
      %p334 = scmp.eq.s32.totalorder %s42, 0
      %p335 = por %p333, %p334
      %p336 = scmp.ne.s32.totalorder %s322, %s323
      %p337 = scmp.eq.s32.totalorder %s43, 5
      %p338 = por %p336, %p337
      %p340 = scmp.ne.s32.totalorder %s323, %s339
      %p341 = scmp.eq.s32.totalorder %s43, 0
      %p342 = por %p340, %p341
      %s343 = ssub.s32 %s45, %s52
      %p344 = scmp.eq.s32.totalorder %s343, 0
      %s346 = sadd.s32 %s345, 1
      %s347 = scalar_select %p344, %s345, %s346
      %p350 = pneg %p344
      %p351 = scmp.eq.s32.totalorder %s37, 5
      %p352 = por %p350, %p351
      %p353 = scmp.ne.s32.totalorder %s345, %s348
      %p354 = scmp.eq.s32.totalorder %s37, 0
      %p355 = por %p353, %p354
      %p356 = scmp.ne.s32.totalorder %s345, %s348
      %p357 = scmp.eq.s32.totalorder %s42, 5
      %p358 = por %p356, %p357
      %p359 = scmp.ne.s32.totalorder %s348, %s349
      %p360 = scmp.eq.s32.totalorder %s42, 0
      %p361 = por %p359, %p360
      %p362 = scmp.ne.s32.totalorder %s348, %s349
      %p363 = scmp.eq.s32.totalorder %s43, 5
      %p364 = por %p362, %p363
      %p366 = scmp.ne.s32.totalorder %s349, %s365
      %p367 = scmp.eq.s32.totalorder %s43, 0
      %p368 = por %p366, %p367
      %s369 = ssub.s32 %s45, %s52
      %p370 = scmp.eq.s32.totalorder %s369, 0
      %s372 = sadd.s32 %s371, 1
      %s373 = scalar_select %p370, %s371, %s372
      %p376 = pneg %p370
      %p377 = scmp.eq.s32.totalorder %s37, 5
      %p378 = por %p376, %p377
      %p379 = scmp.ne.s32.totalorder %s371, %s374
      %p380 = scmp.eq.s32.totalorder %s37, 0
      %p381 = por %p379, %p380
      %p382 = scmp.ne.s32.totalorder %s371, %s374
      %p383 = scmp.eq.s32.totalorder %s42, 5
      %p384 = por %p382, %p383
      %p385 = scmp.ne.s32.totalorder %s374, %s375
      %p386 = scmp.eq.s32.totalorder %s42, 0
      %p387 = por %p385, %p386
      %p388 = scmp.ne.s32.totalorder %s374, %s375
      %p389 = scmp.eq.s32.totalorder %s43, 5
      %p390 = por %p388, %p389
      %p392 = scmp.ne.s32.totalorder %s375, %s391
      %p393 = scmp.eq.s32.totalorder %s43, 0
      %p394 = por %p392, %p393
      %s395 = ssub.s32 %s45, %s52
      %p396 = scmp.eq.s32.totalorder %s395, 0
      %s398 = sadd.s32 %s397, 1
      %s399 = scalar_select %p396, %s397, %s398
      %p402 = pneg %p396
      %p403 = scmp.eq.s32.totalorder %s37, 5
      %p404 = por %p402, %p403
      %p405 = scmp.ne.s32.totalorder %s397, %s400
      %p406 = scmp.eq.s32.totalorder %s37, 0
      %p407 = por %p405, %p406
      %p408 = scmp.ne.s32.totalorder %s397, %s400
      %p409 = scmp.eq.s32.totalorder %s42, 5
      %p410 = por %p408, %p409
      %p411 = scmp.ne.s32.totalorder %s400, %s401
      %p412 = scmp.eq.s32.totalorder %s42, 0
      %p413 = por %p411, %p412
      %p414 = scmp.ne.s32.totalorder %s400, %s401
      %p415 = scmp.eq.s32.totalorder %s43, 5
      %p416 = por %p414, %p415
      %p418 = scmp.ne.s32.totalorder %s401, %s417
      %p419 = scmp.eq.s32.totalorder %s43, 0
      %p420 = por %p418, %p419
      %s421 = ssub.s32 %s45, %s52
      %p422 = scmp.eq.s32.totalorder %s421, 0
      %s424 = sadd.s32 %s423, 1
      %s425 = scalar_select %p422, %s423, %s424
      %p428 = pneg %p422
      %p429 = scmp.eq.s32.totalorder %s37, 5
      %p430 = por %p428, %p429
      %p431 = scmp.ne.s32.totalorder %s423, %s426
      %p432 = scmp.eq.s32.totalorder %s37, 0
      %p433 = por %p431, %p432
      %p434 = scmp.ne.s32.totalorder %s423, %s426
      %p435 = scmp.eq.s32.totalorder %s42, 5
      %p436 = por %p434, %p435
      %p437 = scmp.ne.s32.totalorder %s426, %s427
      %p438 = scmp.eq.s32.totalorder %s42, 0
      %p439 = por %p437, %p438
      %p440 = scmp.ne.s32.totalorder %s426, %s427
      %p441 = scmp.eq.s32.totalorder %s43, 5
      %p442 = por %p440, %p441
      %p444 = scmp.ne.s32.totalorder %s427, %s443
      %p445 = scmp.eq.s32.totalorder %s43, 0
      %p446 = por %p444, %p445
      %s447 = ssub.s32 %s45, %s52
      %p448 = scmp.eq.s32.totalorder %s447, 0
      %s450 = sadd.s32 %s449, 1
      %s451 = scalar_select %p448, %s449, %s450
      %p454 = pneg %p448
      %p455 = scmp.eq.s32.totalorder %s37, 5
      %p456 = por %p454, %p455
      %p457 = scmp.ne.s32.totalorder %s449, %s452
      %p458 = scmp.eq.s32.totalorder %s37, 0
      %p459 = por %p457, %p458
      %p460 = scmp.ne.s32.totalorder %s449, %s452
      %p461 = scmp.eq.s32.totalorder %s42, 5
      %p462 = por %p460, %p461
      %p463 = scmp.ne.s32.totalorder %s452, %s453
      %p464 = scmp.eq.s32.totalorder %s42, 0
      %p465 = por %p463, %p464
      %p466 = scmp.ne.s32.totalorder %s452, %s453
      %p467 = scmp.eq.s32.totalorder %s43, 5
      %p468 = por %p466, %p467
      %p470 = scmp.ne.s32.totalorder %s453, %s469
      %p471 = scmp.eq.s32.totalorder %s43, 0
      %p472 = por %p470, %p471
      %s473 = ssub.s32 %s44, %s56
      %p474 = scmp.eq.s32.totalorder %s473, 0
      %s476 = sadd.s32 %s475, 1
      %s477 = scalar_select %p474, %s475, %s476
      %p480 = pneg %p474
      %p481 = scmp.eq.s32.totalorder %s37, 5
      %p482 = por %p480, %p481
      %p483 = scmp.ne.s32.totalorder %s475, %s478
      %p484 = scmp.eq.s32.totalorder %s37, 0
      %p485 = por %p483, %p484
      %p486 = scmp.ne.s32.totalorder %s475, %s478
      %p487 = scmp.eq.s32.totalorder %s42, 5
      %p488 = por %p486, %p487
      %p489 = scmp.ne.s32.totalorder %s478, %s479
      %p490 = scmp.eq.s32.totalorder %s42, 0
      %p491 = por %p489, %p490
      %p492 = scmp.ne.s32.totalorder %s478, %s479
      %p493 = scmp.eq.s32.totalorder %s43, 5
      %p494 = por %p492, %p493
      %p496 = scmp.ne.s32.totalorder %s479, %s495
      %p497 = scmp.eq.s32.totalorder %s43, 0
      %p498 = por %p496, %p497
      %p499 = scmp.le.s32.totalorder 1, %s37
      %p500 = scmp.lt.s32.totalorder %s37, 7
      %p501 = pnand %p499, %p500
      %p502 = pneg %p501
      // Predicated region
      $region9: #{tpu_custom_call.1} parent=5 // pred_check
        _
      $region10: #{tpu_custom_call.1} parent=5 // pred_check_branch
        %504 = sbr.rel (%p501) target = $region12
      $region11: #{tpu_custom_call.1} parent=5 // pred_region
        %s505 = ssub.s32 %s37, 1
      $region12: #{tpu_custom_call.1} parent=5 // pred_fallthru
        _
      %p506 = scmp.lt.s32.totalorder %s37, 6
      // Predicated region
      $region13: #{tpu_custom_call.1} parent=5 // pred_check
        %p507 = pneg %p506
      $region14: #{tpu_custom_call.1} parent=5 // pred_check_branch
        %509 = sbr.rel (%p507) target = $region16
      $region15: #{tpu_custom_call.1} parent=5 // pred_region
        // Predicated region
        $region17: #{tpu_custom_call.1} parent=15 // pred_check
          %p510 = pneg %p69
        $region18: #{tpu_custom_call.1} parent=15 // pred_check_branch
          %512 = sbr.rel (%p510) target = $region20
        $region19: #{tpu_custom_call.1} parent=15 // pred_region
          %s513 = sand.u32 %s59, 1
          %s514 = scalar_lea.sflag [#allocation3], %s513
          %s515 = sand.u32 %s59, 1
          %s516 = smul.addr %s515, 128
          %s517 = scalar_lea.vmem [#allocation2], %s516
          %s518 = smul.u32 8, %s44
          %s520 = ssub.s32 2048, 2048
          %521 = vsyncadd %s514, %s520
          %s522 = smul.addr %s518, 2
          %s523 = smul.addr %s522, 128
          %s524 = scalar_lea.hbm %s0, %s523
          %s525 = sshll.u32 %s517, 4
          %s526 = int_to_ptr.vmem [resolvable:$true] %s525
          %531 = dma.hbm_to_vmem [thread:$0]  %s524, 2048, %s526, %s514, 128, 128, 8
        $region20: #{tpu_custom_call.1} parent=15 // pred_fallthru
          _
        // Predicated region
        $region21: #{tpu_custom_call.1} parent=15 // pred_check
          %p532 = pneg %p95
        $region22: #{tpu_custom_call.1} parent=15 // pred_check_branch
          %534 = sbr.rel (%p532) target = $region24
        $region23: #{tpu_custom_call.1} parent=15 // pred_region
          %s535 = sand.u32 %s37, 1
          %s536 = scalar_lea.sflag [#allocation6], %s535
          %s537 = sand.u32 %s85, 1
          %s538 = scalar_lea.vmem [#allocation5], %s537
          %s540 = ssub.s32 16, 16
          %541 = vsyncadd %s536, %s540
          %s542 = smul.addr %s45, 16
          %s543 = scalar_lea.hbm %s1, %s542
          %s545 = sshll.u32 %s538, 4
          %s546 = int_to_ptr.vmem [resolvable:$true] %s545
          %548 = dma.hbm_to_vmem [thread:$0]  %s543, 16, %s546, %s536
        $region24: #{tpu_custom_call.1} parent=15 // pred_fallthru
          _
        // Predicated region
        $region25: #{tpu_custom_call.1} parent=15 // pred_check
          %p549 = pneg %p121
        $region26: #{tpu_custom_call.1} parent=15 // pred_check_branch
          %551 = sbr.rel (%p549) target = $region28
        $region27: #{tpu_custom_call.1} parent=15 // pred_region
          %s552 = sand.u32 %s37, 1
          %s553 = scalar_lea.sflag [#allocation6], %s552
          %s554 = sand.u32 %s111, 1
          %s555 = scalar_lea.vmem [#allocation7], %s554
          %s557 = ssub.s32 16, 16
          %558 = vsyncadd %s553, %s557
          %s559 = smul.addr %s45, 16
          %s560 = scalar_lea.hbm %s2, %s559
          %s562 = sshll.u32 %s555, 4
          %s563 = int_to_ptr.vmem [resolvable:$true] %s562
          %565 = dma.hbm_to_vmem [thread:$0]  %s560, 16, %s563, %s553
        $region28: #{tpu_custom_call.1} parent=15 // pred_fallthru
          _
        // Predicated region
        $region29: #{tpu_custom_call.1} parent=15 // pred_check
          %p566 = pneg %p147
        $region30: #{tpu_custom_call.1} parent=15 // pred_check_branch
          %568 = sbr.rel (%p566) target = $region32
        $region31: #{tpu_custom_call.1} parent=15 // pred_region
          %s569 = sand.u32 %s37, 1
          %s570 = scalar_lea.sflag [#allocation9], %s569
          %s571 = sand.u32 %s137, 1
          %s572 = smul.addr %s571, 192
          %s573 = scalar_lea.vmem [#allocation8], %s572
          %s575 = ssub.s32 3072, 3072
          %576 = vsyncadd %s570, %s575
          %s577 = smul.addr %s45, 48
          %s578 = smul.addr %s577, 64
          %s579 = scalar_lea.hbm %s3, %s578
          %s580 = sshll.u32 %s573, 4
          %s581 = int_to_ptr.vmem [resolvable:$true] %s580
          %586 = dma.hbm_to_vmem [thread:$0]  %s579, 3072, %s581, %s570, 192, 192, 12
        $region32: #{tpu_custom_call.1} parent=15 // pred_fallthru
          _
        // Predicated region
        $region33: #{tpu_custom_call.1} parent=15 // pred_check
          %p587 = pneg %p173
        $region34: #{tpu_custom_call.1} parent=15 // pred_check_branch
          %589 = sbr.rel (%p587) target = $region36
        $region35: #{tpu_custom_call.1} parent=15 // pred_region
          %p590 = scmp.lt.s32.totalorder %s45, 2
          %s591 = scalar_select %p590, %s45, 2
          %s592 = smul.addr %s591, 3
          %s593 = scalar_lea.vmem %s4, %s592
        $region36: #{tpu_custom_call.1} parent=15 // pred_fallthru
          _
        // Predicated region
        $region37: #{tpu_custom_call.1} parent=15 // pred_check
          %p594 = pneg %p199
        $region38: #{tpu_custom_call.1} parent=15 // pred_check_branch
          %596 = sbr.rel (%p594) target = $region40
        $region39: #{tpu_custom_call.1} parent=15 // pred_region
          %p597 = scmp.lt.s32.totalorder %s45, 2
          %s598 = scalar_select %p597, %s45, 2
          %s599 = scalar_lea.vmem %s5, %s598
        $region40: #{tpu_custom_call.1} parent=15 // pred_fallthru
          _
        // Predicated region
        $region41: #{tpu_custom_call.1} parent=15 // pred_check
          %p600 = pneg %p225
        $region42: #{tpu_custom_call.1} parent=15 // pred_check_branch
          %602 = sbr.rel (%p600) target = $region44
        $region43: #{tpu_custom_call.1} parent=15 // pred_region
          %p603 = scmp.lt.s32.totalorder %s45, 2
          %s604 = scalar_select %p603, %s45, 2
          %s605 = scalar_lea.vmem %s6, %s604
        $region44: #{tpu_custom_call.1} parent=15 // pred_fallthru
          _
        // Predicated region
        $region45: #{tpu_custom_call.1} parent=15 // pred_check
          %p606 = pneg %p251
        $region46: #{tpu_custom_call.1} parent=15 // pred_check_branch
          %608 = sbr.rel (%p606) target = $region48
        $region47: #{tpu_custom_call.1} parent=15 // pred_region
          %s609 = sand.u32 %s37, 1
          %s610 = scalar_lea.sflag [#allocation9], %s609
          %s611 = sand.u32 %s241, 1
          %s612 = smul.addr %s611, 64
          %s613 = scalar_lea.vmem [#allocation10], %s612
          %s615 = ssub.s32 1024, 1024
          %616 = vsyncadd %s610, %s615
          %s617 = smul.addr %s45, 16
          %s618 = smul.addr %s617, 64
          %s619 = scalar_lea.hbm %s7, %s618
          %s620 = sshll.u32 %s613, 4
          %s621 = int_to_ptr.vmem [resolvable:$true] %s620
          %626 = dma.hbm_to_vmem [thread:$0]  %s619, 1024, %s621, %s610, 64, 64, 4
        $region48: #{tpu_custom_call.1} parent=15 // pred_fallthru
          _
        // Predicated region
        $region49: #{tpu_custom_call.1} parent=15 // pred_check
          %p627 = pneg %p277
        $region50: #{tpu_custom_call.1} parent=15 // pred_check_branch
          %629 = sbr.rel (%p627) target = $region52
        $region51: #{tpu_custom_call.1} parent=15 // pred_region
          %p630 = scmp.lt.s32.totalorder %s45, 2
          %s631 = scalar_select %p630, %s45, 2
          %s632 = scalar_lea.vmem %s8, %s631
        $region52: #{tpu_custom_call.1} parent=15 // pred_fallthru
          _
        // Predicated region
        $region53: #{tpu_custom_call.1} parent=15 // pred_check
          %p633 = pneg %p303
        $region54: #{tpu_custom_call.1} parent=15 // pred_check_branch
          %635 = sbr.rel (%p633) target = $region56
        $region55: #{tpu_custom_call.1} parent=15 // pred_region
          %p636 = scmp.lt.s32.totalorder %s45, 2
          %s637 = scalar_select %p636, %s45, 2
          %s638 = scalar_lea.vmem %s9, %s637
        $region56: #{tpu_custom_call.1} parent=15 // pred_fallthru
          _
        // Predicated region
        $region57: #{tpu_custom_call.1} parent=15 // pred_check
          %p639 = pneg %p329
        $region58: #{tpu_custom_call.1} parent=15 // pred_check_branch
          %641 = sbr.rel (%p639) target = $region60
        $region59: #{tpu_custom_call.1} parent=15 // pred_region
          %p642 = scmp.lt.s32.totalorder %s45, 2
          %s643 = scalar_select %p642, %s45, 2
          %s644 = scalar_lea.vmem %s10, %s643
        $region60: #{tpu_custom_call.1} parent=15 // pred_fallthru
          _
        // Predicated region
        $region61: #{tpu_custom_call.1} parent=15 // pred_check
          %p645 = pneg %p355
        $region62: #{tpu_custom_call.1} parent=15 // pred_check_branch
          %647 = sbr.rel (%p645) target = $region64
        $region63: #{tpu_custom_call.1} parent=15 // pred_region
          %p648 = scmp.lt.s32.totalorder %s45, 2
          %s649 = scalar_select %p648, %s45, 2
          %s650 = scalar_lea.vmem %s11, %s649
        $region64: #{tpu_custom_call.1} parent=15 // pred_fallthru
          _
        // Predicated region
        $region65: #{tpu_custom_call.1} parent=15 // pred_check
          %p651 = pneg %p381
        $region66: #{tpu_custom_call.1} parent=15 // pred_check_branch
          %653 = sbr.rel (%p651) target = $region68
        $region67: #{tpu_custom_call.1} parent=15 // pred_region
          %s654 = sand.u32 %s37, 1
          %s655 = scalar_lea.sflag [#allocation12], %s654
          %s656 = sand.u32 %s371, 1
          %s657 = smul.addr %s656, 128
          %s658 = scalar_lea.vmem [#allocation11], %s657
          %s660 = ssub.s32 2048, 2048
          %661 = vsyncadd %s655, %s660
          %s662 = smul.addr %s45, 32
          %s663 = smul.addr %s662, 64
          %s664 = scalar_lea.hbm %s12, %s663
          %s665 = sshll.u32 %s658, 4
          %s666 = int_to_ptr.vmem [resolvable:$true] %s665
          %671 = dma.hbm_to_vmem [thread:$0]  %s664, 2048, %s666, %s655, 128, 128, 8
        $region68: #{tpu_custom_call.1} parent=15 // pred_fallthru
          _
        // Predicated region
        $region69: #{tpu_custom_call.1} parent=15 // pred_check
          %p672 = pneg %p407
        $region70: #{tpu_custom_call.1} parent=15 // pred_check_branch
          %674 = sbr.rel (%p672) target = $region72
        $region71: #{tpu_custom_call.1} parent=15 // pred_region
          %p675 = scmp.lt.s32.totalorder %s45, 2
          %s676 = scalar_select %p675, %s45, 2
          %s677 = smul.addr %s676, 2
          %s678 = scalar_lea.vmem %s13, %s677
        $region72: #{tpu_custom_call.1} parent=15 // pred_fallthru
          _
        // Predicated region
        $region73: #{tpu_custom_call.1} parent=15 // pred_check
          %p679 = pneg %p433
        $region74: #{tpu_custom_call.1} parent=15 // pred_check_branch
          %681 = sbr.rel (%p679) target = $region76
        $region75: #{tpu_custom_call.1} parent=15 // pred_region
          %s682 = sand.u32 %s37, 1
          %s683 = scalar_lea.sflag [#allocation12], %s682
          %s684 = sand.u32 %s423, 1
          %s685 = smul.addr %s684, 128
          %s686 = scalar_lea.vmem [#allocation13], %s685
          %s688 = ssub.s32 2048, 2048
          %689 = vsyncadd %s683, %s688
          %s690 = smul.addr %s45, 32
          %s691 = smul.addr %s690, 64
          %s692 = scalar_lea.hbm %s14, %s691
          %s693 = sshll.u32 %s686, 4
          %s694 = int_to_ptr.vmem [resolvable:$true] %s693
          %699 = dma.hbm_to_vmem [thread:$0]  %s692, 2048, %s694, %s683, 64, 64, 4
        $region76: #{tpu_custom_call.1} parent=15 // pred_fallthru
          _
        // Predicated region
        $region77: #{tpu_custom_call.1} parent=15 // pred_check
          %p700 = pneg %p459
        $region78: #{tpu_custom_call.1} parent=15 // pred_check_branch
          %702 = sbr.rel (%p700) target = $region80
        $region79: #{tpu_custom_call.1} parent=15 // pred_region
          %p703 = scmp.lt.s32.totalorder %s45, 2
          %s704 = scalar_select %p703, %s45, 2
          %s705 = scalar_lea.vmem %s15, %s704
        $region80: #{tpu_custom_call.1} parent=15 // pred_fallthru
          _
      $region16: #{tpu_custom_call.1} parent=5 // pred_fallthru
        _
      %p706 = scmp.le.s32.totalorder 1, %s37
      %p707 = scmp.lt.s32.totalorder %s37, 7
      %p708 = pnand %p706, %p707
      %p709 = pneg %p708
      // Predicated region
      $region81: #{tpu_custom_call.1} parent=5 // pred_check
        _
      $region82: #{tpu_custom_call.1} parent=5 // pred_check_branch
        %711 = sbr.rel (%p708) target = $region84
      $region83: #{tpu_custom_call.1} parent=5 // pred_region
        %s712 = ssub.s32 %s37, 1
        %s713 = sand.u32 %s62, 1
        %s714 = scalar_lea.sflag [#allocation3], %s713
        %s715 = sand.u32 %s62, 1
        %s716 = smul.addr %s715, 128
        %s717 = scalar_lea.vmem [#allocation2], %s716
        // Predicated region
        $region85: #{tpu_custom_call.1} parent=83 // pred_check
          %p718 = pneg %p75
        $region86: #{tpu_custom_call.1} parent=83 // pred_check_branch
          %720 = sbr.rel (%p718) target = $region88
        $region87: #{tpu_custom_call.1} parent=83 // pred_region
          %721 = dma.done %s714, 2048
        $region88: #{tpu_custom_call.1} parent=83 // pred_fallthru
          _
        %s722 = sand.u32 %s42, 1
        %s723 = scalar_lea.sflag [#allocation6], %s722
        %s724 = sand.u32 %s88, 1
        %s725 = scalar_lea.vmem [#allocation5], %s724
        // Predicated region
        $region89: #{tpu_custom_call.1} parent=83 // pred_check
          %p726 = pneg %p101
        $region90: #{tpu_custom_call.1} parent=83 // pred_check_branch
          %728 = sbr.rel (%p726) target = $region92
        $region91: #{tpu_custom_call.1} parent=83 // pred_region
          %729 = dma.done %s723, 16
        $region92: #{tpu_custom_call.1} parent=83 // pred_fallthru
          _
        %s730 = sand.u32 %s42, 1
        %s731 = scalar_lea.sflag [#allocation6], %s730
        %s732 = sand.u32 %s114, 1
        %s733 = scalar_lea.vmem [#allocation7], %s732
        // Predicated region
        $region93: #{tpu_custom_call.1} parent=83 // pred_check
          %p734 = pneg %p127
        $region94: #{tpu_custom_call.1} parent=83 // pred_check_branch
          %736 = sbr.rel (%p734) target = $region96
        $region95: #{tpu_custom_call.1} parent=83 // pred_region
          %737 = dma.done %s731, 16
        $region96: #{tpu_custom_call.1} parent=83 // pred_fallthru
          _
        %s738 = sand.u32 %s42, 1
        %s739 = scalar_lea.sflag [#allocation9], %s738
        %s740 = sand.u32 %s140, 1
        %s741 = smul.addr %s740, 192
        %s742 = scalar_lea.vmem [#allocation8], %s741
        // Predicated region
        $region97: #{tpu_custom_call.1} parent=83 // pred_check
          %p743 = pneg %p153
        $region98: #{tpu_custom_call.1} parent=83 // pred_check_branch
          %745 = sbr.rel (%p743) target = $region100
        $region99: #{tpu_custom_call.1} parent=83 // pred_region
          %746 = dma.done %s739, 3072
        $region100: #{tpu_custom_call.1} parent=83 // pred_fallthru
          _
        %s747 = sand.u32 %s42, 1
        %s748 = scalar_lea.sflag [#allocation9], %s747
        %s749 = sand.u32 %s244, 1
        %s750 = smul.addr %s749, 64
        %s751 = scalar_lea.vmem [#allocation10], %s750
        // Predicated region
        $region101: #{tpu_custom_call.1} parent=83 // pred_check
          %p752 = pneg %p257
        $region102: #{tpu_custom_call.1} parent=83 // pred_check_branch
          %754 = sbr.rel (%p752) target = $region104
        $region103: #{tpu_custom_call.1} parent=83 // pred_region
          %755 = dma.done %s748, 1024
        $region104: #{tpu_custom_call.1} parent=83 // pred_fallthru
          _
        %s756 = sand.u32 %s42, 1
        %s757 = scalar_lea.sflag [#allocation12], %s756
        %s758 = sand.u32 %s374, 1
        %s759 = smul.addr %s758, 128
        %s760 = scalar_lea.vmem [#allocation11], %s759
        // Predicated region
        $region105: #{tpu_custom_call.1} parent=83 // pred_check
          %p761 = pneg %p387
        $region106: #{tpu_custom_call.1} parent=83 // pred_check_branch
          %763 = sbr.rel (%p761) target = $region108
        $region107: #{tpu_custom_call.1} parent=83 // pred_region
          %764 = dma.done %s757, 2048
        $region108: #{tpu_custom_call.1} parent=83 // pred_fallthru
          _
        %s765 = sand.u32 %s42, 1
        %s766 = scalar_lea.sflag [#allocation12], %s765
        %s767 = sand.u32 %s426, 1
        %s768 = smul.addr %s767, 128
        %s769 = scalar_lea.vmem [#allocation13], %s768
        // Predicated region
        $region109: #{tpu_custom_call.1} parent=83 // pred_check
          %p770 = pneg %p439
        $region110: #{tpu_custom_call.1} parent=83 // pred_check_branch
          %772 = sbr.rel (%p770) target = $region112
        $region111: #{tpu_custom_call.1} parent=83 // pred_region
          %773 = dma.done %s766, 2048
        $region112: #{tpu_custom_call.1} parent=83 // pred_fallthru
          _
        %s774 = sand.u32 %s62, 1
        %s775 = scalar_lea.sflag [#allocation3], %s774
        %s776 = sand.u32 %s62, 1
        %s777 = smul.addr %s776, 128
        %s778 = scalar_lea.vmem [#allocation2], %s777
        %p779 = pneg %p75
        %p780 = pneg %p72
        %s781 = sand.u32 %s42, 1
        %s782 = scalar_lea.sflag [#allocation6], %s781
        %s783 = sand.u32 %s88, 1
        %s784 = scalar_lea.vmem [#allocation5], %s783
        %p785 = pneg %p101
        %p786 = pneg %p98
        %s787 = sand.u32 %s42, 1
        %s788 = scalar_lea.sflag [#allocation6], %s787
        %s789 = sand.u32 %s114, 1
        %s790 = scalar_lea.vmem [#allocation7], %s789
        %p791 = pneg %p127
        %p792 = pneg %p124
        %s793 = sand.u32 %s42, 1
        %s794 = scalar_lea.sflag [#allocation9], %s793
        %s795 = sand.u32 %s140, 1
        %s796 = smul.addr %s795, 192
        %s797 = scalar_lea.vmem [#allocation8], %s796
        %p798 = pneg %p153
        %p799 = pneg %p150
        %p800 = scmp.lt.s32.totalorder %s47, 2
        %s801 = scalar_select %p800, %s47, 2
        %s802 = smul.addr %s801, 3
        %s803 = scalar_lea.vmem %s4, %s802
        %p804 = pneg %p179
        %p805 = pneg %p176
        %p806 = scmp.lt.s32.totalorder %s47, 2
        %s807 = scalar_select %p806, %s47, 2
        %s808 = scalar_lea.vmem %s5, %s807
        %p809 = pneg %p205
        %p810 = pneg %p202
        %p811 = scmp.lt.s32.totalorder %s47, 2
        %s812 = scalar_select %p811, %s47, 2
        %s813 = scalar_lea.vmem %s6, %s812
        %p814 = pneg %p231
        %p815 = pneg %p228
        %s816 = sand.u32 %s42, 1
        %s817 = scalar_lea.sflag [#allocation9], %s816
        %s818 = sand.u32 %s244, 1
        %s819 = smul.addr %s818, 64
        %s820 = scalar_lea.vmem [#allocation10], %s819
        %p821 = pneg %p257
        %p822 = pneg %p254
        %p823 = scmp.lt.s32.totalorder %s47, 2
        %s824 = scalar_select %p823, %s47, 2
        %s825 = scalar_lea.vmem %s8, %s824
        %p826 = pneg %p283
        %p827 = pneg %p280
        %p828 = scmp.lt.s32.totalorder %s47, 2
        %s829 = scalar_select %p828, %s47, 2
        %s830 = scalar_lea.vmem %s9, %s829
        %p831 = pneg %p309
        %p832 = pneg %p306
        %p833 = scmp.lt.s32.totalorder %s47, 2
        %s834 = scalar_select %p833, %s47, 2
        %s835 = scalar_lea.vmem %s10, %s834
        %p836 = pneg %p335
        %p837 = pneg %p332
        %p838 = scmp.lt.s32.totalorder %s47, 2
        %s839 = scalar_select %p838, %s47, 2
        %s840 = scalar_lea.vmem %s11, %s839
        %p841 = pneg %p361
        %p842 = pneg %p358
        %s843 = sand.u32 %s42, 1
        %s844 = scalar_lea.sflag [#allocation12], %s843
        %s845 = sand.u32 %s374, 1
        %s846 = smul.addr %s845, 128
        %s847 = scalar_lea.vmem [#allocation11], %s846
        %p848 = pneg %p387
        %p849 = pneg %p384
        %p850 = scmp.lt.s32.totalorder %s47, 2
        %s851 = scalar_select %p850, %s47, 2
        %s852 = smul.addr %s851, 2
        %s853 = scalar_lea.vmem %s13, %s852
        %p854 = pneg %p413
        %p855 = pneg %p410
        %s856 = sand.u32 %s42, 1
        %s857 = scalar_lea.sflag [#allocation12], %s856
        %s858 = sand.u32 %s426, 1
        %s859 = smul.addr %s858, 128
        %s860 = scalar_lea.vmem [#allocation13], %s859
        %p861 = pneg %p439
        %p862 = pneg %p436
        %p863 = scmp.lt.s32.totalorder %s47, 2
        %s864 = scalar_select %p863, %s47, 2
        %s865 = scalar_lea.vmem %s15, %s864
        %p866 = pneg %p465
        %p867 = pneg %p462
        %p868 = pneg %p491
        %p869 = pneg %p488
        %s870 = sand.u32 %s478, 1
        %s871 = scalar_lea.sflag [#allocation4], %s870
        %s872 = sand.u32 %s478, 1
        %s873 = smul.addr %s872, 128
        %s874 = scalar_lea.vmem [#allocation14], %s873
        %s875 = smul.u32 8, %s46
        %p876 = scmp.lt.s32.totalorder %s47, 2
        %s877 = scalar_select %p876, %s47, 2
        %s878 = smul.addr %s877, 3
        %s879 = scalar_lea.vmem %s4, %s878
        %p880 = scmp.lt.s32.totalorder %s47, 2
        %s881 = scalar_select %p880, %s47, 2
        %s882 = scalar_lea.vmem %s5, %s881
        %p883 = scmp.lt.s32.totalorder %s47, 2
        %s884 = scalar_select %p883, %s47, 2
        %s885 = scalar_lea.vmem %s6, %s884
        %p886 = scmp.lt.s32.totalorder %s47, 2
        %s887 = scalar_select %p886, %s47, 2
        %s888 = scalar_lea.vmem %s8, %s887
        %p889 = scmp.lt.s32.totalorder %s47, 2
        %s890 = scalar_select %p889, %s47, 2
        %s891 = scalar_lea.vmem %s9, %s890
        %p892 = scmp.lt.s32.totalorder %s47, 2
        %s893 = scalar_select %p892, %s47, 2
        %s894 = scalar_lea.vmem %s10, %s893
        %p895 = scmp.lt.s32.totalorder %s47, 2
        %s896 = scalar_select %p895, %s47, 2
        %s897 = scalar_lea.vmem %s11, %s896
        %p898 = scmp.lt.s32.totalorder %s47, 2
        %s899 = scalar_select %p898, %s47, 2
        %s900 = smul.addr %s899, 2
        %s901 = scalar_lea.vmem %s13, %s900
        %p902 = scmp.lt.s32.totalorder %s47, 2
        %s903 = scalar_select %p902, %s47, 2
        %s904 = scalar_lea.vmem %s15, %s903
        %s905 = smul.u32 8, %s46
        %p907 = scmp.eq.s32.totalorder %s47, 0
        // Predicated region
        $region113: #{tpu_custom_call.1} parent=83 // pred_check
          %p908 = pneg %p907
        $region114: #{tpu_custom_call.1} parent=83 // pred_check_branch
          %910 = sbr.rel (%p908) target = $region116
        $region115: #{tpu_custom_call.1} parent=83 // pred_region
          %v911 = vld [vmem:[%s717] sm:$0xff]
          %v912 = vld [vmem:[%s717 + $0x8] sm:$0xff]
          %v913 = vld [vmem:[%s717 + $0x10] sm:$0xff]
          %v914 = vld [vmem:[%s717 + $0x18] sm:$0xff]
          %v915 = vld [vmem:[%s717 + $0x20] sm:$0xff]
          %v916 = vld [vmem:[%s717 + $0x28] sm:$0xff]
          %v917 = vld [vmem:[%s717 + $0x30] sm:$0xff]
          %v918 = vld [vmem:[%s717 + $0x38] sm:$0xff]
          %v919 = vld [vmem:[%s717 + $0x40] sm:$0xff]
          %v920 = vld [vmem:[%s717 + $0x48] sm:$0xff]
          %v921 = vld [vmem:[%s717 + $0x50] sm:$0xff]
          %v922 = vld [vmem:[%s717 + $0x58] sm:$0xff]
          %v923 = vld [vmem:[%s717 + $0x60] sm:$0xff]
          %v924 = vld [vmem:[%s717 + $0x68] sm:$0xff]
          %v925 = vld [vmem:[%s717 + $0x70] sm:$0xff]
          %v926 = vld [vmem:[%s717 + $0x78] sm:$0xff]
          %927 = vst [vmem:[%s874] sm:$0xff] %v911
          %928 = vst [vmem:[%s874 + $0x8] sm:$0xff] %v912
          %929 = vst [vmem:[%s874 + $0x10] sm:$0xff] %v913
          %930 = vst [vmem:[%s874 + $0x18] sm:$0xff] %v914
          %931 = vst [vmem:[%s874 + $0x20] sm:$0xff] %v915
          %932 = vst [vmem:[%s874 + $0x28] sm:$0xff] %v916
          %933 = vst [vmem:[%s874 + $0x30] sm:$0xff] %v917
          %934 = vst [vmem:[%s874 + $0x38] sm:$0xff] %v918
          %935 = vst [vmem:[%s874 + $0x40] sm:$0xff] %v919
          %936 = vst [vmem:[%s874 + $0x48] sm:$0xff] %v920
          %937 = vst [vmem:[%s874 + $0x50] sm:$0xff] %v921
          %938 = vst [vmem:[%s874 + $0x58] sm:$0xff] %v922
          %939 = vst [vmem:[%s874 + $0x60] sm:$0xff] %v923
          %940 = vst [vmem:[%s874 + $0x68] sm:$0xff] %v924
          %941 = vst [vmem:[%s874 + $0x70] sm:$0xff] %v925
          %942 = vst [vmem:[%s874 + $0x78] sm:$0xff] %v926
        $region116: #{tpu_custom_call.1} parent=83 // pred_fallthru
          _
        %v943 = vld [vmem:[%s874] sm:$0xff]
        %v944 = vld [vmem:[%s874 + $0x8] sm:$0xff]
        %v945 = vld [vmem:[%s874 + $0x10] sm:$0xff]
        %v946 = vld [vmem:[%s874 + $0x18] sm:$0xff]
        %v947 = vld [vmem:[%s874 + $0x20] sm:$0xff]
        %v948 = vld [vmem:[%s874 + $0x28] sm:$0xff]
        %v949 = vld [vmem:[%s874 + $0x30] sm:$0xff]
        %v950 = vld [vmem:[%s874 + $0x38] sm:$0xff]
        %v951 = vld [vmem:[%s874 + $0x40] sm:$0xff]
        %v952 = vld [vmem:[%s874 + $0x48] sm:$0xff]
        %v953 = vld [vmem:[%s874 + $0x50] sm:$0xff]
        %v954 = vld [vmem:[%s874 + $0x58] sm:$0xff]
        %v955 = vld [vmem:[%s874 + $0x60] sm:$0xff]
        %v956 = vld [vmem:[%s874 + $0x68] sm:$0xff]
        %v957 = vld [vmem:[%s874 + $0x70] sm:$0xff]
        %v958 = vld [vmem:[%s874 + $0x78] sm:$0xff]
        %v959 = vld [vmem:[%s725] sm:$0x1]
        %v960 = vld [vmem:[%s733] sm:$0x1]
        %961 = vadd.xlane.f32.xlu0 %v943
        %v962 = vpop.xlane.xlu0 %961
        %963 = vadd.xlane.f32.xlu0 %v944
        %v964 = vpop.xlane.xlu0 %963
        %965 = vadd.xlane.f32.xlu0 %v945
        %v966 = vpop.xlane.xlu0 %965
        %967 = vadd.xlane.f32.xlu0 %v946
        %v968 = vpop.xlane.xlu0 %967
        %969 = vadd.xlane.f32.xlu0 %v947
        %v970 = vpop.xlane.xlu0 %969
        %971 = vadd.xlane.f32.xlu0 %v948
        %v972 = vpop.xlane.xlu0 %971
        %973 = vadd.xlane.f32.xlu0 %v949
        %v974 = vpop.xlane.xlu0 %973
        %975 = vadd.xlane.f32.xlu0 %v950
        %v976 = vpop.xlane.xlu0 %975
        %977 = vadd.xlane.f32.xlu0 %v951
        %v978 = vpop.xlane.xlu0 %977
        %979 = vadd.xlane.f32.xlu0 %v952
        %v980 = vpop.xlane.xlu0 %979
        %981 = vadd.xlane.f32.xlu0 %v953
        %v982 = vpop.xlane.xlu0 %981
        %983 = vadd.xlane.f32.xlu0 %v954
        %v984 = vpop.xlane.xlu0 %983
        %985 = vadd.xlane.f32.xlu0 %v955
        %v986 = vpop.xlane.xlu0 %985
        %987 = vadd.xlane.f32.xlu0 %v956
        %v988 = vpop.xlane.xlu0 %987
        %989 = vadd.xlane.f32.xlu0 %v957
        %v990 = vpop.xlane.xlu0 %989
        %991 = vadd.xlane.f32.xlu0 %v958
        %v992 = vpop.xlane.xlu0 %991
        %v993 = vrcp.pop 128.0
        %v994 = vmul.f32 %v962, %v993
        %v995 = vmul.f32 %v964, %v993
        %v996 = vmul.f32 %v966, %v993
        %v997 = vmul.f32 %v968, %v993
        %v998 = vmul.f32 %v970, %v993
        %v999 = vmul.f32 %v972, %v993
        %v1000 = vmul.f32 %v974, %v993
        %v1001 = vmul.f32 %v976, %v993
        %v1002 = vmul.f32 %v978, %v993
        %v1003 = vmul.f32 %v980, %v993
        %v1004 = vmul.f32 %v982, %v993
        %v1005 = vmul.f32 %v984, %v993
        %v1006 = vmul.f32 %v986, %v993
        %v1007 = vmul.f32 %v988, %v993
        %v1008 = vmul.f32 %v990, %v993
        %v1009 = vmul.f32 %v992, %v993
        %v1010 = vsub.f32 %v943, %v994
        %v1011 = vsub.f32 %v944, %v995
        %v1012 = vsub.f32 %v945, %v996
        %v1013 = vsub.f32 %v946, %v997
        %v1014 = vsub.f32 %v947, %v998
        %v1015 = vsub.f32 %v948, %v999
        %v1016 = vsub.f32 %v949, %v1000
        %v1017 = vsub.f32 %v950, %v1001
        %v1018 = vsub.f32 %v951, %v1002
        %v1019 = vsub.f32 %v952, %v1003
        %v1020 = vsub.f32 %v953, %v1004
        %v1021 = vsub.f32 %v954, %v1005
        %v1022 = vsub.f32 %v955, %v1006
        %v1023 = vsub.f32 %v956, %v1007
        %v1024 = vsub.f32 %v957, %v1008
        %v1025 = vsub.f32 %v958, %v1009
        %v1026 = vmul.f32 %v1010, %v1010
        %v1027 = vmul.f32 %v1011, %v1011
        %v1028 = vmul.f32 %v1012, %v1012
        %v1029 = vmul.f32 %v1013, %v1013
        %v1030 = vmul.f32 %v1014, %v1014
        %v1031 = vmul.f32 %v1015, %v1015
        %v1032 = vmul.f32 %v1016, %v1016
        %v1033 = vmul.f32 %v1017, %v1017
        %v1034 = vmul.f32 %v1018, %v1018
        %v1035 = vmul.f32 %v1019, %v1019
        %v1036 = vmul.f32 %v1020, %v1020
        %v1037 = vmul.f32 %v1021, %v1021
        %v1038 = vmul.f32 %v1022, %v1022
        %v1039 = vmul.f32 %v1023, %v1023
        %v1040 = vmul.f32 %v1024, %v1024
        %v1041 = vmul.f32 %v1025, %v1025
        %1042 = vadd.xlane.f32.xlu0 %v1026
        %v1043 = vpop.xlane.xlu0 %1042
        %1044 = vadd.xlane.f32.xlu0 %v1027
        %v1045 = vpop.xlane.xlu0 %1044
        %1046 = vadd.xlane.f32.xlu0 %v1028
        %v1047 = vpop.xlane.xlu0 %1046
        %1048 = vadd.xlane.f32.xlu0 %v1029
        %v1049 = vpop.xlane.xlu0 %1048
        %1050 = vadd.xlane.f32.xlu0 %v1030
        %v1051 = vpop.xlane.xlu0 %1050
        %1052 = vadd.xlane.f32.xlu0 %v1031
        %v1053 = vpop.xlane.xlu0 %1052
        %1054 = vadd.xlane.f32.xlu0 %v1032
        %v1055 = vpop.xlane.xlu0 %1054
        %1056 = vadd.xlane.f32.xlu0 %v1033
        %v1057 = vpop.xlane.xlu0 %1056
        %1058 = vadd.xlane.f32.xlu0 %v1034
        %v1059 = vpop.xlane.xlu0 %1058
        %1060 = vadd.xlane.f32.xlu0 %v1035
        %v1061 = vpop.xlane.xlu0 %1060
        %1062 = vadd.xlane.f32.xlu0 %v1036
        %v1063 = vpop.xlane.xlu0 %1062
        %1064 = vadd.xlane.f32.xlu0 %v1037
        %v1065 = vpop.xlane.xlu0 %1064
        %1066 = vadd.xlane.f32.xlu0 %v1038
        %v1067 = vpop.xlane.xlu0 %1066
        %1068 = vadd.xlane.f32.xlu0 %v1039
        %v1069 = vpop.xlane.xlu0 %1068
        %1070 = vadd.xlane.f32.xlu0 %v1040
        %v1071 = vpop.xlane.xlu0 %1070
        %1072 = vadd.xlane.f32.xlu0 %v1041
        %v1073 = vpop.xlane.xlu0 %1072
        %v1074 = vmul.f32 %v1043, %v993
        %v1075 = vmul.f32 %v1045, %v993
        %v1076 = vmul.f32 %v1047, %v993
        %v1077 = vmul.f32 %v1049, %v993
        %v1078 = vmul.f32 %v1051, %v993
        %v1079 = vmul.f32 %v1053, %v993
        %v1080 = vmul.f32 %v1055, %v993
        %v1081 = vmul.f32 %v1057, %v993
        %v1082 = vmul.f32 %v1059, %v993
        %v1083 = vmul.f32 %v1061, %v993
        %v1084 = vmul.f32 %v1063, %v993
        %v1085 = vmul.f32 %v1065, %v993
        %v1086 = vmul.f32 %v1067, %v993
        %v1087 = vmul.f32 %v1069, %v993
        %v1088 = vmul.f32 %v1071, %v993
        %v1089 = vmul.f32 %v1073, %v993
        %v1090 = vadd.f32 %v1074, 1e-06
        %v1091 = vadd.f32 %v1075, 1e-06
        %v1092 = vadd.f32 %v1076, 1e-06
        %v1093 = vadd.f32 %v1077, 1e-06
        %v1094 = vadd.f32 %v1078, 1e-06
        %v1095 = vadd.f32 %v1079, 1e-06
        %v1096 = vadd.f32 %v1080, 1e-06
        %v1097 = vadd.f32 %v1081, 1e-06
        %v1098 = vadd.f32 %v1082, 1e-06
        %v1099 = vadd.f32 %v1083, 1e-06
        %v1100 = vadd.f32 %v1084, 1e-06
        %v1101 = vadd.f32 %v1085, 1e-06
        %v1102 = vadd.f32 %v1086, 1e-06
        %v1103 = vadd.f32 %v1087, 1e-06
        %v1104 = vadd.f32 %v1088, 1e-06
        %v1105 = vadd.f32 %v1089, 1e-06
        %v1106 = vrsqrt.pop %v1090
        %v1107 = vrsqrt.pop %v1091
        %v1108 = vrsqrt.pop %v1092
        %v1109 = vrsqrt.pop %v1093
        %v1110 = vrsqrt.pop %v1094
        %v1111 = vrsqrt.pop %v1095
        %v1112 = vrsqrt.pop %v1096
        %v1113 = vrsqrt.pop %v1097
        %v1114 = vrsqrt.pop %v1098
        %v1115 = vrsqrt.pop %v1099
        %v1116 = vrsqrt.pop %v1100
        %v1117 = vrsqrt.pop %v1101
        %v1118 = vrsqrt.pop %v1102
        %v1119 = vrsqrt.pop %v1103
        %v1120 = vrsqrt.pop %v1104
        %v1121 = vrsqrt.pop %v1105
        %v1122 = vmul.f32 %v1010, %v1106
        %v1123 = vmul.f32 %v1011, %v1107
        %v1124 = vmul.f32 %v1012, %v1108
        %v1125 = vmul.f32 %v1013, %v1109
        %v1126 = vmul.f32 %v1014, %v1110
        %v1127 = vmul.f32 %v1015, %v1111
        %v1128 = vmul.f32 %v1016, %v1112
        %v1129 = vmul.f32 %v1017, %v1113
        %v1130 = vmul.f32 %v1018, %v1114
        %v1131 = vmul.f32 %v1019, %v1115
        %v1132 = vmul.f32 %v1020, %v1116
        %v1133 = vmul.f32 %v1021, %v1117
        %v1134 = vmul.f32 %v1022, %v1118
        %v1135 = vmul.f32 %v1023, %v1119
        %v1136 = vmul.f32 %v1024, %v1120
        %v1137 = vmul.f32 %v1025, %v1121
        %v1139 = vlaneseq
        %v1140 = vshrl.u32 %v1139, 7
        %v1141 = vsub.s32 0, %v1140
        %v1142 = vrot.slane %v959, %v1141
        %v1144 = vmul.f32 %v1122, %v1142
        %v1145 = vmul.f32 %v1123, %v1142
        %v1146 = vmul.f32 %v1124, %v1142
        %v1147 = vmul.f32 %v1125, %v1142
        %v1148 = vmul.f32 %v1126, %v1142
        %v1149 = vmul.f32 %v1127, %v1142
        %v1150 = vmul.f32 %v1128, %v1142
        %v1151 = vmul.f32 %v1129, %v1142
        %v1152 = vmul.f32 %v1130, %v1142
        %v1153 = vmul.f32 %v1131, %v1142
        %v1154 = vmul.f32 %v1132, %v1142
        %v1155 = vmul.f32 %v1133, %v1142
        %v1156 = vmul.f32 %v1134, %v1142
        %v1157 = vmul.f32 %v1135, %v1142
        %v1158 = vmul.f32 %v1136, %v1142
        %v1159 = vmul.f32 %v1137, %v1142
        %v1161 = vlaneseq
        %v1162 = vshrl.u32 %v1161, 7
        %v1163 = vsub.s32 0, %v1162
        %v1164 = vrot.slane %v960, %v1163
        %v1166 = vadd.f32 %v1144, %v1164
        %v1167 = vadd.f32 %v1145, %v1164
        %v1168 = vadd.f32 %v1146, %v1164
        %v1169 = vadd.f32 %v1147, %v1164
        %v1170 = vadd.f32 %v1148, %v1164
        %v1171 = vadd.f32 %v1149, %v1164
        %v1172 = vadd.f32 %v1150, %v1164
        %v1173 = vadd.f32 %v1151, %v1164
        %v1174 = vadd.f32 %v1152, %v1164
        %v1175 = vadd.f32 %v1153, %v1164
        %v1176 = vadd.f32 %v1154, %v1164
        %v1177 = vadd.f32 %v1155, %v1164
        %v1178 = vadd.f32 %v1156, %v1164
        %v1179 = vadd.f32 %v1157, %v1164
        %v1180 = vadd.f32 %v1158, %v1164
        %v1181 = vadd.f32 %v1159, %v1164
        %v1182 = vpack.c.bf16 %v1167, %v1166
        %v1183 = vpack.c.bf16 %v1169, %v1168
        %v1184 = vpack.c.bf16 %v1171, %v1170
        %v1185 = vpack.c.bf16 %v1173, %v1172
        %v1186 = vpack.c.bf16 %v1175, %v1174
        %v1187 = vpack.c.bf16 %v1177, %v1176
        %v1188 = vpack.c.bf16 %v1179, %v1178
        %v1189 = vpack.c.bf16 %v1181, %v1180
        %v1190 = vld [vmem:[%s742] sm:$0xff]
        %v1191 = vld [vmem:[%s742 + $0x8] sm:$0xf]
        %v1192 = vld [vmem:[%s742 + $0xc] sm:$0xff]
        %v1193 = vld [vmem:[%s742 + $0x14] sm:$0xf]
        %v1194 = vld [vmem:[%s742 + $0x18] sm:$0xff]
        %v1195 = vld [vmem:[%s742 + $0x20] sm:$0xf]
        %v1196 = vld [vmem:[%s742 + $0x24] sm:$0xff]
        %v1197 = vld [vmem:[%s742 + $0x2c] sm:$0xf]
        %v1198 = vld [vmem:[%s742 + $0x30] sm:$0xff]
        %v1199 = vld [vmem:[%s742 + $0x38] sm:$0xf]
        %v1200 = vld [vmem:[%s742 + $0x3c] sm:$0xff]
        %v1201 = vld [vmem:[%s742 + $0x44] sm:$0xf]
        %v1202 = vld [vmem:[%s742 + $0x48] sm:$0xff]
        %v1203 = vld [vmem:[%s742 + $0x50] sm:$0xf]
        %v1204 = vld [vmem:[%s742 + $0x54] sm:$0xff]
        %v1205 = vld [vmem:[%s742 + $0x5c] sm:$0xf]
        %v1206 = vld [vmem:[%s742 + $0x60] sm:$0xff]
        %v1207 = vld [vmem:[%s742 + $0x68] sm:$0xf]
        %v1208 = vld [vmem:[%s742 + $0x6c] sm:$0xff]
        %v1209 = vld [vmem:[%s742 + $0x74] sm:$0xf]
        %v1210 = vld [vmem:[%s742 + $0x78] sm:$0xff]
        %v1211 = vld [vmem:[%s742 + $0x80] sm:$0xf]
        %v1212 = vld [vmem:[%s742 + $0x84] sm:$0xff]
        %v1213 = vld [vmem:[%s742 + $0x8c] sm:$0xf]
        %v1214 = vld [vmem:[%s742 + $0x90] sm:$0xff]
        %v1215 = vld [vmem:[%s742 + $0x98] sm:$0xf]
        %v1216 = vld [vmem:[%s742 + $0x9c] sm:$0xff]
        %v1217 = vld [vmem:[%s742 + $0xa4] sm:$0xf]
        %v1218 = vld [vmem:[%s742 + $0xa8] sm:$0xff]
        %v1219 = vld [vmem:[%s742 + $0xb0] sm:$0xf]
        %v1220 = vld [vmem:[%s742 + $0xb4] sm:$0xff]
        %v1221 = vld [vmem:[%s742 + $0xbc] sm:$0xf]
        %v1222 = vld [vmem:[%s879] sm:$0x7]
        %v1224 = vlaneseq
        %v1225 = vshrl.u32 %v1224, 7
        %v1226 = vsub.s32 0, %v1225
        %v1227 = vrot.slane %v1222, %v1226
        %v1228 = vlaneseq
        %v1229 = vshrl.u32 %v1228, 7
        %v1230 = vsub.s32 1, %v1229
        %v1231 = vrot.slane %v1222, %v1230
        %v1232 = vlaneseq
        %v1233 = vshrl.u32 %v1232, 7
        %v1234 = vsub.s32 2, %v1233
        %v1235 = vrot.slane %v1222, %v1234
        %v1271 = vunpack.c.l.b16 %v1190
        %v1272 = vunpack.c.h.b16 %v1190
        %v1273 = vunpack.c.l.b16 %v1191
        %v1274 = vunpack.c.l.b16 %v1192
        %v1275 = vunpack.c.h.b16 %v1192
        %v1276 = vunpack.c.l.b16 %v1193
        %v1277 = vunpack.c.l.b16 %v1194
        %v1278 = vunpack.c.h.b16 %v1194
        %v1279 = vunpack.c.l.b16 %v1195
        %v1280 = vunpack.c.l.b16 %v1196
        %v1281 = vunpack.c.h.b16 %v1196
        %v1282 = vunpack.c.l.b16 %v1197
        %v1283 = vunpack.c.l.b16 %v1198
        %v1284 = vunpack.c.h.b16 %v1198
        %v1285 = vunpack.c.l.b16 %v1199
        %v1286 = vunpack.c.l.b16 %v1200
        %v1287 = vunpack.c.h.b16 %v1200
        %v1288 = vunpack.c.l.b16 %v1201
        %v1289 = vunpack.c.l.b16 %v1202
        %v1290 = vunpack.c.h.b16 %v1202
        %v1291 = vunpack.c.l.b16 %v1203
        %v1292 = vunpack.c.l.b16 %v1204
        %v1293 = vunpack.c.h.b16 %v1204
        %v1294 = vunpack.c.l.b16 %v1205
        %v1295 = vunpack.c.l.b16 %v1206
        %v1296 = vunpack.c.h.b16 %v1206
        %v1297 = vunpack.c.l.b16 %v1207
        %v1298 = vunpack.c.l.b16 %v1208
        %v1299 = vunpack.c.h.b16 %v1208
        %v1300 = vunpack.c.l.b16 %v1209
        %v1301 = vunpack.c.l.b16 %v1210
        %v1302 = vunpack.c.h.b16 %v1210
        %v1303 = vunpack.c.l.b16 %v1211
        %v1304 = vunpack.c.l.b16 %v1212
        %v1305 = vunpack.c.h.b16 %v1212
        %v1306 = vunpack.c.l.b16 %v1213
        %v1307 = vunpack.c.l.b16 %v1214
        %v1308 = vunpack.c.h.b16 %v1214
        %v1309 = vunpack.c.l.b16 %v1215
        %v1310 = vunpack.c.l.b16 %v1216
        %v1311 = vunpack.c.h.b16 %v1216
        %v1312 = vunpack.c.l.b16 %v1217
        %v1313 = vunpack.c.l.b16 %v1218
        %v1314 = vunpack.c.h.b16 %v1218
        %v1315 = vunpack.c.l.b16 %v1219
        %v1316 = vunpack.c.l.b16 %v1220
        %v1317 = vunpack.c.h.b16 %v1220
        %v1318 = vunpack.c.l.b16 %v1221
        %v1319 = vpack.c.b16 %v1274, %v1271
        %v1320 = vpack.c.b16 %v1275, %v1272
        %v1321 = vpack.c.b16 %v1276, %v1273
        %v1322 = vpack.c.b16 %v1280, %v1277
        %v1323 = vpack.c.b16 %v1281, %v1278
        %v1324 = vpack.c.b16 %v1282, %v1279
        %v1325 = vpack.c.b16 %v1286, %v1283
        %v1326 = vpack.c.b16 %v1287, %v1284
        %v1327 = vpack.c.b16 %v1288, %v1285
        %v1328 = vpack.c.b16 %v1292, %v1289
        %v1329 = vpack.c.b16 %v1293, %v1290
        %v1330 = vpack.c.b16 %v1294, %v1291
        %v1331 = vpack.c.b16 %v1298, %v1295
        %v1332 = vpack.c.b16 %v1299, %v1296
        %v1333 = vpack.c.b16 %v1300, %v1297
        %v1334 = vpack.c.b16 %v1304, %v1301
        %v1335 = vpack.c.b16 %v1305, %v1302
        %v1336 = vpack.c.b16 %v1306, %v1303
        %v1337 = vpack.c.b16 %v1310, %v1307
        %v1338 = vpack.c.b16 %v1311, %v1308
        %v1339 = vpack.c.b16 %v1312, %v1309
        %v1340 = vpack.c.b16 %v1316, %v1313
        %v1341 = vpack.c.b16 %v1317, %v1314
        %v1342 = vpack.c.b16 %v1318, %v1315
        %1367 = vmatprep.subr.bf16.mxu0 %v1320
        %1368 = vmatpush1.bf16.msra.mxu0 %v1319
        %1369 = vmatprep.subr.bf16.mxu0 %v1323
        %1370 = vmatpush1.bf16.msra.mxu0 %v1322
        %1371 = vmatprep.subr.bf16.mxu0 %v1326
        %1372 = vmatpush1.bf16.msra.mxu0 %v1325
        %1373 = vmatprep.subr.bf16.mxu0 %v1329
        %1374 = vmatpush1.bf16.msra.mxu0 %v1328
        %1375 = vmatprep.subr.bf16.mxu0 %v1332
        %1376 = vmatpush1.bf16.msra.mxu0 %v1331
        %1377 = vmatprep.subr.bf16.mxu0 %v1335
        %1378 = vmatpush1.bf16.msra.mxu0 %v1334
        %1379 = vmatprep.subr.bf16.mxu0 %v1338
        %1380 = vmatpush1.bf16.msra.mxu0 %v1337
        %1381 = vmatprep.subr.bf16.mxu0 %v1341
        %1382 = vmatpush1.bf16.msra.mxu0 %v1340
        %1383 = vmatprep.subr.bf16.mxu0 0
        %1384 = vmatpush1.bf16.msra.mxu0 0
        %1385 = vmatprep.subr.bf16.mxu0 0
        %1386 = vmatpush1.bf16.msra.mxu0 0
        %1387 = vmatprep.subr.bf16.mxu0 0
        %1388 = vmatpush1.bf16.msra.mxu0 0
        %1389 = vmatprep.subr.bf16.mxu0 0
        %1390 = vmatpush1.bf16.msra.mxu0 0
        %1391 = vmatprep.subr.bf16.mxu0 0
        %1392 = vmatpush1.bf16.msra.mxu0 0
        %1393 = vmatprep.subr.bf16.mxu0 0
        %1394 = vmatpush1.bf16.msra.mxu0 0
        %1395 = vmatprep.subr.bf16.mxu0 0
        %1396 = vmatpush1.bf16.msra.mxu0 0
        %1397 = vmatprep.subr.bf16.mxu0 0
        %1398 = vmatpush1.bf16.msra.mxu0 0
        %1399 = vmatprep.mubr.bf16.mxu0 0
        %1400 = vmatmul.mubr.bf16.gmra.mrb[0].mxu0 %v1182
        %v1401 = vpop.f32.mrb[0].mxu0
        %v1402 = vadd.f32 %v1227, %v1401
        %v1403 = vpop.f32.mrb[0].mxu0
        %v1404 = vadd.f32 %v1231, %v1403
        %v1405 = vpop.f32.mrb[0].mxu0
        %v1406 = vadd.f32 %v1227, %v1405
        %v1407 = vpop.f32.mrb[0].mxu0
        %v1408 = vadd.f32 %v1231, %v1407
        %1409 = vmatprep.mubr.bf16.mxu0 0
        %1410 = vmatmul.mubr.bf16.gmra.mrb[0].mxu0 %v1183
        %v1411 = vpop.f32.mrb[0].mxu0
        %v1412 = vadd.f32 %v1227, %v1411
        %v1413 = vpop.f32.mrb[0].mxu0
        %v1414 = vadd.f32 %v1231, %v1413
        %v1415 = vpop.f32.mrb[0].mxu0
        %v1416 = vadd.f32 %v1227, %v1415
        %v1417 = vpop.f32.mrb[0].mxu0
        %v1418 = vadd.f32 %v1231, %v1417
        %1419 = vmatprep.mubr.bf16.mxu0 0
        %1420 = vmatmul.mubr.bf16.gmra.mrb[0].mxu0 %v1184
        %v1421 = vpop.f32.mrb[0].mxu0
        %v1422 = vadd.f32 %v1227, %v1421
        %v1423 = vpop.f32.mrb[0].mxu0
        %v1424 = vadd.f32 %v1231, %v1423
        %v1425 = vpop.f32.mrb[0].mxu0
        %v1426 = vadd.f32 %v1227, %v1425
        %v1427 = vpop.f32.mrb[0].mxu0
        %v1428 = vadd.f32 %v1231, %v1427
        %1429 = vmatprep.mubr.bf16.mxu0 0
        %1430 = vmatmul.mubr.bf16.gmra.mrb[0].mxu0 %v1185
        %v1431 = vpop.f32.mrb[0].mxu0
        %v1432 = vadd.f32 %v1227, %v1431
        %v1433 = vpop.f32.mrb[0].mxu0
        %v1434 = vadd.f32 %v1231, %v1433
        %v1435 = vpop.f32.mrb[0].mxu0
        %v1436 = vadd.f32 %v1227, %v1435
        %v1437 = vpop.f32.mrb[0].mxu0
        %v1438 = vadd.f32 %v1231, %v1437
        %1439 = vmatprep.mubr.bf16.mxu0 0
        %1440 = vmatmul.mubr.bf16.gmra.mrb[0].mxu0 %v1186
        %v1441 = vpop.f32.mrb[0].mxu0
        %v1442 = vadd.f32 %v1227, %v1441
        %v1443 = vpop.f32.mrb[0].mxu0
        %v1444 = vadd.f32 %v1231, %v1443
        %v1445 = vpop.f32.mrb[0].mxu0
        %v1446 = vadd.f32 %v1227, %v1445
        %v1447 = vpop.f32.mrb[0].mxu0
        %v1448 = vadd.f32 %v1231, %v1447
        %1449 = vmatprep.mubr.bf16.mxu0 0
        %1450 = vmatmul.mubr.bf16.gmra.mrb[0].mxu0 %v1187
        %v1451 = vpop.f32.mrb[0].mxu0
        %v1452 = vadd.f32 %v1227, %v1451
        %v1453 = vpop.f32.mrb[0].mxu0
        %v1454 = vadd.f32 %v1231, %v1453
        %v1455 = vpop.f32.mrb[0].mxu0
        %v1456 = vadd.f32 %v1227, %v1455
        %v1457 = vpop.f32.mrb[0].mxu0
        %v1458 = vadd.f32 %v1231, %v1457
        %1459 = vmatprep.mubr.bf16.mxu0 0
        %1460 = vmatmul.mubr.bf16.gmra.mrb[0].mxu0 %v1188
        %v1461 = vpop.f32.mrb[0].mxu0
        %v1462 = vadd.f32 %v1227, %v1461
        %v1463 = vpop.f32.mrb[0].mxu0
        %v1464 = vadd.f32 %v1231, %v1463
        %v1465 = vpop.f32.mrb[0].mxu0
        %v1466 = vadd.f32 %v1227, %v1465
        %v1467 = vpop.f32.mrb[0].mxu0
        %v1468 = vadd.f32 %v1231, %v1467
        %1469 = vmatprep.mubr.bf16.mxu0 0
        %1470 = vmatmul.mubr.bf16.gmra.mrb[0].mxu0 %v1189
        %v1471 = vpop.f32.mrb[0].mxu0
        %v1472 = vadd.f32 %v1227, %v1471
        %v1473 = vpop.f32.mrb[0].mxu0
        %v1474 = vadd.f32 %v1231, %v1473
        %v1475 = vpop.f32.mrb[0].mxu0
        %v1476 = vadd.f32 %v1227, %v1475
        %v1477 = vpop.f32.mrb[0].mxu0
        %v1478 = vadd.f32 %v1231, %v1477
        %1479 = vdwg.mxu0
        %1480 = vmatprep.subr.bf16.mxu0 0
        %1481 = vmatpush1.bf16.msra.mxu0 %v1321
        %1482 = vmatprep.subr.bf16.mxu0 0
        %1483 = vmatpush1.bf16.msra.mxu0 %v1324
        %1484 = vmatprep.subr.bf16.mxu0 0
        %1485 = vmatpush1.bf16.msra.mxu0 %v1327
        %1486 = vmatprep.subr.bf16.mxu0 0
        %1487 = vmatpush1.bf16.msra.mxu0 %v1330
        %1488 = vmatprep.subr.bf16.mxu0 0
        %1489 = vmatpush1.bf16.msra.mxu0 %v1333
        %1490 = vmatprep.subr.bf16.mxu0 0
        %1491 = vmatpush1.bf16.msra.mxu0 %v1336
        %1492 = vmatprep.subr.bf16.mxu0 0
        %1493 = vmatpush1.bf16.msra.mxu0 %v1339
        %1494 = vmatprep.subr.bf16.mxu0 0
        %1495 = vmatpush1.bf16.msra.mxu0 %v1342
        %1496 = vmatprep.subr.bf16.mxu0 0
        %1497 = vmatpush1.bf16.msra.mxu0 0
        %1498 = vmatprep.subr.bf16.mxu0 0
        %1499 = vmatpush1.bf16.msra.mxu0 0
        %1500 = vmatprep.subr.bf16.mxu0 0
        %1501 = vmatpush1.bf16.msra.mxu0 0
        %1502 = vmatprep.subr.bf16.mxu0 0
        %1503 = vmatpush1.bf16.msra.mxu0 0
        %1504 = vmatprep.subr.bf16.mxu0 0
        %1505 = vmatpush1.bf16.msra.mxu0 0
        %1506 = vmatprep.subr.bf16.mxu0 0
        %1507 = vmatpush1.bf16.msra.mxu0 0
        %1508 = vmatprep.subr.bf16.mxu0 0
        %1509 = vmatpush1.bf16.msra.mxu0 0
        %1510 = vmatprep.subr.bf16.mxu0 0
        %1511 = vmatpush1.bf16.msra.mxu0 0
        %1512 = vmatprep.mubr.bf16.mxu0 0
        %1513 = vmatmul.mubr.bf16.gmra.mrb[0].mxu0 %v1182
        %v1514 = vpop.f32.mrb[0].mxu0
        %v1515 = vadd.f32 %v1235, %v1514
        %v1516 = vpop.f32.mrb[0].mxu0
        %v1517 = vpop.f32.mrb[0].mxu0
        %v1518 = vadd.f32 %v1235, %v1517
        %v1519 = vpop.f32.mrb[0].mxu0
        %1520 = vmatprep.mubr.bf16.mxu0 0
        %1521 = vmatmul.mubr.bf16.gmra.mrb[0].mxu0 %v1183
        %v1522 = vpop.f32.mrb[0].mxu0
        %v1523 = vadd.f32 %v1235, %v1522
        %v1524 = vpop.f32.mrb[0].mxu0
        %v1525 = vpop.f32.mrb[0].mxu0
        %v1526 = vadd.f32 %v1235, %v1525
        %v1527 = vpop.f32.mrb[0].mxu0
        %1528 = vmatprep.mubr.bf16.mxu0 0
        %1529 = vmatmul.mubr.bf16.gmra.mrb[0].mxu0 %v1184
        %v1530 = vpop.f32.mrb[0].mxu0
        %v1531 = vadd.f32 %v1235, %v1530
        %v1532 = vpop.f32.mrb[0].mxu0
        %v1533 = vpop.f32.mrb[0].mxu0
        %v1534 = vadd.f32 %v1235, %v1533
        %v1535 = vpop.f32.mrb[0].mxu0
        %1536 = vmatprep.mubr.bf16.mxu0 0
        %1537 = vmatmul.mubr.bf16.gmra.mrb[0].mxu0 %v1185
        %v1538 = vpop.f32.mrb[0].mxu0
        %v1539 = vadd.f32 %v1235, %v1538
        %v1540 = vpop.f32.mrb[0].mxu0
        %v1541 = vpop.f32.mrb[0].mxu0
        %v1542 = vadd.f32 %v1235, %v1541
        %v1543 = vpop.f32.mrb[0].mxu0
        %1544 = vmatprep.mubr.bf16.mxu0 0
        %1545 = vmatmul.mubr.bf16.gmra.mrb[0].mxu0 %v1186
        %v1546 = vpop.f32.mrb[0].mxu0
        %v1547 = vadd.f32 %v1235, %v1546
        %v1548 = vpop.f32.mrb[0].mxu0
        %v1549 = vpop.f32.mrb[0].mxu0
        %v1550 = vadd.f32 %v1235, %v1549
        %v1551 = vpop.f32.mrb[0].mxu0
        %1552 = vmatprep.mubr.bf16.mxu0 0
        %1553 = vmatmul.mubr.bf16.gmra.mrb[0].mxu0 %v1187
        %v1554 = vpop.f32.mrb[0].mxu0
        %v1555 = vadd.f32 %v1235, %v1554
        %v1556 = vpop.f32.mrb[0].mxu0
        %v1557 = vpop.f32.mrb[0].mxu0
        %v1558 = vadd.f32 %v1235, %v1557
        %v1559 = vpop.f32.mrb[0].mxu0
        %1560 = vmatprep.mubr.bf16.mxu0 0
        %1561 = vmatmul.mubr.bf16.gmra.mrb[0].mxu0 %v1188
        %v1562 = vpop.f32.mrb[0].mxu0
        %v1563 = vadd.f32 %v1235, %v1562
        %v1564 = vpop.f32.mrb[0].mxu0
        %v1565 = vpop.f32.mrb[0].mxu0
        %v1566 = vadd.f32 %v1235, %v1565
        %v1567 = vpop.f32.mrb[0].mxu0
        %1568 = vmatprep.mubr.bf16.mxu0 0
        %1569 = vmatmul.mubr.bf16.gmra.mrb[0].mxu0 %v1189
        %v1570 = vpop.f32.mrb[0].mxu0
        %v1571 = vadd.f32 %v1235, %v1570
        %v1572 = vpop.f32.mrb[0].mxu0
        %v1573 = vpop.f32.mrb[0].mxu0
        %v1574 = vadd.f32 %v1235, %v1573
        %v1575 = vpop.f32.mrb[0].mxu0
        %1576 = vdwg.mxu0
        %v1577 = vld [vmem:[%s882] sm:$0x1]
        %v1578 = vmul.f32 %v1402, %v1402
        %v1579 = vmul.f32 %v1406, %v1406
        %v1580 = vmul.f32 %v1412, %v1412
        %v1581 = vmul.f32 %v1416, %v1416
        %v1582 = vmul.f32 %v1422, %v1422
        %v1583 = vmul.f32 %v1426, %v1426
        %v1584 = vmul.f32 %v1432, %v1432
        %v1585 = vmul.f32 %v1436, %v1436
        %v1586 = vmul.f32 %v1442, %v1442
        %v1587 = vmul.f32 %v1446, %v1446
        %v1588 = vmul.f32 %v1452, %v1452
        %v1589 = vmul.f32 %v1456, %v1456
        %v1590 = vmul.f32 %v1462, %v1462
        %v1591 = vmul.f32 %v1466, %v1466
        %v1592 = vmul.f32 %v1472, %v1472
        %v1593 = vmul.f32 %v1476, %v1476
        %1594 = vadd.xlane.f32.xlu0 %v1578
        %v1595 = vpop.xlane.xlu0 %1594
        %1596 = vadd.xlane.f32.xlu0 %v1579
        %v1597 = vpop.xlane.xlu0 %1596
        %1598 = vadd.xlane.f32.xlu0 %v1580
        %v1599 = vpop.xlane.xlu0 %1598
        %1600 = vadd.xlane.f32.xlu0 %v1581
        %v1601 = vpop.xlane.xlu0 %1600
        %1602 = vadd.xlane.f32.xlu0 %v1582
        %v1603 = vpop.xlane.xlu0 %1602
        %1604 = vadd.xlane.f32.xlu0 %v1583
        %v1605 = vpop.xlane.xlu0 %1604
        %1606 = vadd.xlane.f32.xlu0 %v1584
        %v1607 = vpop.xlane.xlu0 %1606
        %1608 = vadd.xlane.f32.xlu0 %v1585
        %v1609 = vpop.xlane.xlu0 %1608
        %1610 = vadd.xlane.f32.xlu0 %v1586
        %v1611 = vpop.xlane.xlu0 %1610
        %1612 = vadd.xlane.f32.xlu0 %v1587
        %v1613 = vpop.xlane.xlu0 %1612
        %1614 = vadd.xlane.f32.xlu0 %v1588
        %v1615 = vpop.xlane.xlu0 %1614
        %1616 = vadd.xlane.f32.xlu0 %v1589
        %v1617 = vpop.xlane.xlu0 %1616
        %1618 = vadd.xlane.f32.xlu0 %v1590
        %v1619 = vpop.xlane.xlu0 %1618
        %1620 = vadd.xlane.f32.xlu0 %v1591
        %v1621 = vpop.xlane.xlu0 %1620
        %1622 = vadd.xlane.f32.xlu0 %v1592
        %v1623 = vpop.xlane.xlu0 %1622
        %1624 = vadd.xlane.f32.xlu0 %v1593
        %v1625 = vpop.xlane.xlu0 %1624
        %v1626 = vmax.f32 %v1595, 1e-24
        %v1627 = vmax.f32 %v1597, 1e-24
        %v1628 = vmax.f32 %v1599, 1e-24
        %v1629 = vmax.f32 %v1601, 1e-24
        %v1630 = vmax.f32 %v1603, 1e-24
        %v1631 = vmax.f32 %v1605, 1e-24
        %v1632 = vmax.f32 %v1607, 1e-24
        %v1633 = vmax.f32 %v1609, 1e-24
        %v1634 = vmax.f32 %v1611, 1e-24
        %v1635 = vmax.f32 %v1613, 1e-24
        %v1636 = vmax.f32 %v1615, 1e-24
        %v1637 = vmax.f32 %v1617, 1e-24
        %v1638 = vmax.f32 %v1619, 1e-24
        %v1639 = vmax.f32 %v1621, 1e-24
        %v1640 = vmax.f32 %v1623, 1e-24
        %v1641 = vmax.f32 %v1625, 1e-24
        %v1642 = vrsqrt.pop %v1626
        %v1643 = vrsqrt.pop %v1627
        %v1644 = vrsqrt.pop %v1628
        %v1645 = vrsqrt.pop %v1629
        %v1646 = vrsqrt.pop %v1630
        %v1647 = vrsqrt.pop %v1631
        %v1648 = vrsqrt.pop %v1632
        %v1649 = vrsqrt.pop %v1633
        %v1650 = vrsqrt.pop %v1634
        %v1651 = vrsqrt.pop %v1635
        %v1652 = vrsqrt.pop %v1636
        %v1653 = vrsqrt.pop %v1637
        %v1654 = vrsqrt.pop %v1638
        %v1655 = vrsqrt.pop %v1639
        %v1656 = vrsqrt.pop %v1640
        %v1657 = vrsqrt.pop %v1641
        %v1658 = vmul.f32 %v1402, %v1642
        %v1659 = vmul.f32 %v1406, %v1643
        %v1660 = vmul.f32 %v1412, %v1644
        %v1661 = vmul.f32 %v1416, %v1645
        %v1662 = vmul.f32 %v1422, %v1646
        %v1663 = vmul.f32 %v1426, %v1647
        %v1664 = vmul.f32 %v1432, %v1648
        %v1665 = vmul.f32 %v1436, %v1649
        %v1666 = vmul.f32 %v1442, %v1650
        %v1667 = vmul.f32 %v1446, %v1651
        %v1668 = vmul.f32 %v1452, %v1652
        %v1669 = vmul.f32 %v1456, %v1653
        %v1670 = vmul.f32 %v1462, %v1654
        %v1671 = vmul.f32 %v1466, %v1655
        %v1672 = vmul.f32 %v1472, %v1656
        %v1673 = vmul.f32 %v1476, %v1657
        %v1675 = vlaneseq
        %v1676 = vshrl.u32 %v1675, 7
        %v1677 = vsub.s32 0, %v1676
        %v1678 = vrot.slane %v1577, %v1677
        %v1680 = vmul.f32 %v1658, %v1678
        %v1681 = vmul.f32 %v1659, %v1678
        %v1682 = vmul.f32 %v1660, %v1678
        %v1683 = vmul.f32 %v1661, %v1678
        %v1684 = vmul.f32 %v1662, %v1678
        %v1685 = vmul.f32 %v1663, %v1678
        %v1686 = vmul.f32 %v1664, %v1678
        %v1687 = vmul.f32 %v1665, %v1678
        %v1688 = vmul.f32 %v1666, %v1678
        %v1689 = vmul.f32 %v1667, %v1678
        %v1690 = vmul.f32 %v1668, %v1678
        %v1691 = vmul.f32 %v1669, %v1678
        %v1692 = vmul.f32 %v1670, %v1678
        %v1693 = vmul.f32 %v1671, %v1678
        %v1694 = vmul.f32 %v1672, %v1678
        %v1695 = vmul.f32 %v1673, %v1678
        %v1696 = vmul.f32 %v1680, 11.313708
        %v1697 = vmul.f32 %v1681, 11.313708
        %v1698 = vmul.f32 %v1682, 11.313708
        %v1699 = vmul.f32 %v1683, 11.313708
        %v1700 = vmul.f32 %v1684, 11.313708
        %v1701 = vmul.f32 %v1685, 11.313708
        %v1702 = vmul.f32 %v1686, 11.313708
        %v1703 = vmul.f32 %v1687, 11.313708
        %v1704 = vmul.f32 %v1688, 11.313708
        %v1705 = vmul.f32 %v1689, 11.313708
        %v1706 = vmul.f32 %v1690, 11.313708
        %v1707 = vmul.f32 %v1691, 11.313708
        %v1708 = vmul.f32 %v1692, 11.313708
        %v1709 = vmul.f32 %v1693, 11.313708
        %v1710 = vmul.f32 %v1694, 11.313708
        %v1711 = vmul.f32 %v1695, 11.313708
        %v1712 = vmul.f32 %v1696, 0.17677669
        %v1713 = vmul.f32 %v1697, 0.17677669
        %v1714 = vmul.f32 %v1698, 0.17677669
        %v1715 = vmul.f32 %v1699, 0.17677669
        %v1716 = vmul.f32 %v1700, 0.17677669
        %v1717 = vmul.f32 %v1701, 0.17677669
        %v1718 = vmul.f32 %v1702, 0.17677669
        %v1719 = vmul.f32 %v1703, 0.17677669
        %v1720 = vmul.f32 %v1704, 0.17677669
        %v1721 = vmul.f32 %v1705, 0.17677669
        %v1722 = vmul.f32 %v1706, 0.17677669
        %v1723 = vmul.f32 %v1707, 0.17677669
        %v1724 = vmul.f32 %v1708, 0.17677669
        %v1725 = vmul.f32 %v1709, 0.17677669
        %v1726 = vmul.f32 %v1710, 0.17677669
        %v1727 = vmul.f32 %v1711, 0.17677669
        %v1728 = vld [vmem:[%s885] sm:$0x1]
        %v1729 = vmul.f32 %v1404, %v1404
        %v1730 = vmul.f32 %v1408, %v1408
        %v1731 = vmul.f32 %v1414, %v1414
        %v1732 = vmul.f32 %v1418, %v1418
        %v1733 = vmul.f32 %v1424, %v1424
        %v1734 = vmul.f32 %v1428, %v1428
        %v1735 = vmul.f32 %v1434, %v1434
        %v1736 = vmul.f32 %v1438, %v1438
        %v1737 = vmul.f32 %v1444, %v1444
        %v1738 = vmul.f32 %v1448, %v1448
        %v1739 = vmul.f32 %v1454, %v1454
        %v1740 = vmul.f32 %v1458, %v1458
        %v1741 = vmul.f32 %v1464, %v1464
        %v1742 = vmul.f32 %v1468, %v1468
        %v1743 = vmul.f32 %v1474, %v1474
        %v1744 = vmul.f32 %v1478, %v1478
        %1745 = vadd.xlane.f32.xlu0 %v1729
        %v1746 = vpop.xlane.xlu0 %1745
        %1747 = vadd.xlane.f32.xlu0 %v1730
        %v1748 = vpop.xlane.xlu0 %1747
        %1749 = vadd.xlane.f32.xlu0 %v1731
        %v1750 = vpop.xlane.xlu0 %1749
        %1751 = vadd.xlane.f32.xlu0 %v1732
        %v1752 = vpop.xlane.xlu0 %1751
        %1753 = vadd.xlane.f32.xlu0 %v1733
        %v1754 = vpop.xlane.xlu0 %1753
        %1755 = vadd.xlane.f32.xlu0 %v1734
        %v1756 = vpop.xlane.xlu0 %1755
        %1757 = vadd.xlane.f32.xlu0 %v1735
        %v1758 = vpop.xlane.xlu0 %1757
        %1759 = vadd.xlane.f32.xlu0 %v1736
        %v1760 = vpop.xlane.xlu0 %1759
        %1761 = vadd.xlane.f32.xlu0 %v1737
        %v1762 = vpop.xlane.xlu0 %1761
        %1763 = vadd.xlane.f32.xlu0 %v1738
        %v1764 = vpop.xlane.xlu0 %1763
        %1765 = vadd.xlane.f32.xlu0 %v1739
        %v1766 = vpop.xlane.xlu0 %1765
        %1767 = vadd.xlane.f32.xlu0 %v1740
        %v1768 = vpop.xlane.xlu0 %1767
        %1769 = vadd.xlane.f32.xlu0 %v1741
        %v1770 = vpop.xlane.xlu0 %1769
        %1771 = vadd.xlane.f32.xlu0 %v1742
        %v1772 = vpop.xlane.xlu0 %1771
        %1773 = vadd.xlane.f32.xlu0 %v1743
        %v1774 = vpop.xlane.xlu0 %1773
        %1775 = vadd.xlane.f32.xlu0 %v1744
        %v1776 = vpop.xlane.xlu0 %1775
        %v1777 = vmax.f32 %v1746, 1e-24
        %v1778 = vmax.f32 %v1748, 1e-24
        %v1779 = vmax.f32 %v1750, 1e-24
        %v1780 = vmax.f32 %v1752, 1e-24
        %v1781 = vmax.f32 %v1754, 1e-24
        %v1782 = vmax.f32 %v1756, 1e-24
        %v1783 = vmax.f32 %v1758, 1e-24
        %v1784 = vmax.f32 %v1760, 1e-24
        %v1785 = vmax.f32 %v1762, 1e-24
        %v1786 = vmax.f32 %v1764, 1e-24
        %v1787 = vmax.f32 %v1766, 1e-24
        %v1788 = vmax.f32 %v1768, 1e-24
        %v1789 = vmax.f32 %v1770, 1e-24
        %v1790 = vmax.f32 %v1772, 1e-24
        %v1791 = vmax.f32 %v1774, 1e-24
        %v1792 = vmax.f32 %v1776, 1e-24
        %v1793 = vrsqrt.pop %v1777
        %v1794 = vrsqrt.pop %v1778
        %v1795 = vrsqrt.pop %v1779
        %v1796 = vrsqrt.pop %v1780
        %v1797 = vrsqrt.pop %v1781
        %v1798 = vrsqrt.pop %v1782
        %v1799 = vrsqrt.pop %v1783
        %v1800 = vrsqrt.pop %v1784
        %v1801 = vrsqrt.pop %v1785
        %v1802 = vrsqrt.pop %v1786
        %v1803 = vrsqrt.pop %v1787
        %v1804 = vrsqrt.pop %v1788
        %v1805 = vrsqrt.pop %v1789
        %v1806 = vrsqrt.pop %v1790
        %v1807 = vrsqrt.pop %v1791
        %v1808 = vrsqrt.pop %v1792
        %v1809 = vmul.f32 %v1404, %v1793
        %v1810 = vmul.f32 %v1408, %v1794
        %v1811 = vmul.f32 %v1414, %v1795
        %v1812 = vmul.f32 %v1418, %v1796
        %v1813 = vmul.f32 %v1424, %v1797
        %v1814 = vmul.f32 %v1428, %v1798
        %v1815 = vmul.f32 %v1434, %v1799
        %v1816 = vmul.f32 %v1438, %v1800
        %v1817 = vmul.f32 %v1444, %v1801
        %v1818 = vmul.f32 %v1448, %v1802
        %v1819 = vmul.f32 %v1454, %v1803
        %v1820 = vmul.f32 %v1458, %v1804
        %v1821 = vmul.f32 %v1464, %v1805
        %v1822 = vmul.f32 %v1468, %v1806
        %v1823 = vmul.f32 %v1474, %v1807
        %v1824 = vmul.f32 %v1478, %v1808
        %v1826 = vlaneseq
        %v1827 = vshrl.u32 %v1826, 7
        %v1828 = vsub.s32 0, %v1827
        %v1829 = vrot.slane %v1728, %v1828
        %v1831 = vmul.f32 %v1809, %v1829
        %v1832 = vmul.f32 %v1810, %v1829
        %v1833 = vmul.f32 %v1811, %v1829
        %v1834 = vmul.f32 %v1812, %v1829
        %v1835 = vmul.f32 %v1813, %v1829
        %v1836 = vmul.f32 %v1814, %v1829
        %v1837 = vmul.f32 %v1815, %v1829
        %v1838 = vmul.f32 %v1816, %v1829
        %v1839 = vmul.f32 %v1817, %v1829
        %v1840 = vmul.f32 %v1818, %v1829
        %v1841 = vmul.f32 %v1819, %v1829
        %v1842 = vmul.f32 %v1820, %v1829
        %v1843 = vmul.f32 %v1821, %v1829
        %v1844 = vmul.f32 %v1822, %v1829
        %v1845 = vmul.f32 %v1823, %v1829
        %v1846 = vmul.f32 %v1824, %v1829
        %v1847 = vmul.f32 %v1831, 11.313708
        %v1848 = vmul.f32 %v1832, 11.313708
        %v1849 = vmul.f32 %v1833, 11.313708
        %v1850 = vmul.f32 %v1834, 11.313708
        %v1851 = vmul.f32 %v1835, 11.313708
        %v1852 = vmul.f32 %v1836, 11.313708
        %v1853 = vmul.f32 %v1837, 11.313708
        %v1854 = vmul.f32 %v1838, 11.313708
        %v1855 = vmul.f32 %v1839, 11.313708
        %v1856 = vmul.f32 %v1840, 11.313708
        %v1857 = vmul.f32 %v1841, 11.313708
        %v1858 = vmul.f32 %v1842, 11.313708
        %v1859 = vmul.f32 %v1843, 11.313708
        %v1860 = vmul.f32 %v1844, 11.313708
        %v1861 = vmul.f32 %v1845, 11.313708
        %v1862 = vmul.f32 %v1846, 11.313708
        %vm1863 = vcmask 261120
        %v1865 = vsel %vm1863, %v1712, 0
        %v1868 = vsel %vm1863, %v1713, 0
        %v1871 = vsel %vm1863, %v1847, 0
        %v1874 = vsel %vm1863, %v1848, 0
        %1876 = vmatprep.subr.mxu0 0.0
        %1877 = vmatpush1.xpose.msra.mxu0 %v1871
        %1878 = vmatprep.subr.mxu0 0.0
        %1879 = vmatpush1.xpose.msra.mxu0 %v1874
        %1880 = vmatprep.subr.mxu0 0.0
        %1881 = vmatpush1.xpose.msra.mxu0 0.0
        %1882 = vmatprep.subr.mxu0 0.0
        %1883 = vmatpush1.xpose.msra.mxu0 0.0
        %1884 = vmatprep.subr.mxu0 0.0
        %1885 = vmatpush1.xpose.msra.mxu0 0.0
        %1886 = vmatprep.subr.mxu0 0.0
        %1887 = vmatpush1.xpose.msra.mxu0 0.0
        %1888 = vmatprep.subr.mxu0 0.0
        %1889 = vmatpush1.xpose.msra.mxu0 0.0
        %1890 = vmatprep.subr.mxu0 0.0
        %1891 = vmatpush1.xpose.msra.mxu0 0.0
        %1892 = vmatprep.subr.mxu0 0.0
        %1893 = vmatpush1.xpose.msra.mxu0 0.0
        %1894 = vmatprep.subr.mxu0 0.0
        %1895 = vmatpush1.xpose.msra.mxu0 0.0
        %1896 = vmatprep.subr.mxu0 0.0
        %1897 = vmatpush1.xpose.msra.mxu0 0.0
        %1898 = vmatprep.subr.mxu0 0.0
        %1899 = vmatpush1.xpose.msra.mxu0 0.0
        %1900 = vmatprep.subr.mxu0 0.0
        %1901 = vmatpush1.xpose.msra.mxu0 0.0
        %1902 = vmatprep.subr.mxu0 0.0
        %1903 = vmatpush1.xpose.msra.mxu0 0.0
        %1904 = vmatprep.subr.mxu0 0.0
        %1905 = vmatpush1.xpose.msra.mxu0 0.0
        %1906 = vmatprep.subr.mxu0 0.0
        %1907 = vmatpush1.xpose.msra.mxu0 0.0
        %1908 = vmatprep.subr.mxu0 0.0
        %1909 = vmatpush1.xpose.msra.mxu0 0.0
        %1910 = vmatprep.subr.mxu0 0.0
        %1911 = vmatpush1.xpose.msra.mxu0 0.0
        %1912 = vmatprep.subr.mxu0 0.0
        %1913 = vmatpush1.xpose.msra.mxu0 0.0
        %1914 = vmatprep.subr.mxu0 0.0
        %1915 = vmatpush1.xpose.msra.mxu0 0.0
        %1916 = vmatprep.subr.mxu0 0.0
        %1917 = vmatpush1.xpose.msra.mxu0 0.0
        %1918 = vmatprep.subr.mxu0 0.0
        %1919 = vmatpush1.xpose.msra.mxu0 0.0
        %1920 = vmatprep.subr.mxu0 0.0
        %1921 = vmatpush1.xpose.msra.mxu0 0.0
        %1922 = vmatprep.subr.mxu0 0.0
        %1923 = vmatpush1.xpose.msra.mxu0 0.0
        %1924 = vmatprep.subr.mxu0 0.0
        %1925 = vmatpush1.xpose.msra.mxu0 0.0
        %1926 = vmatprep.subr.mxu0 0.0
        %1927 = vmatpush1.xpose.msra.mxu0 0.0
        %1928 = vmatprep.subr.mxu0 0.0
        %1929 = vmatpush1.xpose.msra.mxu0 0.0
        %1930 = vmatprep.subr.mxu0 0.0
        %1931 = vmatpush1.xpose.msra.mxu0 0.0
        %1932 = vmatprep.subr.mxu0 0.0
        %1933 = vmatpush1.xpose.msra.mxu0 0.0
        %1934 = vmatprep.subr.mxu0 0.0
        %1935 = vmatpush1.xpose.msra.mxu0 0.0
        %1936 = vmatprep.subr.mxu0 0.0
        %1937 = vmatpush1.xpose.msra.mxu0 0.0
        %1938 = vmatprep.subr.mxu0 0.0
        %1939 = vmatpush1.xpose.msra.mxu0 0.0
        %1940 = vmatprep.mubr.f32.mxu0 0.0
        %1941 = vmatmul.mubr.f32.gmra.mrb[0].mxu0 %v1865
        %v1942 = vpop.f32.mrb[0].mxu0
        %v1943 = vadd.f32 0.0, %v1942
        %v1944 = vpop.f32.mrb[0].mxu0
        %1945 = vmatprep.mubr.f32.mxu0 0.0
        %1946 = vmatmul.mubr.f32.gmra.mrb[0].mxu0 %v1868
        %v1947 = vpop.f32.mrb[0].mxu0
        %v1948 = vadd.f32 0.0, %v1947
        %v1949 = vpop.f32.mrb[0].mxu0
        %1950 = vdwg.mxu0
        %v1952 = vsel %vm1863, %v1714, 0
        %v1955 = vsel %vm1863, %v1715, 0
        %v1958 = vsel %vm1863, %v1849, 0
        %v1961 = vsel %vm1863, %v1850, 0
        %1963 = vmatprep.subr.mxu0 0.0
        %1964 = vmatpush1.xpose.msra.mxu0 %v1958
        %1965 = vmatprep.subr.mxu0 0.0
        %1966 = vmatpush1.xpose.msra.mxu0 %v1961
        %1967 = vmatprep.subr.mxu0 0.0
        %1968 = vmatpush1.xpose.msra.mxu0 0.0
        %1969 = vmatprep.subr.mxu0 0.0
        %1970 = vmatpush1.xpose.msra.mxu0 0.0
        %1971 = vmatprep.subr.mxu0 0.0
        %1972 = vmatpush1.xpose.msra.mxu0 0.0
        %1973 = vmatprep.subr.mxu0 0.0
        %1974 = vmatpush1.xpose.msra.mxu0 0.0
        %1975 = vmatprep.subr.mxu0 0.0
        %1976 = vmatpush1.xpose.msra.mxu0 0.0
        %1977 = vmatprep.subr.mxu0 0.0
        %1978 = vmatpush1.xpose.msra.mxu0 0.0
        %1979 = vmatprep.subr.mxu0 0.0
        %1980 = vmatpush1.xpose.msra.mxu0 0.0
        %1981 = vmatprep.subr.mxu0 0.0
        %1982 = vmatpush1.xpose.msra.mxu0 0.0
        %1983 = vmatprep.subr.mxu0 0.0
        %1984 = vmatpush1.xpose.msra.mxu0 0.0
        %1985 = vmatprep.subr.mxu0 0.0
        %1986 = vmatpush1.xpose.msra.mxu0 0.0
        %1987 = vmatprep.subr.mxu0 0.0
        %1988 = vmatpush1.xpose.msra.mxu0 0.0
        %1989 = vmatprep.subr.mxu0 0.0
        %1990 = vmatpush1.xpose.msra.mxu0 0.0
        %1991 = vmatprep.subr.mxu0 0.0
        %1992 = vmatpush1.xpose.msra.mxu0 0.0
        %1993 = vmatprep.subr.mxu0 0.0
        %1994 = vmatpush1.xpose.msra.mxu0 0.0
        %1995 = vmatprep.subr.mxu0 0.0
        %1996 = vmatpush1.xpose.msra.mxu0 0.0
        %1997 = vmatprep.subr.mxu0 0.0
        %1998 = vmatpush1.xpose.msra.mxu0 0.0
        %1999 = vmatprep.subr.mxu0 0.0
        %2000 = vmatpush1.xpose.msra.mxu0 0.0
        %2001 = vmatprep.subr.mxu0 0.0
        %2002 = vmatpush1.xpose.msra.mxu0 0.0
        %2003 = vmatprep.subr.mxu0 0.0
        %2004 = vmatpush1.xpose.msra.mxu0 0.0
        %2005 = vmatprep.subr.mxu0 0.0
        %2006 = vmatpush1.xpose.msra.mxu0 0.0
        %2007 = vmatprep.subr.mxu0 0.0
        %2008 = vmatpush1.xpose.msra.mxu0 0.0
        %2009 = vmatprep.subr.mxu0 0.0
        %2010 = vmatpush1.xpose.msra.mxu0 0.0
        %2011 = vmatprep.subr.mxu0 0.0
        %2012 = vmatpush1.xpose.msra.mxu0 0.0
        %2013 = vmatprep.subr.mxu0 0.0
        %2014 = vmatpush1.xpose.msra.mxu0 0.0
        %2015 = vmatprep.subr.mxu0 0.0
        %2016 = vmatpush1.xpose.msra.mxu0 0.0
        %2017 = vmatprep.subr.mxu0 0.0
        %2018 = vmatpush1.xpose.msra.mxu0 0.0
        %2019 = vmatprep.subr.mxu0 0.0
        %2020 = vmatpush1.xpose.msra.mxu0 0.0
        %2021 = vmatprep.subr.mxu0 0.0
        %2022 = vmatpush1.xpose.msra.mxu0 0.0
        %2023 = vmatprep.subr.mxu0 0.0
        %2024 = vmatpush1.xpose.msra.mxu0 0.0
        %2025 = vmatprep.subr.mxu0 0.0
        %2026 = vmatpush1.xpose.msra.mxu0 0.0
        %2027 = vmatprep.mubr.f32.mxu0 0.0
        %2028 = vmatmul.mubr.f32.gmra.mrb[0].mxu0 %v1952
        %v2029 = vpop.f32.mrb[0].mxu0
        %v2030 = vadd.f32 0.0, %v2029
        %v2031 = vpop.f32.mrb[0].mxu0
        %2032 = vmatprep.mubr.f32.mxu0 0.0
        %2033 = vmatmul.mubr.f32.gmra.mrb[0].mxu0 %v1955
        %v2034 = vpop.f32.mrb[0].mxu0
        %v2035 = vadd.f32 0.0, %v2034
        %v2036 = vpop.f32.mrb[0].mxu0
        %2037 = vdwg.mxu0
        %v2039 = vsel %vm1863, %v1716, 0
        %v2042 = vsel %vm1863, %v1717, 0
        %v2045 = vsel %vm1863, %v1851, 0
        %v2048 = vsel %vm1863, %v1852, 0
        %2050 = vmatprep.subr.mxu0 0.0
        %2051 = vmatpush1.xpose.msra.mxu0 %v2045
        %2052 = vmatprep.subr.mxu0 0.0
        %2053 = vmatpush1.xpose.msra.mxu0 %v2048
        %2054 = vmatprep.subr.mxu0 0.0
        %2055 = vmatpush1.xpose.msra.mxu0 0.0
        %2056 = vmatprep.subr.mxu0 0.0
        %2057 = vmatpush1.xpose.msra.mxu0 0.0
        %2058 = vmatprep.subr.mxu0 0.0
        %2059 = vmatpush1.xpose.msra.mxu0 0.0
        %2060 = vmatprep.subr.mxu0 0.0
        %2061 = vmatpush1.xpose.msra.mxu0 0.0
        %2062 = vmatprep.subr.mxu0 0.0
        %2063 = vmatpush1.xpose.msra.mxu0 0.0
        %2064 = vmatprep.subr.mxu0 0.0
        %2065 = vmatpush1.xpose.msra.mxu0 0.0
        %2066 = vmatprep.subr.mxu0 0.0
        %2067 = vmatpush1.xpose.msra.mxu0 0.0
        %2068 = vmatprep.subr.mxu0 0.0
        %2069 = vmatpush1.xpose.msra.mxu0 0.0
        %2070 = vmatprep.subr.mxu0 0.0
        %2071 = vmatpush1.xpose.msra.mxu0 0.0
        %2072 = vmatprep.subr.mxu0 0.0
        %2073 = vmatpush1.xpose.msra.mxu0 0.0
        %2074 = vmatprep.subr.mxu0 0.0
        %2075 = vmatpush1.xpose.msra.mxu0 0.0
        %2076 = vmatprep.subr.mxu0 0.0
        %2077 = vmatpush1.xpose.msra.mxu0 0.0
        %2078 = vmatprep.subr.mxu0 0.0
        %2079 = vmatpush1.xpose.msra.mxu0 0.0
        %2080 = vmatprep.subr.mxu0 0.0
        %2081 = vmatpush1.xpose.msra.mxu0 0.0
        %2082 = vmatprep.subr.mxu0 0.0
        %2083 = vmatpush1.xpose.msra.mxu0 0.0
        %2084 = vmatprep.subr.mxu0 0.0
        %2085 = vmatpush1.xpose.msra.mxu0 0.0
        %2086 = vmatprep.subr.mxu0 0.0
        %2087 = vmatpush1.xpose.msra.mxu0 0.0
        %2088 = vmatprep.subr.mxu0 0.0
        %2089 = vmatpush1.xpose.msra.mxu0 0.0
        %2090 = vmatprep.subr.mxu0 0.0
        %2091 = vmatpush1.xpose.msra.mxu0 0.0
        %2092 = vmatprep.subr.mxu0 0.0
        %2093 = vmatpush1.xpose.msra.mxu0 0.0
        %2094 = vmatprep.subr.mxu0 0.0
        %2095 = vmatpush1.xpose.msra.mxu0 0.0
        %2096 = vmatprep.subr.mxu0 0.0
        %2097 = vmatpush1.xpose.msra.mxu0 0.0
        %2098 = vmatprep.subr.mxu0 0.0
        %2099 = vmatpush1.xpose.msra.mxu0 0.0
        %2100 = vmatprep.subr.mxu0 0.0
        %2101 = vmatpush1.xpose.msra.mxu0 0.0
        %2102 = vmatprep.subr.mxu0 0.0
        %2103 = vmatpush1.xpose.msra.mxu0 0.0
        %2104 = vmatprep.subr.mxu0 0.0
        %2105 = vmatpush1.xpose.msra.mxu0 0.0
        %2106 = vmatprep.subr.mxu0 0.0
        %2107 = vmatpush1.xpose.msra.mxu0 0.0
        %2108 = vmatprep.subr.mxu0 0.0
        %2109 = vmatpush1.xpose.msra.mxu0 0.0
        %2110 = vmatprep.subr.mxu0 0.0
        %2111 = vmatpush1.xpose.msra.mxu0 0.0
        %2112 = vmatprep.subr.mxu0 0.0
        %2113 = vmatpush1.xpose.msra.mxu0 0.0
        %2114 = vmatprep.mubr.f32.mxu0 0.0
        %2115 = vmatmul.mubr.f32.gmra.mrb[0].mxu0 %v2039
        %v2116 = vpop.f32.mrb[0].mxu0
        %v2117 = vadd.f32 0.0, %v2116
        %v2118 = vpop.f32.mrb[0].mxu0
        %2119 = vmatprep.mubr.f32.mxu0 0.0
        %2120 = vmatmul.mubr.f32.gmra.mrb[0].mxu0 %v2042
        %v2121 = vpop.f32.mrb[0].mxu0
        %v2122 = vadd.f32 0.0, %v2121
        %v2123 = vpop.f32.mrb[0].mxu0
        %2124 = vdwg.mxu0
        %v2126 = vsel %vm1863, %v1718, 0
        %v2129 = vsel %vm1863, %v1719, 0
        %v2132 = vsel %vm1863, %v1853, 0
        %v2135 = vsel %vm1863, %v1854, 0
        %2137 = vmatprep.subr.mxu0 0.0
        %2138 = vmatpush1.xpose.msra.mxu0 %v2132
        %2139 = vmatprep.subr.mxu0 0.0
        %2140 = vmatpush1.xpose.msra.mxu0 %v2135
        %2141 = vmatprep.subr.mxu0 0.0
        %2142 = vmatpush1.xpose.msra.mxu0 0.0
        %2143 = vmatprep.subr.mxu0 0.0
        %2144 = vmatpush1.xpose.msra.mxu0 0.0
        %2145 = vmatprep.subr.mxu0 0.0
        %2146 = vmatpush1.xpose.msra.mxu0 0.0
        %2147 = vmatprep.subr.mxu0 0.0
        %2148 = vmatpush1.xpose.msra.mxu0 0.0
        %2149 = vmatprep.subr.mxu0 0.0
        %2150 = vmatpush1.xpose.msra.mxu0 0.0
        %2151 = vmatprep.subr.mxu0 0.0
        %2152 = vmatpush1.xpose.msra.mxu0 0.0
        %2153 = vmatprep.subr.mxu0 0.0
        %2154 = vmatpush1.xpose.msra.mxu0 0.0
        %2155 = vmatprep.subr.mxu0 0.0
        %2156 = vmatpush1.xpose.msra.mxu0 0.0
        %2157 = vmatprep.subr.mxu0 0.0
        %2158 = vmatpush1.xpose.msra.mxu0 0.0
        %2159 = vmatprep.subr.mxu0 0.0
        %2160 = vmatpush1.xpose.msra.mxu0 0.0
        %2161 = vmatprep.subr.mxu0 0.0
        %2162 = vmatpush1.xpose.msra.mxu0 0.0
        %2163 = vmatprep.subr.mxu0 0.0
        %2164 = vmatpush1.xpose.msra.mxu0 0.0
        %2165 = vmatprep.subr.mxu0 0.0
        %2166 = vmatpush1.xpose.msra.mxu0 0.0
        %2167 = vmatprep.subr.mxu0 0.0
        %2168 = vmatpush1.xpose.msra.mxu0 0.0
        %2169 = vmatprep.subr.mxu0 0.0
        %2170 = vmatpush1.xpose.msra.mxu0 0.0
        %2171 = vmatprep.subr.mxu0 0.0
        %2172 = vmatpush1.xpose.msra.mxu0 0.0
        %2173 = vmatprep.subr.mxu0 0.0
        %2174 = vmatpush1.xpose.msra.mxu0 0.0
        %2175 = vmatprep.subr.mxu0 0.0
        %2176 = vmatpush1.xpose.msra.mxu0 0.0
        %2177 = vmatprep.subr.mxu0 0.0
        %2178 = vmatpush1.xpose.msra.mxu0 0.0
        %2179 = vmatprep.subr.mxu0 0.0
        %2180 = vmatpush1.xpose.msra.mxu0 0.0
        %2181 = vmatprep.subr.mxu0 0.0
        %2182 = vmatpush1.xpose.msra.mxu0 0.0
        %2183 = vmatprep.subr.mxu0 0.0
        %2184 = vmatpush1.xpose.msra.mxu0 0.0
        %2185 = vmatprep.subr.mxu0 0.0
        %2186 = vmatpush1.xpose.msra.mxu0 0.0
        %2187 = vmatprep.subr.mxu0 0.0
        %2188 = vmatpush1.xpose.msra.mxu0 0.0
        %2189 = vmatprep.subr.mxu0 0.0
        %2190 = vmatpush1.xpose.msra.mxu0 0.0
        %2191 = vmatprep.subr.mxu0 0.0
        %2192 = vmatpush1.xpose.msra.mxu0 0.0
        %2193 = vmatprep.subr.mxu0 0.0
        %2194 = vmatpush1.xpose.msra.mxu0 0.0
        %2195 = vmatprep.subr.mxu0 0.0
        %2196 = vmatpush1.xpose.msra.mxu0 0.0
        %2197 = vmatprep.subr.mxu0 0.0
        %2198 = vmatpush1.xpose.msra.mxu0 0.0
        %2199 = vmatprep.subr.mxu0 0.0
        %2200 = vmatpush1.xpose.msra.mxu0 0.0
        %2201 = vmatprep.mubr.f32.mxu0 0.0
        %2202 = vmatmul.mubr.f32.gmra.mrb[0].mxu0 %v2126
        %v2203 = vpop.f32.mrb[0].mxu0
        %v2204 = vadd.f32 0.0, %v2203
        %v2205 = vpop.f32.mrb[0].mxu0
        %2206 = vmatprep.mubr.f32.mxu0 0.0
        %2207 = vmatmul.mubr.f32.gmra.mrb[0].mxu0 %v2129
        %v2208 = vpop.f32.mrb[0].mxu0
        %v2209 = vadd.f32 0.0, %v2208
        %v2210 = vpop.f32.mrb[0].mxu0
        %2211 = vdwg.mxu0
        %v2213 = vsel %vm1863, %v1720, 0
        %v2216 = vsel %vm1863, %v1721, 0
        %v2219 = vsel %vm1863, %v1855, 0
        %v2222 = vsel %vm1863, %v1856, 0
        %2224 = vmatprep.subr.mxu0 0.0
        %2225 = vmatpush1.xpose.msra.mxu0 %v2219
        %2226 = vmatprep.subr.mxu0 0.0
        %2227 = vmatpush1.xpose.msra.mxu0 %v2222
        %2228 = vmatprep.subr.mxu0 0.0
        %2229 = vmatpush1.xpose.msra.mxu0 0.0
        %2230 = vmatprep.subr.mxu0 0.0
        %2231 = vmatpush1.xpose.msra.mxu0 0.0
        %2232 = vmatprep.subr.mxu0 0.0
        %2233 = vmatpush1.xpose.msra.mxu0 0.0
        %2234 = vmatprep.subr.mxu0 0.0
        %2235 = vmatpush1.xpose.msra.mxu0 0.0
        %2236 = vmatprep.subr.mxu0 0.0
        %2237 = vmatpush1.xpose.msra.mxu0 0.0
        %2238 = vmatprep.subr.mxu0 0.0
        %2239 = vmatpush1.xpose.msra.mxu0 0.0
        %2240 = vmatprep.subr.mxu0 0.0
        %2241 = vmatpush1.xpose.msra.mxu0 0.0
        %2242 = vmatprep.subr.mxu0 0.0
        %2243 = vmatpush1.xpose.msra.mxu0 0.0
        %2244 = vmatprep.subr.mxu0 0.0
        %2245 = vmatpush1.xpose.msra.mxu0 0.0
        %2246 = vmatprep.subr.mxu0 0.0
        %2247 = vmatpush1.xpose.msra.mxu0 0.0
        %2248 = vmatprep.subr.mxu0 0.0
        %2249 = vmatpush1.xpose.msra.mxu0 0.0
        %2250 = vmatprep.subr.mxu0 0.0
        %2251 = vmatpush1.xpose.msra.mxu0 0.0
        %2252 = vmatprep.subr.mxu0 0.0
        %2253 = vmatpush1.xpose.msra.mxu0 0.0
        %2254 = vmatprep.subr.mxu0 0.0
        %2255 = vmatpush1.xpose.msra.mxu0 0.0
        %2256 = vmatprep.subr.mxu0 0.0
        %2257 = vmatpush1.xpose.msra.mxu0 0.0
        %2258 = vmatprep.subr.mxu0 0.0
        %2259 = vmatpush1.xpose.msra.mxu0 0.0
        %2260 = vmatprep.subr.mxu0 0.0
        %2261 = vmatpush1.xpose.msra.mxu0 0.0
        %2262 = vmatprep.subr.mxu0 0.0
        %2263 = vmatpush1.xpose.msra.mxu0 0.0
        %2264 = vmatprep.subr.mxu0 0.0
        %2265 = vmatpush1.xpose.msra.mxu0 0.0
        %2266 = vmatprep.subr.mxu0 0.0
        %2267 = vmatpush1.xpose.msra.mxu0 0.0
        %2268 = vmatprep.subr.mxu0 0.0
        %2269 = vmatpush1.xpose.msra.mxu0 0.0
        %2270 = vmatprep.subr.mxu0 0.0
        %2271 = vmatpush1.xpose.msra.mxu0 0.0
        %2272 = vmatprep.subr.mxu0 0.0
        %2273 = vmatpush1.xpose.msra.mxu0 0.0
        %2274 = vmatprep.subr.mxu0 0.0
        %2275 = vmatpush1.xpose.msra.mxu0 0.0
        %2276 = vmatprep.subr.mxu0 0.0
        %2277 = vmatpush1.xpose.msra.mxu0 0.0
        %2278 = vmatprep.subr.mxu0 0.0
        %2279 = vmatpush1.xpose.msra.mxu0 0.0
        %2280 = vmatprep.subr.mxu0 0.0
        %2281 = vmatpush1.xpose.msra.mxu0 0.0
        %2282 = vmatprep.subr.mxu0 0.0
        %2283 = vmatpush1.xpose.msra.mxu0 0.0
        %2284 = vmatprep.subr.mxu0 0.0
        %2285 = vmatpush1.xpose.msra.mxu0 0.0
        %2286 = vmatprep.subr.mxu0 0.0
        %2287 = vmatpush1.xpose.msra.mxu0 0.0
        %2288 = vmatprep.mubr.f32.mxu0 0.0
        %2289 = vmatmul.mubr.f32.gmra.mrb[0].mxu0 %v2213
        %v2290 = vpop.f32.mrb[0].mxu0
        %v2291 = vadd.f32 0.0, %v2290
        %v2292 = vpop.f32.mrb[0].mxu0
        %2293 = vmatprep.mubr.f32.mxu0 0.0
        %2294 = vmatmul.mubr.f32.gmra.mrb[0].mxu0 %v2216
        %v2295 = vpop.f32.mrb[0].mxu0
        %v2296 = vadd.f32 0.0, %v2295
        %v2297 = vpop.f32.mrb[0].mxu0
        %2298 = vdwg.mxu0
        %v2300 = vsel %vm1863, %v1722, 0
        %v2303 = vsel %vm1863, %v1723, 0
        %v2306 = vsel %vm1863, %v1857, 0
        %v2309 = vsel %vm1863, %v1858, 0
        %2311 = vmatprep.subr.mxu0 0.0
        %2312 = vmatpush1.xpose.msra.mxu0 %v2306
        %2313 = vmatprep.subr.mxu0 0.0
        %2314 = vmatpush1.xpose.msra.mxu0 %v2309
        %2315 = vmatprep.subr.mxu0 0.0
        %2316 = vmatpush1.xpose.msra.mxu0 0.0
        %2317 = vmatprep.subr.mxu0 0.0
        %2318 = vmatpush1.xpose.msra.mxu0 0.0
        %2319 = vmatprep.subr.mxu0 0.0
        %2320 = vmatpush1.xpose.msra.mxu0 0.0
        %2321 = vmatprep.subr.mxu0 0.0
        %2322 = vmatpush1.xpose.msra.mxu0 0.0
        %2323 = vmatprep.subr.mxu0 0.0
        %2324 = vmatpush1.xpose.msra.mxu0 0.0
        %2325 = vmatprep.subr.mxu0 0.0
        %2326 = vmatpush1.xpose.msra.mxu0 0.0
        %2327 = vmatprep.subr.mxu0 0.0
        %2328 = vmatpush1.xpose.msra.mxu0 0.0
        %2329 = vmatprep.subr.mxu0 0.0
        %2330 = vmatpush1.xpose.msra.mxu0 0.0
        %2331 = vmatprep.subr.mxu0 0.0
        %2332 = vmatpush1.xpose.msra.mxu0 0.0
        %2333 = vmatprep.subr.mxu0 0.0
        %2334 = vmatpush1.xpose.msra.mxu0 0.0
        %2335 = vmatprep.subr.mxu0 0.0
        %2336 = vmatpush1.xpose.msra.mxu0 0.0
        %2337 = vmatprep.subr.mxu0 0.0
        %2338 = vmatpush1.xpose.msra.mxu0 0.0
        %2339 = vmatprep.subr.mxu0 0.0
        %2340 = vmatpush1.xpose.msra.mxu0 0.0
        %2341 = vmatprep.subr.mxu0 0.0
        %2342 = vmatpush1.xpose.msra.mxu0 0.0
        %2343 = vmatprep.subr.mxu0 0.0
        %2344 = vmatpush1.xpose.msra.mxu0 0.0
        %2345 = vmatprep.subr.mxu0 0.0
        %2346 = vmatpush1.xpose.msra.mxu0 0.0
        %2347 = vmatprep.subr.mxu0 0.0
        %2348 = vmatpush1.xpose.msra.mxu0 0.0
        %2349 = vmatprep.subr.mxu0 0.0
        %2350 = vmatpush1.xpose.msra.mxu0 0.0
        %2351 = vmatprep.subr.mxu0 0.0
        %2352 = vmatpush1.xpose.msra.mxu0 0.0
        %2353 = vmatprep.subr.mxu0 0.0
        %2354 = vmatpush1.xpose.msra.mxu0 0.0
        %2355 = vmatprep.subr.mxu0 0.0
        %2356 = vmatpush1.xpose.msra.mxu0 0.0
        %2357 = vmatprep.subr.mxu0 0.0
        %2358 = vmatpush1.xpose.msra.mxu0 0.0
        %2359 = vmatprep.subr.mxu0 0.0
        %2360 = vmatpush1.xpose.msra.mxu0 0.0
        %2361 = vmatprep.subr.mxu0 0.0
        %2362 = vmatpush1.xpose.msra.mxu0 0.0
        %2363 = vmatprep.subr.mxu0 0.0
        %2364 = vmatpush1.xpose.msra.mxu0 0.0
        %2365 = vmatprep.subr.mxu0 0.0
        %2366 = vmatpush1.xpose.msra.mxu0 0.0
        %2367 = vmatprep.subr.mxu0 0.0
        %2368 = vmatpush1.xpose.msra.mxu0 0.0
        %2369 = vmatprep.subr.mxu0 0.0
        %2370 = vmatpush1.xpose.msra.mxu0 0.0
        %2371 = vmatprep.subr.mxu0 0.0
        %2372 = vmatpush1.xpose.msra.mxu0 0.0
        %2373 = vmatprep.subr.mxu0 0.0
        %2374 = vmatpush1.xpose.msra.mxu0 0.0
        %2375 = vmatprep.mubr.f32.mxu0 0.0
        %2376 = vmatmul.mubr.f32.gmra.mrb[0].mxu0 %v2300
        %v2377 = vpop.f32.mrb[0].mxu0
        %v2378 = vadd.f32 0.0, %v2377
        %v2379 = vpop.f32.mrb[0].mxu0
        %2380 = vmatprep.mubr.f32.mxu0 0.0
        %2381 = vmatmul.mubr.f32.gmra.mrb[0].mxu0 %v2303
        %v2382 = vpop.f32.mrb[0].mxu0
        %v2383 = vadd.f32 0.0, %v2382
        %v2384 = vpop.f32.mrb[0].mxu0
        %2385 = vdwg.mxu0
        %v2387 = vsel %vm1863, %v1724, 0
        %v2390 = vsel %vm1863, %v1725, 0
        %v2393 = vsel %vm1863, %v1859, 0
        %v2396 = vsel %vm1863, %v1860, 0
        %2398 = vmatprep.subr.mxu0 0.0
        %2399 = vmatpush1.xpose.msra.mxu0 %v2393
        %2400 = vmatprep.subr.mxu0 0.0
        %2401 = vmatpush1.xpose.msra.mxu0 %v2396
        %2402 = vmatprep.subr.mxu0 0.0
        %2403 = vmatpush1.xpose.msra.mxu0 0.0
        %2404 = vmatprep.subr.mxu0 0.0
        %2405 = vmatpush1.xpose.msra.mxu0 0.0
        %2406 = vmatprep.subr.mxu0 0.0
        %2407 = vmatpush1.xpose.msra.mxu0 0.0
        %2408 = vmatprep.subr.mxu0 0.0
        %2409 = vmatpush1.xpose.msra.mxu0 0.0
        %2410 = vmatprep.subr.mxu0 0.0
        %2411 = vmatpush1.xpose.msra.mxu0 0.0
        %2412 = vmatprep.subr.mxu0 0.0
        %2413 = vmatpush1.xpose.msra.mxu0 0.0
        %2414 = vmatprep.subr.mxu0 0.0
        %2415 = vmatpush1.xpose.msra.mxu0 0.0
        %2416 = vmatprep.subr.mxu0 0.0
        %2417 = vmatpush1.xpose.msra.mxu0 0.0
        %2418 = vmatprep.subr.mxu0 0.0
        %2419 = vmatpush1.xpose.msra.mxu0 0.0
        %2420 = vmatprep.subr.mxu0 0.0
        %2421 = vmatpush1.xpose.msra.mxu0 0.0
        %2422 = vmatprep.subr.mxu0 0.0
        %2423 = vmatpush1.xpose.msra.mxu0 0.0
        %2424 = vmatprep.subr.mxu0 0.0
        %2425 = vmatpush1.xpose.msra.mxu0 0.0
        %2426 = vmatprep.subr.mxu0 0.0
        %2427 = vmatpush1.xpose.msra.mxu0 0.0
        %2428 = vmatprep.subr.mxu0 0.0
        %2429 = vmatpush1.xpose.msra.mxu0 0.0
        %2430 = vmatprep.subr.mxu0 0.0
        %2431 = vmatpush1.xpose.msra.mxu0 0.0
        %2432 = vmatprep.subr.mxu0 0.0
        %2433 = vmatpush1.xpose.msra.mxu0 0.0
        %2434 = vmatprep.subr.mxu0 0.0
        %2435 = vmatpush1.xpose.msra.mxu0 0.0
        %2436 = vmatprep.subr.mxu0 0.0
        %2437 = vmatpush1.xpose.msra.mxu0 0.0
        %2438 = vmatprep.subr.mxu0 0.0
        %2439 = vmatpush1.xpose.msra.mxu0 0.0
        %2440 = vmatprep.subr.mxu0 0.0
        %2441 = vmatpush1.xpose.msra.mxu0 0.0
        %2442 = vmatprep.subr.mxu0 0.0
        %2443 = vmatpush1.xpose.msra.mxu0 0.0
        %2444 = vmatprep.subr.mxu0 0.0
        %2445 = vmatpush1.xpose.msra.mxu0 0.0
        %2446 = vmatprep.subr.mxu0 0.0
        %2447 = vmatpush1.xpose.msra.mxu0 0.0
        %2448 = vmatprep.subr.mxu0 0.0
        %2449 = vmatpush1.xpose.msra.mxu0 0.0
        %2450 = vmatprep.subr.mxu0 0.0
        %2451 = vmatpush1.xpose.msra.mxu0 0.0
        %2452 = vmatprep.subr.mxu0 0.0
        %2453 = vmatpush1.xpose.msra.mxu0 0.0
        %2454 = vmatprep.subr.mxu0 0.0
        %2455 = vmatpush1.xpose.msra.mxu0 0.0
        %2456 = vmatprep.subr.mxu0 0.0
        %2457 = vmatpush1.xpose.msra.mxu0 0.0
        %2458 = vmatprep.subr.mxu0 0.0
        %2459 = vmatpush1.xpose.msra.mxu0 0.0
        %2460 = vmatprep.subr.mxu0 0.0
        %2461 = vmatpush1.xpose.msra.mxu0 0.0
        %2462 = vmatprep.mubr.f32.mxu0 0.0
        %2463 = vmatmul.mubr.f32.gmra.mrb[0].mxu0 %v2387
        %v2464 = vpop.f32.mrb[0].mxu0
        %v2465 = vadd.f32 0.0, %v2464
        %v2466 = vpop.f32.mrb[0].mxu0
        %2467 = vmatprep.mubr.f32.mxu0 0.0
        %2468 = vmatmul.mubr.f32.gmra.mrb[0].mxu0 %v2390
        %v2469 = vpop.f32.mrb[0].mxu0
        %v2470 = vadd.f32 0.0, %v2469
        %v2471 = vpop.f32.mrb[0].mxu0
        %2472 = vdwg.mxu0
        %v2474 = vsel %vm1863, %v1726, 0
        %v2477 = vsel %vm1863, %v1727, 0
        %v2480 = vsel %vm1863, %v1861, 0
        %v2483 = vsel %vm1863, %v1862, 0
        %2485 = vmatprep.subr.mxu0 0.0
        %2486 = vmatpush1.xpose.msra.mxu0 %v2480
        %2487 = vmatprep.subr.mxu0 0.0
        %2488 = vmatpush1.xpose.msra.mxu0 %v2483
        %2489 = vmatprep.subr.mxu0 0.0
        %2490 = vmatpush1.xpose.msra.mxu0 0.0
        %2491 = vmatprep.subr.mxu0 0.0
        %2492 = vmatpush1.xpose.msra.mxu0 0.0
        %2493 = vmatprep.subr.mxu0 0.0
        %2494 = vmatpush1.xpose.msra.mxu0 0.0
        %2495 = vmatprep.subr.mxu0 0.0
        %2496 = vmatpush1.xpose.msra.mxu0 0.0
        %2497 = vmatprep.subr.mxu0 0.0
        %2498 = vmatpush1.xpose.msra.mxu0 0.0
        %2499 = vmatprep.subr.mxu0 0.0
        %2500 = vmatpush1.xpose.msra.mxu0 0.0
        %2501 = vmatprep.subr.mxu0 0.0
        %2502 = vmatpush1.xpose.msra.mxu0 0.0
        %2503 = vmatprep.subr.mxu0 0.0
        %2504 = vmatpush1.xpose.msra.mxu0 0.0
        %2505 = vmatprep.subr.mxu0 0.0
        %2506 = vmatpush1.xpose.msra.mxu0 0.0
        %2507 = vmatprep.subr.mxu0 0.0
        %2508 = vmatpush1.xpose.msra.mxu0 0.0
        %2509 = vmatprep.subr.mxu0 0.0
        %2510 = vmatpush1.xpose.msra.mxu0 0.0
        %2511 = vmatprep.subr.mxu0 0.0
        %2512 = vmatpush1.xpose.msra.mxu0 0.0
        %2513 = vmatprep.subr.mxu0 0.0
        %2514 = vmatpush1.xpose.msra.mxu0 0.0
        %2515 = vmatprep.subr.mxu0 0.0
        %2516 = vmatpush1.xpose.msra.mxu0 0.0
        %2517 = vmatprep.subr.mxu0 0.0
        %2518 = vmatpush1.xpose.msra.mxu0 0.0
        %2519 = vmatprep.subr.mxu0 0.0
        %2520 = vmatpush1.xpose.msra.mxu0 0.0
        %2521 = vmatprep.subr.mxu0 0.0
        %2522 = vmatpush1.xpose.msra.mxu0 0.0
        %2523 = vmatprep.subr.mxu0 0.0
        %2524 = vmatpush1.xpose.msra.mxu0 0.0
        %2525 = vmatprep.subr.mxu0 0.0
        %2526 = vmatpush1.xpose.msra.mxu0 0.0
        %2527 = vmatprep.subr.mxu0 0.0
        %2528 = vmatpush1.xpose.msra.mxu0 0.0
        %2529 = vmatprep.subr.mxu0 0.0
        %2530 = vmatpush1.xpose.msra.mxu0 0.0
        %2531 = vmatprep.subr.mxu0 0.0
        %2532 = vmatpush1.xpose.msra.mxu0 0.0
        %2533 = vmatprep.subr.mxu0 0.0
        %2534 = vmatpush1.xpose.msra.mxu0 0.0
        %2535 = vmatprep.subr.mxu0 0.0
        %2536 = vmatpush1.xpose.msra.mxu0 0.0
        %2537 = vmatprep.subr.mxu0 0.0
        %2538 = vmatpush1.xpose.msra.mxu0 0.0
        %2539 = vmatprep.subr.mxu0 0.0
        %2540 = vmatpush1.xpose.msra.mxu0 0.0
        %2541 = vmatprep.subr.mxu0 0.0
        %2542 = vmatpush1.xpose.msra.mxu0 0.0
        %2543 = vmatprep.subr.mxu0 0.0
        %2544 = vmatpush1.xpose.msra.mxu0 0.0
        %2545 = vmatprep.subr.mxu0 0.0
        %2546 = vmatpush1.xpose.msra.mxu0 0.0
        %2547 = vmatprep.subr.mxu0 0.0
        %2548 = vmatpush1.xpose.msra.mxu0 0.0
        %2549 = vmatprep.mubr.f32.mxu0 0.0
        %2550 = vmatmul.mubr.f32.gmra.mrb[0].mxu0 %v2474
        %v2551 = vpop.f32.mrb[0].mxu0
        %v2552 = vadd.f32 0.0, %v2551
        %v2553 = vpop.f32.mrb[0].mxu0
        %2554 = vmatprep.mubr.f32.mxu0 0.0
        %2555 = vmatmul.mubr.f32.gmra.mrb[0].mxu0 %v2477
        %v2556 = vpop.f32.mrb[0].mxu0
        %v2557 = vadd.f32 0.0, %v2556
        %v2558 = vpop.f32.mrb[0].mxu0
        %2559 = vdwg.mxu0
        %vm2560 = vcmask 130048
        %v2561 = vsel %vm2560, %v1943, -inf
        %2562 = vmax.xlane.f32.xlu0 %v2561
        %v2563 = vpop.xlane.xlu0 %2562
        %v2564 = vsel %vm2560, %v1948, -inf
        %2565 = vmax.xlane.f32.xlu0 %v2564
        %v2566 = vpop.xlane.xlu0 %2565
        %v2567 = vsel %vm2560, %v2030, -inf
        %2568 = vmax.xlane.f32.xlu0 %v2567
        %v2569 = vpop.xlane.xlu0 %2568
        %v2570 = vsel %vm2560, %v2035, -inf
        %2571 = vmax.xlane.f32.xlu0 %v2570
        %v2572 = vpop.xlane.xlu0 %2571
        %v2573 = vsel %vm2560, %v2117, -inf
        %2574 = vmax.xlane.f32.xlu0 %v2573
        %v2575 = vpop.xlane.xlu0 %2574
        %v2576 = vsel %vm2560, %v2122, -inf
        %2577 = vmax.xlane.f32.xlu0 %v2576
        %v2578 = vpop.xlane.xlu0 %2577
        %v2579 = vsel %vm2560, %v2204, -inf
        %2580 = vmax.xlane.f32.xlu0 %v2579
        %v2581 = vpop.xlane.xlu0 %2580
        %v2582 = vsel %vm2560, %v2209, -inf
        %2583 = vmax.xlane.f32.xlu0 %v2582
        %v2584 = vpop.xlane.xlu0 %2583
        %v2585 = vsel %vm2560, %v2291, -inf
        %2586 = vmax.xlane.f32.xlu0 %v2585
        %v2587 = vpop.xlane.xlu0 %2586
        %v2588 = vsel %vm2560, %v2296, -inf
        %2589 = vmax.xlane.f32.xlu0 %v2588
        %v2590 = vpop.xlane.xlu0 %2589
        %v2591 = vsel %vm2560, %v2378, -inf
        %2592 = vmax.xlane.f32.xlu0 %v2591
        %v2593 = vpop.xlane.xlu0 %2592
        %v2594 = vsel %vm2560, %v2383, -inf
        %2595 = vmax.xlane.f32.xlu0 %v2594
        %v2596 = vpop.xlane.xlu0 %2595
        %v2597 = vsel %vm2560, %v2465, -inf
        %2598 = vmax.xlane.f32.xlu0 %v2597
        %v2599 = vpop.xlane.xlu0 %2598
        %v2600 = vsel %vm2560, %v2470, -inf
        %2601 = vmax.xlane.f32.xlu0 %v2600
        %v2602 = vpop.xlane.xlu0 %2601
        %v2603 = vsel %vm2560, %v2552, -inf
        %2604 = vmax.xlane.f32.xlu0 %v2603
        %v2605 = vpop.xlane.xlu0 %2604
        %v2606 = vsel %vm2560, %v2557, -inf
        %2607 = vmax.xlane.f32.xlu0 %v2606
        %v2608 = vpop.xlane.xlu0 %2607
        %v2609 = vsub.f32 %v1943, %v2563
        %v2610 = vsub.f32 %v1948, %v2566
        %v2611 = vsub.f32 %v2030, %v2569
        %v2612 = vsub.f32 %v2035, %v2572
        %v2613 = vsub.f32 %v2117, %v2575
        %v2614 = vsub.f32 %v2122, %v2578
        %v2615 = vsub.f32 %v2204, %v2581
        %v2616 = vsub.f32 %v2209, %v2584
        %v2617 = vsub.f32 %v2291, %v2587
        %v2618 = vsub.f32 %v2296, %v2590
        %v2619 = vsub.f32 %v2378, %v2593
        %v2620 = vsub.f32 %v2383, %v2596
        %v2621 = vsub.f32 %v2465, %v2599
        %v2622 = vsub.f32 %v2470, %v2602
        %v2623 = vsub.f32 %v2552, %v2605
        %v2624 = vsub.f32 %v2557, %v2608
        %v2625 = vmul.f32 %v2609, 1.442695
        %v2626 = vpow.pop %v2625
        %v2627 = vmul.f32 %v2610, 1.442695
        %v2628 = vpow.pop %v2627
        %v2629 = vmul.f32 %v2611, 1.442695
        %v2630 = vpow.pop %v2629
        %v2631 = vmul.f32 %v2612, 1.442695
        %v2632 = vpow.pop %v2631
        %v2633 = vmul.f32 %v2613, 1.442695
        %v2634 = vpow.pop %v2633
        %v2635 = vmul.f32 %v2614, 1.442695
        %v2636 = vpow.pop %v2635
        %v2637 = vmul.f32 %v2615, 1.442695
        %v2638 = vpow.pop %v2637
        %v2639 = vmul.f32 %v2616, 1.442695
        %v2640 = vpow.pop %v2639
        %v2641 = vmul.f32 %v2617, 1.442695
        %v2642 = vpow.pop %v2641
        %v2643 = vmul.f32 %v2618, 1.442695
        %v2644 = vpow.pop %v2643
        %v2645 = vmul.f32 %v2619, 1.442695
        %v2646 = vpow.pop %v2645
        %v2647 = vmul.f32 %v2620, 1.442695
        %v2648 = vpow.pop %v2647
        %v2649 = vmul.f32 %v2621, 1.442695
        %v2650 = vpow.pop %v2649
        %v2651 = vmul.f32 %v2622, 1.442695
        %v2652 = vpow.pop %v2651
        %v2653 = vmul.f32 %v2623, 1.442695
        %v2654 = vpow.pop %v2653
        %v2655 = vmul.f32 %v2624, 1.442695
        %v2656 = vpow.pop %v2655
        %v2657 = vsel %vm2560, %v2626, 0.0
        %2658 = vadd.xlane.f32.xlu0 %v2657
        %v2659 = vpop.xlane.xlu0 %2658
        %v2660 = vsel %vm2560, %v2628, 0.0
        %2661 = vadd.xlane.f32.xlu0 %v2660
        %v2662 = vpop.xlane.xlu0 %2661
        %v2663 = vsel %vm2560, %v2630, 0.0
        %2664 = vadd.xlane.f32.xlu0 %v2663
        %v2665 = vpop.xlane.xlu0 %2664
        %v2666 = vsel %vm2560, %v2632, 0.0
        %2667 = vadd.xlane.f32.xlu0 %v2666
        %v2668 = vpop.xlane.xlu0 %2667
        %v2669 = vsel %vm2560, %v2634, 0.0
        %2670 = vadd.xlane.f32.xlu0 %v2669
        %v2671 = vpop.xlane.xlu0 %2670
        %v2672 = vsel %vm2560, %v2636, 0.0
        %2673 = vadd.xlane.f32.xlu0 %v2672
        %v2674 = vpop.xlane.xlu0 %2673
        %v2675 = vsel %vm2560, %v2638, 0.0
        %2676 = vadd.xlane.f32.xlu0 %v2675
        %v2677 = vpop.xlane.xlu0 %2676
        %v2678 = vsel %vm2560, %v2640, 0.0
        %2679 = vadd.xlane.f32.xlu0 %v2678
        %v2680 = vpop.xlane.xlu0 %2679
        %v2681 = vsel %vm2560, %v2642, 0.0
        %2682 = vadd.xlane.f32.xlu0 %v2681
        %v2683 = vpop.xlane.xlu0 %2682
        %v2684 = vsel %vm2560, %v2644, 0.0
        %2685 = vadd.xlane.f32.xlu0 %v2684
        %v2686 = vpop.xlane.xlu0 %2685
        %v2687 = vsel %vm2560, %v2646, 0.0
        %2688 = vadd.xlane.f32.xlu0 %v2687
        %v2689 = vpop.xlane.xlu0 %2688
        %v2690 = vsel %vm2560, %v2648, 0.0
        %2691 = vadd.xlane.f32.xlu0 %v2690
        %v2692 = vpop.xlane.xlu0 %2691
        %v2693 = vsel %vm2560, %v2650, 0.0
        %2694 = vadd.xlane.f32.xlu0 %v2693
        %v2695 = vpop.xlane.xlu0 %2694
        %v2696 = vsel %vm2560, %v2652, 0.0
        %2697 = vadd.xlane.f32.xlu0 %v2696
        %v2698 = vpop.xlane.xlu0 %2697
        %v2699 = vsel %vm2560, %v2654, 0.0
        %2700 = vadd.xlane.f32.xlu0 %v2699
        %v2701 = vpop.xlane.xlu0 %2700
        %v2702 = vsel %vm2560, %v2656, 0.0
        %2703 = vadd.xlane.f32.xlu0 %v2702
        %v2704 = vpop.xlane.xlu0 %2703
        %v2705 = vrcp.pop %v2659
        %v2706 = vmul.f32 %v2626, %v2705
        %v2707 = vrcp.pop %v2662
        %v2708 = vmul.f32 %v2628, %v2707
        %v2709 = vrcp.pop %v2665
        %v2710 = vmul.f32 %v2630, %v2709
        %v2711 = vrcp.pop %v2668
        %v2712 = vmul.f32 %v2632, %v2711
        %v2713 = vrcp.pop %v2671
        %v2714 = vmul.f32 %v2634, %v2713
        %v2715 = vrcp.pop %v2674
        %v2716 = vmul.f32 %v2636, %v2715
        %v2717 = vrcp.pop %v2677
        %v2718 = vmul.f32 %v2638, %v2717
        %v2719 = vrcp.pop %v2680
        %v2720 = vmul.f32 %v2640, %v2719
        %v2721 = vrcp.pop %v2683
        %v2722 = vmul.f32 %v2642, %v2721
        %v2723 = vrcp.pop %v2686
        %v2724 = vmul.f32 %v2644, %v2723
        %v2725 = vrcp.pop %v2689
        %v2726 = vmul.f32 %v2646, %v2725
        %v2727 = vrcp.pop %v2692
        %v2728 = vmul.f32 %v2648, %v2727
        %v2729 = vrcp.pop %v2695
        %v2730 = vmul.f32 %v2650, %v2729
        %v2731 = vrcp.pop %v2698
        %v2732 = vmul.f32 %v2652, %v2731
        %v2733 = vrcp.pop %v2701
        %v2734 = vmul.f32 %v2654, %v2733
        %v2735 = vrcp.pop %v2704
        %v2736 = vmul.f32 %v2656, %v2735
        %v2738 = vsel %vm2560, %v2706, 0
        %v2741 = vsel %vm2560, %v2708, 0
        %2743 = vmatprep.subr.mxu0 0.0
        %2744 = vmatpush1.msra.mxu0 %v1515
        %2745 = vmatprep.subr.mxu0 0.0
        %2746 = vmatpush1.msra.mxu0 %v1518
        %2747 = vmatprep.subr.mxu0 0.0
        %2748 = vmatpush1.msra.mxu0 0.0
        %2749 = vmatprep.subr.mxu0 0.0
        %2750 = vmatpush1.msra.mxu0 0.0
        %2751 = vmatprep.subr.mxu0 0.0
        %2752 = vmatpush1.msra.mxu0 0.0
        %2753 = vmatprep.subr.mxu0 0.0
        %2754 = vmatpush1.msra.mxu0 0.0
        %2755 = vmatprep.subr.mxu0 0.0
        %2756 = vmatpush1.msra.mxu0 0.0
        %2757 = vmatprep.subr.mxu0 0.0
        %2758 = vmatpush1.msra.mxu0 0.0
        %2759 = vmatprep.subr.mxu0 0.0
        %2760 = vmatpush1.msra.mxu0 0.0
        %2761 = vmatprep.subr.mxu0 0.0
        %2762 = vmatpush1.msra.mxu0 0.0
        %2763 = vmatprep.subr.mxu0 0.0
        %2764 = vmatpush1.msra.mxu0 0.0
        %2765 = vmatprep.subr.mxu0 0.0
        %2766 = vmatpush1.msra.mxu0 0.0
        %2767 = vmatprep.subr.mxu0 0.0
        %2768 = vmatpush1.msra.mxu0 0.0
        %2769 = vmatprep.subr.mxu0 0.0
        %2770 = vmatpush1.msra.mxu0 0.0
        %2771 = vmatprep.subr.mxu0 0.0
        %2772 = vmatpush1.msra.mxu0 0.0
        %2773 = vmatprep.subr.mxu0 0.0
        %2774 = vmatpush1.msra.mxu0 0.0
        %2775 = vmatprep.subr.mxu0 0.0
        %2776 = vmatpush1.msra.mxu0 0.0
        %2777 = vmatprep.subr.mxu0 0.0
        %2778 = vmatpush1.msra.mxu0 0.0
        %2779 = vmatprep.subr.mxu0 0.0
        %2780 = vmatpush1.msra.mxu0 0.0
        %2781 = vmatprep.subr.mxu0 0.0
        %2782 = vmatpush1.msra.mxu0 0.0
        %2783 = vmatprep.subr.mxu0 0.0
        %2784 = vmatpush1.msra.mxu0 0.0
        %2785 = vmatprep.subr.mxu0 0.0
        %2786 = vmatpush1.msra.mxu0 0.0
        %2787 = vmatprep.subr.mxu0 0.0
        %2788 = vmatpush1.msra.mxu0 0.0
        %2789 = vmatprep.subr.mxu0 0.0
        %2790 = vmatpush1.msra.mxu0 0.0
        %2791 = vmatprep.subr.mxu0 0.0
        %2792 = vmatpush1.msra.mxu0 0.0
        %2793 = vmatprep.subr.mxu0 0.0
        %2794 = vmatpush1.msra.mxu0 0.0
        %2795 = vmatprep.subr.mxu0 0.0
        %2796 = vmatpush1.msra.mxu0 0.0
        %2797 = vmatprep.subr.mxu0 0.0
        %2798 = vmatpush1.msra.mxu0 0.0
        %2799 = vmatprep.subr.mxu0 0.0
        %2800 = vmatpush1.msra.mxu0 0.0
        %2801 = vmatprep.subr.mxu0 0.0
        %2802 = vmatpush1.msra.mxu0 0.0
        %2803 = vmatprep.subr.mxu0 0.0
        %2804 = vmatpush1.msra.mxu0 0.0
        %2805 = vmatprep.subr.mxu0 0.0
        %2806 = vmatpush1.msra.mxu0 0.0
        %2807 = vmatprep.mubr.f32.mxu0 0.0
        %2808 = vmatmul.mubr.f32.gmra.mrb[0].mxu0 %v2738
        %v2809 = vpop.f32.mrb[0].mxu0
        %v2810 = vadd.f32 0.0, %v2809
        %v2811 = vpop.f32.mrb[0].mxu0
        %2812 = vmatprep.mubr.f32.mxu0 0.0
        %2813 = vmatmul.mubr.f32.gmra.mrb[0].mxu0 %v2741
        %v2814 = vpop.f32.mrb[0].mxu0
        %v2815 = vadd.f32 0.0, %v2814
        %v2816 = vpop.f32.mrb[0].mxu0
        %2817 = vdwg.mxu0
        %v2819 = vsel %vm2560, %v2710, 0
        %v2822 = vsel %vm2560, %v2712, 0
        %2824 = vmatprep.subr.mxu0 0.0
        %2825 = vmatpush1.msra.mxu0 %v1523
        %2826 = vmatprep.subr.mxu0 0.0
        %2827 = vmatpush1.msra.mxu0 %v1526
        %2828 = vmatprep.subr.mxu0 0.0
        %2829 = vmatpush1.msra.mxu0 0.0
        %2830 = vmatprep.subr.mxu0 0.0
        %2831 = vmatpush1.msra.mxu0 0.0
        %2832 = vmatprep.subr.mxu0 0.0
        %2833 = vmatpush1.msra.mxu0 0.0
        %2834 = vmatprep.subr.mxu0 0.0
        %2835 = vmatpush1.msra.mxu0 0.0
        %2836 = vmatprep.subr.mxu0 0.0
        %2837 = vmatpush1.msra.mxu0 0.0
        %2838 = vmatprep.subr.mxu0 0.0
        %2839 = vmatpush1.msra.mxu0 0.0
        %2840 = vmatprep.subr.mxu0 0.0
        %2841 = vmatpush1.msra.mxu0 0.0
        %2842 = vmatprep.subr.mxu0 0.0
        %2843 = vmatpush1.msra.mxu0 0.0
        %2844 = vmatprep.subr.mxu0 0.0
        %2845 = vmatpush1.msra.mxu0 0.0
        %2846 = vmatprep.subr.mxu0 0.0
        %2847 = vmatpush1.msra.mxu0 0.0
        %2848 = vmatprep.subr.mxu0 0.0
        %2849 = vmatpush1.msra.mxu0 0.0
        %2850 = vmatprep.subr.mxu0 0.0
        %2851 = vmatpush1.msra.mxu0 0.0
        %2852 = vmatprep.subr.mxu0 0.0
        %2853 = vmatpush1.msra.mxu0 0.0
        %2854 = vmatprep.subr.mxu0 0.0
        %2855 = vmatpush1.msra.mxu0 0.0
        %2856 = vmatprep.subr.mxu0 0.0
        %2857 = vmatpush1.msra.mxu0 0.0
        %2858 = vmatprep.subr.mxu0 0.0
        %2859 = vmatpush1.msra.mxu0 0.0
        %2860 = vmatprep.subr.mxu0 0.0
        %2861 = vmatpush1.msra.mxu0 0.0
        %2862 = vmatprep.subr.mxu0 0.0
        %2863 = vmatpush1.msra.mxu0 0.0
        %2864 = vmatprep.subr.mxu0 0.0
        %2865 = vmatpush1.msra.mxu0 0.0
        %2866 = vmatprep.subr.mxu0 0.0
        %2867 = vmatpush1.msra.mxu0 0.0
        %2868 = vmatprep.subr.mxu0 0.0
        %2869 = vmatpush1.msra.mxu0 0.0
        %2870 = vmatprep.subr.mxu0 0.0
        %2871 = vmatpush1.msra.mxu0 0.0
        %2872 = vmatprep.subr.mxu0 0.0
        %2873 = vmatpush1.msra.mxu0 0.0
        %2874 = vmatprep.subr.mxu0 0.0
        %2875 = vmatpush1.msra.mxu0 0.0
        %2876 = vmatprep.subr.mxu0 0.0
        %2877 = vmatpush1.msra.mxu0 0.0
        %2878 = vmatprep.subr.mxu0 0.0
        %2879 = vmatpush1.msra.mxu0 0.0
        %2880 = vmatprep.subr.mxu0 0.0
        %2881 = vmatpush1.msra.mxu0 0.0
        %2882 = vmatprep.subr.mxu0 0.0
        %2883 = vmatpush1.msra.mxu0 0.0
        %2884 = vmatprep.subr.mxu0 0.0
        %2885 = vmatpush1.msra.mxu0 0.0
        %2886 = vmatprep.subr.mxu0 0.0
        %2887 = vmatpush1.msra.mxu0 0.0
        %2888 = vmatprep.mubr.f32.mxu0 0.0
        %2889 = vmatmul.mubr.f32.gmra.mrb[0].mxu0 %v2819
        %v2890 = vpop.f32.mrb[0].mxu0
        %v2891 = vadd.f32 0.0, %v2890
        %v2892 = vpop.f32.mrb[0].mxu0
        %2893 = vmatprep.mubr.f32.mxu0 0.0
        %2894 = vmatmul.mubr.f32.gmra.mrb[0].mxu0 %v2822
        %v2895 = vpop.f32.mrb[0].mxu0
        %v2896 = vadd.f32 0.0, %v2895
        %v2897 = vpop.f32.mrb[0].mxu0
        %2898 = vdwg.mxu0
        %v2900 = vsel %vm2560, %v2714, 0
        %v2903 = vsel %vm2560, %v2716, 0
        %2905 = vmatprep.subr.mxu0 0.0
        %2906 = vmatpush1.msra.mxu0 %v1531
        %2907 = vmatprep.subr.mxu0 0.0
        %2908 = vmatpush1.msra.mxu0 %v1534
        %2909 = vmatprep.subr.mxu0 0.0
        %2910 = vmatpush1.msra.mxu0 0.0
        %2911 = vmatprep.subr.mxu0 0.0
        %2912 = vmatpush1.msra.mxu0 0.0
        %2913 = vmatprep.subr.mxu0 0.0
        %2914 = vmatpush1.msra.mxu0 0.0
        %2915 = vmatprep.subr.mxu0 0.0
        %2916 = vmatpush1.msra.mxu0 0.0
        %2917 = vmatprep.subr.mxu0 0.0
        %2918 = vmatpush1.msra.mxu0 0.0
        %2919 = vmatprep.subr.mxu0 0.0
        %2920 = vmatpush1.msra.mxu0 0.0
        %2921 = vmatprep.subr.mxu0 0.0
        %2922 = vmatpush1.msra.mxu0 0.0
        %2923 = vmatprep.subr.mxu0 0.0
        %2924 = vmatpush1.msra.mxu0 0.0
        %2925 = vmatprep.subr.mxu0 0.0
        %2926 = vmatpush1.msra.mxu0 0.0
        %2927 = vmatprep.subr.mxu0 0.0
        %2928 = vmatpush1.msra.mxu0 0.0
        %2929 = vmatprep.subr.mxu0 0.0
        %2930 = vmatpush1.msra.mxu0 0.0
        %2931 = vmatprep.subr.mxu0 0.0
        %2932 = vmatpush1.msra.mxu0 0.0
        %2933 = vmatprep.subr.mxu0 0.0
        %2934 = vmatpush1.msra.mxu0 0.0
        %2935 = vmatprep.subr.mxu0 0.0
        %2936 = vmatpush1.msra.mxu0 0.0
        %2937 = vmatprep.subr.mxu0 0.0
        %2938 = vmatpush1.msra.mxu0 0.0
        %2939 = vmatprep.subr.mxu0 0.0
        %2940 = vmatpush1.msra.mxu0 0.0
        %2941 = vmatprep.subr.mxu0 0.0
        %2942 = vmatpush1.msra.mxu0 0.0
        %2943 = vmatprep.subr.mxu0 0.0
        %2944 = vmatpush1.msra.mxu0 0.0
        %2945 = vmatprep.subr.mxu0 0.0
        %2946 = vmatpush1.msra.mxu0 0.0
        %2947 = vmatprep.subr.mxu0 0.0
        %2948 = vmatpush1.msra.mxu0 0.0
        %2949 = vmatprep.subr.mxu0 0.0
        %2950 = vmatpush1.msra.mxu0 0.0
        %2951 = vmatprep.subr.mxu0 0.0
        %2952 = vmatpush1.msra.mxu0 0.0
        %2953 = vmatprep.subr.mxu0 0.0
        %2954 = vmatpush1.msra.mxu0 0.0
        %2955 = vmatprep.subr.mxu0 0.0
        %2956 = vmatpush1.msra.mxu0 0.0
        %2957 = vmatprep.subr.mxu0 0.0
        %2958 = vmatpush1.msra.mxu0 0.0
        %2959 = vmatprep.subr.mxu0 0.0
        %2960 = vmatpush1.msra.mxu0 0.0
        %2961 = vmatprep.subr.mxu0 0.0
        %2962 = vmatpush1.msra.mxu0 0.0
        %2963 = vmatprep.subr.mxu0 0.0
        %2964 = vmatpush1.msra.mxu0 0.0
        %2965 = vmatprep.subr.mxu0 0.0
        %2966 = vmatpush1.msra.mxu0 0.0
        %2967 = vmatprep.subr.mxu0 0.0
        %2968 = vmatpush1.msra.mxu0 0.0
        %2969 = vmatprep.mubr.f32.mxu0 0.0
        %2970 = vmatmul.mubr.f32.gmra.mrb[0].mxu0 %v2900
        %v2971 = vpop.f32.mrb[0].mxu0
        %v2972 = vadd.f32 0.0, %v2971
        %v2973 = vpop.f32.mrb[0].mxu0
        %2974 = vmatprep.mubr.f32.mxu0 0.0
        %2975 = vmatmul.mubr.f32.gmra.mrb[0].mxu0 %v2903
        %v2976 = vpop.f32.mrb[0].mxu0
        %v2977 = vadd.f32 0.0, %v2976
        %v2978 = vpop.f32.mrb[0].mxu0
        %2979 = vdwg.mxu0
        %v2981 = vsel %vm2560, %v2718, 0
        %v2984 = vsel %vm2560, %v2720, 0
        %2986 = vmatprep.subr.mxu0 0.0
        %2987 = vmatpush1.msra.mxu0 %v1539
        %2988 = vmatprep.subr.mxu0 0.0
        %2989 = vmatpush1.msra.mxu0 %v1542
        %2990 = vmatprep.subr.mxu0 0.0
        %2991 = vmatpush1.msra.mxu0 0.0
        %2992 = vmatprep.subr.mxu0 0.0
        %2993 = vmatpush1.msra.mxu0 0.0
        %2994 = vmatprep.subr.mxu0 0.0
        %2995 = vmatpush1.msra.mxu0 0.0
        %2996 = vmatprep.subr.mxu0 0.0
        %2997 = vmatpush1.msra.mxu0 0.0
        %2998 = vmatprep.subr.mxu0 0.0
        %2999 = vmatpush1.msra.mxu0 0.0
        %3000 = vmatprep.subr.mxu0 0.0
        %3001 = vmatpush1.msra.mxu0 0.0
        %3002 = vmatprep.subr.mxu0 0.0
        %3003 = vmatpush1.msra.mxu0 0.0
        %3004 = vmatprep.subr.mxu0 0.0
        %3005 = vmatpush1.msra.mxu0 0.0
        %3006 = vmatprep.subr.mxu0 0.0
        %3007 = vmatpush1.msra.mxu0 0.0
        %3008 = vmatprep.subr.mxu0 0.0
        %3009 = vmatpush1.msra.mxu0 0.0
        %3010 = vmatprep.subr.mxu0 0.0
        %3011 = vmatpush1.msra.mxu0 0.0
        %3012 = vmatprep.subr.mxu0 0.0
        %3013 = vmatpush1.msra.mxu0 0.0
        %3014 = vmatprep.subr.mxu0 0.0
        %3015 = vmatpush1.msra.mxu0 0.0
        %3016 = vmatprep.subr.mxu0 0.0
        %3017 = vmatpush1.msra.mxu0 0.0
        %3018 = vmatprep.subr.mxu0 0.0
        %3019 = vmatpush1.msra.mxu0 0.0
        %3020 = vmatprep.subr.mxu0 0.0
        %3021 = vmatpush1.msra.mxu0 0.0
        %3022 = vmatprep.subr.mxu0 0.0
        %3023 = vmatpush1.msra.mxu0 0.0
        %3024 = vmatprep.subr.mxu0 0.0
        %3025 = vmatpush1.msra.mxu0 0.0
        %3026 = vmatprep.subr.mxu0 0.0
        %3027 = vmatpush1.msra.mxu0 0.0
        %3028 = vmatprep.subr.mxu0 0.0
        %3029 = vmatpush1.msra.mxu0 0.0
        %3030 = vmatprep.subr.mxu0 0.0
        %3031 = vmatpush1.msra.mxu0 0.0
        %3032 = vmatprep.subr.mxu0 0.0
        %3033 = vmatpush1.msra.mxu0 0.0
        %3034 = vmatprep.subr.mxu0 0.0
        %3035 = vmatpush1.msra.mxu0 0.0
        %3036 = vmatprep.subr.mxu0 0.0
        %3037 = vmatpush1.msra.mxu0 0.0
        %3038 = vmatprep.subr.mxu0 0.0
        %3039 = vmatpush1.msra.mxu0 0.0
        %3040 = vmatprep.subr.mxu0 0.0
        %3041 = vmatpush1.msra.mxu0 0.0
        %3042 = vmatprep.subr.mxu0 0.0
        %3043 = vmatpush1.msra.mxu0 0.0
        %3044 = vmatprep.subr.mxu0 0.0
        %3045 = vmatpush1.msra.mxu0 0.0
        %3046 = vmatprep.subr.mxu0 0.0
        %3047 = vmatpush1.msra.mxu0 0.0
        %3048 = vmatprep.subr.mxu0 0.0
        %3049 = vmatpush1.msra.mxu0 0.0
        %3050 = vmatprep.mubr.f32.mxu0 0.0
        %3051 = vmatmul.mubr.f32.gmra.mrb[0].mxu0 %v2981
        %v3052 = vpop.f32.mrb[0].mxu0
        %v3053 = vadd.f32 0.0, %v3052
        %v3054 = vpop.f32.mrb[0].mxu0
        %3055 = vmatprep.mubr.f32.mxu0 0.0
        %3056 = vmatmul.mubr.f32.gmra.mrb[0].mxu0 %v2984
        %v3057 = vpop.f32.mrb[0].mxu0
        %v3058 = vadd.f32 0.0, %v3057
        %v3059 = vpop.f32.mrb[0].mxu0
        %3060 = vdwg.mxu0
        %v3062 = vsel %vm2560, %v2722, 0
        %v3065 = vsel %vm2560, %v2724, 0
        %3067 = vmatprep.subr.mxu0 0.0
        %3068 = vmatpush1.msra.mxu0 %v1547
        %3069 = vmatprep.subr.mxu0 0.0
        %3070 = vmatpush1.msra.mxu0 %v1550
        %3071 = vmatprep.subr.mxu0 0.0
        %3072 = vmatpush1.msra.mxu0 0.0
        %3073 = vmatprep.subr.mxu0 0.0
        %3074 = vmatpush1.msra.mxu0 0.0
        %3075 = vmatprep.subr.mxu0 0.0
        %3076 = vmatpush1.msra.mxu0 0.0
        %3077 = vmatprep.subr.mxu0 0.0
        %3078 = vmatpush1.msra.mxu0 0.0
        %3079 = vmatprep.subr.mxu0 0.0
        %3080 = vmatpush1.msra.mxu0 0.0
        %3081 = vmatprep.subr.mxu0 0.0
        %3082 = vmatpush1.msra.mxu0 0.0
        %3083 = vmatprep.subr.mxu0 0.0
        %3084 = vmatpush1.msra.mxu0 0.0
        %3085 = vmatprep.subr.mxu0 0.0
        %3086 = vmatpush1.msra.mxu0 0.0
        %3087 = vmatprep.subr.mxu0 0.0
        %3088 = vmatpush1.msra.mxu0 0.0
        %3089 = vmatprep.subr.mxu0 0.0
        %3090 = vmatpush1.msra.mxu0 0.0
        %3091 = vmatprep.subr.mxu0 0.0
        %3092 = vmatpush1.msra.mxu0 0.0
        %3093 = vmatprep.subr.mxu0 0.0
        %3094 = vmatpush1.msra.mxu0 0.0
        %3095 = vmatprep.subr.mxu0 0.0
        %3096 = vmatpush1.msra.mxu0 0.0
        %3097 = vmatprep.subr.mxu0 0.0
        %3098 = vmatpush1.msra.mxu0 0.0
        %3099 = vmatprep.subr.mxu0 0.0
        %3100 = vmatpush1.msra.mxu0 0.0
        %3101 = vmatprep.subr.mxu0 0.0
        %3102 = vmatpush1.msra.mxu0 0.0
        %3103 = vmatprep.subr.mxu0 0.0
        %3104 = vmatpush1.msra.mxu0 0.0
        %3105 = vmatprep.subr.mxu0 0.0
        %3106 = vmatpush1.msra.mxu0 0.0
        %3107 = vmatprep.subr.mxu0 0.0
        %3108 = vmatpush1.msra.mxu0 0.0
        %3109 = vmatprep.subr.mxu0 0.0
        %3110 = vmatpush1.msra.mxu0 0.0
        %3111 = vmatprep.subr.mxu0 0.0
        %3112 = vmatpush1.msra.mxu0 0.0
        %3113 = vmatprep.subr.mxu0 0.0
        %3114 = vmatpush1.msra.mxu0 0.0
        %3115 = vmatprep.subr.mxu0 0.0
        %3116 = vmatpush1.msra.mxu0 0.0
        %3117 = vmatprep.subr.mxu0 0.0
        %3118 = vmatpush1.msra.mxu0 0.0
        %3119 = vmatprep.subr.mxu0 0.0
        %3120 = vmatpush1.msra.mxu0 0.0
        %3121 = vmatprep.subr.mxu0 0.0
        %3122 = vmatpush1.msra.mxu0 0.0
        %3123 = vmatprep.subr.mxu0 0.0
        %3124 = vmatpush1.msra.mxu0 0.0
        %3125 = vmatprep.subr.mxu0 0.0
        %3126 = vmatpush1.msra.mxu0 0.0
        %3127 = vmatprep.subr.mxu0 0.0
        %3128 = vmatpush1.msra.mxu0 0.0
        %3129 = vmatprep.subr.mxu0 0.0
        %3130 = vmatpush1.msra.mxu0 0.0
        %3131 = vmatprep.mubr.f32.mxu0 0.0
        %3132 = vmatmul.mubr.f32.gmra.mrb[0].mxu0 %v3062
        %v3133 = vpop.f32.mrb[0].mxu0
        %v3134 = vadd.f32 0.0, %v3133
        %v3135 = vpop.f32.mrb[0].mxu0
        %3136 = vmatprep.mubr.f32.mxu0 0.0
        %3137 = vmatmul.mubr.f32.gmra.mrb[0].mxu0 %v3065
        %v3138 = vpop.f32.mrb[0].mxu0
        %v3139 = vadd.f32 0.0, %v3138
        %v3140 = vpop.f32.mrb[0].mxu0
        %3141 = vdwg.mxu0
        %v3143 = vsel %vm2560, %v2726, 0
        %v3146 = vsel %vm2560, %v2728, 0
        %3148 = vmatprep.subr.mxu0 0.0
        %3149 = vmatpush1.msra.mxu0 %v1555
        %3150 = vmatprep.subr.mxu0 0.0
        %3151 = vmatpush1.msra.mxu0 %v1558
        %3152 = vmatprep.subr.mxu0 0.0
        %3153 = vmatpush1.msra.mxu0 0.0
        %3154 = vmatprep.subr.mxu0 0.0
        %3155 = vmatpush1.msra.mxu0 0.0
        %3156 = vmatprep.subr.mxu0 0.0
        %3157 = vmatpush1.msra.mxu0 0.0
        %3158 = vmatprep.subr.mxu0 0.0
        %3159 = vmatpush1.msra.mxu0 0.0
        %3160 = vmatprep.subr.mxu0 0.0
        %3161 = vmatpush1.msra.mxu0 0.0
        %3162 = vmatprep.subr.mxu0 0.0
        %3163 = vmatpush1.msra.mxu0 0.0
        %3164 = vmatprep.subr.mxu0 0.0
        %3165 = vmatpush1.msra.mxu0 0.0
        %3166 = vmatprep.subr.mxu0 0.0
        %3167 = vmatpush1.msra.mxu0 0.0
        %3168 = vmatprep.subr.mxu0 0.0
        %3169 = vmatpush1.msra.mxu0 0.0
        %3170 = vmatprep.subr.mxu0 0.0
        %3171 = vmatpush1.msra.mxu0 0.0
        %3172 = vmatprep.subr.mxu0 0.0
        %3173 = vmatpush1.msra.mxu0 0.0
        %3174 = vmatprep.subr.mxu0 0.0
        %3175 = vmatpush1.msra.mxu0 0.0
        %3176 = vmatprep.subr.mxu0 0.0
        %3177 = vmatpush1.msra.mxu0 0.0
        %3178 = vmatprep.subr.mxu0 0.0
        %3179 = vmatpush1.msra.mxu0 0.0
        %3180 = vmatprep.subr.mxu0 0.0
        %3181 = vmatpush1.msra.mxu0 0.0
        %3182 = vmatprep.subr.mxu0 0.0
        %3183 = vmatpush1.msra.mxu0 0.0
        %3184 = vmatprep.subr.mxu0 0.0
        %3185 = vmatpush1.msra.mxu0 0.0
        %3186 = vmatprep.subr.mxu0 0.0
        %3187 = vmatpush1.msra.mxu0 0.0
        %3188 = vmatprep.subr.mxu0 0.0
        %3189 = vmatpush1.msra.mxu0 0.0
        %3190 = vmatprep.subr.mxu0 0.0
        %3191 = vmatpush1.msra.mxu0 0.0
        %3192 = vmatprep.subr.mxu0 0.0
        %3193 = vmatpush1.msra.mxu0 0.0
        %3194 = vmatprep.subr.mxu0 0.0
        %3195 = vmatpush1.msra.mxu0 0.0
        %3196 = vmatprep.subr.mxu0 0.0
        %3197 = vmatpush1.msra.mxu0 0.0
        %3198 = vmatprep.subr.mxu0 0.0
        %3199 = vmatpush1.msra.mxu0 0.0
        %3200 = vmatprep.subr.mxu0 0.0
        %3201 = vmatpush1.msra.mxu0 0.0
        %3202 = vmatprep.subr.mxu0 0.0
        %3203 = vmatpush1.msra.mxu0 0.0
        %3204 = vmatprep.subr.mxu0 0.0
        %3205 = vmatpush1.msra.mxu0 0.0
        %3206 = vmatprep.subr.mxu0 0.0
        %3207 = vmatpush1.msra.mxu0 0.0
        %3208 = vmatprep.subr.mxu0 0.0
        %3209 = vmatpush1.msra.mxu0 0.0
        %3210 = vmatprep.subr.mxu0 0.0
        %3211 = vmatpush1.msra.mxu0 0.0
        %3212 = vmatprep.mubr.f32.mxu0 0.0
        %3213 = vmatmul.mubr.f32.gmra.mrb[0].mxu0 %v3143
        %v3214 = vpop.f32.mrb[0].mxu0
        %v3215 = vadd.f32 0.0, %v3214
        %v3216 = vpop.f32.mrb[0].mxu0
        %3217 = vmatprep.mubr.f32.mxu0 0.0
        %3218 = vmatmul.mubr.f32.gmra.mrb[0].mxu0 %v3146
        %v3219 = vpop.f32.mrb[0].mxu0
        %v3220 = vadd.f32 0.0, %v3219
        %v3221 = vpop.f32.mrb[0].mxu0
        %3222 = vdwg.mxu0
        %v3224 = vsel %vm2560, %v2730, 0
        %v3227 = vsel %vm2560, %v2732, 0
        %3229 = vmatprep.subr.mxu0 0.0
        %3230 = vmatpush1.msra.mxu0 %v1563
        %3231 = vmatprep.subr.mxu0 0.0
        %3232 = vmatpush1.msra.mxu0 %v1566
        %3233 = vmatprep.subr.mxu0 0.0
        %3234 = vmatpush1.msra.mxu0 0.0
        %3235 = vmatprep.subr.mxu0 0.0
        %3236 = vmatpush1.msra.mxu0 0.0
        %3237 = vmatprep.subr.mxu0 0.0
        %3238 = vmatpush1.msra.mxu0 0.0
        %3239 = vmatprep.subr.mxu0 0.0
        %3240 = vmatpush1.msra.mxu0 0.0
        %3241 = vmatprep.subr.mxu0 0.0
        %3242 = vmatpush1.msra.mxu0 0.0
        %3243 = vmatprep.subr.mxu0 0.0
        %3244 = vmatpush1.msra.mxu0 0.0
        %3245 = vmatprep.subr.mxu0 0.0
        %3246 = vmatpush1.msra.mxu0 0.0
        %3247 = vmatprep.subr.mxu0 0.0
        %3248 = vmatpush1.msra.mxu0 0.0
        %3249 = vmatprep.subr.mxu0 0.0
        %3250 = vmatpush1.msra.mxu0 0.0
        %3251 = vmatprep.subr.mxu0 0.0
        %3252 = vmatpush1.msra.mxu0 0.0
        %3253 = vmatprep.subr.mxu0 0.0
        %3254 = vmatpush1.msra.mxu0 0.0
        %3255 = vmatprep.subr.mxu0 0.0
        %3256 = vmatpush1.msra.mxu0 0.0
        %3257 = vmatprep.subr.mxu0 0.0
        %3258 = vmatpush1.msra.mxu0 0.0
        %3259 = vmatprep.subr.mxu0 0.0
        %3260 = vmatpush1.msra.mxu0 0.0
        %3261 = vmatprep.subr.mxu0 0.0
        %3262 = vmatpush1.msra.mxu0 0.0
        %3263 = vmatprep.subr.mxu0 0.0
        %3264 = vmatpush1.msra.mxu0 0.0
        %3265 = vmatprep.subr.mxu0 0.0
        %3266 = vmatpush1.msra.mxu0 0.0
        %3267 = vmatprep.subr.mxu0 0.0
        %3268 = vmatpush1.msra.mxu0 0.0
        %3269 = vmatprep.subr.mxu0 0.0
        %3270 = vmatpush1.msra.mxu0 0.0
        %3271 = vmatprep.subr.mxu0 0.0
        %3272 = vmatpush1.msra.mxu0 0.0
        %3273 = vmatprep.subr.mxu0 0.0
        %3274 = vmatpush1.msra.mxu0 0.0
        %3275 = vmatprep.subr.mxu0 0.0
        %3276 = vmatpush1.msra.mxu0 0.0
        %3277 = vmatprep.subr.mxu0 0.0
        %3278 = vmatpush1.msra.mxu0 0.0
        %3279 = vmatprep.subr.mxu0 0.0
        %3280 = vmatpush1.msra.mxu0 0.0
        %3281 = vmatprep.subr.mxu0 0.0
        %3282 = vmatpush1.msra.mxu0 0.0
        %3283 = vmatprep.subr.mxu0 0.0
        %3284 = vmatpush1.msra.mxu0 0.0
        %3285 = vmatprep.subr.mxu0 0.0
        %3286 = vmatpush1.msra.mxu0 0.0
        %3287 = vmatprep.subr.mxu0 0.0
        %3288 = vmatpush1.msra.mxu0 0.0
        %3289 = vmatprep.subr.mxu0 0.0
        %3290 = vmatpush1.msra.mxu0 0.0
        %3291 = vmatprep.subr.mxu0 0.0
        %3292 = vmatpush1.msra.mxu0 0.0
        %3293 = vmatprep.mubr.f32.mxu0 0.0
        %3294 = vmatmul.mubr.f32.gmra.mrb[0].mxu0 %v3224
        %v3295 = vpop.f32.mrb[0].mxu0
        %v3296 = vadd.f32 0.0, %v3295
        %v3297 = vpop.f32.mrb[0].mxu0
        %3298 = vmatprep.mubr.f32.mxu0 0.0
        %3299 = vmatmul.mubr.f32.gmra.mrb[0].mxu0 %v3227
        %v3300 = vpop.f32.mrb[0].mxu0
        %v3301 = vadd.f32 0.0, %v3300
        %v3302 = vpop.f32.mrb[0].mxu0
        %3303 = vdwg.mxu0
        %v3305 = vsel %vm2560, %v2734, 0
        %v3308 = vsel %vm2560, %v2736, 0
        %3310 = vmatprep.subr.mxu0 0.0
        %3311 = vmatpush1.msra.mxu0 %v1571
        %3312 = vmatprep.subr.mxu0 0.0
        %3313 = vmatpush1.msra.mxu0 %v1574
        %3314 = vmatprep.subr.mxu0 0.0
        %3315 = vmatpush1.msra.mxu0 0.0
        %3316 = vmatprep.subr.mxu0 0.0
        %3317 = vmatpush1.msra.mxu0 0.0
        %3318 = vmatprep.subr.mxu0 0.0
        %3319 = vmatpush1.msra.mxu0 0.0
        %3320 = vmatprep.subr.mxu0 0.0
        %3321 = vmatpush1.msra.mxu0 0.0
        %3322 = vmatprep.subr.mxu0 0.0
        %3323 = vmatpush1.msra.mxu0 0.0
        %3324 = vmatprep.subr.mxu0 0.0
        %3325 = vmatpush1.msra.mxu0 0.0
        %3326 = vmatprep.subr.mxu0 0.0
        %3327 = vmatpush1.msra.mxu0 0.0
        %3328 = vmatprep.subr.mxu0 0.0
        %3329 = vmatpush1.msra.mxu0 0.0
        %3330 = vmatprep.subr.mxu0 0.0
        %3331 = vmatpush1.msra.mxu0 0.0
        %3332 = vmatprep.subr.mxu0 0.0
        %3333 = vmatpush1.msra.mxu0 0.0
        %3334 = vmatprep.subr.mxu0 0.0
        %3335 = vmatpush1.msra.mxu0 0.0
        %3336 = vmatprep.subr.mxu0 0.0
        %3337 = vmatpush1.msra.mxu0 0.0
        %3338 = vmatprep.subr.mxu0 0.0
        %3339 = vmatpush1.msra.mxu0 0.0
        %3340 = vmatprep.subr.mxu0 0.0
        %3341 = vmatpush1.msra.mxu0 0.0
        %3342 = vmatprep.subr.mxu0 0.0
        %3343 = vmatpush1.msra.mxu0 0.0
        %3344 = vmatprep.subr.mxu0 0.0
        %3345 = vmatpush1.msra.mxu0 0.0
        %3346 = vmatprep.subr.mxu0 0.0
        %3347 = vmatpush1.msra.mxu0 0.0
        %3348 = vmatprep.subr.mxu0 0.0
        %3349 = vmatpush1.msra.mxu0 0.0
        %3350 = vmatprep.subr.mxu0 0.0
        %3351 = vmatpush1.msra.mxu0 0.0
        %3352 = vmatprep.subr.mxu0 0.0
        %3353 = vmatpush1.msra.mxu0 0.0
        %3354 = vmatprep.subr.mxu0 0.0
        %3355 = vmatpush1.msra.mxu0 0.0
        %3356 = vmatprep.subr.mxu0 0.0
        %3357 = vmatpush1.msra.mxu0 0.0
        %3358 = vmatprep.subr.mxu0 0.0
        %3359 = vmatpush1.msra.mxu0 0.0
        %3360 = vmatprep.subr.mxu0 0.0
        %3361 = vmatpush1.msra.mxu0 0.0
        %3362 = vmatprep.subr.mxu0 0.0
        %3363 = vmatpush1.msra.mxu0 0.0
        %3364 = vmatprep.subr.mxu0 0.0
        %3365 = vmatpush1.msra.mxu0 0.0
        %3366 = vmatprep.subr.mxu0 0.0
        %3367 = vmatpush1.msra.mxu0 0.0
        %3368 = vmatprep.subr.mxu0 0.0
        %3369 = vmatpush1.msra.mxu0 0.0
        %3370 = vmatprep.subr.mxu0 0.0
        %3371 = vmatpush1.msra.mxu0 0.0
        %3372 = vmatprep.subr.mxu0 0.0
        %3373 = vmatpush1.msra.mxu0 0.0
        %3374 = vmatprep.mubr.f32.mxu0 0.0
        %3375 = vmatmul.mubr.f32.gmra.mrb[0].mxu0 %v3305
        %v3376 = vpop.f32.mrb[0].mxu0
        %v3377 = vadd.f32 0.0, %v3376
        %v3378 = vpop.f32.mrb[0].mxu0
        %3379 = vmatprep.mubr.f32.mxu0 0.0
        %3380 = vmatmul.mubr.f32.gmra.mrb[0].mxu0 %v3308
        %v3381 = vpop.f32.mrb[0].mxu0
        %v3382 = vadd.f32 0.0, %v3381
        %v3383 = vpop.f32.mrb[0].mxu0
        %3384 = vdwg.mxu0
        %3385 = vrot.lane.b32.xlu0 %v1712, 96
        %v3386 = vpop.permute.xlu0 %3385
        %3387 = vrot.lane.b32.xlu0 %v1713, 96
        %v3388 = vpop.permute.xlu0 %3387
        %3389 = vrot.lane.b32.xlu0 %v1847, 96
        %v3390 = vpop.permute.xlu0 %3389
        %3391 = vrot.lane.b32.xlu0 %v1848, 96
        %v3392 = vpop.permute.xlu0 %3391
        %v3393 = vsel %vm1863, %v3386, 0
        %v3395 = vsel %vm1863, %v3388, 0
        %v3397 = vsel %vm1863, %v3390, 0
        %v3399 = vsel %vm1863, %v3392, 0
        %3401 = vmatprep.subr.mxu0 0.0
        %3402 = vmatpush1.xpose.msra.mxu0 %v3397
        %3403 = vmatprep.subr.mxu0 0.0
        %3404 = vmatpush1.xpose.msra.mxu0 %v3399
        %3405 = vmatprep.subr.mxu0 0.0
        %3406 = vmatpush1.xpose.msra.mxu0 0.0
        %3407 = vmatprep.subr.mxu0 0.0
        %3408 = vmatpush1.xpose.msra.mxu0 0.0
        %3409 = vmatprep.subr.mxu0 0.0
        %3410 = vmatpush1.xpose.msra.mxu0 0.0
        %3411 = vmatprep.subr.mxu0 0.0
        %3412 = vmatpush1.xpose.msra.mxu0 0.0
        %3413 = vmatprep.subr.mxu0 0.0
        %3414 = vmatpush1.xpose.msra.mxu0 0.0
        %3415 = vmatprep.subr.mxu0 0.0
        %3416 = vmatpush1.xpose.msra.mxu0 0.0
        %3417 = vmatprep.subr.mxu0 0.0
        %3418 = vmatpush1.xpose.msra.mxu0 0.0
        %3419 = vmatprep.subr.mxu0 0.0
        %3420 = vmatpush1.xpose.msra.mxu0 0.0
        %3421 = vmatprep.subr.mxu0 0.0
        %3422 = vmatpush1.xpose.msra.mxu0 0.0
        %3423 = vmatprep.subr.mxu0 0.0
        %3424 = vmatpush1.xpose.msra.mxu0 0.0
        %3425 = vmatprep.subr.mxu0 0.0
        %3426 = vmatpush1.xpose.msra.mxu0 0.0
        %3427 = vmatprep.subr.mxu0 0.0
        %3428 = vmatpush1.xpose.msra.mxu0 0.0
        %3429 = vmatprep.subr.mxu0 0.0
        %3430 = vmatpush1.xpose.msra.mxu0 0.0
        %3431 = vmatprep.subr.mxu0 0.0
        %3432 = vmatpush1.xpose.msra.mxu0 0.0
        %3433 = vmatprep.subr.mxu0 0.0
        %3434 = vmatpush1.xpose.msra.mxu0 0.0
        %3435 = vmatprep.subr.mxu0 0.0
        %3436 = vmatpush1.xpose.msra.mxu0 0.0
        %3437 = vmatprep.subr.mxu0 0.0
        %3438 = vmatpush1.xpose.msra.mxu0 0.0
        %3439 = vmatprep.subr.mxu0 0.0
        %3440 = vmatpush1.xpose.msra.mxu0 0.0
        %3441 = vmatprep.subr.mxu0 0.0
        %3442 = vmatpush1.xpose.msra.mxu0 0.0
        %3443 = vmatprep.subr.mxu0 0.0
        %3444 = vmatpush1.xpose.msra.mxu0 0.0
        %3445 = vmatprep.subr.mxu0 0.0
        %3446 = vmatpush1.xpose.msra.mxu0 0.0
        %3447 = vmatprep.subr.mxu0 0.0
        %3448 = vmatpush1.xpose.msra.mxu0 0.0
        %3449 = vmatprep.subr.mxu0 0.0
        %3450 = vmatpush1.xpose.msra.mxu0 0.0
        %3451 = vmatprep.subr.mxu0 0.0
        %3452 = vmatpush1.xpose.msra.mxu0 0.0
        %3453 = vmatprep.subr.mxu0 0.0
        %3454 = vmatpush1.xpose.msra.mxu0 0.0
        %3455 = vmatprep.subr.mxu0 0.0
        %3456 = vmatpush1.xpose.msra.mxu0 0.0
        %3457 = vmatprep.subr.mxu0 0.0
        %3458 = vmatpush1.xpose.msra.mxu0 0.0
        %3459 = vmatprep.subr.mxu0 0.0
        %3460 = vmatpush1.xpose.msra.mxu0 0.0
        %3461 = vmatprep.subr.mxu0 0.0
        %3462 = vmatpush1.xpose.msra.mxu0 0.0
        %3463 = vmatprep.subr.mxu0 0.0
        %3464 = vmatpush1.xpose.msra.mxu0 0.0
        %3465 = vmatprep.mubr.f32.mxu0 0.0
        %3466 = vmatmul.mubr.f32.gmra.mrb[0].mxu0 %v3393
        %v3467 = vpop.f32.mrb[0].mxu0
        %v3468 = vadd.f32 0.0, %v3467
        %v3469 = vpop.f32.mrb[0].mxu0
        %3470 = vmatprep.mubr.f32.mxu0 0.0
        %3471 = vmatmul.mubr.f32.gmra.mrb[0].mxu0 %v3395
        %v3472 = vpop.f32.mrb[0].mxu0
        %v3473 = vadd.f32 0.0, %v3472
        %v3474 = vpop.f32.mrb[0].mxu0
        %3475 = vdwg.mxu0
        %3476 = vrot.lane.b32.xlu0 %v1714, 96
        %v3477 = vpop.permute.xlu0 %3476
        %3478 = vrot.lane.b32.xlu0 %v1715, 96
        %v3479 = vpop.permute.xlu0 %3478
        %3480 = vrot.lane.b32.xlu0 %v1849, 96
        %v3481 = vpop.permute.xlu0 %3480
        %3482 = vrot.lane.b32.xlu0 %v1850, 96
        %v3483 = vpop.permute.xlu0 %3482
        %v3484 = vsel %vm1863, %v3477, 0
        %v3486 = vsel %vm1863, %v3479, 0
        %v3488 = vsel %vm1863, %v3481, 0
        %v3490 = vsel %vm1863, %v3483, 0
        %3492 = vmatprep.subr.mxu0 0.0
        %3493 = vmatpush1.xpose.msra.mxu0 %v3488
        %3494 = vmatprep.subr.mxu0 0.0
        %3495 = vmatpush1.xpose.msra.mxu0 %v3490
        %3496 = vmatprep.subr.mxu0 0.0
        %3497 = vmatpush1.xpose.msra.mxu0 0.0
        %3498 = vmatprep.subr.mxu0 0.0
        %3499 = vmatpush1.xpose.msra.mxu0 0.0
        %3500 = vmatprep.subr.mxu0 0.0
        %3501 = vmatpush1.xpose.msra.mxu0 0.0
        %3502 = vmatprep.subr.mxu0 0.0
        %3503 = vmatpush1.xpose.msra.mxu0 0.0
        %3504 = vmatprep.subr.mxu0 0.0
        %3505 = vmatpush1.xpose.msra.mxu0 0.0
        %3506 = vmatprep.subr.mxu0 0.0
        %3507 = vmatpush1.xpose.msra.mxu0 0.0
        %3508 = vmatprep.subr.mxu0 0.0
        %3509 = vmatpush1.xpose.msra.mxu0 0.0
        %3510 = vmatprep.subr.mxu0 0.0
        %3511 = vmatpush1.xpose.msra.mxu0 0.0
        %3512 = vmatprep.subr.mxu0 0.0
        %3513 = vmatpush1.xpose.msra.mxu0 0.0
        %3514 = vmatprep.subr.mxu0 0.0
        %3515 = vmatpush1.xpose.msra.mxu0 0.0
        %3516 = vmatprep.subr.mxu0 0.0
        %3517 = vmatpush1.xpose.msra.mxu0 0.0
        %3518 = vmatprep.subr.mxu0 0.0
        %3519 = vmatpush1.xpose.msra.mxu0 0.0
        %3520 = vmatprep.subr.mxu0 0.0
        %3521 = vmatpush1.xpose.msra.mxu0 0.0
        %3522 = vmatprep.subr.mxu0 0.0
        %3523 = vmatpush1.xpose.msra.mxu0 0.0
        %3524 = vmatprep.subr.mxu0 0.0
        %3525 = vmatpush1.xpose.msra.mxu0 0.0
        %3526 = vmatprep.subr.mxu0 0.0
        %3527 = vmatpush1.xpose.msra.mxu0 0.0
        %3528 = vmatprep.subr.mxu0 0.0
        %3529 = vmatpush1.xpose.msra.mxu0 0.0
        %3530 = vmatprep.subr.mxu0 0.0
        %3531 = vmatpush1.xpose.msra.mxu0 0.0
        %3532 = vmatprep.subr.mxu0 0.0
        %3533 = vmatpush1.xpose.msra.mxu0 0.0
        %3534 = vmatprep.subr.mxu0 0.0
        %3535 = vmatpush1.xpose.msra.mxu0 0.0
        %3536 = vmatprep.subr.mxu0 0.0
        %3537 = vmatpush1.xpose.msra.mxu0 0.0
        %3538 = vmatprep.subr.mxu0 0.0
        %3539 = vmatpush1.xpose.msra.mxu0 0.0
        %3540 = vmatprep.subr.mxu0 0.0
        %3541 = vmatpush1.xpose.msra.mxu0 0.0
        %3542 = vmatprep.subr.mxu0 0.0
        %3543 = vmatpush1.xpose.msra.mxu0 0.0
        %3544 = vmatprep.subr.mxu0 0.0
        %3545 = vmatpush1.xpose.msra.mxu0 0.0
        %3546 = vmatprep.subr.mxu0 0.0
        %3547 = vmatpush1.xpose.msra.mxu0 0.0
        %3548 = vmatprep.subr.mxu0 0.0
        %3549 = vmatpush1.xpose.msra.mxu0 0.0
        %3550 = vmatprep.subr.mxu0 0.0
        %3551 = vmatpush1.xpose.msra.mxu0 0.0
        %3552 = vmatprep.subr.mxu0 0.0
        %3553 = vmatpush1.xpose.msra.mxu0 0.0
        %3554 = vmatprep.subr.mxu0 0.0
        %3555 = vmatpush1.xpose.msra.mxu0 0.0
        %3556 = vmatprep.mubr.f32.mxu0 0.0
        %3557 = vmatmul.mubr.f32.gmra.mrb[0].mxu0 %v3484
        %v3558 = vpop.f32.mrb[0].mxu0
        %v3559 = vadd.f32 0.0, %v3558
        %v3560 = vpop.f32.mrb[0].mxu0
        %3561 = vmatprep.mubr.f32.mxu0 0.0
        %3562 = vmatmul.mubr.f32.gmra.mrb[0].mxu0 %v3486
        %v3563 = vpop.f32.mrb[0].mxu0
        %v3564 = vadd.f32 0.0, %v3563
        %v3565 = vpop.f32.mrb[0].mxu0
        %3566 = vdwg.mxu0
        %3567 = vrot.lane.b32.xlu0 %v1716, 96
        %v3568 = vpop.permute.xlu0 %3567
        %3569 = vrot.lane.b32.xlu0 %v1717, 96
        %v3570 = vpop.permute.xlu0 %3569
        %3571 = vrot.lane.b32.xlu0 %v1851, 96
        %v3572 = vpop.permute.xlu0 %3571
        %3573 = vrot.lane.b32.xlu0 %v1852, 96
        %v3574 = vpop.permute.xlu0 %3573
        %v3575 = vsel %vm1863, %v3568, 0
        %v3577 = vsel %vm1863, %v3570, 0
        %v3579 = vsel %vm1863, %v3572, 0
        %v3581 = vsel %vm1863, %v3574, 0
        %3583 = vmatprep.subr.mxu0 0.0
        %3584 = vmatpush1.xpose.msra.mxu0 %v3579
        %3585 = vmatprep.subr.mxu0 0.0
        %3586 = vmatpush1.xpose.msra.mxu0 %v3581
        %3587 = vmatprep.subr.mxu0 0.0
        %3588 = vmatpush1.xpose.msra.mxu0 0.0
        %3589 = vmatprep.subr.mxu0 0.0
        %3590 = vmatpush1.xpose.msra.mxu0 0.0
        %3591 = vmatprep.subr.mxu0 0.0
        %3592 = vmatpush1.xpose.msra.mxu0 0.0
        %3593 = vmatprep.subr.mxu0 0.0
        %3594 = vmatpush1.xpose.msra.mxu0 0.0
        %3595 = vmatprep.subr.mxu0 0.0
        %3596 = vmatpush1.xpose.msra.mxu0 0.0
        %3597 = vmatprep.subr.mxu0 0.0
        %3598 = vmatpush1.xpose.msra.mxu0 0.0
        %3599 = vmatprep.subr.mxu0 0.0
        %3600 = vmatpush1.xpose.msra.mxu0 0.0
        %3601 = vmatprep.subr.mxu0 0.0
        %3602 = vmatpush1.xpose.msra.mxu0 0.0
        %3603 = vmatprep.subr.mxu0 0.0
        %3604 = vmatpush1.xpose.msra.mxu0 0.0
        %3605 = vmatprep.subr.mxu0 0.0
        %3606 = vmatpush1.xpose.msra.mxu0 0.0
        %3607 = vmatprep.subr.mxu0 0.0
        %3608 = vmatpush1.xpose.msra.mxu0 0.0
        %3609 = vmatprep.subr.mxu0 0.0
        %3610 = vmatpush1.xpose.msra.mxu0 0.0
        %3611 = vmatprep.subr.mxu0 0.0
        %3612 = vmatpush1.xpose.msra.mxu0 0.0
        %3613 = vmatprep.subr.mxu0 0.0
        %3614 = vmatpush1.xpose.msra.mxu0 0.0
        %3615 = vmatprep.subr.mxu0 0.0
        %3616 = vmatpush1.xpose.msra.mxu0 0.0
        %3617 = vmatprep.subr.mxu0 0.0
        %3618 = vmatpush1.xpose.msra.mxu0 0.0
        %3619 = vmatprep.subr.mxu0 0.0
        %3620 = vmatpush1.xpose.msra.mxu0 0.0
        %3621 = vmatprep.subr.mxu0 0.0
        %3622 = vmatpush1.xpose.msra.mxu0 0.0
        %3623 = vmatprep.subr.mxu0 0.0
        %3624 = vmatpush1.xpose.msra.mxu0 0.0
        %3625 = vmatprep.subr.mxu0 0.0
        %3626 = vmatpush1.xpose.msra.mxu0 0.0
        %3627 = vmatprep.subr.mxu0 0.0
        %3628 = vmatpush1.xpose.msra.mxu0 0.0
        %3629 = vmatprep.subr.mxu0 0.0
        %3630 = vmatpush1.xpose.msra.mxu0 0.0
        %3631 = vmatprep.subr.mxu0 0.0
        %3632 = vmatpush1.xpose.msra.mxu0 0.0
        %3633 = vmatprep.subr.mxu0 0.0
        %3634 = vmatpush1.xpose.msra.mxu0 0.0
        %3635 = vmatprep.subr.mxu0 0.0
        %3636 = vmatpush1.xpose.msra.mxu0 0.0
        %3637 = vmatprep.subr.mxu0 0.0
        %3638 = vmatpush1.xpose.msra.mxu0 0.0
        %3639 = vmatprep.subr.mxu0 0.0
        %3640 = vmatpush1.xpose.msra.mxu0 0.0
        %3641 = vmatprep.subr.mxu0 0.0
        %3642 = vmatpush1.xpose.msra.mxu0 0.0
        %3643 = vmatprep.subr.mxu0 0.0
        %3644 = vmatpush1.xpose.msra.mxu0 0.0
        %3645 = vmatprep.subr.mxu0 0.0
        %3646 = vmatpush1.xpose.msra.mxu0 0.0
        %3647 = vmatprep.mubr.f32.mxu0 0.0
        %3648 = vmatmul.mubr.f32.gmra.mrb[0].mxu0 %v3575
        %v3649 = vpop.f32.mrb[0].mxu0
        %v3650 = vadd.f32 0.0, %v3649
        %v3651 = vpop.f32.mrb[0].mxu0
        %3652 = vmatprep.mubr.f32.mxu0 0.0
        %3653 = vmatmul.mubr.f32.gmra.mrb[0].mxu0 %v3577
        %v3654 = vpop.f32.mrb[0].mxu0
        %v3655 = vadd.f32 0.0, %v3654
        %v3656 = vpop.f32.mrb[0].mxu0
        %3657 = vdwg.mxu0
        %3658 = vrot.lane.b32.xlu0 %v1718, 96
        %v3659 = vpop.permute.xlu0 %3658
        %3660 = vrot.lane.b32.xlu0 %v1719, 96
        %v3661 = vpop.permute.xlu0 %3660
        %3662 = vrot.lane.b32.xlu0 %v1853, 96
        %v3663 = vpop.permute.xlu0 %3662
        %3664 = vrot.lane.b32.xlu0 %v1854, 96
        %v3665 = vpop.permute.xlu0 %3664
        %v3666 = vsel %vm1863, %v3659, 0
        %v3668 = vsel %vm1863, %v3661, 0
        %v3670 = vsel %vm1863, %v3663, 0
        %v3672 = vsel %vm1863, %v3665, 0
        %3674 = vmatprep.subr.mxu0 0.0
        %3675 = vmatpush1.xpose.msra.mxu0 %v3670
        %3676 = vmatprep.subr.mxu0 0.0
        %3677 = vmatpush1.xpose.msra.mxu0 %v3672
        %3678 = vmatprep.subr.mxu0 0.0
        %3679 = vmatpush1.xpose.msra.mxu0 0.0
        %3680 = vmatprep.subr.mxu0 0.0
        %3681 = vmatpush1.xpose.msra.mxu0 0.0
        %3682 = vmatprep.subr.mxu0 0.0
        %3683 = vmatpush1.xpose.msra.mxu0 0.0
        %3684 = vmatprep.subr.mxu0 0.0
        %3685 = vmatpush1.xpose.msra.mxu0 0.0
        %3686 = vmatprep.subr.mxu0 0.0
        %3687 = vmatpush1.xpose.msra.mxu0 0.0
        %3688 = vmatprep.subr.mxu0 0.0
        %3689 = vmatpush1.xpose.msra.mxu0 0.0
        %3690 = vmatprep.subr.mxu0 0.0
        %3691 = vmatpush1.xpose.msra.mxu0 0.0
        %3692 = vmatprep.subr.mxu0 0.0
        %3693 = vmatpush1.xpose.msra.mxu0 0.0
        %3694 = vmatprep.subr.mxu0 0.0
        %3695 = vmatpush1.xpose.msra.mxu0 0.0
        %3696 = vmatprep.subr.mxu0 0.0
        %3697 = vmatpush1.xpose.msra.mxu0 0.0
        %3698 = vmatprep.subr.mxu0 0.0
        %3699 = vmatpush1.xpose.msra.mxu0 0.0
        %3700 = vmatprep.subr.mxu0 0.0
        %3701 = vmatpush1.xpose.msra.mxu0 0.0
        %3702 = vmatprep.subr.mxu0 0.0
        %3703 = vmatpush1.xpose.msra.mxu0 0.0
        %3704 = vmatprep.subr.mxu0 0.0
        %3705 = vmatpush1.xpose.msra.mxu0 0.0
        %3706 = vmatprep.subr.mxu0 0.0
        %3707 = vmatpush1.xpose.msra.mxu0 0.0
        %3708 = vmatprep.subr.mxu0 0.0
        %3709 = vmatpush1.xpose.msra.mxu0 0.0
        %3710 = vmatprep.subr.mxu0 0.0
        %3711 = vmatpush1.xpose.msra.mxu0 0.0
        %3712 = vmatprep.subr.mxu0 0.0
        %3713 = vmatpush1.xpose.msra.mxu0 0.0
        %3714 = vmatprep.subr.mxu0 0.0
        %3715 = vmatpush1.xpose.msra.mxu0 0.0
        %3716 = vmatprep.subr.mxu0 0.0
        %3717 = vmatpush1.xpose.msra.mxu0 0.0
        %3718 = vmatprep.subr.mxu0 0.0
        %3719 = vmatpush1.xpose.msra.mxu0 0.0
        %3720 = vmatprep.subr.mxu0 0.0
        %3721 = vmatpush1.xpose.msra.mxu0 0.0
        %3722 = vmatprep.subr.mxu0 0.0
        %3723 = vmatpush1.xpose.msra.mxu0 0.0
        %3724 = vmatprep.subr.mxu0 0.0
        %3725 = vmatpush1.xpose.msra.mxu0 0.0
        %3726 = vmatprep.subr.mxu0 0.0
        %3727 = vmatpush1.xpose.msra.mxu0 0.0
        %3728 = vmatprep.subr.mxu0 0.0
        %3729 = vmatpush1.xpose.msra.mxu0 0.0
        %3730 = vmatprep.subr.mxu0 0.0
        %3731 = vmatpush1.xpose.msra.mxu0 0.0
        %3732 = vmatprep.subr.mxu0 0.0
        %3733 = vmatpush1.xpose.msra.mxu0 0.0
        %3734 = vmatprep.subr.mxu0 0.0
        %3735 = vmatpush1.xpose.msra.mxu0 0.0
        %3736 = vmatprep.subr.mxu0 0.0
        %3737 = vmatpush1.xpose.msra.mxu0 0.0
        %3738 = vmatprep.mubr.f32.mxu0 0.0
        %3739 = vmatmul.mubr.f32.gmra.mrb[0].mxu0 %v3666
        %v3740 = vpop.f32.mrb[0].mxu0
        %v3741 = vadd.f32 0.0, %v3740
        %v3742 = vpop.f32.mrb[0].mxu0
        %3743 = vmatprep.mubr.f32.mxu0 0.0
        %3744 = vmatmul.mubr.f32.gmra.mrb[0].mxu0 %v3668
        %v3745 = vpop.f32.mrb[0].mxu0
        %v3746 = vadd.f32 0.0, %v3745
        %v3747 = vpop.f32.mrb[0].mxu0
        %3748 = vdwg.mxu0
        %3749 = vrot.lane.b32.xlu0 %v1720, 96
        %v3750 = vpop.permute.xlu0 %3749
        %3751 = vrot.lane.b32.xlu0 %v1721, 96
        %v3752 = vpop.permute.xlu0 %3751
        %3753 = vrot.lane.b32.xlu0 %v1855, 96
        %v3754 = vpop.permute.xlu0 %3753
        %3755 = vrot.lane.b32.xlu0 %v1856, 96
        %v3756 = vpop.permute.xlu0 %3755
        %v3757 = vsel %vm1863, %v3750, 0
        %v3759 = vsel %vm1863, %v3752, 0
        %v3761 = vsel %vm1863, %v3754, 0
        %v3763 = vsel %vm1863, %v3756, 0
        %3765 = vmatprep.subr.mxu0 0.0
        %3766 = vmatpush1.xpose.msra.mxu0 %v3761
        %3767 = vmatprep.subr.mxu0 0.0
        %3768 = vmatpush1.xpose.msra.mxu0 %v3763
        %3769 = vmatprep.subr.mxu0 0.0
        %3770 = vmatpush1.xpose.msra.mxu0 0.0
        %3771 = vmatprep.subr.mxu0 0.0
        %3772 = vmatpush1.xpose.msra.mxu0 0.0
        %3773 = vmatprep.subr.mxu0 0.0
        %3774 = vmatpush1.xpose.msra.mxu0 0.0
        %3775 = vmatprep.subr.mxu0 0.0
        %3776 = vmatpush1.xpose.msra.mxu0 0.0
        %3777 = vmatprep.subr.mxu0 0.0
        %3778 = vmatpush1.xpose.msra.mxu0 0.0
        %3779 = vmatprep.subr.mxu0 0.0
        %3780 = vmatpush1.xpose.msra.mxu0 0.0
        %3781 = vmatprep.subr.mxu0 0.0
        %3782 = vmatpush1.xpose.msra.mxu0 0.0
        %3783 = vmatprep.subr.mxu0 0.0
        %3784 = vmatpush1.xpose.msra.mxu0 0.0
        %3785 = vmatprep.subr.mxu0 0.0
        %3786 = vmatpush1.xpose.msra.mxu0 0.0
        %3787 = vmatprep.subr.mxu0 0.0
        %3788 = vmatpush1.xpose.msra.mxu0 0.0
        %3789 = vmatprep.subr.mxu0 0.0
        %3790 = vmatpush1.xpose.msra.mxu0 0.0
        %3791 = vmatprep.subr.mxu0 0.0
        %3792 = vmatpush1.xpose.msra.mxu0 0.0
        %3793 = vmatprep.subr.mxu0 0.0
        %3794 = vmatpush1.xpose.msra.mxu0 0.0
        %3795 = vmatprep.subr.mxu0 0.0
        %3796 = vmatpush1.xpose.msra.mxu0 0.0
        %3797 = vmatprep.subr.mxu0 0.0
        %3798 = vmatpush1.xpose.msra.mxu0 0.0
        %3799 = vmatprep.subr.mxu0 0.0
        %3800 = vmatpush1.xpose.msra.mxu0 0.0
        %3801 = vmatprep.subr.mxu0 0.0
        %3802 = vmatpush1.xpose.msra.mxu0 0.0
        %3803 = vmatprep.subr.mxu0 0.0
        %3804 = vmatpush1.xpose.msra.mxu0 0.0
        %3805 = vmatprep.subr.mxu0 0.0
        %3806 = vmatpush1.xpose.msra.mxu0 0.0
        %3807 = vmatprep.subr.mxu0 0.0
        %3808 = vmatpush1.xpose.msra.mxu0 0.0
        %3809 = vmatprep.subr.mxu0 0.0
        %3810 = vmatpush1.xpose.msra.mxu0 0.0
        %3811 = vmatprep.subr.mxu0 0.0
        %3812 = vmatpush1.xpose.msra.mxu0 0.0
        %3813 = vmatprep.subr.mxu0 0.0
        %3814 = vmatpush1.xpose.msra.mxu0 0.0
        %3815 = vmatprep.subr.mxu0 0.0
        %3816 = vmatpush1.xpose.msra.mxu0 0.0
        %3817 = vmatprep.subr.mxu0 0.0
        %3818 = vmatpush1.xpose.msra.mxu0 0.0
        %3819 = vmatprep.subr.mxu0 0.0
        %3820 = vmatpush1.xpose.msra.mxu0 0.0
        %3821 = vmatprep.subr.mxu0 0.0
        %3822 = vmatpush1.xpose.msra.mxu0 0.0
        %3823 = vmatprep.subr.mxu0 0.0
        %3824 = vmatpush1.xpose.msra.mxu0 0.0
        %3825 = vmatprep.subr.mxu0 0.0
        %3826 = vmatpush1.xpose.msra.mxu0 0.0
        %3827 = vmatprep.subr.mxu0 0.0
        %3828 = vmatpush1.xpose.msra.mxu0 0.0
        %3829 = vmatprep.mubr.f32.mxu0 0.0
        %3830 = vmatmul.mubr.f32.gmra.mrb[0].mxu0 %v3757
        %v3831 = vpop.f32.mrb[0].mxu0
        %v3832 = vadd.f32 0.0, %v3831
        %v3833 = vpop.f32.mrb[0].mxu0
        %3834 = vmatprep.mubr.f32.mxu0 0.0
        %3835 = vmatmul.mubr.f32.gmra.mrb[0].mxu0 %v3759
        %v3836 = vpop.f32.mrb[0].mxu0
        %v3837 = vadd.f32 0.0, %v3836
        %v3838 = vpop.f32.mrb[0].mxu0
        %3839 = vdwg.mxu0
        %3840 = vrot.lane.b32.xlu0 %v1722, 96
        %v3841 = vpop.permute.xlu0 %3840
        %3842 = vrot.lane.b32.xlu0 %v1723, 96
        %v3843 = vpop.permute.xlu0 %3842
        %3844 = vrot.lane.b32.xlu0 %v1857, 96
        %v3845 = vpop.permute.xlu0 %3844
        %3846 = vrot.lane.b32.xlu0 %v1858, 96
        %v3847 = vpop.permute.xlu0 %3846
        %v3848 = vsel %vm1863, %v3841, 0
        %v3850 = vsel %vm1863, %v3843, 0
        %v3852 = vsel %vm1863, %v3845, 0
        %v3854 = vsel %vm1863, %v3847, 0
        %3856 = vmatprep.subr.mxu0 0.0
        %3857 = vmatpush1.xpose.msra.mxu0 %v3852
        %3858 = vmatprep.subr.mxu0 0.0
        %3859 = vmatpush1.xpose.msra.mxu0 %v3854
        %3860 = vmatprep.subr.mxu0 0.0
        %3861 = vmatpush1.xpose.msra.mxu0 0.0
        %3862 = vmatprep.subr.mxu0 0.0
        %3863 = vmatpush1.xpose.msra.mxu0 0.0
        %3864 = vmatprep.subr.mxu0 0.0
        %3865 = vmatpush1.xpose.msra.mxu0 0.0
        %3866 = vmatprep.subr.mxu0 0.0
        %3867 = vmatpush1.xpose.msra.mxu0 0.0
        %3868 = vmatprep.subr.mxu0 0.0
        %3869 = vmatpush1.xpose.msra.mxu0 0.0
        %3870 = vmatprep.subr.mxu0 0.0
        %3871 = vmatpush1.xpose.msra.mxu0 0.0
        %3872 = vmatprep.subr.mxu0 0.0
        %3873 = vmatpush1.xpose.msra.mxu0 0.0
        %3874 = vmatprep.subr.mxu0 0.0
        %3875 = vmatpush1.xpose.msra.mxu0 0.0
        %3876 = vmatprep.subr.mxu0 0.0
        %3877 = vmatpush1.xpose.msra.mxu0 0.0
        %3878 = vmatprep.subr.mxu0 0.0
        %3879 = vmatpush1.xpose.msra.mxu0 0.0
        %3880 = vmatprep.subr.mxu0 0.0
        %3881 = vmatpush1.xpose.msra.mxu0 0.0
        %3882 = vmatprep.subr.mxu0 0.0
        %3883 = vmatpush1.xpose.msra.mxu0 0.0
        %3884 = vmatprep.subr.mxu0 0.0
        %3885 = vmatpush1.xpose.msra.mxu0 0.0
        %3886 = vmatprep.subr.mxu0 0.0
        %3887 = vmatpush1.xpose.msra.mxu0 0.0
        %3888 = vmatprep.subr.mxu0 0.0
        %3889 = vmatpush1.xpose.msra.mxu0 0.0
        %3890 = vmatprep.subr.mxu0 0.0
        %3891 = vmatpush1.xpose.msra.mxu0 0.0
        %3892 = vmatprep.subr.mxu0 0.0
        %3893 = vmatpush1.xpose.msra.mxu0 0.0
        %3894 = vmatprep.subr.mxu0 0.0
        %3895 = vmatpush1.xpose.msra.mxu0 0.0
        %3896 = vmatprep.subr.mxu0 0.0
        %3897 = vmatpush1.xpose.msra.mxu0 0.0
        %3898 = vmatprep.subr.mxu0 0.0
        %3899 = vmatpush1.xpose.msra.mxu0 0.0
        %3900 = vmatprep.subr.mxu0 0.0
        %3901 = vmatpush1.xpose.msra.mxu0 0.0
        %3902 = vmatprep.subr.mxu0 0.0
        %3903 = vmatpush1.xpose.msra.mxu0 0.0
        %3904 = vmatprep.subr.mxu0 0.0
        %3905 = vmatpush1.xpose.msra.mxu0 0.0
        %3906 = vmatprep.subr.mxu0 0.0
        %3907 = vmatpush1.xpose.msra.mxu0 0.0
        %3908 = vmatprep.subr.mxu0 0.0
        %3909 = vmatpush1.xpose.msra.mxu0 0.0
        %3910 = vmatprep.subr.mxu0 0.0
        %3911 = vmatpush1.xpose.msra.mxu0 0.0
        %3912 = vmatprep.subr.mxu0 0.0
        %3913 = vmatpush1.xpose.msra.mxu0 0.0
        %3914 = vmatprep.subr.mxu0 0.0
        %3915 = vmatpush1.xpose.msra.mxu0 0.0
        %3916 = vmatprep.subr.mxu0 0.0
        %3917 = vmatpush1.xpose.msra.mxu0 0.0
        %3918 = vmatprep.subr.mxu0 0.0
        %3919 = vmatpush1.xpose.msra.mxu0 0.0
        %3920 = vmatprep.mubr.f32.mxu0 0.0
        %3921 = vmatmul.mubr.f32.gmra.mrb[0].mxu0 %v3848
        %v3922 = vpop.f32.mrb[0].mxu0
        %v3923 = vadd.f32 0.0, %v3922
        %v3924 = vpop.f32.mrb[0].mxu0
        %3925 = vmatprep.mubr.f32.mxu0 0.0
        %3926 = vmatmul.mubr.f32.gmra.mrb[0].mxu0 %v3850
        %v3927 = vpop.f32.mrb[0].mxu0
        %v3928 = vadd.f32 0.0, %v3927
        %v3929 = vpop.f32.mrb[0].mxu0
        %3930 = vdwg.mxu0
        %3931 = vrot.lane.b32.xlu0 %v1724, 96
        %v3932 = vpop.permute.xlu0 %3931
        %3933 = vrot.lane.b32.xlu0 %v1725, 96
        %v3934 = vpop.permute.xlu0 %3933
        %3935 = vrot.lane.b32.xlu0 %v1859, 96
        %v3936 = vpop.permute.xlu0 %3935
        %3937 = vrot.lane.b32.xlu0 %v1860, 96
        %v3938 = vpop.permute.xlu0 %3937
        %v3939 = vsel %vm1863, %v3932, 0
        %v3941 = vsel %vm1863, %v3934, 0
        %v3943 = vsel %vm1863, %v3936, 0
        %v3945 = vsel %vm1863, %v3938, 0
        %3947 = vmatprep.subr.mxu0 0.0
        %3948 = vmatpush1.xpose.msra.mxu0 %v3943
        %3949 = vmatprep.subr.mxu0 0.0
        %3950 = vmatpush1.xpose.msra.mxu0 %v3945
        %3951 = vmatprep.subr.mxu0 0.0
        %3952 = vmatpush1.xpose.msra.mxu0 0.0
        %3953 = vmatprep.subr.mxu0 0.0
        %3954 = vmatpush1.xpose.msra.mxu0 0.0
        %3955 = vmatprep.subr.mxu0 0.0
        %3956 = vmatpush1.xpose.msra.mxu0 0.0
        %3957 = vmatprep.subr.mxu0 0.0
        %3958 = vmatpush1.xpose.msra.mxu0 0.0
        %3959 = vmatprep.subr.mxu0 0.0
        %3960 = vmatpush1.xpose.msra.mxu0 0.0
        %3961 = vmatprep.subr.mxu0 0.0
        %3962 = vmatpush1.xpose.msra.mxu0 0.0
        %3963 = vmatprep.subr.mxu0 0.0
        %3964 = vmatpush1.xpose.msra.mxu0 0.0
        %3965 = vmatprep.subr.mxu0 0.0
        %3966 = vmatpush1.xpose.msra.mxu0 0.0
        %3967 = vmatprep.subr.mxu0 0.0
        %3968 = vmatpush1.xpose.msra.mxu0 0.0
        %3969 = vmatprep.subr.mxu0 0.0
        %3970 = vmatpush1.xpose.msra.mxu0 0.0
        %3971 = vmatprep.subr.mxu0 0.0
        %3972 = vmatpush1.xpose.msra.mxu0 0.0
        %3973 = vmatprep.subr.mxu0 0.0
        %3974 = vmatpush1.xpose.msra.mxu0 0.0
        %3975 = vmatprep.subr.mxu0 0.0
        %3976 = vmatpush1.xpose.msra.mxu0 0.0
        %3977 = vmatprep.subr.mxu0 0.0
        %3978 = vmatpush1.xpose.msra.mxu0 0.0
        %3979 = vmatprep.subr.mxu0 0.0
        %3980 = vmatpush1.xpose.msra.mxu0 0.0
        %3981 = vmatprep.subr.mxu0 0.0
        %3982 = vmatpush1.xpose.msra.mxu0 0.0
        %3983 = vmatprep.subr.mxu0 0.0
        %3984 = vmatpush1.xpose.msra.mxu0 0.0
        %3985 = vmatprep.subr.mxu0 0.0
        %3986 = vmatpush1.xpose.msra.mxu0 0.0
        %3987 = vmatprep.subr.mxu0 0.0
        %3988 = vmatpush1.xpose.msra.mxu0 0.0
        %3989 = vmatprep.subr.mxu0 0.0
        %3990 = vmatpush1.xpose.msra.mxu0 0.0
        %3991 = vmatprep.subr.mxu0 0.0
        %3992 = vmatpush1.xpose.msra.mxu0 0.0
        %3993 = vmatprep.subr.mxu0 0.0
        %3994 = vmatpush1.xpose.msra.mxu0 0.0
        %3995 = vmatprep.subr.mxu0 0.0
        %3996 = vmatpush1.xpose.msra.mxu0 0.0
        %3997 = vmatprep.subr.mxu0 0.0
        %3998 = vmatpush1.xpose.msra.mxu0 0.0
        %3999 = vmatprep.subr.mxu0 0.0
        %4000 = vmatpush1.xpose.msra.mxu0 0.0
        %4001 = vmatprep.subr.mxu0 0.0
        %4002 = vmatpush1.xpose.msra.mxu0 0.0
        %4003 = vmatprep.subr.mxu0 0.0
        %4004 = vmatpush1.xpose.msra.mxu0 0.0
        %4005 = vmatprep.subr.mxu0 0.0
        %4006 = vmatpush1.xpose.msra.mxu0 0.0
        %4007 = vmatprep.subr.mxu0 0.0
        %4008 = vmatpush1.xpose.msra.mxu0 0.0
        %4009 = vmatprep.subr.mxu0 0.0
        %4010 = vmatpush1.xpose.msra.mxu0 0.0
        %4011 = vmatprep.mubr.f32.mxu0 0.0
        %4012 = vmatmul.mubr.f32.gmra.mrb[0].mxu0 %v3939
        %v4013 = vpop.f32.mrb[0].mxu0
        %v4014 = vadd.f32 0.0, %v4013
        %v4015 = vpop.f32.mrb[0].mxu0
        %4016 = vmatprep.mubr.f32.mxu0 0.0
        %4017 = vmatmul.mubr.f32.gmra.mrb[0].mxu0 %v3941
        %v4018 = vpop.f32.mrb[0].mxu0
        %v4019 = vadd.f32 0.0, %v4018
        %v4020 = vpop.f32.mrb[0].mxu0
        %4021 = vdwg.mxu0
        %4022 = vrot.lane.b32.xlu0 %v1726, 96
        %v4023 = vpop.permute.xlu0 %4022
        %4024 = vrot.lane.b32.xlu0 %v1727, 96
        %v4025 = vpop.permute.xlu0 %4024
        %4026 = vrot.lane.b32.xlu0 %v1861, 96
        %v4027 = vpop.permute.xlu0 %4026
        %4028 = vrot.lane.b32.xlu0 %v1862, 96
        %v4029 = vpop.permute.xlu0 %4028
        %v4030 = vsel %vm1863, %v4023, 0
        %v4032 = vsel %vm1863, %v4025, 0
        %v4034 = vsel %vm1863, %v4027, 0
        %v4036 = vsel %vm1863, %v4029, 0
        %4038 = vmatprep.subr.mxu0 0.0
        %4039 = vmatpush1.xpose.msra.mxu0 %v4034
        %4040 = vmatprep.subr.mxu0 0.0
        %4041 = vmatpush1.xpose.msra.mxu0 %v4036
        %4042 = vmatprep.subr.mxu0 0.0
        %4043 = vmatpush1.xpose.msra.mxu0 0.0
        %4044 = vmatprep.subr.mxu0 0.0
        %4045 = vmatpush1.xpose.msra.mxu0 0.0
        %4046 = vmatprep.subr.mxu0 0.0
        %4047 = vmatpush1.xpose.msra.mxu0 0.0
        %4048 = vmatprep.subr.mxu0 0.0
        %4049 = vmatpush1.xpose.msra.mxu0 0.0
        %4050 = vmatprep.subr.mxu0 0.0
        %4051 = vmatpush1.xpose.msra.mxu0 0.0
        %4052 = vmatprep.subr.mxu0 0.0
        %4053 = vmatpush1.xpose.msra.mxu0 0.0
        %4054 = vmatprep.subr.mxu0 0.0
        %4055 = vmatpush1.xpose.msra.mxu0 0.0
        %4056 = vmatprep.subr.mxu0 0.0
        %4057 = vmatpush1.xpose.msra.mxu0 0.0
        %4058 = vmatprep.subr.mxu0 0.0
        %4059 = vmatpush1.xpose.msra.mxu0 0.0
        %4060 = vmatprep.subr.mxu0 0.0
        %4061 = vmatpush1.xpose.msra.mxu0 0.0
        %4062 = vmatprep.subr.mxu0 0.0
        %4063 = vmatpush1.xpose.msra.mxu0 0.0
        %4064 = vmatprep.subr.mxu0 0.0
        %4065 = vmatpush1.xpose.msra.mxu0 0.0
        %4066 = vmatprep.subr.mxu0 0.0
        %4067 = vmatpush1.xpose.msra.mxu0 0.0
        %4068 = vmatprep.subr.mxu0 0.0
        %4069 = vmatpush1.xpose.msra.mxu0 0.0
        %4070 = vmatprep.subr.mxu0 0.0
        %4071 = vmatpush1.xpose.msra.mxu0 0.0
        %4072 = vmatprep.subr.mxu0 0.0
        %4073 = vmatpush1.xpose.msra.mxu0 0.0
        %4074 = vmatprep.subr.mxu0 0.0
        %4075 = vmatpush1.xpose.msra.mxu0 0.0
        %4076 = vmatprep.subr.mxu0 0.0
        %4077 = vmatpush1.xpose.msra.mxu0 0.0
        %4078 = vmatprep.subr.mxu0 0.0
        %4079 = vmatpush1.xpose.msra.mxu0 0.0
        %4080 = vmatprep.subr.mxu0 0.0
        %4081 = vmatpush1.xpose.msra.mxu0 0.0
        %4082 = vmatprep.subr.mxu0 0.0
        %4083 = vmatpush1.xpose.msra.mxu0 0.0
        %4084 = vmatprep.subr.mxu0 0.0
        %4085 = vmatpush1.xpose.msra.mxu0 0.0
        %4086 = vmatprep.subr.mxu0 0.0
        %4087 = vmatpush1.xpose.msra.mxu0 0.0
        %4088 = vmatprep.subr.mxu0 0.0
        %4089 = vmatpush1.xpose.msra.mxu0 0.0
        %4090 = vmatprep.subr.mxu0 0.0
        %4091 = vmatpush1.xpose.msra.mxu0 0.0
        %4092 = vmatprep.subr.mxu0 0.0
        %4093 = vmatpush1.xpose.msra.mxu0 0.0
        %4094 = vmatprep.subr.mxu0 0.0
        %4095 = vmatpush1.xpose.msra.mxu0 0.0
        %4096 = vmatprep.subr.mxu0 0.0
        %4097 = vmatpush1.xpose.msra.mxu0 0.0
        %4098 = vmatprep.subr.mxu0 0.0
        %4099 = vmatpush1.xpose.msra.mxu0 0.0
        %4100 = vmatprep.subr.mxu0 0.0
        %4101 = vmatpush1.xpose.msra.mxu0 0.0
        %4102 = vmatprep.mubr.f32.mxu0 0.0
        %4103 = vmatmul.mubr.f32.gmra.mrb[0].mxu0 %v4030
        %v4104 = vpop.f32.mrb[0].mxu0
        %v4105 = vadd.f32 0.0, %v4104
        %v4106 = vpop.f32.mrb[0].mxu0
        %4107 = vmatprep.mubr.f32.mxu0 0.0
        %4108 = vmatmul.mubr.f32.gmra.mrb[0].mxu0 %v4032
        %v4109 = vpop.f32.mrb[0].mxu0
        %v4110 = vadd.f32 0.0, %v4109
        %v4111 = vpop.f32.mrb[0].mxu0
        %4112 = vdwg.mxu0
        %v4113 = vsel %vm2560, %v3468, -inf
        %4114 = vmax.xlane.f32.xlu0 %v4113
        %v4115 = vpop.xlane.xlu0 %4114
        %v4116 = vsel %vm2560, %v3473, -inf
        %4117 = vmax.xlane.f32.xlu0 %v4116
        %v4118 = vpop.xlane.xlu0 %4117
        %v4119 = vsel %vm2560, %v3559, -inf
        %4120 = vmax.xlane.f32.xlu0 %v4119
        %v4121 = vpop.xlane.xlu0 %4120
        %v4122 = vsel %vm2560, %v3564, -inf
        %4123 = vmax.xlane.f32.xlu0 %v4122
        %v4124 = vpop.xlane.xlu0 %4123
        %v4125 = vsel %vm2560, %v3650, -inf
        %4126 = vmax.xlane.f32.xlu0 %v4125
        %v4127 = vpop.xlane.xlu0 %4126
        %v4128 = vsel %vm2560, %v3655, -inf
        %4129 = vmax.xlane.f32.xlu0 %v4128
        %v4130 = vpop.xlane.xlu0 %4129
        %v4131 = vsel %vm2560, %v3741, -inf
        %4132 = vmax.xlane.f32.xlu0 %v4131
        %v4133 = vpop.xlane.xlu0 %4132
        %v4134 = vsel %vm2560, %v3746, -inf
        %4135 = vmax.xlane.f32.xlu0 %v4134
        %v4136 = vpop.xlane.xlu0 %4135
        %v4137 = vsel %vm2560, %v3832, -inf
        %4138 = vmax.xlane.f32.xlu0 %v4137
        %v4139 = vpop.xlane.xlu0 %4138
        %v4140 = vsel %vm2560, %v3837, -inf
        %4141 = vmax.xlane.f32.xlu0 %v4140
        %v4142 = vpop.xlane.xlu0 %4141
        %v4143 = vsel %vm2560, %v3923, -inf
        %4144 = vmax.xlane.f32.xlu0 %v4143
        %v4145 = vpop.xlane.xlu0 %4144
        %v4146 = vsel %vm2560, %v3928, -inf
        %4147 = vmax.xlane.f32.xlu0 %v4146
        %v4148 = vpop.xlane.xlu0 %4147
        %v4149 = vsel %vm2560, %v4014, -inf
        %4150 = vmax.xlane.f32.xlu0 %v4149
        %v4151 = vpop.xlane.xlu0 %4150
        %v4152 = vsel %vm2560, %v4019, -inf
        %4153 = vmax.xlane.f32.xlu0 %v4152
        %v4154 = vpop.xlane.xlu0 %4153
        %v4155 = vsel %vm2560, %v4105, -inf
        %4156 = vmax.xlane.f32.xlu0 %v4155
        %v4157 = vpop.xlane.xlu0 %4156
        %v4158 = vsel %vm2560, %v4110, -inf
        %4159 = vmax.xlane.f32.xlu0 %v4158
        %v4160 = vpop.xlane.xlu0 %4159
        %v4161 = vsub.f32 %v3468, %v4115
        %v4162 = vsub.f32 %v3473, %v4118
        %v4163 = vsub.f32 %v3559, %v4121
        %v4164 = vsub.f32 %v3564, %v4124
        %v4165 = vsub.f32 %v3650, %v4127
        %v4166 = vsub.f32 %v3655, %v4130
        %v4167 = vsub.f32 %v3741, %v4133
        %v4168 = vsub.f32 %v3746, %v4136
        %v4169 = vsub.f32 %v3832, %v4139
        %v4170 = vsub.f32 %v3837, %v4142
        %v4171 = vsub.f32 %v3923, %v4145
        %v4172 = vsub.f32 %v3928, %v4148
        %v4173 = vsub.f32 %v4014, %v4151
        %v4174 = vsub.f32 %v4019, %v4154
        %v4175 = vsub.f32 %v4105, %v4157
        %v4176 = vsub.f32 %v4110, %v4160
        %v4177 = vmul.f32 %v4161, 1.442695
        %v4178 = vpow.pop %v4177
        %v4179 = vmul.f32 %v4162, 1.442695
        %v4180 = vpow.pop %v4179
        %v4181 = vmul.f32 %v4163, 1.442695
        %v4182 = vpow.pop %v4181
        %v4183 = vmul.f32 %v4164, 1.442695
        %v4184 = vpow.pop %v4183
        %v4185 = vmul.f32 %v4165, 1.442695
        %v4186 = vpow.pop %v4185
        %v4187 = vmul.f32 %v4166, 1.442695
        %v4188 = vpow.pop %v4187
        %v4189 = vmul.f32 %v4167, 1.442695
        %v4190 = vpow.pop %v4189
        %v4191 = vmul.f32 %v4168, 1.442695
        %v4192 = vpow.pop %v4191
        %v4193 = vmul.f32 %v4169, 1.442695
        %v4194 = vpow.pop %v4193
        %v4195 = vmul.f32 %v4170, 1.442695
        %v4196 = vpow.pop %v4195
        %v4197 = vmul.f32 %v4171, 1.442695
        %v4198 = vpow.pop %v4197
        %v4199 = vmul.f32 %v4172, 1.442695
        %v4200 = vpow.pop %v4199
        %v4201 = vmul.f32 %v4173, 1.442695
        %v4202 = vpow.pop %v4201
        %v4203 = vmul.f32 %v4174, 1.442695
        %v4204 = vpow.pop %v4203
        %v4205 = vmul.f32 %v4175, 1.442695
        %v4206 = vpow.pop %v4205
        %v4207 = vmul.f32 %v4176, 1.442695
        %v4208 = vpow.pop %v4207
        %v4209 = vsel %vm2560, %v4178, 0.0
        %4210 = vadd.xlane.f32.xlu0 %v4209
        %v4211 = vpop.xlane.xlu0 %4210
        %v4212 = vsel %vm2560, %v4180, 0.0
        %4213 = vadd.xlane.f32.xlu0 %v4212
        %v4214 = vpop.xlane.xlu0 %4213
        %v4215 = vsel %vm2560, %v4182, 0.0
        %4216 = vadd.xlane.f32.xlu0 %v4215
        %v4217 = vpop.xlane.xlu0 %4216
        %v4218 = vsel %vm2560, %v4184, 0.0
        %4219 = vadd.xlane.f32.xlu0 %v4218
        %v4220 = vpop.xlane.xlu0 %4219
        %v4221 = vsel %vm2560, %v4186, 0.0
        %4222 = vadd.xlane.f32.xlu0 %v4221
        %v4223 = vpop.xlane.xlu0 %4222
        %v4224 = vsel %vm2560, %v4188, 0.0
        %4225 = vadd.xlane.f32.xlu0 %v4224
        %v4226 = vpop.xlane.xlu0 %4225
        %v4227 = vsel %vm2560, %v4190, 0.0
        %4228 = vadd.xlane.f32.xlu0 %v4227
        %v4229 = vpop.xlane.xlu0 %4228
        %v4230 = vsel %vm2560, %v4192, 0.0
        %4231 = vadd.xlane.f32.xlu0 %v4230
        %v4232 = vpop.xlane.xlu0 %4231
        %v4233 = vsel %vm2560, %v4194, 0.0
        %4234 = vadd.xlane.f32.xlu0 %v4233
        %v4235 = vpop.xlane.xlu0 %4234
        %v4236 = vsel %vm2560, %v4196, 0.0
        %4237 = vadd.xlane.f32.xlu0 %v4236
        %v4238 = vpop.xlane.xlu0 %4237
        %v4239 = vsel %vm2560, %v4198, 0.0
        %4240 = vadd.xlane.f32.xlu0 %v4239
        %v4241 = vpop.xlane.xlu0 %4240
        %v4242 = vsel %vm2560, %v4200, 0.0
        %4243 = vadd.xlane.f32.xlu0 %v4242
        %v4244 = vpop.xlane.xlu0 %4243
        %v4245 = vsel %vm2560, %v4202, 0.0
        %4246 = vadd.xlane.f32.xlu0 %v4245
        %v4247 = vpop.xlane.xlu0 %4246
        %v4248 = vsel %vm2560, %v4204, 0.0
        %4249 = vadd.xlane.f32.xlu0 %v4248
        %v4250 = vpop.xlane.xlu0 %4249
        %v4251 = vsel %vm2560, %v4206, 0.0
        %4252 = vadd.xlane.f32.xlu0 %v4251
        %v4253 = vpop.xlane.xlu0 %4252
        %v4254 = vsel %vm2560, %v4208, 0.0
        %4255 = vadd.xlane.f32.xlu0 %v4254
        %v4256 = vpop.xlane.xlu0 %4255
        %v4257 = vrcp.pop %v4211
        %v4258 = vmul.f32 %v4178, %v4257
        %v4259 = vrcp.pop %v4214
        %v4260 = vmul.f32 %v4180, %v4259
        %v4261 = vrcp.pop %v4217
        %v4262 = vmul.f32 %v4182, %v4261
        %v4263 = vrcp.pop %v4220
        %v4264 = vmul.f32 %v4184, %v4263
        %v4265 = vrcp.pop %v4223
        %v4266 = vmul.f32 %v4186, %v4265
        %v4267 = vrcp.pop %v4226
        %v4268 = vmul.f32 %v4188, %v4267
        %v4269 = vrcp.pop %v4229
        %v4270 = vmul.f32 %v4190, %v4269
        %v4271 = vrcp.pop %v4232
        %v4272 = vmul.f32 %v4192, %v4271
        %v4273 = vrcp.pop %v4235
        %v4274 = vmul.f32 %v4194, %v4273
        %v4275 = vrcp.pop %v4238
        %v4276 = vmul.f32 %v4196, %v4275
        %v4277 = vrcp.pop %v4241
        %v4278 = vmul.f32 %v4198, %v4277
        %v4279 = vrcp.pop %v4244
        %v4280 = vmul.f32 %v4200, %v4279
        %v4281 = vrcp.pop %v4247
        %v4282 = vmul.f32 %v4202, %v4281
        %v4283 = vrcp.pop %v4250
        %v4284 = vmul.f32 %v4204, %v4283
        %v4285 = vrcp.pop %v4253
        %v4286 = vmul.f32 %v4206, %v4285
        %v4287 = vrcp.pop %v4256
        %v4288 = vmul.f32 %v4208, %v4287
        %4291 = vrot.lane.b32.xlu0 %v1515, 96
        %v4292 = vpop.permute.xlu0 %4291
        %4293 = vrot.lane.b32.xlu0 %v1518, 96
        %v4294 = vpop.permute.xlu0 %4293
        %v4298 = vsel %vm2560, %v4258, 0
        %v4301 = vsel %vm2560, %v4260, 0
        %4303 = vmatprep.subr.mxu0 0.0
        %4304 = vmatpush1.msra.mxu0 %v4292
        %4305 = vmatprep.subr.mxu0 0.0
        %4306 = vmatpush1.msra.mxu0 %v4294
        %4307 = vmatprep.subr.mxu0 0.0
        %4308 = vmatpush1.msra.mxu0 0.0
        %4309 = vmatprep.subr.mxu0 0.0
        %4310 = vmatpush1.msra.mxu0 0.0
        %4311 = vmatprep.subr.mxu0 0.0
        %4312 = vmatpush1.msra.mxu0 0.0
        %4313 = vmatprep.subr.mxu0 0.0
        %4314 = vmatpush1.msra.mxu0 0.0
        %4315 = vmatprep.subr.mxu0 0.0
        %4316 = vmatpush1.msra.mxu0 0.0
        %4317 = vmatprep.subr.mxu0 0.0
        %4318 = vmatpush1.msra.mxu0 0.0
        %4319 = vmatprep.subr.mxu0 0.0
        %4320 = vmatpush1.msra.mxu0 0.0
        %4321 = vmatprep.subr.mxu0 0.0
        %4322 = vmatpush1.msra.mxu0 0.0
        %4323 = vmatprep.subr.mxu0 0.0
        %4324 = vmatpush1.msra.mxu0 0.0
        %4325 = vmatprep.subr.mxu0 0.0
        %4326 = vmatpush1.msra.mxu0 0.0
        %4327 = vmatprep.subr.mxu0 0.0
        %4328 = vmatpush1.msra.mxu0 0.0
        %4329 = vmatprep.subr.mxu0 0.0
        %4330 = vmatpush1.msra.mxu0 0.0
        %4331 = vmatprep.subr.mxu0 0.0
        %4332 = vmatpush1.msra.mxu0 0.0
        %4333 = vmatprep.subr.mxu0 0.0
        %4334 = vmatpush1.msra.mxu0 0.0
        %4335 = vmatprep.subr.mxu0 0.0
        %4336 = vmatpush1.msra.mxu0 0.0
        %4337 = vmatprep.subr.mxu0 0.0
        %4338 = vmatpush1.msra.mxu0 0.0
        %4339 = vmatprep.subr.mxu0 0.0
        %4340 = vmatpush1.msra.mxu0 0.0
        %4341 = vmatprep.subr.mxu0 0.0
        %4342 = vmatpush1.msra.mxu0 0.0
        %4343 = vmatprep.subr.mxu0 0.0
        %4344 = vmatpush1.msra.mxu0 0.0
        %4345 = vmatprep.subr.mxu0 0.0
        %4346 = vmatpush1.msra.mxu0 0.0
        %4347 = vmatprep.subr.mxu0 0.0
        %4348 = vmatpush1.msra.mxu0 0.0
        %4349 = vmatprep.subr.mxu0 0.0
        %4350 = vmatpush1.msra.mxu0 0.0
        %4351 = vmatprep.subr.mxu0 0.0
        %4352 = vmatpush1.msra.mxu0 0.0
        %4353 = vmatprep.subr.mxu0 0.0
        %4354 = vmatpush1.msra.mxu0 0.0
        %4355 = vmatprep.subr.mxu0 0.0
        %4356 = vmatpush1.msra.mxu0 0.0
        %4357 = vmatprep.subr.mxu0 0.0
        %4358 = vmatpush1.msra.mxu0 0.0
        %4359 = vmatprep.subr.mxu0 0.0
        %4360 = vmatpush1.msra.mxu0 0.0
        %4361 = vmatprep.subr.mxu0 0.0
        %4362 = vmatpush1.msra.mxu0 0.0
        %4363 = vmatprep.subr.mxu0 0.0
        %4364 = vmatpush1.msra.mxu0 0.0
        %4365 = vmatprep.subr.mxu0 0.0
        %4366 = vmatpush1.msra.mxu0 0.0
        %4367 = vmatprep.mubr.f32.mxu0 0.0
        %4368 = vmatmul.mubr.f32.gmra.mrb[0].mxu0 %v4298
        %v4369 = vpop.f32.mrb[0].mxu0
        %v4370 = vadd.f32 0.0, %v4369
        %v4371 = vpop.f32.mrb[0].mxu0
        %4372 = vmatprep.mubr.f32.mxu0 0.0
        %4373 = vmatmul.mubr.f32.gmra.mrb[0].mxu0 %v4301
        %v4374 = vpop.f32.mrb[0].mxu0
        %v4375 = vadd.f32 0.0, %v4374
        %v4376 = vpop.f32.mrb[0].mxu0
        %4377 = vdwg.mxu0
        %4380 = vrot.lane.b32.xlu0 %v1523, 96
        %v4381 = vpop.permute.xlu0 %4380
        %4382 = vrot.lane.b32.xlu0 %v1526, 96
        %v4383 = vpop.permute.xlu0 %4382
        %v4387 = vsel %vm2560, %v4262, 0
        %v4390 = vsel %vm2560, %v4264, 0
        %4392 = vmatprep.subr.mxu0 0.0
        %4393 = vmatpush1.msra.mxu0 %v4381
        %4394 = vmatprep.subr.mxu0 0.0
        %4395 = vmatpush1.msra.mxu0 %v4383
        %4396 = vmatprep.subr.mxu0 0.0
        %4397 = vmatpush1.msra.mxu0 0.0
        %4398 = vmatprep.subr.mxu0 0.0
        %4399 = vmatpush1.msra.mxu0 0.0
        %4400 = vmatprep.subr.mxu0 0.0
        %4401 = vmatpush1.msra.mxu0 0.0
        %4402 = vmatprep.subr.mxu0 0.0
        %4403 = vmatpush1.msra.mxu0 0.0
        %4404 = vmatprep.subr.mxu0 0.0
        %4405 = vmatpush1.msra.mxu0 0.0
        %4406 = vmatprep.subr.mxu0 0.0
        %4407 = vmatpush1.msra.mxu0 0.0
        %4408 = vmatprep.subr.mxu0 0.0
        %4409 = vmatpush1.msra.mxu0 0.0
        %4410 = vmatprep.subr.mxu0 0.0
        %4411 = vmatpush1.msra.mxu0 0.0
        %4412 = vmatprep.subr.mxu0 0.0
        %4413 = vmatpush1.msra.mxu0 0.0
        %4414 = vmatprep.subr.mxu0 0.0
        %4415 = vmatpush1.msra.mxu0 0.0
        %4416 = vmatprep.subr.mxu0 0.0
        %4417 = vmatpush1.msra.mxu0 0.0
        %4418 = vmatprep.subr.mxu0 0.0
        %4419 = vmatpush1.msra.mxu0 0.0
        %4420 = vmatprep.subr.mxu0 0.0
        %4421 = vmatpush1.msra.mxu0 0.0
        %4422 = vmatprep.subr.mxu0 0.0
        %4423 = vmatpush1.msra.mxu0 0.0
        %4424 = vmatprep.subr.mxu0 0.0
        %4425 = vmatpush1.msra.mxu0 0.0
        %4426 = vmatprep.subr.mxu0 0.0
        %4427 = vmatpush1.msra.mxu0 0.0
        %4428 = vmatprep.subr.mxu0 0.0
        %4429 = vmatpush1.msra.mxu0 0.0
        %4430 = vmatprep.subr.mxu0 0.0
        %4431 = vmatpush1.msra.mxu0 0.0
        %4432 = vmatprep.subr.mxu0 0.0
        %4433 = vmatpush1.msra.mxu0 0.0
        %4434 = vmatprep.subr.mxu0 0.0
        %4435 = vmatpush1.msra.mxu0 0.0
        %4436 = vmatprep.subr.mxu0 0.0
        %4437 = vmatpush1.msra.mxu0 0.0
        %4438 = vmatprep.subr.mxu0 0.0
        %4439 = vmatpush1.msra.mxu0 0.0
        %4440 = vmatprep.subr.mxu0 0.0
        %4441 = vmatpush1.msra.mxu0 0.0
        %4442 = vmatprep.subr.mxu0 0.0
        %4443 = vmatpush1.msra.mxu0 0.0
        %4444 = vmatprep.subr.mxu0 0.0
        %4445 = vmatpush1.msra.mxu0 0.0
        %4446 = vmatprep.subr.mxu0 0.0
        %4447 = vmatpush1.msra.mxu0 0.0
        %4448 = vmatprep.subr.mxu0 0.0
        %4449 = vmatpush1.msra.mxu0 0.0
        %4450 = vmatprep.subr.mxu0 0.0
        %4451 = vmatpush1.msra.mxu0 0.0
        %4452 = vmatprep.subr.mxu0 0.0
        %4453 = vmatpush1.msra.mxu0 0.0
        %4454 = vmatprep.subr.mxu0 0.0
        %4455 = vmatpush1.msra.mxu0 0.0
        %4456 = vmatprep.mubr.f32.mxu0 0.0
        %4457 = vmatmul.mubr.f32.gmra.mrb[0].mxu0 %v4387
        %v4458 = vpop.f32.mrb[0].mxu0
        %v4459 = vadd.f32 0.0, %v4458
        %v4460 = vpop.f32.mrb[0].mxu0
        %4461 = vmatprep.mubr.f32.mxu0 0.0
        %4462 = vmatmul.mubr.f32.gmra.mrb[0].mxu0 %v4390
        %v4463 = vpop.f32.mrb[0].mxu0
        %v4464 = vadd.f32 0.0, %v4463
        %v4465 = vpop.f32.mrb[0].mxu0
        %4466 = vdwg.mxu0
        %4469 = vrot.lane.b32.xlu0 %v1531, 96
        %v4470 = vpop.permute.xlu0 %4469
        %4471 = vrot.lane.b32.xlu0 %v1534, 96
        %v4472 = vpop.permute.xlu0 %4471
        %v4476 = vsel %vm2560, %v4266, 0
        %v4479 = vsel %vm2560, %v4268, 0
        %4481 = vmatprep.subr.mxu0 0.0
        %4482 = vmatpush1.msra.mxu0 %v4470
        %4483 = vmatprep.subr.mxu0 0.0
        %4484 = vmatpush1.msra.mxu0 %v4472
        %4485 = vmatprep.subr.mxu0 0.0
        %4486 = vmatpush1.msra.mxu0 0.0
        %4487 = vmatprep.subr.mxu0 0.0
        %4488 = vmatpush1.msra.mxu0 0.0
        %4489 = vmatprep.subr.mxu0 0.0
        %4490 = vmatpush1.msra.mxu0 0.0
        %4491 = vmatprep.subr.mxu0 0.0
        %4492 = vmatpush1.msra.mxu0 0.0
        %4493 = vmatprep.subr.mxu0 0.0
        %4494 = vmatpush1.msra.mxu0 0.0
        %4495 = vmatprep.subr.mxu0 0.0
        %4496 = vmatpush1.msra.mxu0 0.0
        %4497 = vmatprep.subr.mxu0 0.0
        %4498 = vmatpush1.msra.mxu0 0.0
        %4499 = vmatprep.subr.mxu0 0.0
        %4500 = vmatpush1.msra.mxu0 0.0
        %4501 = vmatprep.subr.mxu0 0.0
        %4502 = vmatpush1.msra.mxu0 0.0
        %4503 = vmatprep.subr.mxu0 0.0
        %4504 = vmatpush1.msra.mxu0 0.0
        %4505 = vmatprep.subr.mxu0 0.0
        %4506 = vmatpush1.msra.mxu0 0.0
        %4507 = vmatprep.subr.mxu0 0.0
        %4508 = vmatpush1.msra.mxu0 0.0
        %4509 = vmatprep.subr.mxu0 0.0
        %4510 = vmatpush1.msra.mxu0 0.0
        %4511 = vmatprep.subr.mxu0 0.0
        %4512 = vmatpush1.msra.mxu0 0.0
        %4513 = vmatprep.subr.mxu0 0.0
        %4514 = vmatpush1.msra.mxu0 0.0
        %4515 = vmatprep.subr.mxu0 0.0
        %4516 = vmatpush1.msra.mxu0 0.0
        %4517 = vmatprep.subr.mxu0 0.0
        %4518 = vmatpush1.msra.mxu0 0.0
        %4519 = vmatprep.subr.mxu0 0.0
        %4520 = vmatpush1.msra.mxu0 0.0
        %4521 = vmatprep.subr.mxu0 0.0
        %4522 = vmatpush1.msra.mxu0 0.0
        %4523 = vmatprep.subr.mxu0 0.0
        %4524 = vmatpush1.msra.mxu0 0.0
        %4525 = vmatprep.subr.mxu0 0.0
        %4526 = vmatpush1.msra.mxu0 0.0
        %4527 = vmatprep.subr.mxu0 0.0
        %4528 = vmatpush1.msra.mxu0 0.0
        %4529 = vmatprep.subr.mxu0 0.0
        %4530 = vmatpush1.msra.mxu0 0.0
        %4531 = vmatprep.subr.mxu0 0.0
        %4532 = vmatpush1.msra.mxu0 0.0
        %4533 = vmatprep.subr.mxu0 0.0
        %4534 = vmatpush1.msra.mxu0 0.0
        %4535 = vmatprep.subr.mxu0 0.0
        %4536 = vmatpush1.msra.mxu0 0.0
        %4537 = vmatprep.subr.mxu0 0.0
        %4538 = vmatpush1.msra.mxu0 0.0
        %4539 = vmatprep.subr.mxu0 0.0
        %4540 = vmatpush1.msra.mxu0 0.0
        %4541 = vmatprep.subr.mxu0 0.0
        %4542 = vmatpush1.msra.mxu0 0.0
        %4543 = vmatprep.subr.mxu0 0.0
        %4544 = vmatpush1.msra.mxu0 0.0
        %4545 = vmatprep.mubr.f32.mxu0 0.0
        %4546 = vmatmul.mubr.f32.gmra.mrb[0].mxu0 %v4476
        %v4547 = vpop.f32.mrb[0].mxu0
        %v4548 = vadd.f32 0.0, %v4547
        %v4549 = vpop.f32.mrb[0].mxu0
        %4550 = vmatprep.mubr.f32.mxu0 0.0
        %4551 = vmatmul.mubr.f32.gmra.mrb[0].mxu0 %v4479
        %v4552 = vpop.f32.mrb[0].mxu0
        %v4553 = vadd.f32 0.0, %v4552
        %v4554 = vpop.f32.mrb[0].mxu0
        %4555 = vdwg.mxu0
        %4558 = vrot.lane.b32.xlu0 %v1539, 96
        %v4559 = vpop.permute.xlu0 %4558
        %4560 = vrot.lane.b32.xlu0 %v1542, 96
        %v4561 = vpop.permute.xlu0 %4560
        %v4565 = vsel %vm2560, %v4270, 0
        %v4568 = vsel %vm2560, %v4272, 0
        %4570 = vmatprep.subr.mxu0 0.0
        %4571 = vmatpush1.msra.mxu0 %v4559
        %4572 = vmatprep.subr.mxu0 0.0
        %4573 = vmatpush1.msra.mxu0 %v4561
        %4574 = vmatprep.subr.mxu0 0.0
        %4575 = vmatpush1.msra.mxu0 0.0
        %4576 = vmatprep.subr.mxu0 0.0
        %4577 = vmatpush1.msra.mxu0 0.0
        %4578 = vmatprep.subr.mxu0 0.0
        %4579 = vmatpush1.msra.mxu0 0.0
        %4580 = vmatprep.subr.mxu0 0.0
        %4581 = vmatpush1.msra.mxu0 0.0
        %4582 = vmatprep.subr.mxu0 0.0
        %4583 = vmatpush1.msra.mxu0 0.0
        %4584 = vmatprep.subr.mxu0 0.0
        %4585 = vmatpush1.msra.mxu0 0.0
        %4586 = vmatprep.subr.mxu0 0.0
        %4587 = vmatpush1.msra.mxu0 0.0
        %4588 = vmatprep.subr.mxu0 0.0
        %4589 = vmatpush1.msra.mxu0 0.0
        %4590 = vmatprep.subr.mxu0 0.0
        %4591 = vmatpush1.msra.mxu0 0.0
        %4592 = vmatprep.subr.mxu0 0.0
        %4593 = vmatpush1.msra.mxu0 0.0
        %4594 = vmatprep.subr.mxu0 0.0
        %4595 = vmatpush1.msra.mxu0 0.0
        %4596 = vmatprep.subr.mxu0 0.0
        %4597 = vmatpush1.msra.mxu0 0.0
        %4598 = vmatprep.subr.mxu0 0.0
        %4599 = vmatpush1.msra.mxu0 0.0
        %4600 = vmatprep.subr.mxu0 0.0
        %4601 = vmatpush1.msra.mxu0 0.0
        %4602 = vmatprep.subr.mxu0 0.0
        %4603 = vmatpush1.msra.mxu0 0.0
        %4604 = vmatprep.subr.mxu0 0.0
        %4605 = vmatpush1.msra.mxu0 0.0
        %4606 = vmatprep.subr.mxu0 0.0
        %4607 = vmatpush1.msra.mxu0 0.0
        %4608 = vmatprep.subr.mxu0 0.0
        %4609 = vmatpush1.msra.mxu0 0.0
        %4610 = vmatprep.subr.mxu0 0.0
        %4611 = vmatpush1.msra.mxu0 0.0
        %4612 = vmatprep.subr.mxu0 0.0
        %4613 = vmatpush1.msra.mxu0 0.0
        %4614 = vmatprep.subr.mxu0 0.0
        %4615 = vmatpush1.msra.mxu0 0.0
        %4616 = vmatprep.subr.mxu0 0.0
        %4617 = vmatpush1.msra.mxu0 0.0
        %4618 = vmatprep.subr.mxu0 0.0
        %4619 = vmatpush1.msra.mxu0 0.0
        %4620 = vmatprep.subr.mxu0 0.0
        %4621 = vmatpush1.msra.mxu0 0.0
        %4622 = vmatprep.subr.mxu0 0.0
        %4623 = vmatpush1.msra.mxu0 0.0
        %4624 = vmatprep.subr.mxu0 0.0
        %4625 = vmatpush1.msra.mxu0 0.0
        %4626 = vmatprep.subr.mxu0 0.0
        %4627 = vmatpush1.msra.mxu0 0.0
        %4628 = vmatprep.subr.mxu0 0.0
        %4629 = vmatpush1.msra.mxu0 0.0
        %4630 = vmatprep.subr.mxu0 0.0
        %4631 = vmatpush1.msra.mxu0 0.0
        %4632 = vmatprep.subr.mxu0 0.0
        %4633 = vmatpush1.msra.mxu0 0.0
        %4634 = vmatprep.mubr.f32.mxu0 0.0
        %4635 = vmatmul.mubr.f32.gmra.mrb[0].mxu0 %v4565
        %v4636 = vpop.f32.mrb[0].mxu0
        %v4637 = vadd.f32 0.0, %v4636
        %v4638 = vpop.f32.mrb[0].mxu0
        %4639 = vmatprep.mubr.f32.mxu0 0.0
        %4640 = vmatmul.mubr.f32.gmra.mrb[0].mxu0 %v4568
        %v4641 = vpop.f32.mrb[0].mxu0
        %v4642 = vadd.f32 0.0, %v4641
        %v4643 = vpop.f32.mrb[0].mxu0
        %4644 = vdwg.mxu0
        %4647 = vrot.lane.b32.xlu0 %v1547, 96
        %v4648 = vpop.permute.xlu0 %4647
        %4649 = vrot.lane.b32.xlu0 %v1550, 96
        %v4650 = vpop.permute.xlu0 %4649
        %v4654 = vsel %vm2560, %v4274, 0
        %v4657 = vsel %vm2560, %v4276, 0
        %4659 = vmatprep.subr.mxu0 0.0
        %4660 = vmatpush1.msra.mxu0 %v4648
        %4661 = vmatprep.subr.mxu0 0.0
        %4662 = vmatpush1.msra.mxu0 %v4650
        %4663 = vmatprep.subr.mxu0 0.0
        %4664 = vmatpush1.msra.mxu0 0.0
        %4665 = vmatprep.subr.mxu0 0.0
        %4666 = vmatpush1.msra.mxu0 0.0
        %4667 = vmatprep.subr.mxu0 0.0
        %4668 = vmatpush1.msra.mxu0 0.0
        %4669 = vmatprep.subr.mxu0 0.0
        %4670 = vmatpush1.msra.mxu0 0.0
        %4671 = vmatprep.subr.mxu0 0.0
        %4672 = vmatpush1.msra.mxu0 0.0
        %4673 = vmatprep.subr.mxu0 0.0
        %4674 = vmatpush1.msra.mxu0 0.0
        %4675 = vmatprep.subr.mxu0 0.0
        %4676 = vmatpush1.msra.mxu0 0.0
        %4677 = vmatprep.subr.mxu0 0.0
        %4678 = vmatpush1.msra.mxu0 0.0
        %4679 = vmatprep.subr.mxu0 0.0
        %4680 = vmatpush1.msra.mxu0 0.0
        %4681 = vmatprep.subr.mxu0 0.0
        %4682 = vmatpush1.msra.mxu0 0.0
        %4683 = vmatprep.subr.mxu0 0.0
        %4684 = vmatpush1.msra.mxu0 0.0
        %4685 = vmatprep.subr.mxu0 0.0
        %4686 = vmatpush1.msra.mxu0 0.0
        %4687 = vmatprep.subr.mxu0 0.0
        %4688 = vmatpush1.msra.mxu0 0.0
        %4689 = vmatprep.subr.mxu0 0.0
        %4690 = vmatpush1.msra.mxu0 0.0
        %4691 = vmatprep.subr.mxu0 0.0
        %4692 = vmatpush1.msra.mxu0 0.0
        %4693 = vmatprep.subr.mxu0 0.0
        %4694 = vmatpush1.msra.mxu0 0.0
        %4695 = vmatprep.subr.mxu0 0.0
        %4696 = vmatpush1.msra.mxu0 0.0
        %4697 = vmatprep.subr.mxu0 0.0
        %4698 = vmatpush1.msra.mxu0 0.0
        %4699 = vmatprep.subr.mxu0 0.0
        %4700 = vmatpush1.msra.mxu0 0.0
        %4701 = vmatprep.subr.mxu0 0.0
        %4702 = vmatpush1.msra.mxu0 0.0
        %4703 = vmatprep.subr.mxu0 0.0
        %4704 = vmatpush1.msra.mxu0 0.0
        %4705 = vmatprep.subr.mxu0 0.0
        %4706 = vmatpush1.msra.mxu0 0.0
        %4707 = vmatprep.subr.mxu0 0.0
        %4708 = vmatpush1.msra.mxu0 0.0
        %4709 = vmatprep.subr.mxu0 0.0
        %4710 = vmatpush1.msra.mxu0 0.0
        %4711 = vmatprep.subr.mxu0 0.0
        %4712 = vmatpush1.msra.mxu0 0.0
        %4713 = vmatprep.subr.mxu0 0.0
        %4714 = vmatpush1.msra.mxu0 0.0
        %4715 = vmatprep.subr.mxu0 0.0
        %4716 = vmatpush1.msra.mxu0 0.0
        %4717 = vmatprep.subr.mxu0 0.0
        %4718 = vmatpush1.msra.mxu0 0.0
        %4719 = vmatprep.subr.mxu0 0.0
        %4720 = vmatpush1.msra.mxu0 0.0
        %4721 = vmatprep.subr.mxu0 0.0
        %4722 = vmatpush1.msra.mxu0 0.0
        %4723 = vmatprep.mubr.f32.mxu0 0.0
        %4724 = vmatmul.mubr.f32.gmra.mrb[0].mxu0 %v4654
        %v4725 = vpop.f32.mrb[0].mxu0
        %v4726 = vadd.f32 0.0, %v4725
        %v4727 = vpop.f32.mrb[0].mxu0
        %4728 = vmatprep.mubr.f32.mxu0 0.0
        %4729 = vmatmul.mubr.f32.gmra.mrb[0].mxu0 %v4657
        %v4730 = vpop.f32.mrb[0].mxu0
        %v4731 = vadd.f32 0.0, %v4730
        %v4732 = vpop.f32.mrb[0].mxu0
        %4733 = vdwg.mxu0
        %4736 = vrot.lane.b32.xlu0 %v1555, 96
        %v4737 = vpop.permute.xlu0 %4736
        %4738 = vrot.lane.b32.xlu0 %v1558, 96
        %v4739 = vpop.permute.xlu0 %4738
        %v4743 = vsel %vm2560, %v4278, 0
        %v4746 = vsel %vm2560, %v4280, 0
        %4748 = vmatprep.subr.mxu0 0.0
        %4749 = vmatpush1.msra.mxu0 %v4737
        %4750 = vmatprep.subr.mxu0 0.0
        %4751 = vmatpush1.msra.mxu0 %v4739
        %4752 = vmatprep.subr.mxu0 0.0
        %4753 = vmatpush1.msra.mxu0 0.0
        %4754 = vmatprep.subr.mxu0 0.0
        %4755 = vmatpush1.msra.mxu0 0.0
        %4756 = vmatprep.subr.mxu0 0.0
        %4757 = vmatpush1.msra.mxu0 0.0
        %4758 = vmatprep.subr.mxu0 0.0
        %4759 = vmatpush1.msra.mxu0 0.0
        %4760 = vmatprep.subr.mxu0 0.0
        %4761 = vmatpush1.msra.mxu0 0.0
        %4762 = vmatprep.subr.mxu0 0.0
        %4763 = vmatpush1.msra.mxu0 0.0
        %4764 = vmatprep.subr.mxu0 0.0
        %4765 = vmatpush1.msra.mxu0 0.0
        %4766 = vmatprep.subr.mxu0 0.0
        %4767 = vmatpush1.msra.mxu0 0.0
        %4768 = vmatprep.subr.mxu0 0.0
        %4769 = vmatpush1.msra.mxu0 0.0
        %4770 = vmatprep.subr.mxu0 0.0
        %4771 = vmatpush1.msra.mxu0 0.0
        %4772 = vmatprep.subr.mxu0 0.0
        %4773 = vmatpush1.msra.mxu0 0.0
        %4774 = vmatprep.subr.mxu0 0.0
        %4775 = vmatpush1.msra.mxu0 0.0
        %4776 = vmatprep.subr.mxu0 0.0
        %4777 = vmatpush1.msra.mxu0 0.0
        %4778 = vmatprep.subr.mxu0 0.0
        %4779 = vmatpush1.msra.mxu0 0.0
        %4780 = vmatprep.subr.mxu0 0.0
        %4781 = vmatpush1.msra.mxu0 0.0
        %4782 = vmatprep.subr.mxu0 0.0
        %4783 = vmatpush1.msra.mxu0 0.0
        %4784 = vmatprep.subr.mxu0 0.0
        %4785 = vmatpush1.msra.mxu0 0.0
        %4786 = vmatprep.subr.mxu0 0.0
        %4787 = vmatpush1.msra.mxu0 0.0
        %4788 = vmatprep.subr.mxu0 0.0
        %4789 = vmatpush1.msra.mxu0 0.0
        %4790 = vmatprep.subr.mxu0 0.0
        %4791 = vmatpush1.msra.mxu0 0.0
        %4792 = vmatprep.subr.mxu0 0.0
        %4793 = vmatpush1.msra.mxu0 0.0
        %4794 = vmatprep.subr.mxu0 0.0
        %4795 = vmatpush1.msra.mxu0 0.0
        %4796 = vmatprep.subr.mxu0 0.0
        %4797 = vmatpush1.msra.mxu0 0.0
        %4798 = vmatprep.subr.mxu0 0.0
        %4799 = vmatpush1.msra.mxu0 0.0
        %4800 = vmatprep.subr.mxu0 0.0
        %4801 = vmatpush1.msra.mxu0 0.0
        %4802 = vmatprep.subr.mxu0 0.0
        %4803 = vmatpush1.msra.mxu0 0.0
        %4804 = vmatprep.subr.mxu0 0.0
        %4805 = vmatpush1.msra.mxu0 0.0
        %4806 = vmatprep.subr.mxu0 0.0
        %4807 = vmatpush1.msra.mxu0 0.0
        %4808 = vmatprep.subr.mxu0 0.0
        %4809 = vmatpush1.msra.mxu0 0.0
        %4810 = vmatprep.subr.mxu0 0.0
        %4811 = vmatpush1.msra.mxu0 0.0
        %4812 = vmatprep.mubr.f32.mxu0 0.0
        %4813 = vmatmul.mubr.f32.gmra.mrb[0].mxu0 %v4743
        %v4814 = vpop.f32.mrb[0].mxu0
        %v4815 = vadd.f32 0.0, %v4814
        %v4816 = vpop.f32.mrb[0].mxu0
        %4817 = vmatprep.mubr.f32.mxu0 0.0
        %4818 = vmatmul.mubr.f32.gmra.mrb[0].mxu0 %v4746
        %v4819 = vpop.f32.mrb[0].mxu0
        %v4820 = vadd.f32 0.0, %v4819
        %v4821 = vpop.f32.mrb[0].mxu0
        %4822 = vdwg.mxu0
        %4825 = vrot.lane.b32.xlu0 %v1563, 96
        %v4826 = vpop.permute.xlu0 %4825
        %4827 = vrot.lane.b32.xlu0 %v1566, 96
        %v4828 = vpop.permute.xlu0 %4827
        %v4832 = vsel %vm2560, %v4282, 0
        %v4835 = vsel %vm2560, %v4284, 0
        %4837 = vmatprep.subr.mxu0 0.0
        %4838 = vmatpush1.msra.mxu0 %v4826
        %4839 = vmatprep.subr.mxu0 0.0
        %4840 = vmatpush1.msra.mxu0 %v4828
        %4841 = vmatprep.subr.mxu0 0.0
        %4842 = vmatpush1.msra.mxu0 0.0
        %4843 = vmatprep.subr.mxu0 0.0
        %4844 = vmatpush1.msra.mxu0 0.0
        %4845 = vmatprep.subr.mxu0 0.0
        %4846 = vmatpush1.msra.mxu0 0.0
        %4847 = vmatprep.subr.mxu0 0.0
        %4848 = vmatpush1.msra.mxu0 0.0
        %4849 = vmatprep.subr.mxu0 0.0
        %4850 = vmatpush1.msra.mxu0 0.0
        %4851 = vmatprep.subr.mxu0 0.0
        %4852 = vmatpush1.msra.mxu0 0.0
        %4853 = vmatprep.subr.mxu0 0.0
        %4854 = vmatpush1.msra.mxu0 0.0
        %4855 = vmatprep.subr.mxu0 0.0
        %4856 = vmatpush1.msra.mxu0 0.0
        %4857 = vmatprep.subr.mxu0 0.0
        %4858 = vmatpush1.msra.mxu0 0.0
        %4859 = vmatprep.subr.mxu0 0.0
        %4860 = vmatpush1.msra.mxu0 0.0
        %4861 = vmatprep.subr.mxu0 0.0
        %4862 = vmatpush1.msra.mxu0 0.0
        %4863 = vmatprep.subr.mxu0 0.0
        %4864 = vmatpush1.msra.mxu0 0.0
        %4865 = vmatprep.subr.mxu0 0.0
        %4866 = vmatpush1.msra.mxu0 0.0
        %4867 = vmatprep.subr.mxu0 0.0
        %4868 = vmatpush1.msra.mxu0 0.0
        %4869 = vmatprep.subr.mxu0 0.0
        %4870 = vmatpush1.msra.mxu0 0.0
        %4871 = vmatprep.subr.mxu0 0.0
        %4872 = vmatpush1.msra.mxu0 0.0
        %4873 = vmatprep.subr.mxu0 0.0
        %4874 = vmatpush1.msra.mxu0 0.0
        %4875 = vmatprep.subr.mxu0 0.0
        %4876 = vmatpush1.msra.mxu0 0.0
        %4877 = vmatprep.subr.mxu0 0.0
        %4878 = vmatpush1.msra.mxu0 0.0
        %4879 = vmatprep.subr.mxu0 0.0
        %4880 = vmatpush1.msra.mxu0 0.0
        %4881 = vmatprep.subr.mxu0 0.0
        %4882 = vmatpush1.msra.mxu0 0.0
        %4883 = vmatprep.subr.mxu0 0.0
        %4884 = vmatpush1.msra.mxu0 0.0
        %4885 = vmatprep.subr.mxu0 0.0
        %4886 = vmatpush1.msra.mxu0 0.0
        %4887 = vmatprep.subr.mxu0 0.0
        %4888 = vmatpush1.msra.mxu0 0.0
        %4889 = vmatprep.subr.mxu0 0.0
        %4890 = vmatpush1.msra.mxu0 0.0
        %4891 = vmatprep.subr.mxu0 0.0
        %4892 = vmatpush1.msra.mxu0 0.0
        %4893 = vmatprep.subr.mxu0 0.0
        %4894 = vmatpush1.msra.mxu0 0.0
        %4895 = vmatprep.subr.mxu0 0.0
        %4896 = vmatpush1.msra.mxu0 0.0
        %4897 = vmatprep.subr.mxu0 0.0
        %4898 = vmatpush1.msra.mxu0 0.0
        %4899 = vmatprep.subr.mxu0 0.0
        %4900 = vmatpush1.msra.mxu0 0.0
        %4901 = vmatprep.mubr.f32.mxu0 0.0
        %4902 = vmatmul.mubr.f32.gmra.mrb[0].mxu0 %v4832
        %v4903 = vpop.f32.mrb[0].mxu0
        %v4904 = vadd.f32 0.0, %v4903
        %v4905 = vpop.f32.mrb[0].mxu0
        %4906 = vmatprep.mubr.f32.mxu0 0.0
        %4907 = vmatmul.mubr.f32.gmra.mrb[0].mxu0 %v4835
        %v4908 = vpop.f32.mrb[0].mxu0
        %v4909 = vadd.f32 0.0, %v4908
        %v4910 = vpop.f32.mrb[0].mxu0
        %4911 = vdwg.mxu0
        %4914 = vrot.lane.b32.xlu0 %v1571, 96
        %v4915 = vpop.permute.xlu0 %4914
        %4916 = vrot.lane.b32.xlu0 %v1574, 96
        %v4917 = vpop.permute.xlu0 %4916
        %v4921 = vsel %vm2560, %v4286, 0
        %v4924 = vsel %vm2560, %v4288, 0
        %4926 = vmatprep.subr.mxu0 0.0
        %4927 = vmatpush1.msra.mxu0 %v4915
        %4928 = vmatprep.subr.mxu0 0.0
        %4929 = vmatpush1.msra.mxu0 %v4917
        %4930 = vmatprep.subr.mxu0 0.0
        %4931 = vmatpush1.msra.mxu0 0.0
        %4932 = vmatprep.subr.mxu0 0.0
        %4933 = vmatpush1.msra.mxu0 0.0
        %4934 = vmatprep.subr.mxu0 0.0
        %4935 = vmatpush1.msra.mxu0 0.0
        %4936 = vmatprep.subr.mxu0 0.0
        %4937 = vmatpush1.msra.mxu0 0.0
        %4938 = vmatprep.subr.mxu0 0.0
        %4939 = vmatpush1.msra.mxu0 0.0
        %4940 = vmatprep.subr.mxu0 0.0
        %4941 = vmatpush1.msra.mxu0 0.0
        %4942 = vmatprep.subr.mxu0 0.0
        %4943 = vmatpush1.msra.mxu0 0.0
        %4944 = vmatprep.subr.mxu0 0.0
        %4945 = vmatpush1.msra.mxu0 0.0
        %4946 = vmatprep.subr.mxu0 0.0
        %4947 = vmatpush1.msra.mxu0 0.0
        %4948 = vmatprep.subr.mxu0 0.0
        %4949 = vmatpush1.msra.mxu0 0.0
        %4950 = vmatprep.subr.mxu0 0.0
        %4951 = vmatpush1.msra.mxu0 0.0
        %4952 = vmatprep.subr.mxu0 0.0
        %4953 = vmatpush1.msra.mxu0 0.0
        %4954 = vmatprep.subr.mxu0 0.0
        %4955 = vmatpush1.msra.mxu0 0.0
        %4956 = vmatprep.subr.mxu0 0.0
        %4957 = vmatpush1.msra.mxu0 0.0
        %4958 = vmatprep.subr.mxu0 0.0
        %4959 = vmatpush1.msra.mxu0 0.0
        %4960 = vmatprep.subr.mxu0 0.0
        %4961 = vmatpush1.msra.mxu0 0.0
        %4962 = vmatprep.subr.mxu0 0.0
        %4963 = vmatpush1.msra.mxu0 0.0
        %4964 = vmatprep.subr.mxu0 0.0
        %4965 = vmatpush1.msra.mxu0 0.0
        %4966 = vmatprep.subr.mxu0 0.0
        %4967 = vmatpush1.msra.mxu0 0.0
        %4968 = vmatprep.subr.mxu0 0.0
        %4969 = vmatpush1.msra.mxu0 0.0
        %4970 = vmatprep.subr.mxu0 0.0
        %4971 = vmatpush1.msra.mxu0 0.0
        %4972 = vmatprep.subr.mxu0 0.0
        %4973 = vmatpush1.msra.mxu0 0.0
        %4974 = vmatprep.subr.mxu0 0.0
        %4975 = vmatpush1.msra.mxu0 0.0
        %4976 = vmatprep.subr.mxu0 0.0
        %4977 = vmatpush1.msra.mxu0 0.0
        %4978 = vmatprep.subr.mxu0 0.0
        %4979 = vmatpush1.msra.mxu0 0.0
        %4980 = vmatprep.subr.mxu0 0.0
        %4981 = vmatpush1.msra.mxu0 0.0
        %4982 = vmatprep.subr.mxu0 0.0
        %4983 = vmatpush1.msra.mxu0 0.0
        %4984 = vmatprep.subr.mxu0 0.0
        %4985 = vmatpush1.msra.mxu0 0.0
        %4986 = vmatprep.subr.mxu0 0.0
        %4987 = vmatpush1.msra.mxu0 0.0
        %4988 = vmatprep.subr.mxu0 0.0
        %4989 = vmatpush1.msra.mxu0 0.0
        %4990 = vmatprep.mubr.f32.mxu0 0.0
        %4991 = vmatmul.mubr.f32.gmra.mrb[0].mxu0 %v4921
        %v4992 = vpop.f32.mrb[0].mxu0
        %v4993 = vadd.f32 0.0, %v4992
        %v4994 = vpop.f32.mrb[0].mxu0
        %4995 = vmatprep.mubr.f32.mxu0 0.0
        %4996 = vmatmul.mubr.f32.gmra.mrb[0].mxu0 %v4924
        %v4997 = vpop.f32.mrb[0].mxu0
        %v4998 = vadd.f32 0.0, %v4997
        %v4999 = vpop.f32.mrb[0].mxu0
        %5000 = vdwg.mxu0
        %5001 = vrot.lane.b32.xlu0 %v1712, 64
        %v5002 = vpop.permute.xlu0 %5001
        %5003 = vrot.lane.b32.xlu0 %v1713, 64
        %v5004 = vpop.permute.xlu0 %5003
        %5005 = vrot.lane.b32.xlu0 %v1847, 64
        %v5006 = vpop.permute.xlu0 %5005
        %5007 = vrot.lane.b32.xlu0 %v1848, 64
        %v5008 = vpop.permute.xlu0 %5007
        %v5009 = vsel %vm1863, %v5002, 0
        %v5011 = vsel %vm1863, %v5004, 0
        %v5013 = vsel %vm1863, %v5006, 0
        %v5015 = vsel %vm1863, %v5008, 0
        %5017 = vmatprep.subr.mxu0 0.0
        %5018 = vmatpush1.xpose.msra.mxu0 %v5013
        %5019 = vmatprep.subr.mxu0 0.0
        %5020 = vmatpush1.xpose.msra.mxu0 %v5015
        %5021 = vmatprep.subr.mxu0 0.0
        %5022 = vmatpush1.xpose.msra.mxu0 0.0
        %5023 = vmatprep.subr.mxu0 0.0
        %5024 = vmatpush1.xpose.msra.mxu0 0.0
        %5025 = vmatprep.subr.mxu0 0.0
        %5026 = vmatpush1.xpose.msra.mxu0 0.0
        %5027 = vmatprep.subr.mxu0 0.0
        %5028 = vmatpush1.xpose.msra.mxu0 0.0
        %5029 = vmatprep.subr.mxu0 0.0
        %5030 = vmatpush1.xpose.msra.mxu0 0.0
        %5031 = vmatprep.subr.mxu0 0.0
        %5032 = vmatpush1.xpose.msra.mxu0 0.0
        %5033 = vmatprep.subr.mxu0 0.0
        %5034 = vmatpush1.xpose.msra.mxu0 0.0
        %5035 = vmatprep.subr.mxu0 0.0
        %5036 = vmatpush1.xpose.msra.mxu0 0.0
        %5037 = vmatprep.subr.mxu0 0.0
        %5038 = vmatpush1.xpose.msra.mxu0 0.0
        %5039 = vmatprep.subr.mxu0 0.0
        %5040 = vmatpush1.xpose.msra.mxu0 0.0
        %5041 = vmatprep.subr.mxu0 0.0
        %5042 = vmatpush1.xpose.msra.mxu0 0.0
        %5043 = vmatprep.subr.mxu0 0.0
        %5044 = vmatpush1.xpose.msra.mxu0 0.0
        %5045 = vmatprep.subr.mxu0 0.0
        %5046 = vmatpush1.xpose.msra.mxu0 0.0
        %5047 = vmatprep.subr.mxu0 0.0
        %5048 = vmatpush1.xpose.msra.mxu0 0.0
        %5049 = vmatprep.subr.mxu0 0.0
        %5050 = vmatpush1.xpose.msra.mxu0 0.0
        %5051 = vmatprep.subr.mxu0 0.0
        %5052 = vmatpush1.xpose.msra.mxu0 0.0
        %5053 = vmatprep.subr.mxu0 0.0
        %5054 = vmatpush1.xpose.msra.mxu0 0.0
        %5055 = vmatprep.subr.mxu0 0.0
        %5056 = vmatpush1.xpose.msra.mxu0 0.0
        %5057 = vmatprep.subr.mxu0 0.0
        %5058 = vmatpush1.xpose.msra.mxu0 0.0
        %5059 = vmatprep.subr.mxu0 0.0
        %5060 = vmatpush1.xpose.msra.mxu0 0.0
        %5061 = vmatprep.subr.mxu0 0.0
        %5062 = vmatpush1.xpose.msra.mxu0 0.0
        %5063 = vmatprep.subr.mxu0 0.0
        %5064 = vmatpush1.xpose.msra.mxu0 0.0
        %5065 = vmatprep.subr.mxu0 0.0
        %5066 = vmatpush1.xpose.msra.mxu0 0.0
        %5067 = vmatprep.subr.mxu0 0.0
        %5068 = vmatpush1.xpose.msra.mxu0 0.0
        %5069 = vmatprep.subr.mxu0 0.0
        %5070 = vmatpush1.xpose.msra.mxu0 0.0
        %5071 = vmatprep.subr.mxu0 0.0
        %5072 = vmatpush1.xpose.msra.mxu0 0.0
        %5073 = vmatprep.subr.mxu0 0.0
        %5074 = vmatpush1.xpose.msra.mxu0 0.0
        %5075 = vmatprep.subr.mxu0 0.0
        %5076 = vmatpush1.xpose.msra.mxu0 0.0
        %5077 = vmatprep.subr.mxu0 0.0
        %5078 = vmatpush1.xpose.msra.mxu0 0.0
        %5079 = vmatprep.subr.mxu0 0.0
        %5080 = vmatpush1.xpose.msra.mxu0 0.0
        %5081 = vmatprep.mubr.f32.mxu0 0.0
        %5082 = vmatmul.mubr.f32.gmra.mrb[0].mxu0 %v5009
        %v5083 = vpop.f32.mrb[0].mxu0
        %v5084 = vadd.f32 0.0, %v5083
        %v5085 = vpop.f32.mrb[0].mxu0
        %5086 = vmatprep.mubr.f32.mxu0 0.0
        %5087 = vmatmul.mubr.f32.gmra.mrb[0].mxu0 %v5011
        %v5088 = vpop.f32.mrb[0].mxu0
        %v5089 = vadd.f32 0.0, %v5088
        %v5090 = vpop.f32.mrb[0].mxu0
        %5091 = vdwg.mxu0
        %5092 = vrot.lane.b32.xlu0 %v1714, 64
        %v5093 = vpop.permute.xlu0 %5092
        %5094 = vrot.lane.b32.xlu0 %v1715, 64
        %v5095 = vpop.permute.xlu0 %5094
        %5096 = vrot.lane.b32.xlu0 %v1849, 64
        %v5097 = vpop.permute.xlu0 %5096
        %5098 = vrot.lane.b32.xlu0 %v1850, 64
        %v5099 = vpop.permute.xlu0 %5098
        %v5100 = vsel %vm1863, %v5093, 0
        %v5102 = vsel %vm1863, %v5095, 0
        %v5104 = vsel %vm1863, %v5097, 0
        %v5106 = vsel %vm1863, %v5099, 0
        %5108 = vmatprep.subr.mxu0 0.0
        %5109 = vmatpush1.xpose.msra.mxu0 %v5104
        %5110 = vmatprep.subr.mxu0 0.0
        %5111 = vmatpush1.xpose.msra.mxu0 %v5106
        %5112 = vmatprep.subr.mxu0 0.0
        %5113 = vmatpush1.xpose.msra.mxu0 0.0
        %5114 = vmatprep.subr.mxu0 0.0
        %5115 = vmatpush1.xpose.msra.mxu0 0.0
        %5116 = vmatprep.subr.mxu0 0.0
        %5117 = vmatpush1.xpose.msra.mxu0 0.0
        %5118 = vmatprep.subr.mxu0 0.0
        %5119 = vmatpush1.xpose.msra.mxu0 0.0
        %5120 = vmatprep.subr.mxu0 0.0
        %5121 = vmatpush1.xpose.msra.mxu0 0.0
        %5122 = vmatprep.subr.mxu0 0.0
        %5123 = vmatpush1.xpose.msra.mxu0 0.0
        %5124 = vmatprep.subr.mxu0 0.0
        %5125 = vmatpush1.xpose.msra.mxu0 0.0
        %5126 = vmatprep.subr.mxu0 0.0
        %5127 = vmatpush1.xpose.msra.mxu0 0.0
        %5128 = vmatprep.subr.mxu0 0.0
        %5129 = vmatpush1.xpose.msra.mxu0 0.0
        %5130 = vmatprep.subr.mxu0 0.0
        %5131 = vmatpush1.xpose.msra.mxu0 0.0
        %5132 = vmatprep.subr.mxu0 0.0
        %5133 = vmatpush1.xpose.msra.mxu0 0.0
        %5134 = vmatprep.subr.mxu0 0.0
        %5135 = vmatpush1.xpose.msra.mxu0 0.0
        %5136 = vmatprep.subr.mxu0 0.0
        %5137 = vmatpush1.xpose.msra.mxu0 0.0
        %5138 = vmatprep.subr.mxu0 0.0
        %5139 = vmatpush1.xpose.msra.mxu0 0.0
        %5140 = vmatprep.subr.mxu0 0.0
        %5141 = vmatpush1.xpose.msra.mxu0 0.0
        %5142 = vmatprep.subr.mxu0 0.0
        %5143 = vmatpush1.xpose.msra.mxu0 0.0
        %5144 = vmatprep.subr.mxu0 0.0
        %5145 = vmatpush1.xpose.msra.mxu0 0.0
        %5146 = vmatprep.subr.mxu0 0.0
        %5147 = vmatpush1.xpose.msra.mxu0 0.0
        %5148 = vmatprep.subr.mxu0 0.0
        %5149 = vmatpush1.xpose.msra.mxu0 0.0
        %5150 = vmatprep.subr.mxu0 0.0
        %5151 = vmatpush1.xpose.msra.mxu0 0.0
        %5152 = vmatprep.subr.mxu0 0.0
        %5153 = vmatpush1.xpose.msra.mxu0 0.0
        %5154 = vmatprep.subr.mxu0 0.0
        %5155 = vmatpush1.xpose.msra.mxu0 0.0
        %5156 = vmatprep.subr.mxu0 0.0
        %5157 = vmatpush1.xpose.msra.mxu0 0.0
        %5158 = vmatprep.subr.mxu0 0.0
        %5159 = vmatpush1.xpose.msra.mxu0 0.0
        %5160 = vmatprep.subr.mxu0 0.0
        %5161 = vmatpush1.xpose.msra.mxu0 0.0
        %5162 = vmatprep.subr.mxu0 0.0
        %5163 = vmatpush1.xpose.msra.mxu0 0.0
        %5164 = vmatprep.subr.mxu0 0.0
        %5165 = vmatpush1.xpose.msra.mxu0 0.0
        %5166 = vmatprep.subr.mxu0 0.0
        %5167 = vmatpush1.xpose.msra.mxu0 0.0
        %5168 = vmatprep.subr.mxu0 0.0
        %5169 = vmatpush1.xpose.msra.mxu0 0.0
        %5170 = vmatprep.subr.mxu0 0.0
        %5171 = vmatpush1.xpose.msra.mxu0 0.0
        %5172 = vmatprep.mubr.f32.mxu0 0.0
        %5173 = vmatmul.mubr.f32.gmra.mrb[0].mxu0 %v5100
        %v5174 = vpop.f32.mrb[0].mxu0
        %v5175 = vadd.f32 0.0, %v5174
        %v5176 = vpop.f32.mrb[0].mxu0
        %5177 = vmatprep.mubr.f32.mxu0 0.0
        %5178 = vmatmul.mubr.f32.gmra.mrb[0].mxu0 %v5102
        %v5179 = vpop.f32.mrb[0].mxu0
        %v5180 = vadd.f32 0.0, %v5179
        %v5181 = vpop.f32.mrb[0].mxu0
        %5182 = vdwg.mxu0
        %5183 = vrot.lane.b32.xlu0 %v1716, 64
        %v5184 = vpop.permute.xlu0 %5183
        %5185 = vrot.lane.b32.xlu0 %v1717, 64
        %v5186 = vpop.permute.xlu0 %5185
        %5187 = vrot.lane.b32.xlu0 %v1851, 64
        %v5188 = vpop.permute.xlu0 %5187
        %5189 = vrot.lane.b32.xlu0 %v1852, 64
        %v5190 = vpop.permute.xlu0 %5189
        %v5191 = vsel %vm1863, %v5184, 0
        %v5193 = vsel %vm1863, %v5186, 0
        %v5195 = vsel %vm1863, %v5188, 0
        %v5197 = vsel %vm1863, %v5190, 0
        %5199 = vmatprep.subr.mxu0 0.0
        %5200 = vmatpush1.xpose.msra.mxu0 %v5195
        %5201 = vmatprep.subr.mxu0 0.0
        %5202 = vmatpush1.xpose.msra.mxu0 %v5197
        %5203 = vmatprep.subr.mxu0 0.0
        %5204 = vmatpush1.xpose.msra.mxu0 0.0
        %5205 = vmatprep.subr.mxu0 0.0
        %5206 = vmatpush1.xpose.msra.mxu0 0.0
        %5207 = vmatprep.subr.mxu0 0.0
        %5208 = vmatpush1.xpose.msra.mxu0 0.0
        %5209 = vmatprep.subr.mxu0 0.0
        %5210 = vmatpush1.xpose.msra.mxu0 0.0
        %5211 = vmatprep.subr.mxu0 0.0
        %5212 = vmatpush1.xpose.msra.mxu0 0.0
        %5213 = vmatprep.subr.mxu0 0.0
        %5214 = vmatpush1.xpose.msra.mxu0 0.0
        %5215 = vmatprep.subr.mxu0 0.0
        %5216 = vmatpush1.xpose.msra.mxu0 0.0
        %5217 = vmatprep.subr.mxu0 0.0
        %5218 = vmatpush1.xpose.msra.mxu0 0.0
        %5219 = vmatprep.subr.mxu0 0.0
        %5220 = vmatpush1.xpose.msra.mxu0 0.0
        %5221 = vmatprep.subr.mxu0 0.0
        %5222 = vmatpush1.xpose.msra.mxu0 0.0
        %5223 = vmatprep.subr.mxu0 0.0
        %5224 = vmatpush1.xpose.msra.mxu0 0.0
        %5225 = vmatprep.subr.mxu0 0.0
        %5226 = vmatpush1.xpose.msra.mxu0 0.0
        %5227 = vmatprep.subr.mxu0 0.0
        %5228 = vmatpush1.xpose.msra.mxu0 0.0
        %5229 = vmatprep.subr.mxu0 0.0
        %5230 = vmatpush1.xpose.msra.mxu0 0.0
        %5231 = vmatprep.subr.mxu0 0.0
        %5232 = vmatpush1.xpose.msra.mxu0 0.0
        %5233 = vmatprep.subr.mxu0 0.0
        %5234 = vmatpush1.xpose.msra.mxu0 0.0
        %5235 = vmatprep.subr.mxu0 0.0
        %5236 = vmatpush1.xpose.msra.mxu0 0.0
        %5237 = vmatprep.subr.mxu0 0.0
        %5238 = vmatpush1.xpose.msra.mxu0 0.0
        %5239 = vmatprep.subr.mxu0 0.0
        %5240 = vmatpush1.xpose.msra.mxu0 0.0
        %5241 = vmatprep.subr.mxu0 0.0
        %5242 = vmatpush1.xpose.msra.mxu0 0.0
        %5243 = vmatprep.subr.mxu0 0.0
        %5244 = vmatpush1.xpose.msra.mxu0 0.0
        %5245 = vmatprep.subr.mxu0 0.0
        %5246 = vmatpush1.xpose.msra.mxu0 0.0
        %5247 = vmatprep.subr.mxu0 0.0
        %5248 = vmatpush1.xpose.msra.mxu0 0.0
        %5249 = vmatprep.subr.mxu0 0.0
        %5250 = vmatpush1.xpose.msra.mxu0 0.0
        %5251 = vmatprep.subr.mxu0 0.0
        %5252 = vmatpush1.xpose.msra.mxu0 0.0
        %5253 = vmatprep.subr.mxu0 0.0
        %5254 = vmatpush1.xpose.msra.mxu0 0.0
        %5255 = vmatprep.subr.mxu0 0.0
        %5256 = vmatpush1.xpose.msra.mxu0 0.0
        %5257 = vmatprep.subr.mxu0 0.0
        %5258 = vmatpush1.xpose.msra.mxu0 0.0
        %5259 = vmatprep.subr.mxu0 0.0
        %5260 = vmatpush1.xpose.msra.mxu0 0.0
        %5261 = vmatprep.subr.mxu0 0.0
        %5262 = vmatpush1.xpose.msra.mxu0 0.0
        %5263 = vmatprep.mubr.f32.mxu0 0.0
        %5264 = vmatmul.mubr.f32.gmra.mrb[0].mxu0 %v5191
        %v5265 = vpop.f32.mrb[0].mxu0
        %v5266 = vadd.f32 0.0, %v5265
        %v5267 = vpop.f32.mrb[0].mxu0
        %5268 = vmatprep.mubr.f32.mxu0 0.0
        %5269 = vmatmul.mubr.f32.gmra.mrb[0].mxu0 %v5193
        %v5270 = vpop.f32.mrb[0].mxu0
        %v5271 = vadd.f32 0.0, %v5270
        %v5272 = vpop.f32.mrb[0].mxu0
        %5273 = vdwg.mxu0
        %5274 = vrot.lane.b32.xlu0 %v1718, 64
        %v5275 = vpop.permute.xlu0 %5274
        %5276 = vrot.lane.b32.xlu0 %v1719, 64
        %v5277 = vpop.permute.xlu0 %5276
        %5278 = vrot.lane.b32.xlu0 %v1853, 64
        %v5279 = vpop.permute.xlu0 %5278
        %5280 = vrot.lane.b32.xlu0 %v1854, 64
        %v5281 = vpop.permute.xlu0 %5280
        %v5282 = vsel %vm1863, %v5275, 0
        %v5284 = vsel %vm1863, %v5277, 0
        %v5286 = vsel %vm1863, %v5279, 0
        %v5288 = vsel %vm1863, %v5281, 0
        %5290 = vmatprep.subr.mxu0 0.0
        %5291 = vmatpush1.xpose.msra.mxu0 %v5286
        %5292 = vmatprep.subr.mxu0 0.0
        %5293 = vmatpush1.xpose.msra.mxu0 %v5288
        %5294 = vmatprep.subr.mxu0 0.0
        %5295 = vmatpush1.xpose.msra.mxu0 0.0
        %5296 = vmatprep.subr.mxu0 0.0
        %5297 = vmatpush1.xpose.msra.mxu0 0.0
        %5298 = vmatprep.subr.mxu0 0.0
        %5299 = vmatpush1.xpose.msra.mxu0 0.0
        %5300 = vmatprep.subr.mxu0 0.0
        %5301 = vmatpush1.xpose.msra.mxu0 0.0
        %5302 = vmatprep.subr.mxu0 0.0
        %5303 = vmatpush1.xpose.msra.mxu0 0.0
        %5304 = vmatprep.subr.mxu0 0.0
        %5305 = vmatpush1.xpose.msra.mxu0 0.0
        %5306 = vmatprep.subr.mxu0 0.0
        %5307 = vmatpush1.xpose.msra.mxu0 0.0
        %5308 = vmatprep.subr.mxu0 0.0
        %5309 = vmatpush1.xpose.msra.mxu0 0.0
        %5310 = vmatprep.subr.mxu0 0.0
        %5311 = vmatpush1.xpose.msra.mxu0 0.0
        %5312 = vmatprep.subr.mxu0 0.0
        %5313 = vmatpush1.xpose.msra.mxu0 0.0
        %5314 = vmatprep.subr.mxu0 0.0
        %5315 = vmatpush1.xpose.msra.mxu0 0.0
        %5316 = vmatprep.subr.mxu0 0.0
        %5317 = vmatpush1.xpose.msra.mxu0 0.0
        %5318 = vmatprep.subr.mxu0 0.0
        %5319 = vmatpush1.xpose.msra.mxu0 0.0
        %5320 = vmatprep.subr.mxu0 0.0
        %5321 = vmatpush1.xpose.msra.mxu0 0.0
        %5322 = vmatprep.subr.mxu0 0.0
        %5323 = vmatpush1.xpose.msra.mxu0 0.0
        %5324 = vmatprep.subr.mxu0 0.0
        %5325 = vmatpush1.xpose.msra.mxu0 0.0
        %5326 = vmatprep.subr.mxu0 0.0
        %5327 = vmatpush1.xpose.msra.mxu0 0.0
        %5328 = vmatprep.subr.mxu0 0.0
        %5329 = vmatpush1.xpose.msra.mxu0 0.0
        %5330 = vmatprep.subr.mxu0 0.0
        %5331 = vmatpush1.xpose.msra.mxu0 0.0
        %5332 = vmatprep.subr.mxu0 0.0
        %5333 = vmatpush1.xpose.msra.mxu0 0.0
        %5334 = vmatprep.subr.mxu0 0.0
        %5335 = vmatpush1.xpose.msra.mxu0 0.0
        %5336 = vmatprep.subr.mxu0 0.0
        %5337 = vmatpush1.xpose.msra.mxu0 0.0
        %5338 = vmatprep.subr.mxu0 0.0
        %5339 = vmatpush1.xpose.msra.mxu0 0.0
        %5340 = vmatprep.subr.mxu0 0.0
        %5341 = vmatpush1.xpose.msra.mxu0 0.0
        %5342 = vmatprep.subr.mxu0 0.0
        %5343 = vmatpush1.xpose.msra.mxu0 0.0
        %5344 = vmatprep.subr.mxu0 0.0
        %5345 = vmatpush1.xpose.msra.mxu0 0.0
        %5346 = vmatprep.subr.mxu0 0.0
        %5347 = vmatpush1.xpose.msra.mxu0 0.0
        %5348 = vmatprep.subr.mxu0 0.0
        %5349 = vmatpush1.xpose.msra.mxu0 0.0
        %5350 = vmatprep.subr.mxu0 0.0
        %5351 = vmatpush1.xpose.msra.mxu0 0.0
        %5352 = vmatprep.subr.mxu0 0.0
        %5353 = vmatpush1.xpose.msra.mxu0 0.0
        %5354 = vmatprep.mubr.f32.mxu0 0.0
        %5355 = vmatmul.mubr.f32.gmra.mrb[0].mxu0 %v5282
        %v5356 = vpop.f32.mrb[0].mxu0
        %v5357 = vadd.f32 0.0, %v5356
        %v5358 = vpop.f32.mrb[0].mxu0
        %5359 = vmatprep.mubr.f32.mxu0 0.0
        %5360 = vmatmul.mubr.f32.gmra.mrb[0].mxu0 %v5284
        %v5361 = vpop.f32.mrb[0].mxu0
        %v5362 = vadd.f32 0.0, %v5361
        %v5363 = vpop.f32.mrb[0].mxu0
        %5364 = vdwg.mxu0
        %5365 = vrot.lane.b32.xlu0 %v1720, 64
        %v5366 = vpop.permute.xlu0 %5365
        %5367 = vrot.lane.b32.xlu0 %v1721, 64
        %v5368 = vpop.permute.xlu0 %5367
        %5369 = vrot.lane.b32.xlu0 %v1855, 64
        %v5370 = vpop.permute.xlu0 %5369
        %5371 = vrot.lane.b32.xlu0 %v1856, 64
        %v5372 = vpop.permute.xlu0 %5371
        %v5373 = vsel %vm1863, %v5366, 0
        %v5375 = vsel %vm1863, %v5368, 0
        %v5377 = vsel %vm1863, %v5370, 0
        %v5379 = vsel %vm1863, %v5372, 0
        %5381 = vmatprep.subr.mxu0 0.0
        %5382 = vmatpush1.xpose.msra.mxu0 %v5377
        %5383 = vmatprep.subr.mxu0 0.0
        %5384 = vmatpush1.xpose.msra.mxu0 %v5379
        %5385 = vmatprep.subr.mxu0 0.0
        %5386 = vmatpush1.xpose.msra.mxu0 0.0
        %5387 = vmatprep.subr.mxu0 0.0
        %5388 = vmatpush1.xpose.msra.mxu0 0.0
        %5389 = vmatprep.subr.mxu0 0.0
        %5390 = vmatpush1.xpose.msra.mxu0 0.0
        %5391 = vmatprep.subr.mxu0 0.0
        %5392 = vmatpush1.xpose.msra.mxu0 0.0
        %5393 = vmatprep.subr.mxu0 0.0
        %5394 = vmatpush1.xpose.msra.mxu0 0.0
        %5395 = vmatprep.subr.mxu0 0.0
        %5396 = vmatpush1.xpose.msra.mxu0 0.0
        %5397 = vmatprep.subr.mxu0 0.0
        %5398 = vmatpush1.xpose.msra.mxu0 0.0
        %5399 = vmatprep.subr.mxu0 0.0
        %5400 = vmatpush1.xpose.msra.mxu0 0.0
        %5401 = vmatprep.subr.mxu0 0.0
        %5402 = vmatpush1.xpose.msra.mxu0 0.0
        %5403 = vmatprep.subr.mxu0 0.0
        %5404 = vmatpush1.xpose.msra.mxu0 0.0
        %5405 = vmatprep.subr.mxu0 0.0
        %5406 = vmatpush1.xpose.msra.mxu0 0.0
        %5407 = vmatprep.subr.mxu0 0.0
        %5408 = vmatpush1.xpose.msra.mxu0 0.0
        %5409 = vmatprep.subr.mxu0 0.0
        %5410 = vmatpush1.xpose.msra.mxu0 0.0
        %5411 = vmatprep.subr.mxu0 0.0
        %5412 = vmatpush1.xpose.msra.mxu0 0.0
        %5413 = vmatprep.subr.mxu0 0.0
        %5414 = vmatpush1.xpose.msra.mxu0 0.0
        %5415 = vmatprep.subr.mxu0 0.0
        %5416 = vmatpush1.xpose.msra.mxu0 0.0
        %5417 = vmatprep.subr.mxu0 0.0
        %5418 = vmatpush1.xpose.msra.mxu0 0.0
        %5419 = vmatprep.subr.mxu0 0.0
        %5420 = vmatpush1.xpose.msra.mxu0 0.0
        %5421 = vmatprep.subr.mxu0 0.0
        %5422 = vmatpush1.xpose.msra.mxu0 0.0
        %5423 = vmatprep.subr.mxu0 0.0
        %5424 = vmatpush1.xpose.msra.mxu0 0.0
        %5425 = vmatprep.subr.mxu0 0.0
        %5426 = vmatpush1.xpose.msra.mxu0 0.0
        %5427 = vmatprep.subr.mxu0 0.0
        %5428 = vmatpush1.xpose.msra.mxu0 0.0
        %5429 = vmatprep.subr.mxu0 0.0
        %5430 = vmatpush1.xpose.msra.mxu0 0.0
        %5431 = vmatprep.subr.mxu0 0.0
        %5432 = vmatpush1.xpose.msra.mxu0 0.0
        %5433 = vmatprep.subr.mxu0 0.0
        %5434 = vmatpush1.xpose.msra.mxu0 0.0
        %5435 = vmatprep.subr.mxu0 0.0
        %5436 = vmatpush1.xpose.msra.mxu0 0.0
        %5437 = vmatprep.subr.mxu0 0.0
        %5438 = vmatpush1.xpose.msra.mxu0 0.0
        %5439 = vmatprep.subr.mxu0 0.0
        %5440 = vmatpush1.xpose.msra.mxu0 0.0
        %5441 = vmatprep.subr.mxu0 0.0
        %5442 = vmatpush1.xpose.msra.mxu0 0.0
        %5443 = vmatprep.subr.mxu0 0.0
        %5444 = vmatpush1.xpose.msra.mxu0 0.0
        %5445 = vmatprep.mubr.f32.mxu0 0.0
        %5446 = vmatmul.mubr.f32.gmra.mrb[0].mxu0 %v5373
        %v5447 = vpop.f32.mrb[0].mxu0
        %v5448 = vadd.f32 0.0, %v5447
        %v5449 = vpop.f32.mrb[0].mxu0
        %5450 = vmatprep.mubr.f32.mxu0 0.0
        %5451 = vmatmul.mubr.f32.gmra.mrb[0].mxu0 %v5375
        %v5452 = vpop.f32.mrb[0].mxu0
        %v5453 = vadd.f32 0.0, %v5452
        %v5454 = vpop.f32.mrb[0].mxu0
        %5455 = vdwg.mxu0
        %5456 = vrot.lane.b32.xlu0 %v1722, 64
        %v5457 = vpop.permute.xlu0 %5456
        %5458 = vrot.lane.b32.xlu0 %v1723, 64
        %v5459 = vpop.permute.xlu0 %5458
        %5460 = vrot.lane.b32.xlu0 %v1857, 64
        %v5461 = vpop.permute.xlu0 %5460
        %5462 = vrot.lane.b32.xlu0 %v1858, 64
        %v5463 = vpop.permute.xlu0 %5462
        %v5464 = vsel %vm1863, %v5457, 0
        %v5466 = vsel %vm1863, %v5459, 0
        %v5468 = vsel %vm1863, %v5461, 0
        %v5470 = vsel %vm1863, %v5463, 0
        %5472 = vmatprep.subr.mxu0 0.0
        %5473 = vmatpush1.xpose.msra.mxu0 %v5468
        %5474 = vmatprep.subr.mxu0 0.0
        %5475 = vmatpush1.xpose.msra.mxu0 %v5470
        %5476 = vmatprep.subr.mxu0 0.0
        %5477 = vmatpush1.xpose.msra.mxu0 0.0
        %5478 = vmatprep.subr.mxu0 0.0
        %5479 = vmatpush1.xpose.msra.mxu0 0.0
        %5480 = vmatprep.subr.mxu0 0.0
        %5481 = vmatpush1.xpose.msra.mxu0 0.0
        %5482 = vmatprep.subr.mxu0 0.0
        %5483 = vmatpush1.xpose.msra.mxu0 0.0
        %5484 = vmatprep.subr.mxu0 0.0
        %5485 = vmatpush1.xpose.msra.mxu0 0.0
        %5486 = vmatprep.subr.mxu0 0.0
        %5487 = vmatpush1.xpose.msra.mxu0 0.0
        %5488 = vmatprep.subr.mxu0 0.0
        %5489 = vmatpush1.xpose.msra.mxu0 0.0
        %5490 = vmatprep.subr.mxu0 0.0
        %5491 = vmatpush1.xpose.msra.mxu0 0.0
        %5492 = vmatprep.subr.mxu0 0.0
        %5493 = vmatpush1.xpose.msra.mxu0 0.0
        %5494 = vmatprep.subr.mxu0 0.0
        %5495 = vmatpush1.xpose.msra.mxu0 0.0
        %5496 = vmatprep.subr.mxu0 0.0
        %5497 = vmatpush1.xpose.msra.mxu0 0.0
        %5498 = vmatprep.subr.mxu0 0.0
        %5499 = vmatpush1.xpose.msra.mxu0 0.0
        %5500 = vmatprep.subr.mxu0 0.0
        %5501 = vmatpush1.xpose.msra.mxu0 0.0
        %5502 = vmatprep.subr.mxu0 0.0
        %5503 = vmatpush1.xpose.msra.mxu0 0.0
        %5504 = vmatprep.subr.mxu0 0.0
        %5505 = vmatpush1.xpose.msra.mxu0 0.0
        %5506 = vmatprep.subr.mxu0 0.0
        %5507 = vmatpush1.xpose.msra.mxu0 0.0
        %5508 = vmatprep.subr.mxu0 0.0
        %5509 = vmatpush1.xpose.msra.mxu0 0.0
        %5510 = vmatprep.subr.mxu0 0.0
        %5511 = vmatpush1.xpose.msra.mxu0 0.0
        %5512 = vmatprep.subr.mxu0 0.0
        %5513 = vmatpush1.xpose.msra.mxu0 0.0
        %5514 = vmatprep.subr.mxu0 0.0
        %5515 = vmatpush1.xpose.msra.mxu0 0.0
        %5516 = vmatprep.subr.mxu0 0.0
        %5517 = vmatpush1.xpose.msra.mxu0 0.0
        %5518 = vmatprep.subr.mxu0 0.0
        %5519 = vmatpush1.xpose.msra.mxu0 0.0
        %5520 = vmatprep.subr.mxu0 0.0
        %5521 = vmatpush1.xpose.msra.mxu0 0.0
        %5522 = vmatprep.subr.mxu0 0.0
        %5523 = vmatpush1.xpose.msra.mxu0 0.0
        %5524 = vmatprep.subr.mxu0 0.0
        %5525 = vmatpush1.xpose.msra.mxu0 0.0
        %5526 = vmatprep.subr.mxu0 0.0
        %5527 = vmatpush1.xpose.msra.mxu0 0.0
        %5528 = vmatprep.subr.mxu0 0.0
        %5529 = vmatpush1.xpose.msra.mxu0 0.0
        %5530 = vmatprep.subr.mxu0 0.0
        %5531 = vmatpush1.xpose.msra.mxu0 0.0
        %5532 = vmatprep.subr.mxu0 0.0
        %5533 = vmatpush1.xpose.msra.mxu0 0.0
        %5534 = vmatprep.subr.mxu0 0.0
        %5535 = vmatpush1.xpose.msra.mxu0 0.0
        %5536 = vmatprep.mubr.f32.mxu0 0.0
        %5537 = vmatmul.mubr.f32.gmra.mrb[0].mxu0 %v5464
        %v5538 = vpop.f32.mrb[0].mxu0
        %v5539 = vadd.f32 0.0, %v5538
        %v5540 = vpop.f32.mrb[0].mxu0
        %5541 = vmatprep.mubr.f32.mxu0 0.0
        %5542 = vmatmul.mubr.f32.gmra.mrb[0].mxu0 %v5466
        %v5543 = vpop.f32.mrb[0].mxu0
        %v5544 = vadd.f32 0.0, %v5543
        %v5545 = vpop.f32.mrb[0].mxu0
        %5546 = vdwg.mxu0
        %5547 = vrot.lane.b32.xlu0 %v1724, 64
        %v5548 = vpop.permute.xlu0 %5547
        %5549 = vrot.lane.b32.xlu0 %v1725, 64
        %v5550 = vpop.permute.xlu0 %5549
        %5551 = vrot.lane.b32.xlu0 %v1859, 64
        %v5552 = vpop.permute.xlu0 %5551
        %5553 = vrot.lane.b32.xlu0 %v1860, 64
        %v5554 = vpop.permute.xlu0 %5553
        %v5555 = vsel %vm1863, %v5548, 0
        %v5557 = vsel %vm1863, %v5550, 0
        %v5559 = vsel %vm1863, %v5552, 0
        %v5561 = vsel %vm1863, %v5554, 0
        %5563 = vmatprep.subr.mxu0 0.0
        %5564 = vmatpush1.xpose.msra.mxu0 %v5559
        %5565 = vmatprep.subr.mxu0 0.0
        %5566 = vmatpush1.xpose.msra.mxu0 %v5561
        %5567 = vmatprep.subr.mxu0 0.0
        %5568 = vmatpush1.xpose.msra.mxu0 0.0
        %5569 = vmatprep.subr.mxu0 0.0
        %5570 = vmatpush1.xpose.msra.mxu0 0.0
        %5571 = vmatprep.subr.mxu0 0.0
        %5572 = vmatpush1.xpose.msra.mxu0 0.0
        %5573 = vmatprep.subr.mxu0 0.0
        %5574 = vmatpush1.xpose.msra.mxu0 0.0
        %5575 = vmatprep.subr.mxu0 0.0
        %5576 = vmatpush1.xpose.msra.mxu0 0.0
        %5577 = vmatprep.subr.mxu0 0.0
        %5578 = vmatpush1.xpose.msra.mxu0 0.0
        %5579 = vmatprep.subr.mxu0 0.0
        %5580 = vmatpush1.xpose.msra.mxu0 0.0
        %5581 = vmatprep.subr.mxu0 0.0
        %5582 = vmatpush1.xpose.msra.mxu0 0.0
        %5583 = vmatprep.subr.mxu0 0.0
        %5584 = vmatpush1.xpose.msra.mxu0 0.0
        %5585 = vmatprep.subr.mxu0 0.0
        %5586 = vmatpush1.xpose.msra.mxu0 0.0
        %5587 = vmatprep.subr.mxu0 0.0
        %5588 = vmatpush1.xpose.msra.mxu0 0.0
        %5589 = vmatprep.subr.mxu0 0.0
        %5590 = vmatpush1.xpose.msra.mxu0 0.0
        %5591 = vmatprep.subr.mxu0 0.0
        %5592 = vmatpush1.xpose.msra.mxu0 0.0
        %5593 = vmatprep.subr.mxu0 0.0
        %5594 = vmatpush1.xpose.msra.mxu0 0.0
        %5595 = vmatprep.subr.mxu0 0.0
        %5596 = vmatpush1.xpose.msra.mxu0 0.0
        %5597 = vmatprep.subr.mxu0 0.0
        %5598 = vmatpush1.xpose.msra.mxu0 0.0
        %5599 = vmatprep.subr.mxu0 0.0
        %5600 = vmatpush1.xpose.msra.mxu0 0.0
        %5601 = vmatprep.subr.mxu0 0.0
        %5602 = vmatpush1.xpose.msra.mxu0 0.0
        %5603 = vmatprep.subr.mxu0 0.0
        %5604 = vmatpush1.xpose.msra.mxu0 0.0
        %5605 = vmatprep.subr.mxu0 0.0
        %5606 = vmatpush1.xpose.msra.mxu0 0.0
        %5607 = vmatprep.subr.mxu0 0.0
        %5608 = vmatpush1.xpose.msra.mxu0 0.0
        %5609 = vmatprep.subr.mxu0 0.0
        %5610 = vmatpush1.xpose.msra.mxu0 0.0
        %5611 = vmatprep.subr.mxu0 0.0
        %5612 = vmatpush1.xpose.msra.mxu0 0.0
        %5613 = vmatprep.subr.mxu0 0.0
        %5614 = vmatpush1.xpose.msra.mxu0 0.0
        %5615 = vmatprep.subr.mxu0 0.0
        %5616 = vmatpush1.xpose.msra.mxu0 0.0
        %5617 = vmatprep.subr.mxu0 0.0
        %5618 = vmatpush1.xpose.msra.mxu0 0.0
        %5619 = vmatprep.subr.mxu0 0.0
        %5620 = vmatpush1.xpose.msra.mxu0 0.0
        %5621 = vmatprep.subr.mxu0 0.0
        %5622 = vmatpush1.xpose.msra.mxu0 0.0
        %5623 = vmatprep.subr.mxu0 0.0
        %5624 = vmatpush1.xpose.msra.mxu0 0.0
        %5625 = vmatprep.subr.mxu0 0.0
        %5626 = vmatpush1.xpose.msra.mxu0 0.0
        %5627 = vmatprep.mubr.f32.mxu0 0.0
        %5628 = vmatmul.mubr.f32.gmra.mrb[0].mxu0 %v5555
        %v5629 = vpop.f32.mrb[0].mxu0
        %v5630 = vadd.f32 0.0, %v5629
        %v5631 = vpop.f32.mrb[0].mxu0
        %5632 = vmatprep.mubr.f32.mxu0 0.0
        %5633 = vmatmul.mubr.f32.gmra.mrb[0].mxu0 %v5557
        %v5634 = vpop.f32.mrb[0].mxu0
        %v5635 = vadd.f32 0.0, %v5634
        %v5636 = vpop.f32.mrb[0].mxu0
        %5637 = vdwg.mxu0
        %5638 = vrot.lane.b32.xlu0 %v1726, 64
        %v5639 = vpop.permute.xlu0 %5638
        %5640 = vrot.lane.b32.xlu0 %v1727, 64
        %v5641 = vpop.permute.xlu0 %5640
        %5642 = vrot.lane.b32.xlu0 %v1861, 64
        %v5643 = vpop.permute.xlu0 %5642
        %5644 = vrot.lane.b32.xlu0 %v1862, 64
        %v5645 = vpop.permute.xlu0 %5644
        %v5646 = vsel %vm1863, %v5639, 0
        %v5648 = vsel %vm1863, %v5641, 0
        %v5650 = vsel %vm1863, %v5643, 0
        %v5652 = vsel %vm1863, %v5645, 0
        %5654 = vmatprep.subr.mxu0 0.0
        %5655 = vmatpush1.xpose.msra.mxu0 %v5650
        %5656 = vmatprep.subr.mxu0 0.0
        %5657 = vmatpush1.xpose.msra.mxu0 %v5652
        %5658 = vmatprep.subr.mxu0 0.0
        %5659 = vmatpush1.xpose.msra.mxu0 0.0
        %5660 = vmatprep.subr.mxu0 0.0
        %5661 = vmatpush1.xpose.msra.mxu0 0.0
        %5662 = vmatprep.subr.mxu0 0.0
        %5663 = vmatpush1.xpose.msra.mxu0 0.0
        %5664 = vmatprep.subr.mxu0 0.0
        %5665 = vmatpush1.xpose.msra.mxu0 0.0
        %5666 = vmatprep.subr.mxu0 0.0
        %5667 = vmatpush1.xpose.msra.mxu0 0.0
        %5668 = vmatprep.subr.mxu0 0.0
        %5669 = vmatpush1.xpose.msra.mxu0 0.0
        %5670 = vmatprep.subr.mxu0 0.0
        %5671 = vmatpush1.xpose.msra.mxu0 0.0
        %5672 = vmatprep.subr.mxu0 0.0
        %5673 = vmatpush1.xpose.msra.mxu0 0.0
        %5674 = vmatprep.subr.mxu0 0.0
        %5675 = vmatpush1.xpose.msra.mxu0 0.0
        %5676 = vmatprep.subr.mxu0 0.0
        %5677 = vmatpush1.xpose.msra.mxu0 0.0
        %5678 = vmatprep.subr.mxu0 0.0
        %5679 = vmatpush1.xpose.msra.mxu0 0.0
        %5680 = vmatprep.subr.mxu0 0.0
        %5681 = vmatpush1.xpose.msra.mxu0 0.0
        %5682 = vmatprep.subr.mxu0 0.0
        %5683 = vmatpush1.xpose.msra.mxu0 0.0
        %5684 = vmatprep.subr.mxu0 0.0
        %5685 = vmatpush1.xpose.msra.mxu0 0.0
        %5686 = vmatprep.subr.mxu0 0.0
        %5687 = vmatpush1.xpose.msra.mxu0 0.0
        %5688 = vmatprep.subr.mxu0 0.0
        %5689 = vmatpush1.xpose.msra.mxu0 0.0
        %5690 = vmatprep.subr.mxu0 0.0
        %5691 = vmatpush1.xpose.msra.mxu0 0.0
        %5692 = vmatprep.subr.mxu0 0.0
        %5693 = vmatpush1.xpose.msra.mxu0 0.0
        %5694 = vmatprep.subr.mxu0 0.0
        %5695 = vmatpush1.xpose.msra.mxu0 0.0
        %5696 = vmatprep.subr.mxu0 0.0
        %5697 = vmatpush1.xpose.msra.mxu0 0.0
        %5698 = vmatprep.subr.mxu0 0.0
        %5699 = vmatpush1.xpose.msra.mxu0 0.0
        %5700 = vmatprep.subr.mxu0 0.0
        %5701 = vmatpush1.xpose.msra.mxu0 0.0
        %5702 = vmatprep.subr.mxu0 0.0
        %5703 = vmatpush1.xpose.msra.mxu0 0.0
        %5704 = vmatprep.subr.mxu0 0.0
        %5705 = vmatpush1.xpose.msra.mxu0 0.0
        %5706 = vmatprep.subr.mxu0 0.0
        %5707 = vmatpush1.xpose.msra.mxu0 0.0
        %5708 = vmatprep.subr.mxu0 0.0
        %5709 = vmatpush1.xpose.msra.mxu0 0.0
        %5710 = vmatprep.subr.mxu0 0.0
        %5711 = vmatpush1.xpose.msra.mxu0 0.0
        %5712 = vmatprep.subr.mxu0 0.0
        %5713 = vmatpush1.xpose.msra.mxu0 0.0
        %5714 = vmatprep.subr.mxu0 0.0
        %5715 = vmatpush1.xpose.msra.mxu0 0.0
        %5716 = vmatprep.subr.mxu0 0.0
        %5717 = vmatpush1.xpose.msra.mxu0 0.0
        %5718 = vmatprep.mubr.f32.mxu0 0.0
        %5719 = vmatmul.mubr.f32.gmra.mrb[0].mxu0 %v5646
        %v5720 = vpop.f32.mrb[0].mxu0
        %v5721 = vadd.f32 0.0, %v5720
        %v5722 = vpop.f32.mrb[0].mxu0
        %5723 = vmatprep.mubr.f32.mxu0 0.0
        %5724 = vmatmul.mubr.f32.gmra.mrb[0].mxu0 %v5648
        %v5725 = vpop.f32.mrb[0].mxu0
        %v5726 = vadd.f32 0.0, %v5725
        %v5727 = vpop.f32.mrb[0].mxu0
        %5728 = vdwg.mxu0
        %v5729 = vsel %vm2560, %v5084, -inf
        %5730 = vmax.xlane.f32.xlu0 %v5729
        %v5731 = vpop.xlane.xlu0 %5730
        %v5732 = vsel %vm2560, %v5089, -inf
        %5733 = vmax.xlane.f32.xlu0 %v5732
        %v5734 = vpop.xlane.xlu0 %5733
        %v5735 = vsel %vm2560, %v5175, -inf
        %5736 = vmax.xlane.f32.xlu0 %v5735
        %v5737 = vpop.xlane.xlu0 %5736
        %v5738 = vsel %vm2560, %v5180, -inf
        %5739 = vmax.xlane.f32.xlu0 %v5738
        %v5740 = vpop.xlane.xlu0 %5739
        %v5741 = vsel %vm2560, %v5266, -inf
        %5742 = vmax.xlane.f32.xlu0 %v5741
        %v5743 = vpop.xlane.xlu0 %5742
        %v5744 = vsel %vm2560, %v5271, -inf
        %5745 = vmax.xlane.f32.xlu0 %v5744
        %v5746 = vpop.xlane.xlu0 %5745
        %v5747 = vsel %vm2560, %v5357, -inf
        %5748 = vmax.xlane.f32.xlu0 %v5747
        %v5749 = vpop.xlane.xlu0 %5748
        %v5750 = vsel %vm2560, %v5362, -inf
        %5751 = vmax.xlane.f32.xlu0 %v5750
        %v5752 = vpop.xlane.xlu0 %5751
        %v5753 = vsel %vm2560, %v5448, -inf
        %5754 = vmax.xlane.f32.xlu0 %v5753
        %v5755 = vpop.xlane.xlu0 %5754
        %v5756 = vsel %vm2560, %v5453, -inf
        %5757 = vmax.xlane.f32.xlu0 %v5756
        %v5758 = vpop.xlane.xlu0 %5757
        %v5759 = vsel %vm2560, %v5539, -inf
        %5760 = vmax.xlane.f32.xlu0 %v5759
        %v5761 = vpop.xlane.xlu0 %5760
        %v5762 = vsel %vm2560, %v5544, -inf
        %5763 = vmax.xlane.f32.xlu0 %v5762
        %v5764 = vpop.xlane.xlu0 %5763
        %v5765 = vsel %vm2560, %v5630, -inf
        %5766 = vmax.xlane.f32.xlu0 %v5765
        %v5767 = vpop.xlane.xlu0 %5766
        %v5768 = vsel %vm2560, %v5635, -inf
        %5769 = vmax.xlane.f32.xlu0 %v5768
        %v5770 = vpop.xlane.xlu0 %5769
        %v5771 = vsel %vm2560, %v5721, -inf
        %5772 = vmax.xlane.f32.xlu0 %v5771
        %v5773 = vpop.xlane.xlu0 %5772
        %v5774 = vsel %vm2560, %v5726, -inf
        %5775 = vmax.xlane.f32.xlu0 %v5774
        %v5776 = vpop.xlane.xlu0 %5775
        %v5777 = vsub.f32 %v5084, %v5731
        %v5778 = vsub.f32 %v5089, %v5734
        %v5779 = vsub.f32 %v5175, %v5737
        %v5780 = vsub.f32 %v5180, %v5740
        %v5781 = vsub.f32 %v5266, %v5743
        %v5782 = vsub.f32 %v5271, %v5746
        %v5783 = vsub.f32 %v5357, %v5749
        %v5784 = vsub.f32 %v5362, %v5752
        %v5785 = vsub.f32 %v5448, %v5755
        %v5786 = vsub.f32 %v5453, %v5758
        %v5787 = vsub.f32 %v5539, %v5761
        %v5788 = vsub.f32 %v5544, %v5764
        %v5789 = vsub.f32 %v5630, %v5767
        %v5790 = vsub.f32 %v5635, %v5770
        %v5791 = vsub.f32 %v5721, %v5773
        %v5792 = vsub.f32 %v5726, %v5776
        %v5793 = vmul.f32 %v5777, 1.442695
        %v5794 = vpow.pop %v5793
        %v5795 = vmul.f32 %v5778, 1.442695
        %v5796 = vpow.pop %v5795
        %v5797 = vmul.f32 %v5779, 1.442695
        %v5798 = vpow.pop %v5797
        %v5799 = vmul.f32 %v5780, 1.442695
        %v5800 = vpow.pop %v5799
        %v5801 = vmul.f32 %v5781, 1.442695
        %v5802 = vpow.pop %v5801
        %v5803 = vmul.f32 %v5782, 1.442695
        %v5804 = vpow.pop %v5803
        %v5805 = vmul.f32 %v5783, 1.442695
        %v5806 = vpow.pop %v5805
        %v5807 = vmul.f32 %v5784, 1.442695
        %v5808 = vpow.pop %v5807
        %v5809 = vmul.f32 %v5785, 1.442695
        %v5810 = vpow.pop %v5809
        %v5811 = vmul.f32 %v5786, 1.442695
        %v5812 = vpow.pop %v5811
        %v5813 = vmul.f32 %v5787, 1.442695
        %v5814 = vpow.pop %v5813
        %v5815 = vmul.f32 %v5788, 1.442695
        %v5816 = vpow.pop %v5815
        %v5817 = vmul.f32 %v5789, 1.442695
        %v5818 = vpow.pop %v5817
        %v5819 = vmul.f32 %v5790, 1.442695
        %v5820 = vpow.pop %v5819
        %v5821 = vmul.f32 %v5791, 1.442695
        %v5822 = vpow.pop %v5821
        %v5823 = vmul.f32 %v5792, 1.442695
        %v5824 = vpow.pop %v5823
        %v5825 = vsel %vm2560, %v5794, 0.0
        %5826 = vadd.xlane.f32.xlu0 %v5825
        %v5827 = vpop.xlane.xlu0 %5826
        %v5828 = vsel %vm2560, %v5796, 0.0
        %5829 = vadd.xlane.f32.xlu0 %v5828
        %v5830 = vpop.xlane.xlu0 %5829
        %v5831 = vsel %vm2560, %v5798, 0.0
        %5832 = vadd.xlane.f32.xlu0 %v5831
        %v5833 = vpop.xlane.xlu0 %5832
        %v5834 = vsel %vm2560, %v5800, 0.0
        %5835 = vadd.xlane.f32.xlu0 %v5834
        %v5836 = vpop.xlane.xlu0 %5835
        %v5837 = vsel %vm2560, %v5802, 0.0
        %5838 = vadd.xlane.f32.xlu0 %v5837
        %v5839 = vpop.xlane.xlu0 %5838
        %v5840 = vsel %vm2560, %v5804, 0.0
        %5841 = vadd.xlane.f32.xlu0 %v5840
        %v5842 = vpop.xlane.xlu0 %5841
        %v5843 = vsel %vm2560, %v5806, 0.0
        %5844 = vadd.xlane.f32.xlu0 %v5843
        %v5845 = vpop.xlane.xlu0 %5844
        %v5846 = vsel %vm2560, %v5808, 0.0
        %5847 = vadd.xlane.f32.xlu0 %v5846
        %v5848 = vpop.xlane.xlu0 %5847
        %v5849 = vsel %vm2560, %v5810, 0.0
        %5850 = vadd.xlane.f32.xlu0 %v5849
        %v5851 = vpop.xlane.xlu0 %5850
        %v5852 = vsel %vm2560, %v5812, 0.0
        %5853 = vadd.xlane.f32.xlu0 %v5852
        %v5854 = vpop.xlane.xlu0 %5853
        %v5855 = vsel %vm2560, %v5814, 0.0
        %5856 = vadd.xlane.f32.xlu0 %v5855
        %v5857 = vpop.xlane.xlu0 %5856
        %v5858 = vsel %vm2560, %v5816, 0.0
        %5859 = vadd.xlane.f32.xlu0 %v5858
        %v5860 = vpop.xlane.xlu0 %5859
        %v5861 = vsel %vm2560, %v5818, 0.0
        %5862 = vadd.xlane.f32.xlu0 %v5861
        %v5863 = vpop.xlane.xlu0 %5862
        %v5864 = vsel %vm2560, %v5820, 0.0
        %5865 = vadd.xlane.f32.xlu0 %v5864
        %v5866 = vpop.xlane.xlu0 %5865
        %v5867 = vsel %vm2560, %v5822, 0.0
        %5868 = vadd.xlane.f32.xlu0 %v5867
        %v5869 = vpop.xlane.xlu0 %5868
        %v5870 = vsel %vm2560, %v5824, 0.0
        %5871 = vadd.xlane.f32.xlu0 %v5870
        %v5872 = vpop.xlane.xlu0 %5871
        %v5873 = vrcp.pop %v5827
        %v5874 = vmul.f32 %v5794, %v5873
        %v5875 = vrcp.pop %v5830
        %v5876 = vmul.f32 %v5796, %v5875
        %v5877 = vrcp.pop %v5833
        %v5878 = vmul.f32 %v5798, %v5877
        %v5879 = vrcp.pop %v5836
        %v5880 = vmul.f32 %v5800, %v5879
        %v5881 = vrcp.pop %v5839
        %v5882 = vmul.f32 %v5802, %v5881
        %v5883 = vrcp.pop %v5842
        %v5884 = vmul.f32 %v5804, %v5883
        %v5885 = vrcp.pop %v5845
        %v5886 = vmul.f32 %v5806, %v5885
        %v5887 = vrcp.pop %v5848
        %v5888 = vmul.f32 %v5808, %v5887
        %v5889 = vrcp.pop %v5851
        %v5890 = vmul.f32 %v5810, %v5889
        %v5891 = vrcp.pop %v5854
        %v5892 = vmul.f32 %v5812, %v5891
        %v5893 = vrcp.pop %v5857
        %v5894 = vmul.f32 %v5814, %v5893
        %v5895 = vrcp.pop %v5860
        %v5896 = vmul.f32 %v5816, %v5895
        %v5897 = vrcp.pop %v5863
        %v5898 = vmul.f32 %v5818, %v5897
        %v5899 = vrcp.pop %v5866
        %v5900 = vmul.f32 %v5820, %v5899
        %v5901 = vrcp.pop %v5869
        %v5902 = vmul.f32 %v5822, %v5901
        %v5903 = vrcp.pop %v5872
        %v5904 = vmul.f32 %v5824, %v5903
        %5905 = vrot.lane.b32.xlu0 %v1515, 64
        %v5906 = vpop.permute.xlu0 %5905
        %5907 = vrot.lane.b32.xlu0 %v1518, 64
        %v5908 = vpop.permute.xlu0 %5907
        %v5912 = vsel %vm2560, %v5874, 0
        %v5915 = vsel %vm2560, %v5876, 0
        %5917 = vmatprep.subr.mxu0 0.0
        %5918 = vmatpush1.msra.mxu0 %v5906
        %5919 = vmatprep.subr.mxu0 0.0
        %5920 = vmatpush1.msra.mxu0 %v5908
        %5921 = vmatprep.subr.mxu0 0.0
        %5922 = vmatpush1.msra.mxu0 0.0
        %5923 = vmatprep.subr.mxu0 0.0
        %5924 = vmatpush1.msra.mxu0 0.0
        %5925 = vmatprep.subr.mxu0 0.0
        %5926 = vmatpush1.msra.mxu0 0.0
        %5927 = vmatprep.subr.mxu0 0.0
        %5928 = vmatpush1.msra.mxu0 0.0
        %5929 = vmatprep.subr.mxu0 0.0
        %5930 = vmatpush1.msra.mxu0 0.0
        %5931 = vmatprep.subr.mxu0 0.0
        %5932 = vmatpush1.msra.mxu0 0.0
        %5933 = vmatprep.subr.mxu0 0.0
        %5934 = vmatpush1.msra.mxu0 0.0
        %5935 = vmatprep.subr.mxu0 0.0
        %5936 = vmatpush1.msra.mxu0 0.0
        %5937 = vmatprep.subr.mxu0 0.0
        %5938 = vmatpush1.msra.mxu0 0.0
        %5939 = vmatprep.subr.mxu0 0.0
        %5940 = vmatpush1.msra.mxu0 0.0
        %5941 = vmatprep.subr.mxu0 0.0
        %5942 = vmatpush1.msra.mxu0 0.0
        %5943 = vmatprep.subr.mxu0 0.0
        %5944 = vmatpush1.msra.mxu0 0.0
        %5945 = vmatprep.subr.mxu0 0.0
        %5946 = vmatpush1.msra.mxu0 0.0
        %5947 = vmatprep.subr.mxu0 0.0
        %5948 = vmatpush1.msra.mxu0 0.0
        %5949 = vmatprep.subr.mxu0 0.0
        %5950 = vmatpush1.msra.mxu0 0.0
        %5951 = vmatprep.subr.mxu0 0.0
        %5952 = vmatpush1.msra.mxu0 0.0
        %5953 = vmatprep.subr.mxu0 0.0
        %5954 = vmatpush1.msra.mxu0 0.0
        %5955 = vmatprep.subr.mxu0 0.0
        %5956 = vmatpush1.msra.mxu0 0.0
        %5957 = vmatprep.subr.mxu0 0.0
        %5958 = vmatpush1.msra.mxu0 0.0
        %5959 = vmatprep.subr.mxu0 0.0
        %5960 = vmatpush1.msra.mxu0 0.0
        %5961 = vmatprep.subr.mxu0 0.0
        %5962 = vmatpush1.msra.mxu0 0.0
        %5963 = vmatprep.subr.mxu0 0.0
        %5964 = vmatpush1.msra.mxu0 0.0
        %5965 = vmatprep.subr.mxu0 0.0
        %5966 = vmatpush1.msra.mxu0 0.0
        %5967 = vmatprep.subr.mxu0 0.0
        %5968 = vmatpush1.msra.mxu0 0.0
        %5969 = vmatprep.subr.mxu0 0.0
        %5970 = vmatpush1.msra.mxu0 0.0
        %5971 = vmatprep.subr.mxu0 0.0
        %5972 = vmatpush1.msra.mxu0 0.0
        %5973 = vmatprep.subr.mxu0 0.0
        %5974 = vmatpush1.msra.mxu0 0.0
        %5975 = vmatprep.subr.mxu0 0.0
        %5976 = vmatpush1.msra.mxu0 0.0
        %5977 = vmatprep.subr.mxu0 0.0
        %5978 = vmatpush1.msra.mxu0 0.0
        %5979 = vmatprep.subr.mxu0 0.0
        %5980 = vmatpush1.msra.mxu0 0.0
        %5981 = vmatprep.mubr.f32.mxu0 0.0
        %5982 = vmatmul.mubr.f32.gmra.mrb[0].mxu0 %v5912
        %v5983 = vpop.f32.mrb[0].mxu0
        %v5984 = vadd.f32 0.0, %v5983
        %v5985 = vpop.f32.mrb[0].mxu0
        %5986 = vmatprep.mubr.f32.mxu0 0.0
        %5987 = vmatmul.mubr.f32.gmra.mrb[0].mxu0 %v5915
        %v5988 = vpop.f32.mrb[0].mxu0
        %v5989 = vadd.f32 0.0, %v5988
        %v5990 = vpop.f32.mrb[0].mxu0
        %5991 = vdwg.mxu0
        %5992 = vrot.lane.b32.xlu0 %v1523, 64
        %v5993 = vpop.permute.xlu0 %5992
        %5994 = vrot.lane.b32.xlu0 %v1526, 64
        %v5995 = vpop.permute.xlu0 %5994
        %v5999 = vsel %vm2560, %v5878, 0
        %v6002 = vsel %vm2560, %v5880, 0
        %6004 = vmatprep.subr.mxu0 0.0
        %6005 = vmatpush1.msra.mxu0 %v5993
        %6006 = vmatprep.subr.mxu0 0.0
        %6007 = vmatpush1.msra.mxu0 %v5995
        %6008 = vmatprep.subr.mxu0 0.0
        %6009 = vmatpush1.msra.mxu0 0.0
        %6010 = vmatprep.subr.mxu0 0.0
        %6011 = vmatpush1.msra.mxu0 0.0
        %6012 = vmatprep.subr.mxu0 0.0
        %6013 = vmatpush1.msra.mxu0 0.0
        %6014 = vmatprep.subr.mxu0 0.0
        %6015 = vmatpush1.msra.mxu0 0.0
        %6016 = vmatprep.subr.mxu0 0.0
        %6017 = vmatpush1.msra.mxu0 0.0
        %6018 = vmatprep.subr.mxu0 0.0
        %6019 = vmatpush1.msra.mxu0 0.0
        %6020 = vmatprep.subr.mxu0 0.0
        %6021 = vmatpush1.msra.mxu0 0.0
        %6022 = vmatprep.subr.mxu0 0.0
        %6023 = vmatpush1.msra.mxu0 0.0
        %6024 = vmatprep.subr.mxu0 0.0
        %6025 = vmatpush1.msra.mxu0 0.0
        %6026 = vmatprep.subr.mxu0 0.0
        %6027 = vmatpush1.msra.mxu0 0.0
        %6028 = vmatprep.subr.mxu0 0.0
        %6029 = vmatpush1.msra.mxu0 0.0
        %6030 = vmatprep.subr.mxu0 0.0
        %6031 = vmatpush1.msra.mxu0 0.0
        %6032 = vmatprep.subr.mxu0 0.0
        %6033 = vmatpush1.msra.mxu0 0.0
        %6034 = vmatprep.subr.mxu0 0.0
        %6035 = vmatpush1.msra.mxu0 0.0
        %6036 = vmatprep.subr.mxu0 0.0
        %6037 = vmatpush1.msra.mxu0 0.0
        %6038 = vmatprep.subr.mxu0 0.0
        %6039 = vmatpush1.msra.mxu0 0.0
        %6040 = vmatprep.subr.mxu0 0.0
        %6041 = vmatpush1.msra.mxu0 0.0
        %6042 = vmatprep.subr.mxu0 0.0
        %6043 = vmatpush1.msra.mxu0 0.0
        %6044 = vmatprep.subr.mxu0 0.0
        %6045 = vmatpush1.msra.mxu0 0.0
        %6046 = vmatprep.subr.mxu0 0.0
        %6047 = vmatpush1.msra.mxu0 0.0
        %6048 = vmatprep.subr.mxu0 0.0
        %6049 = vmatpush1.msra.mxu0 0.0
        %6050 = vmatprep.subr.mxu0 0.0
        %6051 = vmatpush1.msra.mxu0 0.0
        %6052 = vmatprep.subr.mxu0 0.0
        %6053 = vmatpush1.msra.mxu0 0.0
        %6054 = vmatprep.subr.mxu0 0.0
        %6055 = vmatpush1.msra.mxu0 0.0
        %6056 = vmatprep.subr.mxu0 0.0
        %6057 = vmatpush1.msra.mxu0 0.0
        %6058 = vmatprep.subr.mxu0 0.0
        %6059 = vmatpush1.msra.mxu0 0.0
        %6060 = vmatprep.subr.mxu0 0.0
        %6061 = vmatpush1.msra.mxu0 0.0
        %6062 = vmatprep.subr.mxu0 0.0
        %6063 = vmatpush1.msra.mxu0 0.0
        %6064 = vmatprep.subr.mxu0 0.0
        %6065 = vmatpush1.msra.mxu0 0.0
        %6066 = vmatprep.subr.mxu0 0.0
        %6067 = vmatpush1.msra.mxu0 0.0
        %6068 = vmatprep.mubr.f32.mxu0 0.0
        %6069 = vmatmul.mubr.f32.gmra.mrb[0].mxu0 %v5999
        %v6070 = vpop.f32.mrb[0].mxu0
        %v6071 = vadd.f32 0.0, %v6070
        %v6072 = vpop.f32.mrb[0].mxu0
        %6073 = vmatprep.mubr.f32.mxu0 0.0
        %6074 = vmatmul.mubr.f32.gmra.mrb[0].mxu0 %v6002
        %v6075 = vpop.f32.mrb[0].mxu0
        %v6076 = vadd.f32 0.0, %v6075
        %v6077 = vpop.f32.mrb[0].mxu0
        %6078 = vdwg.mxu0
        %6079 = vrot.lane.b32.xlu0 %v1531, 64
        %v6080 = vpop.permute.xlu0 %6079
        %6081 = vrot.lane.b32.xlu0 %v1534, 64
        %v6082 = vpop.permute.xlu0 %6081
        %v6086 = vsel %vm2560, %v5882, 0
        %v6089 = vsel %vm2560, %v5884, 0
        %6091 = vmatprep.subr.mxu0 0.0
        %6092 = vmatpush1.msra.mxu0 %v6080
        %6093 = vmatprep.subr.mxu0 0.0
        %6094 = vmatpush1.msra.mxu0 %v6082
        %6095 = vmatprep.subr.mxu0 0.0
        %6096 = vmatpush1.msra.mxu0 0.0
        %6097 = vmatprep.subr.mxu0 0.0
        %6098 = vmatpush1.msra.mxu0 0.0
        %6099 = vmatprep.subr.mxu0 0.0
        %6100 = vmatpush1.msra.mxu0 0.0
        %6101 = vmatprep.subr.mxu0 0.0
        %6102 = vmatpush1.msra.mxu0 0.0
        %6103 = vmatprep.subr.mxu0 0.0
        %6104 = vmatpush1.msra.mxu0 0.0
        %6105 = vmatprep.subr.mxu0 0.0
        %6106 = vmatpush1.msra.mxu0 0.0
        %6107 = vmatprep.subr.mxu0 0.0
        %6108 = vmatpush1.msra.mxu0 0.0
        %6109 = vmatprep.subr.mxu0 0.0
        %6110 = vmatpush1.msra.mxu0 0.0
        %6111 = vmatprep.subr.mxu0 0.0
        %6112 = vmatpush1.msra.mxu0 0.0
        %6113 = vmatprep.subr.mxu0 0.0
        %6114 = vmatpush1.msra.mxu0 0.0
        %6115 = vmatprep.subr.mxu0 0.0
        %6116 = vmatpush1.msra.mxu0 0.0
        %6117 = vmatprep.subr.mxu0 0.0
        %6118 = vmatpush1.msra.mxu0 0.0
        %6119 = vmatprep.subr.mxu0 0.0
        %6120 = vmatpush1.msra.mxu0 0.0
        %6121 = vmatprep.subr.mxu0 0.0
        %6122 = vmatpush1.msra.mxu0 0.0
        %6123 = vmatprep.subr.mxu0 0.0
        %6124 = vmatpush1.msra.mxu0 0.0
        %6125 = vmatprep.subr.mxu0 0.0
        %6126 = vmatpush1.msra.mxu0 0.0
        %6127 = vmatprep.subr.mxu0 0.0
        %6128 = vmatpush1.msra.mxu0 0.0
        %6129 = vmatprep.subr.mxu0 0.0
        %6130 = vmatpush1.msra.mxu0 0.0
        %6131 = vmatprep.subr.mxu0 0.0
        %6132 = vmatpush1.msra.mxu0 0.0
        %6133 = vmatprep.subr.mxu0 0.0
        %6134 = vmatpush1.msra.mxu0 0.0
        %6135 = vmatprep.subr.mxu0 0.0
        %6136 = vmatpush1.msra.mxu0 0.0
        %6137 = vmatprep.subr.mxu0 0.0
        %6138 = vmatpush1.msra.mxu0 0.0
        %6139 = vmatprep.subr.mxu0 0.0
        %6140 = vmatpush1.msra.mxu0 0.0
        %6141 = vmatprep.subr.mxu0 0.0
        %6142 = vmatpush1.msra.mxu0 0.0
        %6143 = vmatprep.subr.mxu0 0.0
        %6144 = vmatpush1.msra.mxu0 0.0
        %6145 = vmatprep.subr.mxu0 0.0
        %6146 = vmatpush1.msra.mxu0 0.0
        %6147 = vmatprep.subr.mxu0 0.0
        %6148 = vmatpush1.msra.mxu0 0.0
        %6149 = vmatprep.subr.mxu0 0.0
        %6150 = vmatpush1.msra.mxu0 0.0
        %6151 = vmatprep.subr.mxu0 0.0
        %6152 = vmatpush1.msra.mxu0 0.0
        %6153 = vmatprep.subr.mxu0 0.0
        %6154 = vmatpush1.msra.mxu0 0.0
        %6155 = vmatprep.mubr.f32.mxu0 0.0
        %6156 = vmatmul.mubr.f32.gmra.mrb[0].mxu0 %v6086
        %v6157 = vpop.f32.mrb[0].mxu0
        %v6158 = vadd.f32 0.0, %v6157
        %v6159 = vpop.f32.mrb[0].mxu0
        %6160 = vmatprep.mubr.f32.mxu0 0.0
        %6161 = vmatmul.mubr.f32.gmra.mrb[0].mxu0 %v6089
        %v6162 = vpop.f32.mrb[0].mxu0
        %v6163 = vadd.f32 0.0, %v6162
        %v6164 = vpop.f32.mrb[0].mxu0
        %6165 = vdwg.mxu0
        %6166 = vrot.lane.b32.xlu0 %v1539, 64
        %v6167 = vpop.permute.xlu0 %6166
        %6168 = vrot.lane.b32.xlu0 %v1542, 64
        %v6169 = vpop.permute.xlu0 %6168
        %v6173 = vsel %vm2560, %v5886, 0
        %v6176 = vsel %vm2560, %v5888, 0
        %6178 = vmatprep.subr.mxu0 0.0
        %6179 = vmatpush1.msra.mxu0 %v6167
        %6180 = vmatprep.subr.mxu0 0.0
        %6181 = vmatpush1.msra.mxu0 %v6169
        %6182 = vmatprep.subr.mxu0 0.0
        %6183 = vmatpush1.msra.mxu0 0.0
        %6184 = vmatprep.subr.mxu0 0.0
        %6185 = vmatpush1.msra.mxu0 0.0
        %6186 = vmatprep.subr.mxu0 0.0
        %6187 = vmatpush1.msra.mxu0 0.0
        %6188 = vmatprep.subr.mxu0 0.0
        %6189 = vmatpush1.msra.mxu0 0.0
        %6190 = vmatprep.subr.mxu0 0.0
        %6191 = vmatpush1.msra.mxu0 0.0
        %6192 = vmatprep.subr.mxu0 0.0
        %6193 = vmatpush1.msra.mxu0 0.0
        %6194 = vmatprep.subr.mxu0 0.0
        %6195 = vmatpush1.msra.mxu0 0.0
        %6196 = vmatprep.subr.mxu0 0.0
        %6197 = vmatpush1.msra.mxu0 0.0
        %6198 = vmatprep.subr.mxu0 0.0
        %6199 = vmatpush1.msra.mxu0 0.0
        %6200 = vmatprep.subr.mxu0 0.0
        %6201 = vmatpush1.msra.mxu0 0.0
        %6202 = vmatprep.subr.mxu0 0.0
        %6203 = vmatpush1.msra.mxu0 0.0
        %6204 = vmatprep.subr.mxu0 0.0
        %6205 = vmatpush1.msra.mxu0 0.0
        %6206 = vmatprep.subr.mxu0 0.0
        %6207 = vmatpush1.msra.mxu0 0.0
        %6208 = vmatprep.subr.mxu0 0.0
        %6209 = vmatpush1.msra.mxu0 0.0
        %6210 = vmatprep.subr.mxu0 0.0
        %6211 = vmatpush1.msra.mxu0 0.0
        %6212 = vmatprep.subr.mxu0 0.0
        %6213 = vmatpush1.msra.mxu0 0.0
        %6214 = vmatprep.subr.mxu0 0.0
        %6215 = vmatpush1.msra.mxu0 0.0
        %6216 = vmatprep.subr.mxu0 0.0
        %6217 = vmatpush1.msra.mxu0 0.0
        %6218 = vmatprep.subr.mxu0 0.0
        %6219 = vmatpush1.msra.mxu0 0.0
        %6220 = vmatprep.subr.mxu0 0.0
        %6221 = vmatpush1.msra.mxu0 0.0
        %6222 = vmatprep.subr.mxu0 0.0
        %6223 = vmatpush1.msra.mxu0 0.0
        %6224 = vmatprep.subr.mxu0 0.0
        %6225 = vmatpush1.msra.mxu0 0.0
        %6226 = vmatprep.subr.mxu0 0.0
        %6227 = vmatpush1.msra.mxu0 0.0
        %6228 = vmatprep.subr.mxu0 0.0
        %6229 = vmatpush1.msra.mxu0 0.0
        %6230 = vmatprep.subr.mxu0 0.0
        %6231 = vmatpush1.msra.mxu0 0.0
        %6232 = vmatprep.subr.mxu0 0.0
        %6233 = vmatpush1.msra.mxu0 0.0
        %6234 = vmatprep.subr.mxu0 0.0
        %6235 = vmatpush1.msra.mxu0 0.0
        %6236 = vmatprep.subr.mxu0 0.0
        %6237 = vmatpush1.msra.mxu0 0.0
        %6238 = vmatprep.subr.mxu0 0.0
        %6239 = vmatpush1.msra.mxu0 0.0
        %6240 = vmatprep.subr.mxu0 0.0
        %6241 = vmatpush1.msra.mxu0 0.0
        %6242 = vmatprep.mubr.f32.mxu0 0.0
        %6243 = vmatmul.mubr.f32.gmra.mrb[0].mxu0 %v6173
        %v6244 = vpop.f32.mrb[0].mxu0
        %v6245 = vadd.f32 0.0, %v6244
        %v6246 = vpop.f32.mrb[0].mxu0
        %6247 = vmatprep.mubr.f32.mxu0 0.0
        %6248 = vmatmul.mubr.f32.gmra.mrb[0].mxu0 %v6176
        %v6249 = vpop.f32.mrb[0].mxu0
        %v6250 = vadd.f32 0.0, %v6249
        %v6251 = vpop.f32.mrb[0].mxu0
        %6252 = vdwg.mxu0
        %6253 = vrot.lane.b32.xlu0 %v1547, 64
        %v6254 = vpop.permute.xlu0 %6253
        %6255 = vrot.lane.b32.xlu0 %v1550, 64
        %v6256 = vpop.permute.xlu0 %6255
        %v6260 = vsel %vm2560, %v5890, 0
        %v6263 = vsel %vm2560, %v5892, 0
        %6265 = vmatprep.subr.mxu0 0.0
        %6266 = vmatpush1.msra.mxu0 %v6254
        %6267 = vmatprep.subr.mxu0 0.0
        %6268 = vmatpush1.msra.mxu0 %v6256
        %6269 = vmatprep.subr.mxu0 0.0
        %6270 = vmatpush1.msra.mxu0 0.0
        %6271 = vmatprep.subr.mxu0 0.0
        %6272 = vmatpush1.msra.mxu0 0.0
        %6273 = vmatprep.subr.mxu0 0.0
        %6274 = vmatpush1.msra.mxu0 0.0
        %6275 = vmatprep.subr.mxu0 0.0
        %6276 = vmatpush1.msra.mxu0 0.0
        %6277 = vmatprep.subr.mxu0 0.0
        %6278 = vmatpush1.msra.mxu0 0.0
        %6279 = vmatprep.subr.mxu0 0.0
        %6280 = vmatpush1.msra.mxu0 0.0
        %6281 = vmatprep.subr.mxu0 0.0
        %6282 = vmatpush1.msra.mxu0 0.0
        %6283 = vmatprep.subr.mxu0 0.0
        %6284 = vmatpush1.msra.mxu0 0.0
        %6285 = vmatprep.subr.mxu0 0.0
        %6286 = vmatpush1.msra.mxu0 0.0
        %6287 = vmatprep.subr.mxu0 0.0
        %6288 = vmatpush1.msra.mxu0 0.0
        %6289 = vmatprep.subr.mxu0 0.0
        %6290 = vmatpush1.msra.mxu0 0.0
        %6291 = vmatprep.subr.mxu0 0.0
        %6292 = vmatpush1.msra.mxu0 0.0
        %6293 = vmatprep.subr.mxu0 0.0
        %6294 = vmatpush1.msra.mxu0 0.0
        %6295 = vmatprep.subr.mxu0 0.0
        %6296 = vmatpush1.msra.mxu0 0.0
        %6297 = vmatprep.subr.mxu0 0.0
        %6298 = vmatpush1.msra.mxu0 0.0
        %6299 = vmatprep.subr.mxu0 0.0
        %6300 = vmatpush1.msra.mxu0 0.0
        %6301 = vmatprep.subr.mxu0 0.0
        %6302 = vmatpush1.msra.mxu0 0.0
        %6303 = vmatprep.subr.mxu0 0.0
        %6304 = vmatpush1.msra.mxu0 0.0
        %6305 = vmatprep.subr.mxu0 0.0
        %6306 = vmatpush1.msra.mxu0 0.0
        %6307 = vmatprep.subr.mxu0 0.0
        %6308 = vmatpush1.msra.mxu0 0.0
        %6309 = vmatprep.subr.mxu0 0.0
        %6310 = vmatpush1.msra.mxu0 0.0
        %6311 = vmatprep.subr.mxu0 0.0
        %6312 = vmatpush1.msra.mxu0 0.0
        %6313 = vmatprep.subr.mxu0 0.0
        %6314 = vmatpush1.msra.mxu0 0.0
        %6315 = vmatprep.subr.mxu0 0.0
        %6316 = vmatpush1.msra.mxu0 0.0
        %6317 = vmatprep.subr.mxu0 0.0
        %6318 = vmatpush1.msra.mxu0 0.0
        %6319 = vmatprep.subr.mxu0 0.0
        %6320 = vmatpush1.msra.mxu0 0.0
        %6321 = vmatprep.subr.mxu0 0.0
        %6322 = vmatpush1.msra.mxu0 0.0
        %6323 = vmatprep.subr.mxu0 0.0
        %6324 = vmatpush1.msra.mxu0 0.0
        %6325 = vmatprep.subr.mxu0 0.0
        %6326 = vmatpush1.msra.mxu0 0.0
        %6327 = vmatprep.subr.mxu0 0.0
        %6328 = vmatpush1.msra.mxu0 0.0
        %6329 = vmatprep.mubr.f32.mxu0 0.0
        %6330 = vmatmul.mubr.f32.gmra.mrb[0].mxu0 %v6260
        %v6331 = vpop.f32.mrb[0].mxu0
        %v6332 = vadd.f32 0.0, %v6331
        %v6333 = vpop.f32.mrb[0].mxu0
        %6334 = vmatprep.mubr.f32.mxu0 0.0
        %6335 = vmatmul.mubr.f32.gmra.mrb[0].mxu0 %v6263
        %v6336 = vpop.f32.mrb[0].mxu0
        %v6337 = vadd.f32 0.0, %v6336
        %v6338 = vpop.f32.mrb[0].mxu0
        %6339 = vdwg.mxu0
        %6340 = vrot.lane.b32.xlu0 %v1555, 64
        %v6341 = vpop.permute.xlu0 %6340
        %6342 = vrot.lane.b32.xlu0 %v1558, 64
        %v6343 = vpop.permute.xlu0 %6342
        %v6347 = vsel %vm2560, %v5894, 0
        %v6350 = vsel %vm2560, %v5896, 0
        %6352 = vmatprep.subr.mxu0 0.0
        %6353 = vmatpush1.msra.mxu0 %v6341
        %6354 = vmatprep.subr.mxu0 0.0
        %6355 = vmatpush1.msra.mxu0 %v6343
        %6356 = vmatprep.subr.mxu0 0.0
        %6357 = vmatpush1.msra.mxu0 0.0
        %6358 = vmatprep.subr.mxu0 0.0
        %6359 = vmatpush1.msra.mxu0 0.0
        %6360 = vmatprep.subr.mxu0 0.0
        %6361 = vmatpush1.msra.mxu0 0.0
        %6362 = vmatprep.subr.mxu0 0.0
        %6363 = vmatpush1.msra.mxu0 0.0
        %6364 = vmatprep.subr.mxu0 0.0
        %6365 = vmatpush1.msra.mxu0 0.0
        %6366 = vmatprep.subr.mxu0 0.0
        %6367 = vmatpush1.msra.mxu0 0.0
        %6368 = vmatprep.subr.mxu0 0.0
        %6369 = vmatpush1.msra.mxu0 0.0
        %6370 = vmatprep.subr.mxu0 0.0
        %6371 = vmatpush1.msra.mxu0 0.0
        %6372 = vmatprep.subr.mxu0 0.0
        %6373 = vmatpush1.msra.mxu0 0.0
        %6374 = vmatprep.subr.mxu0 0.0
        %6375 = vmatpush1.msra.mxu0 0.0
        %6376 = vmatprep.subr.mxu0 0.0
        %6377 = vmatpush1.msra.mxu0 0.0
        %6378 = vmatprep.subr.mxu0 0.0
        %6379 = vmatpush1.msra.mxu0 0.0
        %6380 = vmatprep.subr.mxu0 0.0
        %6381 = vmatpush1.msra.mxu0 0.0
        %6382 = vmatprep.subr.mxu0 0.0
        %6383 = vmatpush1.msra.mxu0 0.0
        %6384 = vmatprep.subr.mxu0 0.0
        %6385 = vmatpush1.msra.mxu0 0.0
        %6386 = vmatprep.subr.mxu0 0.0
        %6387 = vmatpush1.msra.mxu0 0.0
        %6388 = vmatprep.subr.mxu0 0.0
        %6389 = vmatpush1.msra.mxu0 0.0
        %6390 = vmatprep.subr.mxu0 0.0
        %6391 = vmatpush1.msra.mxu0 0.0
        %6392 = vmatprep.subr.mxu0 0.0
        %6393 = vmatpush1.msra.mxu0 0.0
        %6394 = vmatprep.subr.mxu0 0.0
        %6395 = vmatpush1.msra.mxu0 0.0
        %6396 = vmatprep.subr.mxu0 0.0
        %6397 = vmatpush1.msra.mxu0 0.0
        %6398 = vmatprep.subr.mxu0 0.0
        %6399 = vmatpush1.msra.mxu0 0.0
        %6400 = vmatprep.subr.mxu0 0.0
        %6401 = vmatpush1.msra.mxu0 0.0
        %6402 = vmatprep.subr.mxu0 0.0
        %6403 = vmatpush1.msra.mxu0 0.0
        %6404 = vmatprep.subr.mxu0 0.0
        %6405 = vmatpush1.msra.mxu0 0.0
        %6406 = vmatprep.subr.mxu0 0.0
        %6407 = vmatpush1.msra.mxu0 0.0
        %6408 = vmatprep.subr.mxu0 0.0
        %6409 = vmatpush1.msra.mxu0 0.0
        %6410 = vmatprep.subr.mxu0 0.0
        %6411 = vmatpush1.msra.mxu0 0.0
        %6412 = vmatprep.subr.mxu0 0.0
        %6413 = vmatpush1.msra.mxu0 0.0
        %6414 = vmatprep.subr.mxu0 0.0
        %6415 = vmatpush1.msra.mxu0 0.0
        %6416 = vmatprep.mubr.f32.mxu0 0.0
        %6417 = vmatmul.mubr.f32.gmra.mrb[0].mxu0 %v6347
        %v6418 = vpop.f32.mrb[0].mxu0
        %v6419 = vadd.f32 0.0, %v6418
        %v6420 = vpop.f32.mrb[0].mxu0
        %6421 = vmatprep.mubr.f32.mxu0 0.0
        %6422 = vmatmul.mubr.f32.gmra.mrb[0].mxu0 %v6350
        %v6423 = vpop.f32.mrb[0].mxu0
        %v6424 = vadd.f32 0.0, %v6423
        %v6425 = vpop.f32.mrb[0].mxu0
        %6426 = vdwg.mxu0
        %6427 = vrot.lane.b32.xlu0 %v1563, 64
        %v6428 = vpop.permute.xlu0 %6427
        %6429 = vrot.lane.b32.xlu0 %v1566, 64
        %v6430 = vpop.permute.xlu0 %6429
        %v6434 = vsel %vm2560, %v5898, 0
        %v6437 = vsel %vm2560, %v5900, 0
        %6439 = vmatprep.subr.mxu0 0.0
        %6440 = vmatpush1.msra.mxu0 %v6428
        %6441 = vmatprep.subr.mxu0 0.0
        %6442 = vmatpush1.msra.mxu0 %v6430
        %6443 = vmatprep.subr.mxu0 0.0
        %6444 = vmatpush1.msra.mxu0 0.0
        %6445 = vmatprep.subr.mxu0 0.0
        %6446 = vmatpush1.msra.mxu0 0.0
        %6447 = vmatprep.subr.mxu0 0.0
        %6448 = vmatpush1.msra.mxu0 0.0
        %6449 = vmatprep.subr.mxu0 0.0
        %6450 = vmatpush1.msra.mxu0 0.0
        %6451 = vmatprep.subr.mxu0 0.0
        %6452 = vmatpush1.msra.mxu0 0.0
        %6453 = vmatprep.subr.mxu0 0.0
        %6454 = vmatpush1.msra.mxu0 0.0
        %6455 = vmatprep.subr.mxu0 0.0
        %6456 = vmatpush1.msra.mxu0 0.0
        %6457 = vmatprep.subr.mxu0 0.0
        %6458 = vmatpush1.msra.mxu0 0.0
        %6459 = vmatprep.subr.mxu0 0.0
        %6460 = vmatpush1.msra.mxu0 0.0
        %6461 = vmatprep.subr.mxu0 0.0
        %6462 = vmatpush1.msra.mxu0 0.0
        %6463 = vmatprep.subr.mxu0 0.0
        %6464 = vmatpush1.msra.mxu0 0.0
        %6465 = vmatprep.subr.mxu0 0.0
        %6466 = vmatpush1.msra.mxu0 0.0
        %6467 = vmatprep.subr.mxu0 0.0
        %6468 = vmatpush1.msra.mxu0 0.0
        %6469 = vmatprep.subr.mxu0 0.0
        %6470 = vmatpush1.msra.mxu0 0.0
        %6471 = vmatprep.subr.mxu0 0.0
        %6472 = vmatpush1.msra.mxu0 0.0
        %6473 = vmatprep.subr.mxu0 0.0
        %6474 = vmatpush1.msra.mxu0 0.0
        %6475 = vmatprep.subr.mxu0 0.0
        %6476 = vmatpush1.msra.mxu0 0.0
        %6477 = vmatprep.subr.mxu0 0.0
        %6478 = vmatpush1.msra.mxu0 0.0
        %6479 = vmatprep.subr.mxu0 0.0
        %6480 = vmatpush1.msra.mxu0 0.0
        %6481 = vmatprep.subr.mxu0 0.0
        %6482 = vmatpush1.msra.mxu0 0.0
        %6483 = vmatprep.subr.mxu0 0.0
        %6484 = vmatpush1.msra.mxu0 0.0
        %6485 = vmatprep.subr.mxu0 0.0
        %6486 = vmatpush1.msra.mxu0 0.0
        %6487 = vmatprep.subr.mxu0 0.0
        %6488 = vmatpush1.msra.mxu0 0.0
        %6489 = vmatprep.subr.mxu0 0.0
        %6490 = vmatpush1.msra.mxu0 0.0
        %6491 = vmatprep.subr.mxu0 0.0
        %6492 = vmatpush1.msra.mxu0 0.0
        %6493 = vmatprep.subr.mxu0 0.0
        %6494 = vmatpush1.msra.mxu0 0.0
        %6495 = vmatprep.subr.mxu0 0.0
        %6496 = vmatpush1.msra.mxu0 0.0
        %6497 = vmatprep.subr.mxu0 0.0
        %6498 = vmatpush1.msra.mxu0 0.0
        %6499 = vmatprep.subr.mxu0 0.0
        %6500 = vmatpush1.msra.mxu0 0.0
        %6501 = vmatprep.subr.mxu0 0.0
        %6502 = vmatpush1.msra.mxu0 0.0
        %6503 = vmatprep.mubr.f32.mxu0 0.0
        %6504 = vmatmul.mubr.f32.gmra.mrb[0].mxu0 %v6434
        %v6505 = vpop.f32.mrb[0].mxu0
        %v6506 = vadd.f32 0.0, %v6505
        %v6507 = vpop.f32.mrb[0].mxu0
        %6508 = vmatprep.mubr.f32.mxu0 0.0
        %6509 = vmatmul.mubr.f32.gmra.mrb[0].mxu0 %v6437
        %v6510 = vpop.f32.mrb[0].mxu0
        %v6511 = vadd.f32 0.0, %v6510
        %v6512 = vpop.f32.mrb[0].mxu0
        %6513 = vdwg.mxu0
        %6514 = vrot.lane.b32.xlu0 %v1571, 64
        %v6515 = vpop.permute.xlu0 %6514
        %6516 = vrot.lane.b32.xlu0 %v1574, 64
        %v6517 = vpop.permute.xlu0 %6516
        %v6521 = vsel %vm2560, %v5902, 0
        %v6524 = vsel %vm2560, %v5904, 0
        %6526 = vmatprep.subr.mxu0 0.0
        %6527 = vmatpush1.msra.mxu0 %v6515
        %6528 = vmatprep.subr.mxu0 0.0
        %6529 = vmatpush1.msra.mxu0 %v6517
        %6530 = vmatprep.subr.mxu0 0.0
        %6531 = vmatpush1.msra.mxu0 0.0
        %6532 = vmatprep.subr.mxu0 0.0
        %6533 = vmatpush1.msra.mxu0 0.0
        %6534 = vmatprep.subr.mxu0 0.0
        %6535 = vmatpush1.msra.mxu0 0.0
        %6536 = vmatprep.subr.mxu0 0.0
        %6537 = vmatpush1.msra.mxu0 0.0
        %6538 = vmatprep.subr.mxu0 0.0
        %6539 = vmatpush1.msra.mxu0 0.0
        %6540 = vmatprep.subr.mxu0 0.0
        %6541 = vmatpush1.msra.mxu0 0.0
        %6542 = vmatprep.subr.mxu0 0.0
        %6543 = vmatpush1.msra.mxu0 0.0
        %6544 = vmatprep.subr.mxu0 0.0
        %6545 = vmatpush1.msra.mxu0 0.0
        %6546 = vmatprep.subr.mxu0 0.0
        %6547 = vmatpush1.msra.mxu0 0.0
        %6548 = vmatprep.subr.mxu0 0.0
        %6549 = vmatpush1.msra.mxu0 0.0
        %6550 = vmatprep.subr.mxu0 0.0
        %6551 = vmatpush1.msra.mxu0 0.0
        %6552 = vmatprep.subr.mxu0 0.0
        %6553 = vmatpush1.msra.mxu0 0.0
        %6554 = vmatprep.subr.mxu0 0.0
        %6555 = vmatpush1.msra.mxu0 0.0
        %6556 = vmatprep.subr.mxu0 0.0
        %6557 = vmatpush1.msra.mxu0 0.0
        %6558 = vmatprep.subr.mxu0 0.0
        %6559 = vmatpush1.msra.mxu0 0.0
        %6560 = vmatprep.subr.mxu0 0.0
        %6561 = vmatpush1.msra.mxu0 0.0
        %6562 = vmatprep.subr.mxu0 0.0
        %6563 = vmatpush1.msra.mxu0 0.0
        %6564 = vmatprep.subr.mxu0 0.0
        %6565 = vmatpush1.msra.mxu0 0.0
        %6566 = vmatprep.subr.mxu0 0.0
        %6567 = vmatpush1.msra.mxu0 0.0
        %6568 = vmatprep.subr.mxu0 0.0
        %6569 = vmatpush1.msra.mxu0 0.0
        %6570 = vmatprep.subr.mxu0 0.0
        %6571 = vmatpush1.msra.mxu0 0.0
        %6572 = vmatprep.subr.mxu0 0.0
        %6573 = vmatpush1.msra.mxu0 0.0
        %6574 = vmatprep.subr.mxu0 0.0
        %6575 = vmatpush1.msra.mxu0 0.0
        %6576 = vmatprep.subr.mxu0 0.0
        %6577 = vmatpush1.msra.mxu0 0.0
        %6578 = vmatprep.subr.mxu0 0.0
        %6579 = vmatpush1.msra.mxu0 0.0
        %6580 = vmatprep.subr.mxu0 0.0
        %6581 = vmatpush1.msra.mxu0 0.0
        %6582 = vmatprep.subr.mxu0 0.0
        %6583 = vmatpush1.msra.mxu0 0.0
        %6584 = vmatprep.subr.mxu0 0.0
        %6585 = vmatpush1.msra.mxu0 0.0
        %6586 = vmatprep.subr.mxu0 0.0
        %6587 = vmatpush1.msra.mxu0 0.0
        %6588 = vmatprep.subr.mxu0 0.0
        %6589 = vmatpush1.msra.mxu0 0.0
        %6590 = vmatprep.mubr.f32.mxu0 0.0
        %6591 = vmatmul.mubr.f32.gmra.mrb[0].mxu0 %v6521
        %v6592 = vpop.f32.mrb[0].mxu0
        %v6593 = vadd.f32 0.0, %v6592
        %v6594 = vpop.f32.mrb[0].mxu0
        %6595 = vmatprep.mubr.f32.mxu0 0.0
        %6596 = vmatmul.mubr.f32.gmra.mrb[0].mxu0 %v6524
        %v6597 = vpop.f32.mrb[0].mxu0
        %v6598 = vadd.f32 0.0, %v6597
        %v6599 = vpop.f32.mrb[0].mxu0
        %6600 = vdwg.mxu0
        %6601 = vrot.lane.b32.xlu0 %v1712, 32
        %v6602 = vpop.permute.xlu0 %6601
        %6603 = vrot.lane.b32.xlu0 %v1713, 32
        %v6604 = vpop.permute.xlu0 %6603
        %6605 = vrot.lane.b32.xlu0 %v1847, 32
        %v6606 = vpop.permute.xlu0 %6605
        %6607 = vrot.lane.b32.xlu0 %v1848, 32
        %v6608 = vpop.permute.xlu0 %6607
        %v6609 = vsel %vm1863, %v6602, 0
        %v6611 = vsel %vm1863, %v6604, 0
        %v6613 = vsel %vm1863, %v6606, 0
        %v6615 = vsel %vm1863, %v6608, 0
        %6617 = vmatprep.subr.mxu0 0.0
        %6618 = vmatpush1.xpose.msra.mxu0 %v6613
        %6619 = vmatprep.subr.mxu0 0.0
        %6620 = vmatpush1.xpose.msra.mxu0 %v6615
        %6621 = vmatprep.subr.mxu0 0.0
        %6622 = vmatpush1.xpose.msra.mxu0 0.0
        %6623 = vmatprep.subr.mxu0 0.0
        %6624 = vmatpush1.xpose.msra.mxu0 0.0
        %6625 = vmatprep.subr.mxu0 0.0
        %6626 = vmatpush1.xpose.msra.mxu0 0.0
        %6627 = vmatprep.subr.mxu0 0.0
        %6628 = vmatpush1.xpose.msra.mxu0 0.0
        %6629 = vmatprep.subr.mxu0 0.0
        %6630 = vmatpush1.xpose.msra.mxu0 0.0
        %6631 = vmatprep.subr.mxu0 0.0
        %6632 = vmatpush1.xpose.msra.mxu0 0.0
        %6633 = vmatprep.subr.mxu0 0.0
        %6634 = vmatpush1.xpose.msra.mxu0 0.0
        %6635 = vmatprep.subr.mxu0 0.0
        %6636 = vmatpush1.xpose.msra.mxu0 0.0
        %6637 = vmatprep.subr.mxu0 0.0
        %6638 = vmatpush1.xpose.msra.mxu0 0.0
        %6639 = vmatprep.subr.mxu0 0.0
        %6640 = vmatpush1.xpose.msra.mxu0 0.0
        %6641 = vmatprep.subr.mxu0 0.0
        %6642 = vmatpush1.xpose.msra.mxu0 0.0
        %6643 = vmatprep.subr.mxu0 0.0
        %6644 = vmatpush1.xpose.msra.mxu0 0.0
        %6645 = vmatprep.subr.mxu0 0.0
        %6646 = vmatpush1.xpose.msra.mxu0 0.0
        %6647 = vmatprep.subr.mxu0 0.0
        %6648 = vmatpush1.xpose.msra.mxu0 0.0
        %6649 = vmatprep.subr.mxu0 0.0
        %6650 = vmatpush1.xpose.msra.mxu0 0.0
        %6651 = vmatprep.subr.mxu0 0.0
        %6652 = vmatpush1.xpose.msra.mxu0 0.0
        %6653 = vmatprep.subr.mxu0 0.0
        %6654 = vmatpush1.xpose.msra.mxu0 0.0
        %6655 = vmatprep.subr.mxu0 0.0
        %6656 = vmatpush1.xpose.msra.mxu0 0.0
        %6657 = vmatprep.subr.mxu0 0.0
        %6658 = vmatpush1.xpose.msra.mxu0 0.0
        %6659 = vmatprep.subr.mxu0 0.0
        %6660 = vmatpush1.xpose.msra.mxu0 0.0
        %6661 = vmatprep.subr.mxu0 0.0
        %6662 = vmatpush1.xpose.msra.mxu0 0.0
        %6663 = vmatprep.subr.mxu0 0.0
        %6664 = vmatpush1.xpose.msra.mxu0 0.0
        %6665 = vmatprep.subr.mxu0 0.0
        %6666 = vmatpush1.xpose.msra.mxu0 0.0
        %6667 = vmatprep.subr.mxu0 0.0
        %6668 = vmatpush1.xpose.msra.mxu0 0.0
        %6669 = vmatprep.subr.mxu0 0.0
        %6670 = vmatpush1.xpose.msra.mxu0 0.0
        %6671 = vmatprep.subr.mxu0 0.0
        %6672 = vmatpush1.xpose.msra.mxu0 0.0
        %6673 = vmatprep.subr.mxu0 0.0
        %6674 = vmatpush1.xpose.msra.mxu0 0.0
        %6675 = vmatprep.subr.mxu0 0.0
        %6676 = vmatpush1.xpose.msra.mxu0 0.0
        %6677 = vmatprep.subr.mxu0 0.0
        %6678 = vmatpush1.xpose.msra.mxu0 0.0
        %6679 = vmatprep.subr.mxu0 0.0
        %6680 = vmatpush1.xpose.msra.mxu0 0.0
        %6681 = vmatprep.mubr.f32.mxu0 0.0
        %6682 = vmatmul.mubr.f32.gmra.mrb[0].mxu0 %v6609
        %v6683 = vpop.f32.mrb[0].mxu0
        %v6684 = vadd.f32 0.0, %v6683
        %v6685 = vpop.f32.mrb[0].mxu0
        %6686 = vmatprep.mubr.f32.mxu0 0.0
        %6687 = vmatmul.mubr.f32.gmra.mrb[0].mxu0 %v6611
        %v6688 = vpop.f32.mrb[0].mxu0
        %v6689 = vadd.f32 0.0, %v6688
        %v6690 = vpop.f32.mrb[0].mxu0
        %6691 = vdwg.mxu0
        %6692 = vrot.lane.b32.xlu0 %v1714, 32
        %v6693 = vpop.permute.xlu0 %6692
        %6694 = vrot.lane.b32.xlu0 %v1715, 32
        %v6695 = vpop.permute.xlu0 %6694
        %6696 = vrot.lane.b32.xlu0 %v1849, 32
        %v6697 = vpop.permute.xlu0 %6696
        %6698 = vrot.lane.b32.xlu0 %v1850, 32
        %v6699 = vpop.permute.xlu0 %6698
        %v6700 = vsel %vm1863, %v6693, 0
        %v6702 = vsel %vm1863, %v6695, 0
        %v6704 = vsel %vm1863, %v6697, 0
        %v6706 = vsel %vm1863, %v6699, 0
        %6708 = vmatprep.subr.mxu0 0.0
        %6709 = vmatpush1.xpose.msra.mxu0 %v6704
        %6710 = vmatprep.subr.mxu0 0.0
        %6711 = vmatpush1.xpose.msra.mxu0 %v6706
        %6712 = vmatprep.subr.mxu0 0.0
        %6713 = vmatpush1.xpose.msra.mxu0 0.0
        %6714 = vmatprep.subr.mxu0 0.0
        %6715 = vmatpush1.xpose.msra.mxu0 0.0
        %6716 = vmatprep.subr.mxu0 0.0
        %6717 = vmatpush1.xpose.msra.mxu0 0.0
        %6718 = vmatprep.subr.mxu0 0.0
        %6719 = vmatpush1.xpose.msra.mxu0 0.0
        %6720 = vmatprep.subr.mxu0 0.0
        %6721 = vmatpush1.xpose.msra.mxu0 0.0
        %6722 = vmatprep.subr.mxu0 0.0
        %6723 = vmatpush1.xpose.msra.mxu0 0.0
        %6724 = vmatprep.subr.mxu0 0.0
        %6725 = vmatpush1.xpose.msra.mxu0 0.0
        %6726 = vmatprep.subr.mxu0 0.0
        %6727 = vmatpush1.xpose.msra.mxu0 0.0
        %6728 = vmatprep.subr.mxu0 0.0
        %6729 = vmatpush1.xpose.msra.mxu0 0.0
        %6730 = vmatprep.subr.mxu0 0.0
        %6731 = vmatpush1.xpose.msra.mxu0 0.0
        %6732 = vmatprep.subr.mxu0 0.0
        %6733 = vmatpush1.xpose.msra.mxu0 0.0
        %6734 = vmatprep.subr.mxu0 0.0
        %6735 = vmatpush1.xpose.msra.mxu0 0.0
        %6736 = vmatprep.subr.mxu0 0.0
        %6737 = vmatpush1.xpose.msra.mxu0 0.0
        %6738 = vmatprep.subr.mxu0 0.0
        %6739 = vmatpush1.xpose.msra.mxu0 0.0
        %6740 = vmatprep.subr.mxu0 0.0
        %6741 = vmatpush1.xpose.msra.mxu0 0.0
        %6742 = vmatprep.subr.mxu0 0.0
        %6743 = vmatpush1.xpose.msra.mxu0 0.0
        %6744 = vmatprep.subr.mxu0 0.0
        %6745 = vmatpush1.xpose.msra.mxu0 0.0
        %6746 = vmatprep.subr.mxu0 0.0
        %6747 = vmatpush1.xpose.msra.mxu0 0.0
        %6748 = vmatprep.subr.mxu0 0.0
        %6749 = vmatpush1.xpose.msra.mxu0 0.0
        %6750 = vmatprep.subr.mxu0 0.0
        %6751 = vmatpush1.xpose.msra.mxu0 0.0
        %6752 = vmatprep.subr.mxu0 0.0
        %6753 = vmatpush1.xpose.msra.mxu0 0.0
        %6754 = vmatprep.subr.mxu0 0.0
        %6755 = vmatpush1.xpose.msra.mxu0 0.0
        %6756 = vmatprep.subr.mxu0 0.0
        %6757 = vmatpush1.xpose.msra.mxu0 0.0
        %6758 = vmatprep.subr.mxu0 0.0
        %6759 = vmatpush1.xpose.msra.mxu0 0.0
        %6760 = vmatprep.subr.mxu0 0.0
        %6761 = vmatpush1.xpose.msra.mxu0 0.0
        %6762 = vmatprep.subr.mxu0 0.0
        %6763 = vmatpush1.xpose.msra.mxu0 0.0
        %6764 = vmatprep.subr.mxu0 0.0
        %6765 = vmatpush1.xpose.msra.mxu0 0.0
        %6766 = vmatprep.subr.mxu0 0.0
        %6767 = vmatpush1.xpose.msra.mxu0 0.0
        %6768 = vmatprep.subr.mxu0 0.0
        %6769 = vmatpush1.xpose.msra.mxu0 0.0
        %6770 = vmatprep.subr.mxu0 0.0
        %6771 = vmatpush1.xpose.msra.mxu0 0.0
        %6772 = vmatprep.mubr.f32.mxu0 0.0
        %6773 = vmatmul.mubr.f32.gmra.mrb[0].mxu0 %v6700
        %v6774 = vpop.f32.mrb[0].mxu0
        %v6775 = vadd.f32 0.0, %v6774
        %v6776 = vpop.f32.mrb[0].mxu0
        %6777 = vmatprep.mubr.f32.mxu0 0.0
        %6778 = vmatmul.mubr.f32.gmra.mrb[0].mxu0 %v6702
        %v6779 = vpop.f32.mrb[0].mxu0
        %v6780 = vadd.f32 0.0, %v6779
        %v6781 = vpop.f32.mrb[0].mxu0
        %6782 = vdwg.mxu0
        %6783 = vrot.lane.b32.xlu0 %v1716, 32
        %v6784 = vpop.permute.xlu0 %6783
        %6785 = vrot.lane.b32.xlu0 %v1717, 32
        %v6786 = vpop.permute.xlu0 %6785
        %6787 = vrot.lane.b32.xlu0 %v1851, 32
        %v6788 = vpop.permute.xlu0 %6787
        %6789 = vrot.lane.b32.xlu0 %v1852, 32
        %v6790 = vpop.permute.xlu0 %6789
        %v6791 = vsel %vm1863, %v6784, 0
        %v6793 = vsel %vm1863, %v6786, 0
        %v6795 = vsel %vm1863, %v6788, 0
        %v6797 = vsel %vm1863, %v6790, 0
        %6799 = vmatprep.subr.mxu0 0.0
        %6800 = vmatpush1.xpose.msra.mxu0 %v6795
        %6801 = vmatprep.subr.mxu0 0.0
        %6802 = vmatpush1.xpose.msra.mxu0 %v6797
        %6803 = vmatprep.subr.mxu0 0.0
        %6804 = vmatpush1.xpose.msra.mxu0 0.0
        %6805 = vmatprep.subr.mxu0 0.0
        %6806 = vmatpush1.xpose.msra.mxu0 0.0
        %6807 = vmatprep.subr.mxu0 0.0
        %6808 = vmatpush1.xpose.msra.mxu0 0.0
        %6809 = vmatprep.subr.mxu0 0.0
        %6810 = vmatpush1.xpose.msra.mxu0 0.0
        %6811 = vmatprep.subr.mxu0 0.0
        %6812 = vmatpush1.xpose.msra.mxu0 0.0
        %6813 = vmatprep.subr.mxu0 0.0
        %6814 = vmatpush1.xpose.msra.mxu0 0.0
        %6815 = vmatprep.subr.mxu0 0.0
        %6816 = vmatpush1.xpose.msra.mxu0 0.0
        %6817 = vmatprep.subr.mxu0 0.0
        %6818 = vmatpush1.xpose.msra.mxu0 0.0
        %6819 = vmatprep.subr.mxu0 0.0
        %6820 = vmatpush1.xpose.msra.mxu0 0.0
        %6821 = vmatprep.subr.mxu0 0.0
        %6822 = vmatpush1.xpose.msra.mxu0 0.0
        %6823 = vmatprep.subr.mxu0 0.0
        %6824 = vmatpush1.xpose.msra.mxu0 0.0
        %6825 = vmatprep.subr.mxu0 0.0
        %6826 = vmatpush1.xpose.msra.mxu0 0.0
        %6827 = vmatprep.subr.mxu0 0.0
        %6828 = vmatpush1.xpose.msra.mxu0 0.0
        %6829 = vmatprep.subr.mxu0 0.0
        %6830 = vmatpush1.xpose.msra.mxu0 0.0
        %6831 = vmatprep.subr.mxu0 0.0
        %6832 = vmatpush1.xpose.msra.mxu0 0.0
        %6833 = vmatprep.subr.mxu0 0.0
        %6834 = vmatpush1.xpose.msra.mxu0 0.0
        %6835 = vmatprep.subr.mxu0 0.0
        %6836 = vmatpush1.xpose.msra.mxu0 0.0
        %6837 = vmatprep.subr.mxu0 0.0
        %6838 = vmatpush1.xpose.msra.mxu0 0.0
        %6839 = vmatprep.subr.mxu0 0.0
        %6840 = vmatpush1.xpose.msra.mxu0 0.0
        %6841 = vmatprep.subr.mxu0 0.0
        %6842 = vmatpush1.xpose.msra.mxu0 0.0
        %6843 = vmatprep.subr.mxu0 0.0
        %6844 = vmatpush1.xpose.msra.mxu0 0.0
        %6845 = vmatprep.subr.mxu0 0.0
        %6846 = vmatpush1.xpose.msra.mxu0 0.0
        %6847 = vmatprep.subr.mxu0 0.0
        %6848 = vmatpush1.xpose.msra.mxu0 0.0
        %6849 = vmatprep.subr.mxu0 0.0
        %6850 = vmatpush1.xpose.msra.mxu0 0.0
        %6851 = vmatprep.subr.mxu0 0.0
        %6852 = vmatpush1.xpose.msra.mxu0 0.0
        %6853 = vmatprep.subr.mxu0 0.0
        %6854 = vmatpush1.xpose.msra.mxu0 0.0
        %6855 = vmatprep.subr.mxu0 0.0
        %6856 = vmatpush1.xpose.msra.mxu0 0.0
        %6857 = vmatprep.subr.mxu0 0.0
        %6858 = vmatpush1.xpose.msra.mxu0 0.0
        %6859 = vmatprep.subr.mxu0 0.0
        %6860 = vmatpush1.xpose.msra.mxu0 0.0
        %6861 = vmatprep.subr.mxu0 0.0
        %6862 = vmatpush1.xpose.msra.mxu0 0.0
        %6863 = vmatprep.mubr.f32.mxu0 0.0
        %6864 = vmatmul.mubr.f32.gmra.mrb[0].mxu0 %v6791
        %v6865 = vpop.f32.mrb[0].mxu0
        %v6866 = vadd.f32 0.0, %v6865
        %v6867 = vpop.f32.mrb[0].mxu0
        %6868 = vmatprep.mubr.f32.mxu0 0.0
        %6869 = vmatmul.mubr.f32.gmra.mrb[0].mxu0 %v6793
        %v6870 = vpop.f32.mrb[0].mxu0
        %v6871 = vadd.f32 0.0, %v6870
        %v6872 = vpop.f32.mrb[0].mxu0
        %6873 = vdwg.mxu0
        %6874 = vrot.lane.b32.xlu0 %v1718, 32
        %v6875 = vpop.permute.xlu0 %6874
        %6876 = vrot.lane.b32.xlu0 %v1719, 32
        %v6877 = vpop.permute.xlu0 %6876
        %6878 = vrot.lane.b32.xlu0 %v1853, 32
        %v6879 = vpop.permute.xlu0 %6878
        %6880 = vrot.lane.b32.xlu0 %v1854, 32
        %v6881 = vpop.permute.xlu0 %6880
        %v6882 = vsel %vm1863, %v6875, 0
        %v6884 = vsel %vm1863, %v6877, 0
        %v6886 = vsel %vm1863, %v6879, 0
        %v6888 = vsel %vm1863, %v6881, 0
        %6890 = vmatprep.subr.mxu0 0.0
        %6891 = vmatpush1.xpose.msra.mxu0 %v6886
        %6892 = vmatprep.subr.mxu0 0.0
        %6893 = vmatpush1.xpose.msra.mxu0 %v6888
        %6894 = vmatprep.subr.mxu0 0.0
        %6895 = vmatpush1.xpose.msra.mxu0 0.0
        %6896 = vmatprep.subr.mxu0 0.0
        %6897 = vmatpush1.xpose.msra.mxu0 0.0
        %6898 = vmatprep.subr.mxu0 0.0
        %6899 = vmatpush1.xpose.msra.mxu0 0.0
        %6900 = vmatprep.subr.mxu0 0.0
        %6901 = vmatpush1.xpose.msra.mxu0 0.0
        %6902 = vmatprep.subr.mxu0 0.0
        %6903 = vmatpush1.xpose.msra.mxu0 0.0
        %6904 = vmatprep.subr.mxu0 0.0
        %6905 = vmatpush1.xpose.msra.mxu0 0.0
        %6906 = vmatprep.subr.mxu0 0.0
        %6907 = vmatpush1.xpose.msra.mxu0 0.0
        %6908 = vmatprep.subr.mxu0 0.0
        %6909 = vmatpush1.xpose.msra.mxu0 0.0
        %6910 = vmatprep.subr.mxu0 0.0
        %6911 = vmatpush1.xpose.msra.mxu0 0.0
        %6912 = vmatprep.subr.mxu0 0.0
        %6913 = vmatpush1.xpose.msra.mxu0 0.0
        %6914 = vmatprep.subr.mxu0 0.0
        %6915 = vmatpush1.xpose.msra.mxu0 0.0
        %6916 = vmatprep.subr.mxu0 0.0
        %6917 = vmatpush1.xpose.msra.mxu0 0.0
        %6918 = vmatprep.subr.mxu0 0.0
        %6919 = vmatpush1.xpose.msra.mxu0 0.0
        %6920 = vmatprep.subr.mxu0 0.0
        %6921 = vmatpush1.xpose.msra.mxu0 0.0
        %6922 = vmatprep.subr.mxu0 0.0
        %6923 = vmatpush1.xpose.msra.mxu0 0.0
        %6924 = vmatprep.subr.mxu0 0.0
        %6925 = vmatpush1.xpose.msra.mxu0 0.0
        %6926 = vmatprep.subr.mxu0 0.0
        %6927 = vmatpush1.xpose.msra.mxu0 0.0
        %6928 = vmatprep.subr.mxu0 0.0
        %6929 = vmatpush1.xpose.msra.mxu0 0.0
        %6930 = vmatprep.subr.mxu0 0.0
        %6931 = vmatpush1.xpose.msra.mxu0 0.0
        %6932 = vmatprep.subr.mxu0 0.0
        %6933 = vmatpush1.xpose.msra.mxu0 0.0
        %6934 = vmatprep.subr.mxu0 0.0
        %6935 = vmatpush1.xpose.msra.mxu0 0.0
        %6936 = vmatprep.subr.mxu0 0.0
        %6937 = vmatpush1.xpose.msra.mxu0 0.0
        %6938 = vmatprep.subr.mxu0 0.0
        %6939 = vmatpush1.xpose.msra.mxu0 0.0
        %6940 = vmatprep.subr.mxu0 0.0
        %6941 = vmatpush1.xpose.msra.mxu0 0.0
        %6942 = vmatprep.subr.mxu0 0.0
        %6943 = vmatpush1.xpose.msra.mxu0 0.0
        %6944 = vmatprep.subr.mxu0 0.0
        %6945 = vmatpush1.xpose.msra.mxu0 0.0
        %6946 = vmatprep.subr.mxu0 0.0
        %6947 = vmatpush1.xpose.msra.mxu0 0.0
        %6948 = vmatprep.subr.mxu0 0.0
        %6949 = vmatpush1.xpose.msra.mxu0 0.0
        %6950 = vmatprep.subr.mxu0 0.0
        %6951 = vmatpush1.xpose.msra.mxu0 0.0
        %6952 = vmatprep.subr.mxu0 0.0
        %6953 = vmatpush1.xpose.msra.mxu0 0.0
        %6954 = vmatprep.mubr.f32.mxu0 0.0
        %6955 = vmatmul.mubr.f32.gmra.mrb[0].mxu0 %v6882
        %v6956 = vpop.f32.mrb[0].mxu0
        %v6957 = vadd.f32 0.0, %v6956
        %v6958 = vpop.f32.mrb[0].mxu0
        %6959 = vmatprep.mubr.f32.mxu0 0.0
        %6960 = vmatmul.mubr.f32.gmra.mrb[0].mxu0 %v6884
        %v6961 = vpop.f32.mrb[0].mxu0
        %v6962 = vadd.f32 0.0, %v6961
        %v6963 = vpop.f32.mrb[0].mxu0
        %6964 = vdwg.mxu0
        %6965 = vrot.lane.b32.xlu0 %v1720, 32
        %v6966 = vpop.permute.xlu0 %6965
        %6967 = vrot.lane.b32.xlu0 %v1721, 32
        %v6968 = vpop.permute.xlu0 %6967
        %6969 = vrot.lane.b32.xlu0 %v1855, 32
        %v6970 = vpop.permute.xlu0 %6969
        %6971 = vrot.lane.b32.xlu0 %v1856, 32
        %v6972 = vpop.permute.xlu0 %6971
        %v6973 = vsel %vm1863, %v6966, 0
        %v6975 = vsel %vm1863, %v6968, 0
        %v6977 = vsel %vm1863, %v6970, 0
        %v6979 = vsel %vm1863, %v6972, 0
        %6981 = vmatprep.subr.mxu0 0.0
        %6982 = vmatpush1.xpose.msra.mxu0 %v6977
        %6983 = vmatprep.subr.mxu0 0.0
        %6984 = vmatpush1.xpose.msra.mxu0 %v6979
        %6985 = vmatprep.subr.mxu0 0.0
        %6986 = vmatpush1.xpose.msra.mxu0 0.0
        %6987 = vmatprep.subr.mxu0 0.0
        %6988 = vmatpush1.xpose.msra.mxu0 0.0
        %6989 = vmatprep.subr.mxu0 0.0
        %6990 = vmatpush1.xpose.msra.mxu0 0.0
        %6991 = vmatprep.subr.mxu0 0.0
        %6992 = vmatpush1.xpose.msra.mxu0 0.0
        %6993 = vmatprep.subr.mxu0 0.0
        %6994 = vmatpush1.xpose.msra.mxu0 0.0
        %6995 = vmatprep.subr.mxu0 0.0
        %6996 = vmatpush1.xpose.msra.mxu0 0.0
        %6997 = vmatprep.subr.mxu0 0.0
        %6998 = vmatpush1.xpose.msra.mxu0 0.0
        %6999 = vmatprep.subr.mxu0 0.0
        %7000 = vmatpush1.xpose.msra.mxu0 0.0
        %7001 = vmatprep.subr.mxu0 0.0
        %7002 = vmatpush1.xpose.msra.mxu0 0.0
        %7003 = vmatprep.subr.mxu0 0.0
        %7004 = vmatpush1.xpose.msra.mxu0 0.0
        %7005 = vmatprep.subr.mxu0 0.0
        %7006 = vmatpush1.xpose.msra.mxu0 0.0
        %7007 = vmatprep.subr.mxu0 0.0
        %7008 = vmatpush1.xpose.msra.mxu0 0.0
        %7009 = vmatprep.subr.mxu0 0.0
        %7010 = vmatpush1.xpose.msra.mxu0 0.0
        %7011 = vmatprep.subr.mxu0 0.0
        %7012 = vmatpush1.xpose.msra.mxu0 0.0
        %7013 = vmatprep.subr.mxu0 0.0
        %7014 = vmatpush1.xpose.msra.mxu0 0.0
        %7015 = vmatprep.subr.mxu0 0.0
        %7016 = vmatpush1.xpose.msra.mxu0 0.0
        %7017 = vmatprep.subr.mxu0 0.0
        %7018 = vmatpush1.xpose.msra.mxu0 0.0
        %7019 = vmatprep.subr.mxu0 0.0
        %7020 = vmatpush1.xpose.msra.mxu0 0.0
        %7021 = vmatprep.subr.mxu0 0.0
        %7022 = vmatpush1.xpose.msra.mxu0 0.0
        %7023 = vmatprep.subr.mxu0 0.0
        %7024 = vmatpush1.xpose.msra.mxu0 0.0
        %7025 = vmatprep.subr.mxu0 0.0
        %7026 = vmatpush1.xpose.msra.mxu0 0.0
        %7027 = vmatprep.subr.mxu0 0.0
        %7028 = vmatpush1.xpose.msra.mxu0 0.0
        %7029 = vmatprep.subr.mxu0 0.0
        %7030 = vmatpush1.xpose.msra.mxu0 0.0
        %7031 = vmatprep.subr.mxu0 0.0
        %7032 = vmatpush1.xpose.msra.mxu0 0.0
        %7033 = vmatprep.subr.mxu0 0.0
        %7034 = vmatpush1.xpose.msra.mxu0 0.0
        %7035 = vmatprep.subr.mxu0 0.0
        %7036 = vmatpush1.xpose.msra.mxu0 0.0
        %7037 = vmatprep.subr.mxu0 0.0
        %7038 = vmatpush1.xpose.msra.mxu0 0.0
        %7039 = vmatprep.subr.mxu0 0.0
        %7040 = vmatpush1.xpose.msra.mxu0 0.0
        %7041 = vmatprep.subr.mxu0 0.0
        %7042 = vmatpush1.xpose.msra.mxu0 0.0
        %7043 = vmatprep.subr.mxu0 0.0
        %7044 = vmatpush1.xpose.msra.mxu0 0.0
        %7045 = vmatprep.mubr.f32.mxu0 0.0
        %7046 = vmatmul.mubr.f32.gmra.mrb[0].mxu0 %v6973
        %v7047 = vpop.f32.mrb[0].mxu0
        %v7048 = vadd.f32 0.0, %v7047
        %v7049 = vpop.f32.mrb[0].mxu0
        %7050 = vmatprep.mubr.f32.mxu0 0.0
        %7051 = vmatmul.mubr.f32.gmra.mrb[0].mxu0 %v6975
        %v7052 = vpop.f32.mrb[0].mxu0
        %v7053 = vadd.f32 0.0, %v7052
        %v7054 = vpop.f32.mrb[0].mxu0
        %7055 = vdwg.mxu0
        %7056 = vrot.lane.b32.xlu0 %v1722, 32
        %v7057 = vpop.permute.xlu0 %7056
        %7058 = vrot.lane.b32.xlu0 %v1723, 32
        %v7059 = vpop.permute.xlu0 %7058
        %7060 = vrot.lane.b32.xlu0 %v1857, 32
        %v7061 = vpop.permute.xlu0 %7060
        %7062 = vrot.lane.b32.xlu0 %v1858, 32
        %v7063 = vpop.permute.xlu0 %7062
        %v7064 = vsel %vm1863, %v7057, 0
        %v7066 = vsel %vm1863, %v7059, 0
        %v7068 = vsel %vm1863, %v7061, 0
        %v7070 = vsel %vm1863, %v7063, 0
        %7072 = vmatprep.subr.mxu0 0.0
        %7073 = vmatpush1.xpose.msra.mxu0 %v7068
        %7074 = vmatprep.subr.mxu0 0.0
        %7075 = vmatpush1.xpose.msra.mxu0 %v7070
        %7076 = vmatprep.subr.mxu0 0.0
        %7077 = vmatpush1.xpose.msra.mxu0 0.0
        %7078 = vmatprep.subr.mxu0 0.0
        %7079 = vmatpush1.xpose.msra.mxu0 0.0
        %7080 = vmatprep.subr.mxu0 0.0
        %7081 = vmatpush1.xpose.msra.mxu0 0.0
        %7082 = vmatprep.subr.mxu0 0.0
        %7083 = vmatpush1.xpose.msra.mxu0 0.0
        %7084 = vmatprep.subr.mxu0 0.0
        %7085 = vmatpush1.xpose.msra.mxu0 0.0
        %7086 = vmatprep.subr.mxu0 0.0
        %7087 = vmatpush1.xpose.msra.mxu0 0.0
        %7088 = vmatprep.subr.mxu0 0.0
        %7089 = vmatpush1.xpose.msra.mxu0 0.0
        %7090 = vmatprep.subr.mxu0 0.0
        %7091 = vmatpush1.xpose.msra.mxu0 0.0
        %7092 = vmatprep.subr.mxu0 0.0
        %7093 = vmatpush1.xpose.msra.mxu0 0.0
        %7094 = vmatprep.subr.mxu0 0.0
        %7095 = vmatpush1.xpose.msra.mxu0 0.0
        %7096 = vmatprep.subr.mxu0 0.0
        %7097 = vmatpush1.xpose.msra.mxu0 0.0
        %7098 = vmatprep.subr.mxu0 0.0
        %7099 = vmatpush1.xpose.msra.mxu0 0.0
        %7100 = vmatprep.subr.mxu0 0.0
        %7101 = vmatpush1.xpose.msra.mxu0 0.0
        %7102 = vmatprep.subr.mxu0 0.0
        %7103 = vmatpush1.xpose.msra.mxu0 0.0
        %7104 = vmatprep.subr.mxu0 0.0
        %7105 = vmatpush1.xpose.msra.mxu0 0.0
        %7106 = vmatprep.subr.mxu0 0.0
        %7107 = vmatpush1.xpose.msra.mxu0 0.0
        %7108 = vmatprep.subr.mxu0 0.0
        %7109 = vmatpush1.xpose.msra.mxu0 0.0
        %7110 = vmatprep.subr.mxu0 0.0
        %7111 = vmatpush1.xpose.msra.mxu0 0.0
        %7112 = vmatprep.subr.mxu0 0.0
        %7113 = vmatpush1.xpose.msra.mxu0 0.0
        %7114 = vmatprep.subr.mxu0 0.0
        %7115 = vmatpush1.xpose.msra.mxu0 0.0
        %7116 = vmatprep.subr.mxu0 0.0
        %7117 = vmatpush1.xpose.msra.mxu0 0.0
        %7118 = vmatprep.subr.mxu0 0.0
        %7119 = vmatpush1.xpose.msra.mxu0 0.0
        %7120 = vmatprep.subr.mxu0 0.0
        %7121 = vmatpush1.xpose.msra.mxu0 0.0
        %7122 = vmatprep.subr.mxu0 0.0
        %7123 = vmatpush1.xpose.msra.mxu0 0.0
        %7124 = vmatprep.subr.mxu0 0.0
        %7125 = vmatpush1.xpose.msra.mxu0 0.0
        %7126 = vmatprep.subr.mxu0 0.0
        %7127 = vmatpush1.xpose.msra.mxu0 0.0
        %7128 = vmatprep.subr.mxu0 0.0
        %7129 = vmatpush1.xpose.msra.mxu0 0.0
        %7130 = vmatprep.subr.mxu0 0.0
        %7131 = vmatpush1.xpose.msra.mxu0 0.0
        %7132 = vmatprep.subr.mxu0 0.0
        %7133 = vmatpush1.xpose.msra.mxu0 0.0
        %7134 = vmatprep.subr.mxu0 0.0
        %7135 = vmatpush1.xpose.msra.mxu0 0.0
        %7136 = vmatprep.mubr.f32.mxu0 0.0
        %7137 = vmatmul.mubr.f32.gmra.mrb[0].mxu0 %v7064
        %v7138 = vpop.f32.mrb[0].mxu0
        %v7139 = vadd.f32 0.0, %v7138
        %v7140 = vpop.f32.mrb[0].mxu0
        %7141 = vmatprep.mubr.f32.mxu0 0.0
        %7142 = vmatmul.mubr.f32.gmra.mrb[0].mxu0 %v7066
        %v7143 = vpop.f32.mrb[0].mxu0
        %v7144 = vadd.f32 0.0, %v7143
        %v7145 = vpop.f32.mrb[0].mxu0
        %7146 = vdwg.mxu0
        %7147 = vrot.lane.b32.xlu0 %v1724, 32
        %v7148 = vpop.permute.xlu0 %7147
        %7149 = vrot.lane.b32.xlu0 %v1725, 32
        %v7150 = vpop.permute.xlu0 %7149
        %7151 = vrot.lane.b32.xlu0 %v1859, 32
        %v7152 = vpop.permute.xlu0 %7151
        %7153 = vrot.lane.b32.xlu0 %v1860, 32
        %v7154 = vpop.permute.xlu0 %7153
        %v7155 = vsel %vm1863, %v7148, 0
        %v7157 = vsel %vm1863, %v7150, 0
        %v7159 = vsel %vm1863, %v7152, 0
        %v7161 = vsel %vm1863, %v7154, 0
        %7163 = vmatprep.subr.mxu0 0.0
        %7164 = vmatpush1.xpose.msra.mxu0 %v7159
        %7165 = vmatprep.subr.mxu0 0.0
        %7166 = vmatpush1.xpose.msra.mxu0 %v7161
        %7167 = vmatprep.subr.mxu0 0.0
        %7168 = vmatpush1.xpose.msra.mxu0 0.0
        %7169 = vmatprep.subr.mxu0 0.0
        %7170 = vmatpush1.xpose.msra.mxu0 0.0
        %7171 = vmatprep.subr.mxu0 0.0
        %7172 = vmatpush1.xpose.msra.mxu0 0.0
        %7173 = vmatprep.subr.mxu0 0.0
        %7174 = vmatpush1.xpose.msra.mxu0 0.0
        %7175 = vmatprep.subr.mxu0 0.0
        %7176 = vmatpush1.xpose.msra.mxu0 0.0
        %7177 = vmatprep.subr.mxu0 0.0
        %7178 = vmatpush1.xpose.msra.mxu0 0.0
        %7179 = vmatprep.subr.mxu0 0.0
        %7180 = vmatpush1.xpose.msra.mxu0 0.0
        %7181 = vmatprep.subr.mxu0 0.0
        %7182 = vmatpush1.xpose.msra.mxu0 0.0
        %7183 = vmatprep.subr.mxu0 0.0
        %7184 = vmatpush1.xpose.msra.mxu0 0.0
        %7185 = vmatprep.subr.mxu0 0.0
        %7186 = vmatpush1.xpose.msra.mxu0 0.0
        %7187 = vmatprep.subr.mxu0 0.0
        %7188 = vmatpush1.xpose.msra.mxu0 0.0
        %7189 = vmatprep.subr.mxu0 0.0
        %7190 = vmatpush1.xpose.msra.mxu0 0.0
        %7191 = vmatprep.subr.mxu0 0.0
        %7192 = vmatpush1.xpose.msra.mxu0 0.0
        %7193 = vmatprep.subr.mxu0 0.0
        %7194 = vmatpush1.xpose.msra.mxu0 0.0
        %7195 = vmatprep.subr.mxu0 0.0
        %7196 = vmatpush1.xpose.msra.mxu0 0.0
        %7197 = vmatprep.subr.mxu0 0.0
        %7198 = vmatpush1.xpose.msra.mxu0 0.0
        %7199 = vmatprep.subr.mxu0 0.0
        %7200 = vmatpush1.xpose.msra.mxu0 0.0
        %7201 = vmatprep.subr.mxu0 0.0
        %7202 = vmatpush1.xpose.msra.mxu0 0.0
        %7203 = vmatprep.subr.mxu0 0.0
        %7204 = vmatpush1.xpose.msra.mxu0 0.0
        %7205 = vmatprep.subr.mxu0 0.0
        %7206 = vmatpush1.xpose.msra.mxu0 0.0
        %7207 = vmatprep.subr.mxu0 0.0
        %7208 = vmatpush1.xpose.msra.mxu0 0.0
        %7209 = vmatprep.subr.mxu0 0.0
        %7210 = vmatpush1.xpose.msra.mxu0 0.0
        %7211 = vmatprep.subr.mxu0 0.0
        %7212 = vmatpush1.xpose.msra.mxu0 0.0
        %7213 = vmatprep.subr.mxu0 0.0
        %7214 = vmatpush1.xpose.msra.mxu0 0.0
        %7215 = vmatprep.subr.mxu0 0.0
        %7216 = vmatpush1.xpose.msra.mxu0 0.0
        %7217 = vmatprep.subr.mxu0 0.0
        %7218 = vmatpush1.xpose.msra.mxu0 0.0
        %7219 = vmatprep.subr.mxu0 0.0
        %7220 = vmatpush1.xpose.msra.mxu0 0.0
        %7221 = vmatprep.subr.mxu0 0.0
        %7222 = vmatpush1.xpose.msra.mxu0 0.0
        %7223 = vmatprep.subr.mxu0 0.0
        %7224 = vmatpush1.xpose.msra.mxu0 0.0
        %7225 = vmatprep.subr.mxu0 0.0
        %7226 = vmatpush1.xpose.msra.mxu0 0.0
        %7227 = vmatprep.mubr.f32.mxu0 0.0
        %7228 = vmatmul.mubr.f32.gmra.mrb[0].mxu0 %v7155
        %v7229 = vpop.f32.mrb[0].mxu0
        %v7230 = vadd.f32 0.0, %v7229
        %v7231 = vpop.f32.mrb[0].mxu0
        %7232 = vmatprep.mubr.f32.mxu0 0.0
        %7233 = vmatmul.mubr.f32.gmra.mrb[0].mxu0 %v7157
        %v7234 = vpop.f32.mrb[0].mxu0
        %v7235 = vadd.f32 0.0, %v7234
        %v7236 = vpop.f32.mrb[0].mxu0
        %7237 = vdwg.mxu0
        %7238 = vrot.lane.b32.xlu0 %v1726, 32
        %v7239 = vpop.permute.xlu0 %7238
        %7240 = vrot.lane.b32.xlu0 %v1727, 32
        %v7241 = vpop.permute.xlu0 %7240
        %7242 = vrot.lane.b32.xlu0 %v1861, 32
        %v7243 = vpop.permute.xlu0 %7242
        %7244 = vrot.lane.b32.xlu0 %v1862, 32
        %v7245 = vpop.permute.xlu0 %7244
        %v7246 = vsel %vm1863, %v7239, 0
        %v7248 = vsel %vm1863, %v7241, 0
        %v7250 = vsel %vm1863, %v7243, 0
        %v7252 = vsel %vm1863, %v7245, 0
        %7254 = vmatprep.subr.mxu0 0.0
        %7255 = vmatpush1.xpose.msra.mxu0 %v7250
        %7256 = vmatprep.subr.mxu0 0.0
        %7257 = vmatpush1.xpose.msra.mxu0 %v7252
        %7258 = vmatprep.subr.mxu0 0.0
        %7259 = vmatpush1.xpose.msra.mxu0 0.0
        %7260 = vmatprep.subr.mxu0 0.0
        %7261 = vmatpush1.xpose.msra.mxu0 0.0
        %7262 = vmatprep.subr.mxu0 0.0
        %7263 = vmatpush1.xpose.msra.mxu0 0.0
        %7264 = vmatprep.subr.mxu0 0.0
        %7265 = vmatpush1.xpose.msra.mxu0 0.0
        %7266 = vmatprep.subr.mxu0 0.0
        %7267 = vmatpush1.xpose.msra.mxu0 0.0
        %7268 = vmatprep.subr.mxu0 0.0
        %7269 = vmatpush1.xpose.msra.mxu0 0.0
        %7270 = vmatprep.subr.mxu0 0.0
        %7271 = vmatpush1.xpose.msra.mxu0 0.0
        %7272 = vmatprep.subr.mxu0 0.0
        %7273 = vmatpush1.xpose.msra.mxu0 0.0
        %7274 = vmatprep.subr.mxu0 0.0
        %7275 = vmatpush1.xpose.msra.mxu0 0.0
        %7276 = vmatprep.subr.mxu0 0.0
        %7277 = vmatpush1.xpose.msra.mxu0 0.0
        %7278 = vmatprep.subr.mxu0 0.0
        %7279 = vmatpush1.xpose.msra.mxu0 0.0
        %7280 = vmatprep.subr.mxu0 0.0
        %7281 = vmatpush1.xpose.msra.mxu0 0.0
        %7282 = vmatprep.subr.mxu0 0.0
        %7283 = vmatpush1.xpose.msra.mxu0 0.0
        %7284 = vmatprep.subr.mxu0 0.0
        %7285 = vmatpush1.xpose.msra.mxu0 0.0
        %7286 = vmatprep.subr.mxu0 0.0
        %7287 = vmatpush1.xpose.msra.mxu0 0.0
        %7288 = vmatprep.subr.mxu0 0.0
        %7289 = vmatpush1.xpose.msra.mxu0 0.0
        %7290 = vmatprep.subr.mxu0 0.0
        %7291 = vmatpush1.xpose.msra.mxu0 0.0
        %7292 = vmatprep.subr.mxu0 0.0
        %7293 = vmatpush1.xpose.msra.mxu0 0.0
        %7294 = vmatprep.subr.mxu0 0.0
        %7295 = vmatpush1.xpose.msra.mxu0 0.0
        %7296 = vmatprep.subr.mxu0 0.0
        %7297 = vmatpush1.xpose.msra.mxu0 0.0
        %7298 = vmatprep.subr.mxu0 0.0
        %7299 = vmatpush1.xpose.msra.mxu0 0.0
        %7300 = vmatprep.subr.mxu0 0.0
        %7301 = vmatpush1.xpose.msra.mxu0 0.0
        %7302 = vmatprep.subr.mxu0 0.0
        %7303 = vmatpush1.xpose.msra.mxu0 0.0
        %7304 = vmatprep.subr.mxu0 0.0
        %7305 = vmatpush1.xpose.msra.mxu0 0.0
        %7306 = vmatprep.subr.mxu0 0.0
        %7307 = vmatpush1.xpose.msra.mxu0 0.0
        %7308 = vmatprep.subr.mxu0 0.0
        %7309 = vmatpush1.xpose.msra.mxu0 0.0
        %7310 = vmatprep.subr.mxu0 0.0
        %7311 = vmatpush1.xpose.msra.mxu0 0.0
        %7312 = vmatprep.subr.mxu0 0.0
        %7313 = vmatpush1.xpose.msra.mxu0 0.0
        %7314 = vmatprep.subr.mxu0 0.0
        %7315 = vmatpush1.xpose.msra.mxu0 0.0
        %7316 = vmatprep.subr.mxu0 0.0
        %7317 = vmatpush1.xpose.msra.mxu0 0.0
        %7318 = vmatprep.mubr.f32.mxu0 0.0
        %7319 = vmatmul.mubr.f32.gmra.mrb[0].mxu0 %v7246
        %v7320 = vpop.f32.mrb[0].mxu0
        %v7321 = vadd.f32 0.0, %v7320
        %v7322 = vpop.f32.mrb[0].mxu0
        %7323 = vmatprep.mubr.f32.mxu0 0.0
        %7324 = vmatmul.mubr.f32.gmra.mrb[0].mxu0 %v7248
        %v7325 = vpop.f32.mrb[0].mxu0
        %v7326 = vadd.f32 0.0, %v7325
        %v7327 = vpop.f32.mrb[0].mxu0
        %7328 = vdwg.mxu0
        %v7329 = vsel %vm2560, %v6684, -inf
        %7330 = vmax.xlane.f32.xlu0 %v7329
        %v7331 = vpop.xlane.xlu0 %7330
        %v7332 = vsel %vm2560, %v6689, -inf
        %7333 = vmax.xlane.f32.xlu0 %v7332
        %v7334 = vpop.xlane.xlu0 %7333
        %v7335 = vsel %vm2560, %v6775, -inf
        %7336 = vmax.xlane.f32.xlu0 %v7335
        %v7337 = vpop.xlane.xlu0 %7336
        %v7338 = vsel %vm2560, %v6780, -inf
        %7339 = vmax.xlane.f32.xlu0 %v7338
        %v7340 = vpop.xlane.xlu0 %7339
        %v7341 = vsel %vm2560, %v6866, -inf
        %7342 = vmax.xlane.f32.xlu0 %v7341
        %v7343 = vpop.xlane.xlu0 %7342
        %v7344 = vsel %vm2560, %v6871, -inf
        %7345 = vmax.xlane.f32.xlu0 %v7344
        %v7346 = vpop.xlane.xlu0 %7345
        %v7347 = vsel %vm2560, %v6957, -inf
        %7348 = vmax.xlane.f32.xlu0 %v7347
        %v7349 = vpop.xlane.xlu0 %7348
        %v7350 = vsel %vm2560, %v6962, -inf
        %7351 = vmax.xlane.f32.xlu0 %v7350
        %v7352 = vpop.xlane.xlu0 %7351
        %v7353 = vsel %vm2560, %v7048, -inf
        %7354 = vmax.xlane.f32.xlu0 %v7353
        %v7355 = vpop.xlane.xlu0 %7354
        %v7356 = vsel %vm2560, %v7053, -inf
        %7357 = vmax.xlane.f32.xlu0 %v7356
        %v7358 = vpop.xlane.xlu0 %7357
        %v7359 = vsel %vm2560, %v7139, -inf
        %7360 = vmax.xlane.f32.xlu0 %v7359
        %v7361 = vpop.xlane.xlu0 %7360
        %v7362 = vsel %vm2560, %v7144, -inf
        %7363 = vmax.xlane.f32.xlu0 %v7362
        %v7364 = vpop.xlane.xlu0 %7363
        %v7365 = vsel %vm2560, %v7230, -inf
        %7366 = vmax.xlane.f32.xlu0 %v7365
        %v7367 = vpop.xlane.xlu0 %7366
        %v7368 = vsel %vm2560, %v7235, -inf
        %7369 = vmax.xlane.f32.xlu0 %v7368
        %v7370 = vpop.xlane.xlu0 %7369
        %v7371 = vsel %vm2560, %v7321, -inf
        %7372 = vmax.xlane.f32.xlu0 %v7371
        %v7373 = vpop.xlane.xlu0 %7372
        %v7374 = vsel %vm2560, %v7326, -inf
        %7375 = vmax.xlane.f32.xlu0 %v7374
        %v7376 = vpop.xlane.xlu0 %7375
        %v7377 = vsub.f32 %v6684, %v7331
        %v7378 = vsub.f32 %v6689, %v7334
        %v7379 = vsub.f32 %v6775, %v7337
        %v7380 = vsub.f32 %v6780, %v7340
        %v7381 = vsub.f32 %v6866, %v7343
        %v7382 = vsub.f32 %v6871, %v7346
        %v7383 = vsub.f32 %v6957, %v7349
        %v7384 = vsub.f32 %v6962, %v7352
        %v7385 = vsub.f32 %v7048, %v7355
        %v7386 = vsub.f32 %v7053, %v7358
        %v7387 = vsub.f32 %v7139, %v7361
        %v7388 = vsub.f32 %v7144, %v7364
        %v7389 = vsub.f32 %v7230, %v7367
        %v7390 = vsub.f32 %v7235, %v7370
        %v7391 = vsub.f32 %v7321, %v7373
        %v7392 = vsub.f32 %v7326, %v7376
        %v7393 = vmul.f32 %v7377, 1.442695
        %v7394 = vpow.pop %v7393
        %v7395 = vmul.f32 %v7378, 1.442695
        %v7396 = vpow.pop %v7395
        %v7397 = vmul.f32 %v7379, 1.442695
        %v7398 = vpow.pop %v7397
        %v7399 = vmul.f32 %v7380, 1.442695
        %v7400 = vpow.pop %v7399
        %v7401 = vmul.f32 %v7381, 1.442695
        %v7402 = vpow.pop %v7401
        %v7403 = vmul.f32 %v7382, 1.442695
        %v7404 = vpow.pop %v7403
        %v7405 = vmul.f32 %v7383, 1.442695
        %v7406 = vpow.pop %v7405
        %v7407 = vmul.f32 %v7384, 1.442695
        %v7408 = vpow.pop %v7407
        %v7409 = vmul.f32 %v7385, 1.442695
        %v7410 = vpow.pop %v7409
        %v7411 = vmul.f32 %v7386, 1.442695
        %v7412 = vpow.pop %v7411
        %v7413 = vmul.f32 %v7387, 1.442695
        %v7414 = vpow.pop %v7413
        %v7415 = vmul.f32 %v7388, 1.442695
        %v7416 = vpow.pop %v7415
        %v7417 = vmul.f32 %v7389, 1.442695
        %v7418 = vpow.pop %v7417
        %v7419 = vmul.f32 %v7390, 1.442695
        %v7420 = vpow.pop %v7419
        %v7421 = vmul.f32 %v7391, 1.442695
        %v7422 = vpow.pop %v7421
        %v7423 = vmul.f32 %v7392, 1.442695
        %v7424 = vpow.pop %v7423
        %v7425 = vsel %vm2560, %v7394, 0.0
        %7426 = vadd.xlane.f32.xlu0 %v7425
        %v7427 = vpop.xlane.xlu0 %7426
        %v7428 = vsel %vm2560, %v7396, 0.0
        %7429 = vadd.xlane.f32.xlu0 %v7428
        %v7430 = vpop.xlane.xlu0 %7429
        %v7431 = vsel %vm2560, %v7398, 0.0
        %7432 = vadd.xlane.f32.xlu0 %v7431
        %v7433 = vpop.xlane.xlu0 %7432
        %v7434 = vsel %vm2560, %v7400, 0.0
        %7435 = vadd.xlane.f32.xlu0 %v7434
        %v7436 = vpop.xlane.xlu0 %7435
        %v7437 = vsel %vm2560, %v7402, 0.0
        %7438 = vadd.xlane.f32.xlu0 %v7437
        %v7439 = vpop.xlane.xlu0 %7438
        %v7440 = vsel %vm2560, %v7404, 0.0
        %7441 = vadd.xlane.f32.xlu0 %v7440
        %v7442 = vpop.xlane.xlu0 %7441
        %v7443 = vsel %vm2560, %v7406, 0.0
        %7444 = vadd.xlane.f32.xlu0 %v7443
        %v7445 = vpop.xlane.xlu0 %7444
        %v7446 = vsel %vm2560, %v7408, 0.0
        %7447 = vadd.xlane.f32.xlu0 %v7446
        %v7448 = vpop.xlane.xlu0 %7447
        %v7449 = vsel %vm2560, %v7410, 0.0
        %7450 = vadd.xlane.f32.xlu0 %v7449
        %v7451 = vpop.xlane.xlu0 %7450
        %v7452 = vsel %vm2560, %v7412, 0.0
        %7453 = vadd.xlane.f32.xlu0 %v7452
        %v7454 = vpop.xlane.xlu0 %7453
        %v7455 = vsel %vm2560, %v7414, 0.0
        %7456 = vadd.xlane.f32.xlu0 %v7455
        %v7457 = vpop.xlane.xlu0 %7456
        %v7458 = vsel %vm2560, %v7416, 0.0
        %7459 = vadd.xlane.f32.xlu0 %v7458
        %v7460 = vpop.xlane.xlu0 %7459
        %v7461 = vsel %vm2560, %v7418, 0.0
        %7462 = vadd.xlane.f32.xlu0 %v7461
        %v7463 = vpop.xlane.xlu0 %7462
        %v7464 = vsel %vm2560, %v7420, 0.0
        %7465 = vadd.xlane.f32.xlu0 %v7464
        %v7466 = vpop.xlane.xlu0 %7465
        %v7467 = vsel %vm2560, %v7422, 0.0
        %7468 = vadd.xlane.f32.xlu0 %v7467
        %v7469 = vpop.xlane.xlu0 %7468
        %v7470 = vsel %vm2560, %v7424, 0.0
        %7471 = vadd.xlane.f32.xlu0 %v7470
        %v7472 = vpop.xlane.xlu0 %7471
        %v7473 = vrcp.pop %v7427
        %v7474 = vmul.f32 %v7394, %v7473
        %v7475 = vrcp.pop %v7430
        %v7476 = vmul.f32 %v7396, %v7475
        %v7477 = vrcp.pop %v7433
        %v7478 = vmul.f32 %v7398, %v7477
        %v7479 = vrcp.pop %v7436
        %v7480 = vmul.f32 %v7400, %v7479
        %v7481 = vrcp.pop %v7439
        %v7482 = vmul.f32 %v7402, %v7481
        %v7483 = vrcp.pop %v7442
        %v7484 = vmul.f32 %v7404, %v7483
        %v7485 = vrcp.pop %v7445
        %v7486 = vmul.f32 %v7406, %v7485
        %v7487 = vrcp.pop %v7448
        %v7488 = vmul.f32 %v7408, %v7487
        %v7489 = vrcp.pop %v7451
        %v7490 = vmul.f32 %v7410, %v7489
        %v7491 = vrcp.pop %v7454
        %v7492 = vmul.f32 %v7412, %v7491
        %v7493 = vrcp.pop %v7457
        %v7494 = vmul.f32 %v7414, %v7493
        %v7495 = vrcp.pop %v7460
        %v7496 = vmul.f32 %v7416, %v7495
        %v7497 = vrcp.pop %v7463
        %v7498 = vmul.f32 %v7418, %v7497
        %v7499 = vrcp.pop %v7466
        %v7500 = vmul.f32 %v7420, %v7499
        %v7501 = vrcp.pop %v7469
        %v7502 = vmul.f32 %v7422, %v7501
        %v7503 = vrcp.pop %v7472
        %v7504 = vmul.f32 %v7424, %v7503
        %7505 = vrot.lane.b32.xlu0 %v1515, 32
        %v7506 = vpop.permute.xlu0 %7505
        %7507 = vrot.lane.b32.xlu0 %v1518, 32
        %v7508 = vpop.permute.xlu0 %7507
        %v7512 = vsel %vm2560, %v7474, 0
        %v7515 = vsel %vm2560, %v7476, 0
        %7517 = vmatprep.subr.mxu0 0.0
        %7518 = vmatpush1.msra.mxu0 %v7506
        %7519 = vmatprep.subr.mxu0 0.0
        %7520 = vmatpush1.msra.mxu0 %v7508
        %7521 = vmatprep.subr.mxu0 0.0
        %7522 = vmatpush1.msra.mxu0 0.0
        %7523 = vmatprep.subr.mxu0 0.0
        %7524 = vmatpush1.msra.mxu0 0.0
        %7525 = vmatprep.subr.mxu0 0.0
        %7526 = vmatpush1.msra.mxu0 0.0
        %7527 = vmatprep.subr.mxu0 0.0
        %7528 = vmatpush1.msra.mxu0 0.0
        %7529 = vmatprep.subr.mxu0 0.0
        %7530 = vmatpush1.msra.mxu0 0.0
        %7531 = vmatprep.subr.mxu0 0.0
        %7532 = vmatpush1.msra.mxu0 0.0
        %7533 = vmatprep.subr.mxu0 0.0
        %7534 = vmatpush1.msra.mxu0 0.0
        %7535 = vmatprep.subr.mxu0 0.0
        %7536 = vmatpush1.msra.mxu0 0.0
        %7537 = vmatprep.subr.mxu0 0.0
        %7538 = vmatpush1.msra.mxu0 0.0
        %7539 = vmatprep.subr.mxu0 0.0
        %7540 = vmatpush1.msra.mxu0 0.0
        %7541 = vmatprep.subr.mxu0 0.0
        %7542 = vmatpush1.msra.mxu0 0.0
        %7543 = vmatprep.subr.mxu0 0.0
        %7544 = vmatpush1.msra.mxu0 0.0
        %7545 = vmatprep.subr.mxu0 0.0
        %7546 = vmatpush1.msra.mxu0 0.0
        %7547 = vmatprep.subr.mxu0 0.0
        %7548 = vmatpush1.msra.mxu0 0.0
        %7549 = vmatprep.subr.mxu0 0.0
        %7550 = vmatpush1.msra.mxu0 0.0
        %7551 = vmatprep.subr.mxu0 0.0
        %7552 = vmatpush1.msra.mxu0 0.0
        %7553 = vmatprep.subr.mxu0 0.0
        %7554 = vmatpush1.msra.mxu0 0.0
        %7555 = vmatprep.subr.mxu0 0.0
        %7556 = vmatpush1.msra.mxu0 0.0
        %7557 = vmatprep.subr.mxu0 0.0
        %7558 = vmatpush1.msra.mxu0 0.0
        %7559 = vmatprep.subr.mxu0 0.0
        %7560 = vmatpush1.msra.mxu0 0.0
        %7561 = vmatprep.subr.mxu0 0.0
        %7562 = vmatpush1.msra.mxu0 0.0
        %7563 = vmatprep.subr.mxu0 0.0
        %7564 = vmatpush1.msra.mxu0 0.0
        %7565 = vmatprep.subr.mxu0 0.0
        %7566 = vmatpush1.msra.mxu0 0.0
        %7567 = vmatprep.subr.mxu0 0.0
        %7568 = vmatpush1.msra.mxu0 0.0
        %7569 = vmatprep.subr.mxu0 0.0
        %7570 = vmatpush1.msra.mxu0 0.0
        %7571 = vmatprep.subr.mxu0 0.0
        %7572 = vmatpush1.msra.mxu0 0.0
        %7573 = vmatprep.subr.mxu0 0.0
        %7574 = vmatpush1.msra.mxu0 0.0
        %7575 = vmatprep.subr.mxu0 0.0
        %7576 = vmatpush1.msra.mxu0 0.0
        %7577 = vmatprep.subr.mxu0 0.0
        %7578 = vmatpush1.msra.mxu0 0.0
        %7579 = vmatprep.subr.mxu0 0.0
        %7580 = vmatpush1.msra.mxu0 0.0
        %7581 = vmatprep.mubr.f32.mxu0 0.0
        %7582 = vmatmul.mubr.f32.gmra.mrb[0].mxu0 %v7512
        %v7583 = vpop.f32.mrb[0].mxu0
        %v7584 = vadd.f32 0.0, %v7583
        %v7585 = vpop.f32.mrb[0].mxu0
        %7586 = vmatprep.mubr.f32.mxu0 0.0
        %7587 = vmatmul.mubr.f32.gmra.mrb[0].mxu0 %v7515
        %v7588 = vpop.f32.mrb[0].mxu0
        %v7589 = vadd.f32 0.0, %v7588
        %v7590 = vpop.f32.mrb[0].mxu0
        %7591 = vdwg.mxu0
        %7592 = vrot.lane.b32.xlu0 %v1523, 32
        %v7593 = vpop.permute.xlu0 %7592
        %7594 = vrot.lane.b32.xlu0 %v1526, 32
        %v7595 = vpop.permute.xlu0 %7594
        %v7599 = vsel %vm2560, %v7478, 0
        %v7602 = vsel %vm2560, %v7480, 0
        %7604 = vmatprep.subr.mxu0 0.0
        %7605 = vmatpush1.msra.mxu0 %v7593
        %7606 = vmatprep.subr.mxu0 0.0
        %7607 = vmatpush1.msra.mxu0 %v7595
        %7608 = vmatprep.subr.mxu0 0.0
        %7609 = vmatpush1.msra.mxu0 0.0
        %7610 = vmatprep.subr.mxu0 0.0
        %7611 = vmatpush1.msra.mxu0 0.0
        %7612 = vmatprep.subr.mxu0 0.0
        %7613 = vmatpush1.msra.mxu0 0.0
        %7614 = vmatprep.subr.mxu0 0.0
        %7615 = vmatpush1.msra.mxu0 0.0
        %7616 = vmatprep.subr.mxu0 0.0
        %7617 = vmatpush1.msra.mxu0 0.0
        %7618 = vmatprep.subr.mxu0 0.0
        %7619 = vmatpush1.msra.mxu0 0.0
        %7620 = vmatprep.subr.mxu0 0.0
        %7621 = vmatpush1.msra.mxu0 0.0
        %7622 = vmatprep.subr.mxu0 0.0
        %7623 = vmatpush1.msra.mxu0 0.0
        %7624 = vmatprep.subr.mxu0 0.0
        %7625 = vmatpush1.msra.mxu0 0.0
        %7626 = vmatprep.subr.mxu0 0.0
        %7627 = vmatpush1.msra.mxu0 0.0
        %7628 = vmatprep.subr.mxu0 0.0
        %7629 = vmatpush1.msra.mxu0 0.0
        %7630 = vmatprep.subr.mxu0 0.0
        %7631 = vmatpush1.msra.mxu0 0.0
        %7632 = vmatprep.subr.mxu0 0.0
        %7633 = vmatpush1.msra.mxu0 0.0
        %7634 = vmatprep.subr.mxu0 0.0
        %7635 = vmatpush1.msra.mxu0 0.0
        %7636 = vmatprep.subr.mxu0 0.0
        %7637 = vmatpush1.msra.mxu0 0.0
        %7638 = vmatprep.subr.mxu0 0.0
        %7639 = vmatpush1.msra.mxu0 0.0
        %7640 = vmatprep.subr.mxu0 0.0
        %7641 = vmatpush1.msra.mxu0 0.0
        %7642 = vmatprep.subr.mxu0 0.0
        %7643 = vmatpush1.msra.mxu0 0.0
        %7644 = vmatprep.subr.mxu0 0.0
        %7645 = vmatpush1.msra.mxu0 0.0
        %7646 = vmatprep.subr.mxu0 0.0
        %7647 = vmatpush1.msra.mxu0 0.0
        %7648 = vmatprep.subr.mxu0 0.0
        %7649 = vmatpush1.msra.mxu0 0.0
        %7650 = vmatprep.subr.mxu0 0.0
        %7651 = vmatpush1.msra.mxu0 0.0
        %7652 = vmatprep.subr.mxu0 0.0
        %7653 = vmatpush1.msra.mxu0 0.0
        %7654 = vmatprep.subr.mxu0 0.0
        %7655 = vmatpush1.msra.mxu0 0.0
        %7656 = vmatprep.subr.mxu0 0.0
        %7657 = vmatpush1.msra.mxu0 0.0
        %7658 = vmatprep.subr.mxu0 0.0
        %7659 = vmatpush1.msra.mxu0 0.0
        %7660 = vmatprep.subr.mxu0 0.0
        %7661 = vmatpush1.msra.mxu0 0.0
        %7662 = vmatprep.subr.mxu0 0.0
        %7663 = vmatpush1.msra.mxu0 0.0
        %7664 = vmatprep.subr.mxu0 0.0
        %7665 = vmatpush1.msra.mxu0 0.0
        %7666 = vmatprep.subr.mxu0 0.0
        %7667 = vmatpush1.msra.mxu0 0.0
        %7668 = vmatprep.mubr.f32.mxu0 0.0
        %7669 = vmatmul.mubr.f32.gmra.mrb[0].mxu0 %v7599
        %v7670 = vpop.f32.mrb[0].mxu0
        %v7671 = vadd.f32 0.0, %v7670
        %v7672 = vpop.f32.mrb[0].mxu0
        %7673 = vmatprep.mubr.f32.mxu0 0.0
        %7674 = vmatmul.mubr.f32.gmra.mrb[0].mxu0 %v7602
        %v7675 = vpop.f32.mrb[0].mxu0
        %v7676 = vadd.f32 0.0, %v7675
        %v7677 = vpop.f32.mrb[0].mxu0
        %7678 = vdwg.mxu0
        %7679 = vrot.lane.b32.xlu0 %v1531, 32
        %v7680 = vpop.permute.xlu0 %7679
        %7681 = vrot.lane.b32.xlu0 %v1534, 32
        %v7682 = vpop.permute.xlu0 %7681
        %v7686 = vsel %vm2560, %v7482, 0
        %v7689 = vsel %vm2560, %v7484, 0
        %7691 = vmatprep.subr.mxu0 0.0
        %7692 = vmatpush1.msra.mxu0 %v7680
        %7693 = vmatprep.subr.mxu0 0.0
        %7694 = vmatpush1.msra.mxu0 %v7682
        %7695 = vmatprep.subr.mxu0 0.0
        %7696 = vmatpush1.msra.mxu0 0.0
        %7697 = vmatprep.subr.mxu0 0.0
        %7698 = vmatpush1.msra.mxu0 0.0
        %7699 = vmatprep.subr.mxu0 0.0
        %7700 = vmatpush1.msra.mxu0 0.0
        %7701 = vmatprep.subr.mxu0 0.0
        %7702 = vmatpush1.msra.mxu0 0.0
        %7703 = vmatprep.subr.mxu0 0.0
        %7704 = vmatpush1.msra.mxu0 0.0
        %7705 = vmatprep.subr.mxu0 0.0
        %7706 = vmatpush1.msra.mxu0 0.0
        %7707 = vmatprep.subr.mxu0 0.0
        %7708 = vmatpush1.msra.mxu0 0.0
        %7709 = vmatprep.subr.mxu0 0.0
        %7710 = vmatpush1.msra.mxu0 0.0
        %7711 = vmatprep.subr.mxu0 0.0
        %7712 = vmatpush1.msra.mxu0 0.0
        %7713 = vmatprep.subr.mxu0 0.0
        %7714 = vmatpush1.msra.mxu0 0.0
        %7715 = vmatprep.subr.mxu0 0.0
        %7716 = vmatpush1.msra.mxu0 0.0
        %7717 = vmatprep.subr.mxu0 0.0
        %7718 = vmatpush1.msra.mxu0 0.0
        %7719 = vmatprep.subr.mxu0 0.0
        %7720 = vmatpush1.msra.mxu0 0.0
        %7721 = vmatprep.subr.mxu0 0.0
        %7722 = vmatpush1.msra.mxu0 0.0
        %7723 = vmatprep.subr.mxu0 0.0
        %7724 = vmatpush1.msra.mxu0 0.0
        %7725 = vmatprep.subr.mxu0 0.0
        %7726 = vmatpush1.msra.mxu0 0.0
        %7727 = vmatprep.subr.mxu0 0.0
        %7728 = vmatpush1.msra.mxu0 0.0
        %7729 = vmatprep.subr.mxu0 0.0
        %7730 = vmatpush1.msra.mxu0 0.0
        %7731 = vmatprep.subr.mxu0 0.0
        %7732 = vmatpush1.msra.mxu0 0.0
        %7733 = vmatprep.subr.mxu0 0.0
        %7734 = vmatpush1.msra.mxu0 0.0
        %7735 = vmatprep.subr.mxu0 0.0
        %7736 = vmatpush1.msra.mxu0 0.0
        %7737 = vmatprep.subr.mxu0 0.0
        %7738 = vmatpush1.msra.mxu0 0.0
        %7739 = vmatprep.subr.mxu0 0.0
        %7740 = vmatpush1.msra.mxu0 0.0
        %7741 = vmatprep.subr.mxu0 0.0
        %7742 = vmatpush1.msra.mxu0 0.0
        %7743 = vmatprep.subr.mxu0 0.0
        %7744 = vmatpush1.msra.mxu0 0.0
        %7745 = vmatprep.subr.mxu0 0.0
        %7746 = vmatpush1.msra.mxu0 0.0
        %7747 = vmatprep.subr.mxu0 0.0
        %7748 = vmatpush1.msra.mxu0 0.0
        %7749 = vmatprep.subr.mxu0 0.0
        %7750 = vmatpush1.msra.mxu0 0.0
        %7751 = vmatprep.subr.mxu0 0.0
        %7752 = vmatpush1.msra.mxu0 0.0
        %7753 = vmatprep.subr.mxu0 0.0
        %7754 = vmatpush1.msra.mxu0 0.0
        %7755 = vmatprep.mubr.f32.mxu0 0.0
        %7756 = vmatmul.mubr.f32.gmra.mrb[0].mxu0 %v7686
        %v7757 = vpop.f32.mrb[0].mxu0
        %v7758 = vadd.f32 0.0, %v7757
        %v7759 = vpop.f32.mrb[0].mxu0
        %7760 = vmatprep.mubr.f32.mxu0 0.0
        %7761 = vmatmul.mubr.f32.gmra.mrb[0].mxu0 %v7689
        %v7762 = vpop.f32.mrb[0].mxu0
        %v7763 = vadd.f32 0.0, %v7762
        %v7764 = vpop.f32.mrb[0].mxu0
        %7765 = vdwg.mxu0
        %7766 = vrot.lane.b32.xlu0 %v1539, 32
        %v7767 = vpop.permute.xlu0 %7766
        %7768 = vrot.lane.b32.xlu0 %v1542, 32
        %v7769 = vpop.permute.xlu0 %7768
        %v7773 = vsel %vm2560, %v7486, 0
        %v7776 = vsel %vm2560, %v7488, 0
        %7778 = vmatprep.subr.mxu0 0.0
        %7779 = vmatpush1.msra.mxu0 %v7767
        %7780 = vmatprep.subr.mxu0 0.0
        %7781 = vmatpush1.msra.mxu0 %v7769
        %7782 = vmatprep.subr.mxu0 0.0
        %7783 = vmatpush1.msra.mxu0 0.0
        %7784 = vmatprep.subr.mxu0 0.0
        %7785 = vmatpush1.msra.mxu0 0.0
        %7786 = vmatprep.subr.mxu0 0.0
        %7787 = vmatpush1.msra.mxu0 0.0
        %7788 = vmatprep.subr.mxu0 0.0
        %7789 = vmatpush1.msra.mxu0 0.0
        %7790 = vmatprep.subr.mxu0 0.0
        %7791 = vmatpush1.msra.mxu0 0.0
        %7792 = vmatprep.subr.mxu0 0.0
        %7793 = vmatpush1.msra.mxu0 0.0
        %7794 = vmatprep.subr.mxu0 0.0
        %7795 = vmatpush1.msra.mxu0 0.0
        %7796 = vmatprep.subr.mxu0 0.0
        %7797 = vmatpush1.msra.mxu0 0.0
        %7798 = vmatprep.subr.mxu0 0.0
        %7799 = vmatpush1.msra.mxu0 0.0
        %7800 = vmatprep.subr.mxu0 0.0
        %7801 = vmatpush1.msra.mxu0 0.0
        %7802 = vmatprep.subr.mxu0 0.0
        %7803 = vmatpush1.msra.mxu0 0.0
        %7804 = vmatprep.subr.mxu0 0.0
        %7805 = vmatpush1.msra.mxu0 0.0
        %7806 = vmatprep.subr.mxu0 0.0
        %7807 = vmatpush1.msra.mxu0 0.0
        %7808 = vmatprep.subr.mxu0 0.0
        %7809 = vmatpush1.msra.mxu0 0.0
        %7810 = vmatprep.subr.mxu0 0.0
        %7811 = vmatpush1.msra.mxu0 0.0
        %7812 = vmatprep.subr.mxu0 0.0
        %7813 = vmatpush1.msra.mxu0 0.0
        %7814 = vmatprep.subr.mxu0 0.0
        %7815 = vmatpush1.msra.mxu0 0.0
        %7816 = vmatprep.subr.mxu0 0.0
        %7817 = vmatpush1.msra.mxu0 0.0
        %7818 = vmatprep.subr.mxu0 0.0
        %7819 = vmatpush1.msra.mxu0 0.0
        %7820 = vmatprep.subr.mxu0 0.0
        %7821 = vmatpush1.msra.mxu0 0.0
        %7822 = vmatprep.subr.mxu0 0.0
        %7823 = vmatpush1.msra.mxu0 0.0
        %7824 = vmatprep.subr.mxu0 0.0
        %7825 = vmatpush1.msra.mxu0 0.0
        %7826 = vmatprep.subr.mxu0 0.0
        %7827 = vmatpush1.msra.mxu0 0.0
        %7828 = vmatprep.subr.mxu0 0.0
        %7829 = vmatpush1.msra.mxu0 0.0
        %7830 = vmatprep.subr.mxu0 0.0
        %7831 = vmatpush1.msra.mxu0 0.0
        %7832 = vmatprep.subr.mxu0 0.0
        %7833 = vmatpush1.msra.mxu0 0.0
        %7834 = vmatprep.subr.mxu0 0.0
        %7835 = vmatpush1.msra.mxu0 0.0
        %7836 = vmatprep.subr.mxu0 0.0
        %7837 = vmatpush1.msra.mxu0 0.0
        %7838 = vmatprep.subr.mxu0 0.0
        %7839 = vmatpush1.msra.mxu0 0.0
        %7840 = vmatprep.subr.mxu0 0.0
        %7841 = vmatpush1.msra.mxu0 0.0
        %7842 = vmatprep.mubr.f32.mxu0 0.0
        %7843 = vmatmul.mubr.f32.gmra.mrb[0].mxu0 %v7773
        %v7844 = vpop.f32.mrb[0].mxu0
        %v7845 = vadd.f32 0.0, %v7844
        %v7846 = vpop.f32.mrb[0].mxu0
        %7847 = vmatprep.mubr.f32.mxu0 0.0
        %7848 = vmatmul.mubr.f32.gmra.mrb[0].mxu0 %v7776
        %v7849 = vpop.f32.mrb[0].mxu0
        %v7850 = vadd.f32 0.0, %v7849
        %v7851 = vpop.f32.mrb[0].mxu0
        %7852 = vdwg.mxu0
        %7853 = vrot.lane.b32.xlu0 %v1547, 32
        %v7854 = vpop.permute.xlu0 %7853
        %7855 = vrot.lane.b32.xlu0 %v1550, 32
        %v7856 = vpop.permute.xlu0 %7855
        %v7860 = vsel %vm2560, %v7490, 0
        %v7863 = vsel %vm2560, %v7492, 0
        %7865 = vmatprep.subr.mxu0 0.0
        %7866 = vmatpush1.msra.mxu0 %v7854
        %7867 = vmatprep.subr.mxu0 0.0
        %7868 = vmatpush1.msra.mxu0 %v7856
        %7869 = vmatprep.subr.mxu0 0.0
        %7870 = vmatpush1.msra.mxu0 0.0
        %7871 = vmatprep.subr.mxu0 0.0
        %7872 = vmatpush1.msra.mxu0 0.0
        %7873 = vmatprep.subr.mxu0 0.0
        %7874 = vmatpush1.msra.mxu0 0.0
        %7875 = vmatprep.subr.mxu0 0.0
        %7876 = vmatpush1.msra.mxu0 0.0
        %7877 = vmatprep.subr.mxu0 0.0
        %7878 = vmatpush1.msra.mxu0 0.0
        %7879 = vmatprep.subr.mxu0 0.0
        %7880 = vmatpush1.msra.mxu0 0.0
        %7881 = vmatprep.subr.mxu0 0.0
        %7882 = vmatpush1.msra.mxu0 0.0
        %7883 = vmatprep.subr.mxu0 0.0
        %7884 = vmatpush1.msra.mxu0 0.0
        %7885 = vmatprep.subr.mxu0 0.0
        %7886 = vmatpush1.msra.mxu0 0.0
        %7887 = vmatprep.subr.mxu0 0.0
        %7888 = vmatpush1.msra.mxu0 0.0
        %7889 = vmatprep.subr.mxu0 0.0
        %7890 = vmatpush1.msra.mxu0 0.0
        %7891 = vmatprep.subr.mxu0 0.0
        %7892 = vmatpush1.msra.mxu0 0.0
        %7893 = vmatprep.subr.mxu0 0.0
        %7894 = vmatpush1.msra.mxu0 0.0
        %7895 = vmatprep.subr.mxu0 0.0
        %7896 = vmatpush1.msra.mxu0 0.0
        %7897 = vmatprep.subr.mxu0 0.0
        %7898 = vmatpush1.msra.mxu0 0.0
        %7899 = vmatprep.subr.mxu0 0.0
        %7900 = vmatpush1.msra.mxu0 0.0
        %7901 = vmatprep.subr.mxu0 0.0
        %7902 = vmatpush1.msra.mxu0 0.0
        %7903 = vmatprep.subr.mxu0 0.0
        %7904 = vmatpush1.msra.mxu0 0.0
        %7905 = vmatprep.subr.mxu0 0.0
        %7906 = vmatpush1.msra.mxu0 0.0
        %7907 = vmatprep.subr.mxu0 0.0
        %7908 = vmatpush1.msra.mxu0 0.0
        %7909 = vmatprep.subr.mxu0 0.0
        %7910 = vmatpush1.msra.mxu0 0.0
        %7911 = vmatprep.subr.mxu0 0.0
        %7912 = vmatpush1.msra.mxu0 0.0
        %7913 = vmatprep.subr.mxu0 0.0
        %7914 = vmatpush1.msra.mxu0 0.0
        %7915 = vmatprep.subr.mxu0 0.0
        %7916 = vmatpush1.msra.mxu0 0.0
        %7917 = vmatprep.subr.mxu0 0.0
        %7918 = vmatpush1.msra.mxu0 0.0
        %7919 = vmatprep.subr.mxu0 0.0
        %7920 = vmatpush1.msra.mxu0 0.0
        %7921 = vmatprep.subr.mxu0 0.0
        %7922 = vmatpush1.msra.mxu0 0.0
        %7923 = vmatprep.subr.mxu0 0.0
        %7924 = vmatpush1.msra.mxu0 0.0
        %7925 = vmatprep.subr.mxu0 0.0
        %7926 = vmatpush1.msra.mxu0 0.0
        %7927 = vmatprep.subr.mxu0 0.0
        %7928 = vmatpush1.msra.mxu0 0.0
        %7929 = vmatprep.mubr.f32.mxu0 0.0
        %7930 = vmatmul.mubr.f32.gmra.mrb[0].mxu0 %v7860
        %v7931 = vpop.f32.mrb[0].mxu0
        %v7932 = vadd.f32 0.0, %v7931
        %v7933 = vpop.f32.mrb[0].mxu0
        %7934 = vmatprep.mubr.f32.mxu0 0.0
        %7935 = vmatmul.mubr.f32.gmra.mrb[0].mxu0 %v7863
        %v7936 = vpop.f32.mrb[0].mxu0
        %v7937 = vadd.f32 0.0, %v7936
        %v7938 = vpop.f32.mrb[0].mxu0
        %7939 = vdwg.mxu0
        %7940 = vrot.lane.b32.xlu0 %v1555, 32
        %v7941 = vpop.permute.xlu0 %7940
        %7942 = vrot.lane.b32.xlu0 %v1558, 32
        %v7943 = vpop.permute.xlu0 %7942
        %v7947 = vsel %vm2560, %v7494, 0
        %v7950 = vsel %vm2560, %v7496, 0
        %7952 = vmatprep.subr.mxu0 0.0
        %7953 = vmatpush1.msra.mxu0 %v7941
        %7954 = vmatprep.subr.mxu0 0.0
        %7955 = vmatpush1.msra.mxu0 %v7943
        %7956 = vmatprep.subr.mxu0 0.0
        %7957 = vmatpush1.msra.mxu0 0.0
        %7958 = vmatprep.subr.mxu0 0.0
        %7959 = vmatpush1.msra.mxu0 0.0
        %7960 = vmatprep.subr.mxu0 0.0
        %7961 = vmatpush1.msra.mxu0 0.0
        %7962 = vmatprep.subr.mxu0 0.0
        %7963 = vmatpush1.msra.mxu0 0.0
        %7964 = vmatprep.subr.mxu0 0.0
        %7965 = vmatpush1.msra.mxu0 0.0
        %7966 = vmatprep.subr.mxu0 0.0
        %7967 = vmatpush1.msra.mxu0 0.0
        %7968 = vmatprep.subr.mxu0 0.0
        %7969 = vmatpush1.msra.mxu0 0.0
        %7970 = vmatprep.subr.mxu0 0.0
        %7971 = vmatpush1.msra.mxu0 0.0
        %7972 = vmatprep.subr.mxu0 0.0
        %7973 = vmatpush1.msra.mxu0 0.0
        %7974 = vmatprep.subr.mxu0 0.0
        %7975 = vmatpush1.msra.mxu0 0.0
        %7976 = vmatprep.subr.mxu0 0.0
        %7977 = vmatpush1.msra.mxu0 0.0
        %7978 = vmatprep.subr.mxu0 0.0
        %7979 = vmatpush1.msra.mxu0 0.0
        %7980 = vmatprep.subr.mxu0 0.0
        %7981 = vmatpush1.msra.mxu0 0.0
        %7982 = vmatprep.subr.mxu0 0.0
        %7983 = vmatpush1.msra.mxu0 0.0
        %7984 = vmatprep.subr.mxu0 0.0
        %7985 = vmatpush1.msra.mxu0 0.0
        %7986 = vmatprep.subr.mxu0 0.0
        %7987 = vmatpush1.msra.mxu0 0.0
        %7988 = vmatprep.subr.mxu0 0.0
        %7989 = vmatpush1.msra.mxu0 0.0
        %7990 = vmatprep.subr.mxu0 0.0
        %7991 = vmatpush1.msra.mxu0 0.0
        %7992 = vmatprep.subr.mxu0 0.0
        %7993 = vmatpush1.msra.mxu0 0.0
        %7994 = vmatprep.subr.mxu0 0.0
        %7995 = vmatpush1.msra.mxu0 0.0
        %7996 = vmatprep.subr.mxu0 0.0
        %7997 = vmatpush1.msra.mxu0 0.0
        %7998 = vmatprep.subr.mxu0 0.0
        %7999 = vmatpush1.msra.mxu0 0.0
        %8000 = vmatprep.subr.mxu0 0.0
        %8001 = vmatpush1.msra.mxu0 0.0
        %8002 = vmatprep.subr.mxu0 0.0
        %8003 = vmatpush1.msra.mxu0 0.0
        %8004 = vmatprep.subr.mxu0 0.0
        %8005 = vmatpush1.msra.mxu0 0.0
        %8006 = vmatprep.subr.mxu0 0.0
        %8007 = vmatpush1.msra.mxu0 0.0
        %8008 = vmatprep.subr.mxu0 0.0
        %8009 = vmatpush1.msra.mxu0 0.0
        %8010 = vmatprep.subr.mxu0 0.0
        %8011 = vmatpush1.msra.mxu0 0.0
        %8012 = vmatprep.subr.mxu0 0.0
        %8013 = vmatpush1.msra.mxu0 0.0
        %8014 = vmatprep.subr.mxu0 0.0
        %8015 = vmatpush1.msra.mxu0 0.0
        %8016 = vmatprep.mubr.f32.mxu0 0.0
        %8017 = vmatmul.mubr.f32.gmra.mrb[0].mxu0 %v7947
        %v8018 = vpop.f32.mrb[0].mxu0
        %v8019 = vadd.f32 0.0, %v8018
        %v8020 = vpop.f32.mrb[0].mxu0
        %8021 = vmatprep.mubr.f32.mxu0 0.0
        %8022 = vmatmul.mubr.f32.gmra.mrb[0].mxu0 %v7950
        %v8023 = vpop.f32.mrb[0].mxu0
        %v8024 = vadd.f32 0.0, %v8023
        %v8025 = vpop.f32.mrb[0].mxu0
        %8026 = vdwg.mxu0
        %8027 = vrot.lane.b32.xlu0 %v1563, 32
        %v8028 = vpop.permute.xlu0 %8027
        %8029 = vrot.lane.b32.xlu0 %v1566, 32
        %v8030 = vpop.permute.xlu0 %8029
        %v8034 = vsel %vm2560, %v7498, 0
        %v8037 = vsel %vm2560, %v7500, 0
        %8039 = vmatprep.subr.mxu0 0.0
        %8040 = vmatpush1.msra.mxu0 %v8028
        %8041 = vmatprep.subr.mxu0 0.0
        %8042 = vmatpush1.msra.mxu0 %v8030
        %8043 = vmatprep.subr.mxu0 0.0
        %8044 = vmatpush1.msra.mxu0 0.0
        %8045 = vmatprep.subr.mxu0 0.0
        %8046 = vmatpush1.msra.mxu0 0.0
        %8047 = vmatprep.subr.mxu0 0.0
        %8048 = vmatpush1.msra.mxu0 0.0
        %8049 = vmatprep.subr.mxu0 0.0
        %8050 = vmatpush1.msra.mxu0 0.0
        %8051 = vmatprep.subr.mxu0 0.0
        %8052 = vmatpush1.msra.mxu0 0.0
        %8053 = vmatprep.subr.mxu0 0.0
        %8054 = vmatpush1.msra.mxu0 0.0
        %8055 = vmatprep.subr.mxu0 0.0
        %8056 = vmatpush1.msra.mxu0 0.0
        %8057 = vmatprep.subr.mxu0 0.0
        %8058 = vmatpush1.msra.mxu0 0.0
        %8059 = vmatprep.subr.mxu0 0.0
        %8060 = vmatpush1.msra.mxu0 0.0
        %8061 = vmatprep.subr.mxu0 0.0
        %8062 = vmatpush1.msra.mxu0 0.0
        %8063 = vmatprep.subr.mxu0 0.0
        %8064 = vmatpush1.msra.mxu0 0.0
        %8065 = vmatprep.subr.mxu0 0.0
        %8066 = vmatpush1.msra.mxu0 0.0
        %8067 = vmatprep.subr.mxu0 0.0
        %8068 = vmatpush1.msra.mxu0 0.0
        %8069 = vmatprep.subr.mxu0 0.0
        %8070 = vmatpush1.msra.mxu0 0.0
        %8071 = vmatprep.subr.mxu0 0.0
        %8072 = vmatpush1.msra.mxu0 0.0
        %8073 = vmatprep.subr.mxu0 0.0
        %8074 = vmatpush1.msra.mxu0 0.0
        %8075 = vmatprep.subr.mxu0 0.0
        %8076 = vmatpush1.msra.mxu0 0.0
        %8077 = vmatprep.subr.mxu0 0.0
        %8078 = vmatpush1.msra.mxu0 0.0
        %8079 = vmatprep.subr.mxu0 0.0
        %8080 = vmatpush1.msra.mxu0 0.0
        %8081 = vmatprep.subr.mxu0 0.0
        %8082 = vmatpush1.msra.mxu0 0.0
        %8083 = vmatprep.subr.mxu0 0.0
        %8084 = vmatpush1.msra.mxu0 0.0
        %8085 = vmatprep.subr.mxu0 0.0
        %8086 = vmatpush1.msra.mxu0 0.0
        %8087 = vmatprep.subr.mxu0 0.0
        %8088 = vmatpush1.msra.mxu0 0.0
        %8089 = vmatprep.subr.mxu0 0.0
        %8090 = vmatpush1.msra.mxu0 0.0
        %8091 = vmatprep.subr.mxu0 0.0
        %8092 = vmatpush1.msra.mxu0 0.0
        %8093 = vmatprep.subr.mxu0 0.0
        %8094 = vmatpush1.msra.mxu0 0.0
        %8095 = vmatprep.subr.mxu0 0.0
        %8096 = vmatpush1.msra.mxu0 0.0
        %8097 = vmatprep.subr.mxu0 0.0
        %8098 = vmatpush1.msra.mxu0 0.0
        %8099 = vmatprep.subr.mxu0 0.0
        %8100 = vmatpush1.msra.mxu0 0.0
        %8101 = vmatprep.subr.mxu0 0.0
        %8102 = vmatpush1.msra.mxu0 0.0
        %8103 = vmatprep.mubr.f32.mxu0 0.0
        %8104 = vmatmul.mubr.f32.gmra.mrb[0].mxu0 %v8034
        %v8105 = vpop.f32.mrb[0].mxu0
        %v8106 = vadd.f32 0.0, %v8105
        %v8107 = vpop.f32.mrb[0].mxu0
        %8108 = vmatprep.mubr.f32.mxu0 0.0
        %8109 = vmatmul.mubr.f32.gmra.mrb[0].mxu0 %v8037
        %v8110 = vpop.f32.mrb[0].mxu0
        %v8111 = vadd.f32 0.0, %v8110
        %v8112 = vpop.f32.mrb[0].mxu0
        %8113 = vdwg.mxu0
        %8114 = vrot.lane.b32.xlu0 %v1571, 32
        %v8115 = vpop.permute.xlu0 %8114
        %8116 = vrot.lane.b32.xlu0 %v1574, 32
        %v8117 = vpop.permute.xlu0 %8116
        %v8121 = vsel %vm2560, %v7502, 0
        %v8124 = vsel %vm2560, %v7504, 0
        %8126 = vmatprep.subr.mxu0 0.0
        %8127 = vmatpush1.msra.mxu0 %v8115
        %8128 = vmatprep.subr.mxu0 0.0
        %8129 = vmatpush1.msra.mxu0 %v8117
        %8130 = vmatprep.subr.mxu0 0.0
        %8131 = vmatpush1.msra.mxu0 0.0
        %8132 = vmatprep.subr.mxu0 0.0
        %8133 = vmatpush1.msra.mxu0 0.0
        %8134 = vmatprep.subr.mxu0 0.0
        %8135 = vmatpush1.msra.mxu0 0.0
        %8136 = vmatprep.subr.mxu0 0.0
        %8137 = vmatpush1.msra.mxu0 0.0
        %8138 = vmatprep.subr.mxu0 0.0
        %8139 = vmatpush1.msra.mxu0 0.0
        %8140 = vmatprep.subr.mxu0 0.0
        %8141 = vmatpush1.msra.mxu0 0.0
        %8142 = vmatprep.subr.mxu0 0.0
        %8143 = vmatpush1.msra.mxu0 0.0
        %8144 = vmatprep.subr.mxu0 0.0
        %8145 = vmatpush1.msra.mxu0 0.0
        %8146 = vmatprep.subr.mxu0 0.0
        %8147 = vmatpush1.msra.mxu0 0.0
        %8148 = vmatprep.subr.mxu0 0.0
        %8149 = vmatpush1.msra.mxu0 0.0
        %8150 = vmatprep.subr.mxu0 0.0
        %8151 = vmatpush1.msra.mxu0 0.0
        %8152 = vmatprep.subr.mxu0 0.0
        %8153 = vmatpush1.msra.mxu0 0.0
        %8154 = vmatprep.subr.mxu0 0.0
        %8155 = vmatpush1.msra.mxu0 0.0
        %8156 = vmatprep.subr.mxu0 0.0
        %8157 = vmatpush1.msra.mxu0 0.0
        %8158 = vmatprep.subr.mxu0 0.0
        %8159 = vmatpush1.msra.mxu0 0.0
        %8160 = vmatprep.subr.mxu0 0.0
        %8161 = vmatpush1.msra.mxu0 0.0
        %8162 = vmatprep.subr.mxu0 0.0
        %8163 = vmatpush1.msra.mxu0 0.0
        %8164 = vmatprep.subr.mxu0 0.0
        %8165 = vmatpush1.msra.mxu0 0.0
        %8166 = vmatprep.subr.mxu0 0.0
        %8167 = vmatpush1.msra.mxu0 0.0
        %8168 = vmatprep.subr.mxu0 0.0
        %8169 = vmatpush1.msra.mxu0 0.0
        %8170 = vmatprep.subr.mxu0 0.0
        %8171 = vmatpush1.msra.mxu0 0.0
        %8172 = vmatprep.subr.mxu0 0.0
        %8173 = vmatpush1.msra.mxu0 0.0
        %8174 = vmatprep.subr.mxu0 0.0
        %8175 = vmatpush1.msra.mxu0 0.0
        %8176 = vmatprep.subr.mxu0 0.0
        %8177 = vmatpush1.msra.mxu0 0.0
        %8178 = vmatprep.subr.mxu0 0.0
        %8179 = vmatpush1.msra.mxu0 0.0
        %8180 = vmatprep.subr.mxu0 0.0
        %8181 = vmatpush1.msra.mxu0 0.0
        %8182 = vmatprep.subr.mxu0 0.0
        %8183 = vmatpush1.msra.mxu0 0.0
        %8184 = vmatprep.subr.mxu0 0.0
        %8185 = vmatpush1.msra.mxu0 0.0
        %8186 = vmatprep.subr.mxu0 0.0
        %8187 = vmatpush1.msra.mxu0 0.0
        %8188 = vmatprep.subr.mxu0 0.0
        %8189 = vmatpush1.msra.mxu0 0.0
        %8190 = vmatprep.mubr.f32.mxu0 0.0
        %8191 = vmatmul.mubr.f32.gmra.mrb[0].mxu0 %v8121
        %v8192 = vpop.f32.mrb[0].mxu0
        %v8193 = vadd.f32 0.0, %v8192
        %v8194 = vpop.f32.mrb[0].mxu0
        %8195 = vmatprep.mubr.f32.mxu0 0.0
        %8196 = vmatmul.mubr.f32.gmra.mrb[0].mxu0 %v8124
        %v8197 = vpop.f32.mrb[0].mxu0
        %v8198 = vadd.f32 0.0, %v8197
        %v8199 = vpop.f32.mrb[0].mxu0
        %8200 = vdwg.mxu0
        %8217 = vrot.lane.b32.xlu0 %v4370, 32
        %v8218 = vpop.permute.xlu0 %8217
        %8219 = vrot.lane.b32.xlu0 %v4375, 32
        %v8220 = vpop.permute.xlu0 %8219
        %8221 = vrot.lane.b32.xlu0 %v4459, 32
        %v8222 = vpop.permute.xlu0 %8221
        %8223 = vrot.lane.b32.xlu0 %v4464, 32
        %v8224 = vpop.permute.xlu0 %8223
        %8225 = vrot.lane.b32.xlu0 %v4548, 32
        %v8226 = vpop.permute.xlu0 %8225
        %8227 = vrot.lane.b32.xlu0 %v4553, 32
        %v8228 = vpop.permute.xlu0 %8227
        %8229 = vrot.lane.b32.xlu0 %v4637, 32
        %v8230 = vpop.permute.xlu0 %8229
        %8231 = vrot.lane.b32.xlu0 %v4642, 32
        %v8232 = vpop.permute.xlu0 %8231
        %8233 = vrot.lane.b32.xlu0 %v4726, 32
        %v8234 = vpop.permute.xlu0 %8233
        %8235 = vrot.lane.b32.xlu0 %v4731, 32
        %v8236 = vpop.permute.xlu0 %8235
        %8237 = vrot.lane.b32.xlu0 %v4815, 32
        %v8238 = vpop.permute.xlu0 %8237
        %8239 = vrot.lane.b32.xlu0 %v4820, 32
        %v8240 = vpop.permute.xlu0 %8239
        %8241 = vrot.lane.b32.xlu0 %v4904, 32
        %v8242 = vpop.permute.xlu0 %8241
        %8243 = vrot.lane.b32.xlu0 %v4909, 32
        %v8244 = vpop.permute.xlu0 %8243
        %8245 = vrot.lane.b32.xlu0 %v4993, 32
        %v8246 = vpop.permute.xlu0 %8245
        %8247 = vrot.lane.b32.xlu0 %v4998, 32
        %v8248 = vpop.permute.xlu0 %8247
        %8281 = vrot.lane.b32.xlu0 %v5984, 64
        %v8282 = vpop.permute.xlu0 %8281
        %8283 = vrot.lane.b32.xlu0 %v5989, 64
        %v8284 = vpop.permute.xlu0 %8283
        %8285 = vrot.lane.b32.xlu0 %v6071, 64
        %v8286 = vpop.permute.xlu0 %8285
        %8287 = vrot.lane.b32.xlu0 %v6076, 64
        %v8288 = vpop.permute.xlu0 %8287
        %8289 = vrot.lane.b32.xlu0 %v6158, 64
        %v8290 = vpop.permute.xlu0 %8289
        %8291 = vrot.lane.b32.xlu0 %v6163, 64
        %v8292 = vpop.permute.xlu0 %8291
        %8293 = vrot.lane.b32.xlu0 %v6245, 64
        %v8294 = vpop.permute.xlu0 %8293
        %8295 = vrot.lane.b32.xlu0 %v6250, 64
        %v8296 = vpop.permute.xlu0 %8295
        %8297 = vrot.lane.b32.xlu0 %v6332, 64
        %v8298 = vpop.permute.xlu0 %8297
        %8299 = vrot.lane.b32.xlu0 %v6337, 64
        %v8300 = vpop.permute.xlu0 %8299
        %8301 = vrot.lane.b32.xlu0 %v6419, 64
        %v8302 = vpop.permute.xlu0 %8301
        %8303 = vrot.lane.b32.xlu0 %v6424, 64
        %v8304 = vpop.permute.xlu0 %8303
        %8305 = vrot.lane.b32.xlu0 %v6506, 64
        %v8306 = vpop.permute.xlu0 %8305
        %8307 = vrot.lane.b32.xlu0 %v6511, 64
        %v8308 = vpop.permute.xlu0 %8307
        %8309 = vrot.lane.b32.xlu0 %v6593, 64
        %v8310 = vpop.permute.xlu0 %8309
        %8311 = vrot.lane.b32.xlu0 %v6598, 64
        %v8312 = vpop.permute.xlu0 %8311
        %8345 = vrot.lane.b32.xlu0 %v7584, 96
        %v8346 = vpop.permute.xlu0 %8345
        %8347 = vrot.lane.b32.xlu0 %v7589, 96
        %v8348 = vpop.permute.xlu0 %8347
        %8349 = vrot.lane.b32.xlu0 %v7671, 96
        %v8350 = vpop.permute.xlu0 %8349
        %8351 = vrot.lane.b32.xlu0 %v7676, 96
        %v8352 = vpop.permute.xlu0 %8351
        %8353 = vrot.lane.b32.xlu0 %v7758, 96
        %v8354 = vpop.permute.xlu0 %8353
        %8355 = vrot.lane.b32.xlu0 %v7763, 96
        %v8356 = vpop.permute.xlu0 %8355
        %8357 = vrot.lane.b32.xlu0 %v7845, 96
        %v8358 = vpop.permute.xlu0 %8357
        %8359 = vrot.lane.b32.xlu0 %v7850, 96
        %v8360 = vpop.permute.xlu0 %8359
        %8361 = vrot.lane.b32.xlu0 %v7932, 96
        %v8362 = vpop.permute.xlu0 %8361
        %8363 = vrot.lane.b32.xlu0 %v7937, 96
        %v8364 = vpop.permute.xlu0 %8363
        %8365 = vrot.lane.b32.xlu0 %v8019, 96
        %v8366 = vpop.permute.xlu0 %8365
        %8367 = vrot.lane.b32.xlu0 %v8024, 96
        %v8368 = vpop.permute.xlu0 %8367
        %8369 = vrot.lane.b32.xlu0 %v8106, 96
        %v8370 = vpop.permute.xlu0 %8369
        %8371 = vrot.lane.b32.xlu0 %v8111, 96
        %v8372 = vpop.permute.xlu0 %8371
        %8373 = vrot.lane.b32.xlu0 %v8193, 96
        %v8374 = vpop.permute.xlu0 %8373
        %8375 = vrot.lane.b32.xlu0 %v8198, 96
        %v8376 = vpop.permute.xlu0 %8375
        %v8393 = vsel %vm1863, %v2810, %v8218
        %v8394 = vsel %vm1863, %v2815, %v8220
        %v8395 = vsel %vm1863, %v2891, %v8222
        %v8396 = vsel %vm1863, %v2896, %v8224
        %v8397 = vsel %vm1863, %v2972, %v8226
        %v8398 = vsel %vm1863, %v2977, %v8228
        %v8399 = vsel %vm1863, %v3053, %v8230
        %v8400 = vsel %vm1863, %v3058, %v8232
        %v8401 = vsel %vm1863, %v3134, %v8234
        %v8402 = vsel %vm1863, %v3139, %v8236
        %v8403 = vsel %vm1863, %v3215, %v8238
        %v8404 = vsel %vm1863, %v3220, %v8240
        %v8405 = vsel %vm1863, %v3296, %v8242
        %v8406 = vsel %vm1863, %v3301, %v8244
        %v8407 = vsel %vm1863, %v3377, %v8246
        %v8408 = vsel %vm1863, %v3382, %v8248
        %vm8409 = vcmask 523264
        %v8410 = vsel %vm8409, %v8393, %v8282
        %v8411 = vsel %vm8409, %v8394, %v8284
        %v8412 = vsel %vm8409, %v8395, %v8286
        %v8413 = vsel %vm8409, %v8396, %v8288
        %v8414 = vsel %vm8409, %v8397, %v8290
        %v8415 = vsel %vm8409, %v8398, %v8292
        %v8416 = vsel %vm8409, %v8399, %v8294
        %v8417 = vsel %vm8409, %v8400, %v8296
        %v8418 = vsel %vm8409, %v8401, %v8298
        %v8419 = vsel %vm8409, %v8402, %v8300
        %v8420 = vsel %vm8409, %v8403, %v8302
        %v8421 = vsel %vm8409, %v8404, %v8304
        %v8422 = vsel %vm8409, %v8405, %v8306
        %v8423 = vsel %vm8409, %v8406, %v8308
        %v8424 = vsel %vm8409, %v8407, %v8310
        %v8425 = vsel %vm8409, %v8408, %v8312
        %vm8426 = vcmask 785408
        %v8427 = vsel %vm8426, %v8410, %v8346
        %v8428 = vsel %vm8426, %v8411, %v8348
        %v8429 = vsel %vm8426, %v8412, %v8350
        %v8430 = vsel %vm8426, %v8413, %v8352
        %v8431 = vsel %vm8426, %v8414, %v8354
        %v8432 = vsel %vm8426, %v8415, %v8356
        %v8433 = vsel %vm8426, %v8416, %v8358
        %v8434 = vsel %vm8426, %v8417, %v8360
        %v8435 = vsel %vm8426, %v8418, %v8362
        %v8436 = vsel %vm8426, %v8419, %v8364
        %v8437 = vsel %vm8426, %v8420, %v8366
        %v8438 = vsel %vm8426, %v8421, %v8368
        %v8439 = vsel %vm8426, %v8422, %v8370
        %v8440 = vsel %vm8426, %v8423, %v8372
        %v8441 = vsel %vm8426, %v8424, %v8374
        %v8442 = vsel %vm8426, %v8425, %v8376
        %v8443 = vpack.c.bf16 %v8428, %v8427
        %v8444 = vpack.c.bf16 %v8430, %v8429
        %v8445 = vpack.c.bf16 %v8432, %v8431
        %v8446 = vpack.c.bf16 %v8434, %v8433
        %v8447 = vpack.c.bf16 %v8436, %v8435
        %v8448 = vpack.c.bf16 %v8438, %v8437
        %v8449 = vpack.c.bf16 %v8440, %v8439
        %v8450 = vpack.c.bf16 %v8442, %v8441
        %v8451 = vld [vmem:[%s751] sm:$0xf]
        %v8452 = vld [vmem:[%s751 + $0x4] sm:$0xf]
        %v8453 = vld [vmem:[%s751 + $0x8] sm:$0xf]
        %v8454 = vld [vmem:[%s751 + $0xc] sm:$0xf]
        %v8455 = vld [vmem:[%s751 + $0x10] sm:$0xf]
        %v8456 = vld [vmem:[%s751 + $0x14] sm:$0xf]
        %v8457 = vld [vmem:[%s751 + $0x18] sm:$0xf]
        %v8458 = vld [vmem:[%s751 + $0x1c] sm:$0xf]
        %v8459 = vld [vmem:[%s751 + $0x20] sm:$0xf]
        %v8460 = vld [vmem:[%s751 + $0x24] sm:$0xf]
        %v8461 = vld [vmem:[%s751 + $0x28] sm:$0xf]
        %v8462 = vld [vmem:[%s751 + $0x2c] sm:$0xf]
        %v8463 = vld [vmem:[%s751 + $0x30] sm:$0xf]
        %v8464 = vld [vmem:[%s751 + $0x34] sm:$0xf]
        %v8465 = vld [vmem:[%s751 + $0x38] sm:$0xf]
        %v8466 = vld [vmem:[%s751 + $0x3c] sm:$0xf]
        %v8467 = vld [vmem:[%s888] sm:$0x1]
        %v8469 = vlaneseq
        %v8470 = vshrl.u32 %v8469, 7
        %v8471 = vsub.s32 0, %v8470
        %v8472 = vrot.slane %v8467, %v8471
        %v8490 = vunpack.c.l.b16 %v8451
        %v8491 = vunpack.c.l.b16 %v8452
        %v8492 = vunpack.c.l.b16 %v8453
        %v8493 = vunpack.c.l.b16 %v8454
        %v8494 = vunpack.c.l.b16 %v8455
        %v8495 = vunpack.c.l.b16 %v8456
        %v8496 = vunpack.c.l.b16 %v8457
        %v8497 = vunpack.c.l.b16 %v8458
        %v8498 = vunpack.c.l.b16 %v8459
        %v8499 = vunpack.c.l.b16 %v8460
        %v8500 = vunpack.c.l.b16 %v8461
        %v8501 = vunpack.c.l.b16 %v8462
        %v8502 = vunpack.c.l.b16 %v8463
        %v8503 = vunpack.c.l.b16 %v8464
        %v8504 = vunpack.c.l.b16 %v8465
        %v8505 = vunpack.c.l.b16 %v8466
        %v8506 = vpack.c.b16 %v8491, %v8490
        %v8507 = vpack.c.b16 %v8493, %v8492
        %v8508 = vpack.c.b16 %v8495, %v8494
        %v8509 = vpack.c.b16 %v8497, %v8496
        %v8510 = vpack.c.b16 %v8499, %v8498
        %v8511 = vpack.c.b16 %v8501, %v8500
        %v8512 = vpack.c.b16 %v8503, %v8502
        %v8513 = vpack.c.b16 %v8505, %v8504
        %8522 = vmatprep.subr.bf16.mxu0 0
        %8523 = vmatpush1.bf16.msra.mxu0 %v8506
        %8524 = vmatprep.subr.bf16.mxu0 0
        %8525 = vmatpush1.bf16.msra.mxu0 %v8507
        %8526 = vmatprep.subr.bf16.mxu0 0
        %8527 = vmatpush1.bf16.msra.mxu0 %v8508
        %8528 = vmatprep.subr.bf16.mxu0 0
        %8529 = vmatpush1.bf16.msra.mxu0 %v8509
        %8530 = vmatprep.subr.bf16.mxu0 0
        %8531 = vmatpush1.bf16.msra.mxu0 %v8510
        %8532 = vmatprep.subr.bf16.mxu0 0
        %8533 = vmatpush1.bf16.msra.mxu0 %v8511
        %8534 = vmatprep.subr.bf16.mxu0 0
        %8535 = vmatpush1.bf16.msra.mxu0 %v8512
        %8536 = vmatprep.subr.bf16.mxu0 0
        %8537 = vmatpush1.bf16.msra.mxu0 %v8513
        %8538 = vmatprep.subr.bf16.mxu0 0
        %8539 = vmatpush1.bf16.msra.mxu0 0
        %8540 = vmatprep.subr.bf16.mxu0 0
        %8541 = vmatpush1.bf16.msra.mxu0 0
        %8542 = vmatprep.subr.bf16.mxu0 0
        %8543 = vmatpush1.bf16.msra.mxu0 0
        %8544 = vmatprep.subr.bf16.mxu0 0
        %8545 = vmatpush1.bf16.msra.mxu0 0
        %8546 = vmatprep.subr.bf16.mxu0 0
        %8547 = vmatpush1.bf16.msra.mxu0 0
        %8548 = vmatprep.subr.bf16.mxu0 0
        %8549 = vmatpush1.bf16.msra.mxu0 0
        %8550 = vmatprep.subr.bf16.mxu0 0
        %8551 = vmatpush1.bf16.msra.mxu0 0
        %8552 = vmatprep.subr.bf16.mxu0 0
        %8553 = vmatpush1.bf16.msra.mxu0 0
        %8554 = vmatprep.mubr.bf16.mxu0 0
        %8555 = vmatmul.mubr.bf16.gmra.mrb[0].mxu0 %v8443
        %v8556 = vpop.f32.mrb[0].mxu0
        %v8557 = vadd.f32 %v8472, %v8556
        %v8558 = vpop.f32.mrb[0].mxu0
        %v8559 = vpop.f32.mrb[0].mxu0
        %v8560 = vadd.f32 %v8472, %v8559
        %v8561 = vpop.f32.mrb[0].mxu0
        %8562 = vmatprep.mubr.bf16.mxu0 0
        %8563 = vmatmul.mubr.bf16.gmra.mrb[0].mxu0 %v8444
        %v8564 = vpop.f32.mrb[0].mxu0
        %v8565 = vadd.f32 %v8472, %v8564
        %v8566 = vpop.f32.mrb[0].mxu0
        %v8567 = vpop.f32.mrb[0].mxu0
        %v8568 = vadd.f32 %v8472, %v8567
        %v8569 = vpop.f32.mrb[0].mxu0
        %8570 = vmatprep.mubr.bf16.mxu0 0
        %8571 = vmatmul.mubr.bf16.gmra.mrb[0].mxu0 %v8445
        %v8572 = vpop.f32.mrb[0].mxu0
        %v8573 = vadd.f32 %v8472, %v8572
        %v8574 = vpop.f32.mrb[0].mxu0
        %v8575 = vpop.f32.mrb[0].mxu0
        %v8576 = vadd.f32 %v8472, %v8575
        %v8577 = vpop.f32.mrb[0].mxu0
        %8578 = vmatprep.mubr.bf16.mxu0 0
        %8579 = vmatmul.mubr.bf16.gmra.mrb[0].mxu0 %v8446
        %v8580 = vpop.f32.mrb[0].mxu0
        %v8581 = vadd.f32 %v8472, %v8580
        %v8582 = vpop.f32.mrb[0].mxu0
        %v8583 = vpop.f32.mrb[0].mxu0
        %v8584 = vadd.f32 %v8472, %v8583
        %v8585 = vpop.f32.mrb[0].mxu0
        %8586 = vmatprep.mubr.bf16.mxu0 0
        %8587 = vmatmul.mubr.bf16.gmra.mrb[0].mxu0 %v8447
        %v8588 = vpop.f32.mrb[0].mxu0
        %v8589 = vadd.f32 %v8472, %v8588
        %v8590 = vpop.f32.mrb[0].mxu0
        %v8591 = vpop.f32.mrb[0].mxu0
        %v8592 = vadd.f32 %v8472, %v8591
        %v8593 = vpop.f32.mrb[0].mxu0
        %8594 = vmatprep.mubr.bf16.mxu0 0
        %8595 = vmatmul.mubr.bf16.gmra.mrb[0].mxu0 %v8448
        %v8596 = vpop.f32.mrb[0].mxu0
        %v8597 = vadd.f32 %v8472, %v8596
        %v8598 = vpop.f32.mrb[0].mxu0
        %v8599 = vpop.f32.mrb[0].mxu0
        %v8600 = vadd.f32 %v8472, %v8599
        %v8601 = vpop.f32.mrb[0].mxu0
        %8602 = vmatprep.mubr.bf16.mxu0 0
        %8603 = vmatmul.mubr.bf16.gmra.mrb[0].mxu0 %v8449
        %v8604 = vpop.f32.mrb[0].mxu0
        %v8605 = vadd.f32 %v8472, %v8604
        %v8606 = vpop.f32.mrb[0].mxu0
        %v8607 = vpop.f32.mrb[0].mxu0
        %v8608 = vadd.f32 %v8472, %v8607
        %v8609 = vpop.f32.mrb[0].mxu0
        %8610 = vmatprep.mubr.bf16.mxu0 0
        %8611 = vmatmul.mubr.bf16.gmra.mrb[0].mxu0 %v8450
        %v8612 = vpop.f32.mrb[0].mxu0
        %v8613 = vadd.f32 %v8472, %v8612
        %v8614 = vpop.f32.mrb[0].mxu0
        %v8615 = vpop.f32.mrb[0].mxu0
        %v8616 = vadd.f32 %v8472, %v8615
        %v8617 = vpop.f32.mrb[0].mxu0
        %8618 = vdwg.mxu0
        %v8619 = vld [vmem:[%s891] sm:$0x1]
        %v8620 = vmul.f32 %v8557, %v8557
        %v8621 = vmul.f32 %v8560, %v8560
        %v8622 = vmul.f32 %v8565, %v8565
        %v8623 = vmul.f32 %v8568, %v8568
        %v8624 = vmul.f32 %v8573, %v8573
        %v8625 = vmul.f32 %v8576, %v8576
        %v8626 = vmul.f32 %v8581, %v8581
        %v8627 = vmul.f32 %v8584, %v8584
        %v8628 = vmul.f32 %v8589, %v8589
        %v8629 = vmul.f32 %v8592, %v8592
        %v8630 = vmul.f32 %v8597, %v8597
        %v8631 = vmul.f32 %v8600, %v8600
        %v8632 = vmul.f32 %v8605, %v8605
        %v8633 = vmul.f32 %v8608, %v8608
        %v8634 = vmul.f32 %v8613, %v8613
        %v8635 = vmul.f32 %v8616, %v8616
        %8636 = vadd.xlane.f32.xlu0 %v8620
        %v8637 = vpop.xlane.xlu0 %8636
        %8638 = vadd.xlane.f32.xlu0 %v8621
        %v8639 = vpop.xlane.xlu0 %8638
        %8640 = vadd.xlane.f32.xlu0 %v8622
        %v8641 = vpop.xlane.xlu0 %8640
        %8642 = vadd.xlane.f32.xlu0 %v8623
        %v8643 = vpop.xlane.xlu0 %8642
        %8644 = vadd.xlane.f32.xlu0 %v8624
        %v8645 = vpop.xlane.xlu0 %8644
        %8646 = vadd.xlane.f32.xlu0 %v8625
        %v8647 = vpop.xlane.xlu0 %8646
        %8648 = vadd.xlane.f32.xlu0 %v8626
        %v8649 = vpop.xlane.xlu0 %8648
        %8650 = vadd.xlane.f32.xlu0 %v8627
        %v8651 = vpop.xlane.xlu0 %8650
        %8652 = vadd.xlane.f32.xlu0 %v8628
        %v8653 = vpop.xlane.xlu0 %8652
        %8654 = vadd.xlane.f32.xlu0 %v8629
        %v8655 = vpop.xlane.xlu0 %8654
        %8656 = vadd.xlane.f32.xlu0 %v8630
        %v8657 = vpop.xlane.xlu0 %8656
        %8658 = vadd.xlane.f32.xlu0 %v8631
        %v8659 = vpop.xlane.xlu0 %8658
        %8660 = vadd.xlane.f32.xlu0 %v8632
        %v8661 = vpop.xlane.xlu0 %8660
        %8662 = vadd.xlane.f32.xlu0 %v8633
        %v8663 = vpop.xlane.xlu0 %8662
        %8664 = vadd.xlane.f32.xlu0 %v8634
        %v8665 = vpop.xlane.xlu0 %8664
        %8666 = vadd.xlane.f32.xlu0 %v8635
        %v8667 = vpop.xlane.xlu0 %8666
        %v8668 = vmax.f32 %v8637, 1e-24
        %v8669 = vmax.f32 %v8639, 1e-24
        %v8670 = vmax.f32 %v8641, 1e-24
        %v8671 = vmax.f32 %v8643, 1e-24
        %v8672 = vmax.f32 %v8645, 1e-24
        %v8673 = vmax.f32 %v8647, 1e-24
        %v8674 = vmax.f32 %v8649, 1e-24
        %v8675 = vmax.f32 %v8651, 1e-24
        %v8676 = vmax.f32 %v8653, 1e-24
        %v8677 = vmax.f32 %v8655, 1e-24
        %v8678 = vmax.f32 %v8657, 1e-24
        %v8679 = vmax.f32 %v8659, 1e-24
        %v8680 = vmax.f32 %v8661, 1e-24
        %v8681 = vmax.f32 %v8663, 1e-24
        %v8682 = vmax.f32 %v8665, 1e-24
        %v8683 = vmax.f32 %v8667, 1e-24
        %v8684 = vrsqrt.pop %v8668
        %v8685 = vrsqrt.pop %v8669
        %v8686 = vrsqrt.pop %v8670
        %v8687 = vrsqrt.pop %v8671
        %v8688 = vrsqrt.pop %v8672
        %v8689 = vrsqrt.pop %v8673
        %v8690 = vrsqrt.pop %v8674
        %v8691 = vrsqrt.pop %v8675
        %v8692 = vrsqrt.pop %v8676
        %v8693 = vrsqrt.pop %v8677
        %v8694 = vrsqrt.pop %v8678
        %v8695 = vrsqrt.pop %v8679
        %v8696 = vrsqrt.pop %v8680
        %v8697 = vrsqrt.pop %v8681
        %v8698 = vrsqrt.pop %v8682
        %v8699 = vrsqrt.pop %v8683
        %v8700 = vmul.f32 %v8557, %v8684
        %v8701 = vmul.f32 %v8560, %v8685
        %v8702 = vmul.f32 %v8565, %v8686
        %v8703 = vmul.f32 %v8568, %v8687
        %v8704 = vmul.f32 %v8573, %v8688
        %v8705 = vmul.f32 %v8576, %v8689
        %v8706 = vmul.f32 %v8581, %v8690
        %v8707 = vmul.f32 %v8584, %v8691
        %v8708 = vmul.f32 %v8589, %v8692
        %v8709 = vmul.f32 %v8592, %v8693
        %v8710 = vmul.f32 %v8597, %v8694
        %v8711 = vmul.f32 %v8600, %v8695
        %v8712 = vmul.f32 %v8605, %v8696
        %v8713 = vmul.f32 %v8608, %v8697
        %v8714 = vmul.f32 %v8613, %v8698
        %v8715 = vmul.f32 %v8616, %v8699
        %v8717 = vlaneseq
        %v8718 = vshrl.u32 %v8717, 7
        %v8719 = vsub.s32 0, %v8718
        %v8720 = vrot.slane %v8619, %v8719
        %v8722 = vmul.f32 %v8700, %v8720
        %v8723 = vmul.f32 %v8701, %v8720
        %v8724 = vmul.f32 %v8702, %v8720
        %v8725 = vmul.f32 %v8703, %v8720
        %v8726 = vmul.f32 %v8704, %v8720
        %v8727 = vmul.f32 %v8705, %v8720
        %v8728 = vmul.f32 %v8706, %v8720
        %v8729 = vmul.f32 %v8707, %v8720
        %v8730 = vmul.f32 %v8708, %v8720
        %v8731 = vmul.f32 %v8709, %v8720
        %v8732 = vmul.f32 %v8710, %v8720
        %v8733 = vmul.f32 %v8711, %v8720
        %v8734 = vmul.f32 %v8712, %v8720
        %v8735 = vmul.f32 %v8713, %v8720
        %v8736 = vmul.f32 %v8714, %v8720
        %v8737 = vmul.f32 %v8715, %v8720
        %v8738 = vmul.f32 %v8722, 11.313708
        %v8739 = vmul.f32 %v8723, 11.313708
        %v8740 = vmul.f32 %v8724, 11.313708
        %v8741 = vmul.f32 %v8725, 11.313708
        %v8742 = vmul.f32 %v8726, 11.313708
        %v8743 = vmul.f32 %v8727, 11.313708
        %v8744 = vmul.f32 %v8728, 11.313708
        %v8745 = vmul.f32 %v8729, 11.313708
        %v8746 = vmul.f32 %v8730, 11.313708
        %v8747 = vmul.f32 %v8731, 11.313708
        %v8748 = vmul.f32 %v8732, 11.313708
        %v8749 = vmul.f32 %v8733, 11.313708
        %v8750 = vmul.f32 %v8734, 11.313708
        %v8751 = vmul.f32 %v8735, 11.313708
        %v8752 = vmul.f32 %v8736, 11.313708
        %v8753 = vmul.f32 %v8737, 11.313708
        %v8754 = vadd.f32 %v943, %v8738
        %v8755 = vadd.f32 %v944, %v8739
        %v8756 = vadd.f32 %v945, %v8740
        %v8757 = vadd.f32 %v946, %v8741
        %v8758 = vadd.f32 %v947, %v8742
        %v8759 = vadd.f32 %v948, %v8743
        %v8760 = vadd.f32 %v949, %v8744
        %v8761 = vadd.f32 %v950, %v8745
        %v8762 = vadd.f32 %v951, %v8746
        %v8763 = vadd.f32 %v952, %v8747
        %v8764 = vadd.f32 %v953, %v8748
        %v8765 = vadd.f32 %v954, %v8749
        %v8766 = vadd.f32 %v955, %v8750
        %v8767 = vadd.f32 %v956, %v8751
        %v8768 = vadd.f32 %v957, %v8752
        %v8769 = vadd.f32 %v958, %v8753
        %v8770 = vld [vmem:[%s894] sm:$0x1]
        %v8771 = vld [vmem:[%s897] sm:$0x1]
        %8772 = vadd.xlane.f32.xlu0 %v8754
        %v8773 = vpop.xlane.xlu0 %8772
        %8774 = vadd.xlane.f32.xlu0 %v8755
        %v8775 = vpop.xlane.xlu0 %8774
        %8776 = vadd.xlane.f32.xlu0 %v8756
        %v8777 = vpop.xlane.xlu0 %8776
        %8778 = vadd.xlane.f32.xlu0 %v8757
        %v8779 = vpop.xlane.xlu0 %8778
        %8780 = vadd.xlane.f32.xlu0 %v8758
        %v8781 = vpop.xlane.xlu0 %8780
        %8782 = vadd.xlane.f32.xlu0 %v8759
        %v8783 = vpop.xlane.xlu0 %8782
        %8784 = vadd.xlane.f32.xlu0 %v8760
        %v8785 = vpop.xlane.xlu0 %8784
        %8786 = vadd.xlane.f32.xlu0 %v8761
        %v8787 = vpop.xlane.xlu0 %8786
        %8788 = vadd.xlane.f32.xlu0 %v8762
        %v8789 = vpop.xlane.xlu0 %8788
        %8790 = vadd.xlane.f32.xlu0 %v8763
        %v8791 = vpop.xlane.xlu0 %8790
        %8792 = vadd.xlane.f32.xlu0 %v8764
        %v8793 = vpop.xlane.xlu0 %8792
        %8794 = vadd.xlane.f32.xlu0 %v8765
        %v8795 = vpop.xlane.xlu0 %8794
        %8796 = vadd.xlane.f32.xlu0 %v8766
        %v8797 = vpop.xlane.xlu0 %8796
        %8798 = vadd.xlane.f32.xlu0 %v8767
        %v8799 = vpop.xlane.xlu0 %8798
        %8800 = vadd.xlane.f32.xlu0 %v8768
        %v8801 = vpop.xlane.xlu0 %8800
        %8802 = vadd.xlane.f32.xlu0 %v8769
        %v8803 = vpop.xlane.xlu0 %8802
        %v8804 = vmul.f32 %v8773, %v993
        %v8805 = vmul.f32 %v8775, %v993
        %v8806 = vmul.f32 %v8777, %v993
        %v8807 = vmul.f32 %v8779, %v993
        %v8808 = vmul.f32 %v8781, %v993
        %v8809 = vmul.f32 %v8783, %v993
        %v8810 = vmul.f32 %v8785, %v993
        %v8811 = vmul.f32 %v8787, %v993
        %v8812 = vmul.f32 %v8789, %v993
        %v8813 = vmul.f32 %v8791, %v993
        %v8814 = vmul.f32 %v8793, %v993
        %v8815 = vmul.f32 %v8795, %v993
        %v8816 = vmul.f32 %v8797, %v993
        %v8817 = vmul.f32 %v8799, %v993
        %v8818 = vmul.f32 %v8801, %v993
        %v8819 = vmul.f32 %v8803, %v993
        %v8820 = vsub.f32 %v8754, %v8804
        %v8821 = vsub.f32 %v8755, %v8805
        %v8822 = vsub.f32 %v8756, %v8806
        %v8823 = vsub.f32 %v8757, %v8807
        %v8824 = vsub.f32 %v8758, %v8808
        %v8825 = vsub.f32 %v8759, %v8809
        %v8826 = vsub.f32 %v8760, %v8810
        %v8827 = vsub.f32 %v8761, %v8811
        %v8828 = vsub.f32 %v8762, %v8812
        %v8829 = vsub.f32 %v8763, %v8813
        %v8830 = vsub.f32 %v8764, %v8814
        %v8831 = vsub.f32 %v8765, %v8815
        %v8832 = vsub.f32 %v8766, %v8816
        %v8833 = vsub.f32 %v8767, %v8817
        %v8834 = vsub.f32 %v8768, %v8818
        %v8835 = vsub.f32 %v8769, %v8819
        %v8836 = vmul.f32 %v8820, %v8820
        %v8837 = vmul.f32 %v8821, %v8821
        %v8838 = vmul.f32 %v8822, %v8822
        %v8839 = vmul.f32 %v8823, %v8823
        %v8840 = vmul.f32 %v8824, %v8824
        %v8841 = vmul.f32 %v8825, %v8825
        %v8842 = vmul.f32 %v8826, %v8826
        %v8843 = vmul.f32 %v8827, %v8827
        %v8844 = vmul.f32 %v8828, %v8828
        %v8845 = vmul.f32 %v8829, %v8829
        %v8846 = vmul.f32 %v8830, %v8830
        %v8847 = vmul.f32 %v8831, %v8831
        %v8848 = vmul.f32 %v8832, %v8832
        %v8849 = vmul.f32 %v8833, %v8833
        %v8850 = vmul.f32 %v8834, %v8834
        %v8851 = vmul.f32 %v8835, %v8835
        %8852 = vadd.xlane.f32.xlu0 %v8836
        %v8853 = vpop.xlane.xlu0 %8852
        %8854 = vadd.xlane.f32.xlu0 %v8837
        %v8855 = vpop.xlane.xlu0 %8854
        %8856 = vadd.xlane.f32.xlu0 %v8838
        %v8857 = vpop.xlane.xlu0 %8856
        %8858 = vadd.xlane.f32.xlu0 %v8839
        %v8859 = vpop.xlane.xlu0 %8858
        %8860 = vadd.xlane.f32.xlu0 %v8840
        %v8861 = vpop.xlane.xlu0 %8860
        %8862 = vadd.xlane.f32.xlu0 %v8841
        %v8863 = vpop.xlane.xlu0 %8862
        %8864 = vadd.xlane.f32.xlu0 %v8842
        %v8865 = vpop.xlane.xlu0 %8864
        %8866 = vadd.xlane.f32.xlu0 %v8843
        %v8867 = vpop.xlane.xlu0 %8866
        %8868 = vadd.xlane.f32.xlu0 %v8844
        %v8869 = vpop.xlane.xlu0 %8868
        %8870 = vadd.xlane.f32.xlu0 %v8845
        %v8871 = vpop.xlane.xlu0 %8870
        %8872 = vadd.xlane.f32.xlu0 %v8846
        %v8873 = vpop.xlane.xlu0 %8872
        %8874 = vadd.xlane.f32.xlu0 %v8847
        %v8875 = vpop.xlane.xlu0 %8874
        %8876 = vadd.xlane.f32.xlu0 %v8848
        %v8877 = vpop.xlane.xlu0 %8876
        %8878 = vadd.xlane.f32.xlu0 %v8849
        %v8879 = vpop.xlane.xlu0 %8878
        %8880 = vadd.xlane.f32.xlu0 %v8850
        %v8881 = vpop.xlane.xlu0 %8880
        %8882 = vadd.xlane.f32.xlu0 %v8851
        %v8883 = vpop.xlane.xlu0 %8882
        %v8884 = vmul.f32 %v8853, %v993
        %v8885 = vmul.f32 %v8855, %v993
        %v8886 = vmul.f32 %v8857, %v993
        %v8887 = vmul.f32 %v8859, %v993
        %v8888 = vmul.f32 %v8861, %v993
        %v8889 = vmul.f32 %v8863, %v993
        %v8890 = vmul.f32 %v8865, %v993
        %v8891 = vmul.f32 %v8867, %v993
        %v8892 = vmul.f32 %v8869, %v993
        %v8893 = vmul.f32 %v8871, %v993
        %v8894 = vmul.f32 %v8873, %v993
        %v8895 = vmul.f32 %v8875, %v993
        %v8896 = vmul.f32 %v8877, %v993
        %v8897 = vmul.f32 %v8879, %v993
        %v8898 = vmul.f32 %v8881, %v993
        %v8899 = vmul.f32 %v8883, %v993
        %v8900 = vadd.f32 %v8884, 1e-06
        %v8901 = vadd.f32 %v8885, 1e-06
        %v8902 = vadd.f32 %v8886, 1e-06
        %v8903 = vadd.f32 %v8887, 1e-06
        %v8904 = vadd.f32 %v8888, 1e-06
        %v8905 = vadd.f32 %v8889, 1e-06
        %v8906 = vadd.f32 %v8890, 1e-06
        %v8907 = vadd.f32 %v8891, 1e-06
        %v8908 = vadd.f32 %v8892, 1e-06
        %v8909 = vadd.f32 %v8893, 1e-06
        %v8910 = vadd.f32 %v8894, 1e-06
        %v8911 = vadd.f32 %v8895, 1e-06
        %v8912 = vadd.f32 %v8896, 1e-06
        %v8913 = vadd.f32 %v8897, 1e-06
        %v8914 = vadd.f32 %v8898, 1e-06
        %v8915 = vadd.f32 %v8899, 1e-06
        %v8916 = vrsqrt.pop %v8900
        %v8917 = vrsqrt.pop %v8901
        %v8918 = vrsqrt.pop %v8902
        %v8919 = vrsqrt.pop %v8903
        %v8920 = vrsqrt.pop %v8904
        %v8921 = vrsqrt.pop %v8905
        %v8922 = vrsqrt.pop %v8906
        %v8923 = vrsqrt.pop %v8907
        %v8924 = vrsqrt.pop %v8908
        %v8925 = vrsqrt.pop %v8909
        %v8926 = vrsqrt.pop %v8910
        %v8927 = vrsqrt.pop %v8911
        %v8928 = vrsqrt.pop %v8912
        %v8929 = vrsqrt.pop %v8913
        %v8930 = vrsqrt.pop %v8914
        %v8931 = vrsqrt.pop %v8915
        %v8932 = vmul.f32 %v8820, %v8916
        %v8933 = vmul.f32 %v8821, %v8917
        %v8934 = vmul.f32 %v8822, %v8918
        %v8935 = vmul.f32 %v8823, %v8919
        %v8936 = vmul.f32 %v8824, %v8920
        %v8937 = vmul.f32 %v8825, %v8921
        %v8938 = vmul.f32 %v8826, %v8922
        %v8939 = vmul.f32 %v8827, %v8923
        %v8940 = vmul.f32 %v8828, %v8924
        %v8941 = vmul.f32 %v8829, %v8925
        %v8942 = vmul.f32 %v8830, %v8926
        %v8943 = vmul.f32 %v8831, %v8927
        %v8944 = vmul.f32 %v8832, %v8928
        %v8945 = vmul.f32 %v8833, %v8929
        %v8946 = vmul.f32 %v8834, %v8930
        %v8947 = vmul.f32 %v8835, %v8931
        %v8949 = vlaneseq
        %v8950 = vshrl.u32 %v8949, 7
        %v8951 = vsub.s32 0, %v8950
        %v8952 = vrot.slane %v8770, %v8951
        %v8954 = vmul.f32 %v8932, %v8952
        %v8955 = vmul.f32 %v8933, %v8952
        %v8956 = vmul.f32 %v8934, %v8952
        %v8957 = vmul.f32 %v8935, %v8952
        %v8958 = vmul.f32 %v8936, %v8952
        %v8959 = vmul.f32 %v8937, %v8952
        %v8960 = vmul.f32 %v8938, %v8952
        %v8961 = vmul.f32 %v8939, %v8952
        %v8962 = vmul.f32 %v8940, %v8952
        %v8963 = vmul.f32 %v8941, %v8952
        %v8964 = vmul.f32 %v8942, %v8952
        %v8965 = vmul.f32 %v8943, %v8952
        %v8966 = vmul.f32 %v8944, %v8952
        %v8967 = vmul.f32 %v8945, %v8952
        %v8968 = vmul.f32 %v8946, %v8952
        %v8969 = vmul.f32 %v8947, %v8952
        %v8971 = vlaneseq
        %v8972 = vshrl.u32 %v8971, 7
        %v8973 = vsub.s32 0, %v8972
        %v8974 = vrot.slane %v8771, %v8973
        %v8976 = vadd.f32 %v8954, %v8974
        %v8977 = vadd.f32 %v8955, %v8974
        %v8978 = vadd.f32 %v8956, %v8974
        %v8979 = vadd.f32 %v8957, %v8974
        %v8980 = vadd.f32 %v8958, %v8974
        %v8981 = vadd.f32 %v8959, %v8974
        %v8982 = vadd.f32 %v8960, %v8974
        %v8983 = vadd.f32 %v8961, %v8974
        %v8984 = vadd.f32 %v8962, %v8974
        %v8985 = vadd.f32 %v8963, %v8974
        %v8986 = vadd.f32 %v8964, %v8974
        %v8987 = vadd.f32 %v8965, %v8974
        %v8988 = vadd.f32 %v8966, %v8974
        %v8989 = vadd.f32 %v8967, %v8974
        %v8990 = vadd.f32 %v8968, %v8974
        %v8991 = vadd.f32 %v8969, %v8974
        %v8992 = vpack.c.bf16 %v8977, %v8976
        %v8993 = vpack.c.bf16 %v8979, %v8978
        %v8994 = vpack.c.bf16 %v8981, %v8980
        %v8995 = vpack.c.bf16 %v8983, %v8982
        %v8996 = vpack.c.bf16 %v8985, %v8984
        %v8997 = vpack.c.bf16 %v8987, %v8986
        %v8998 = vpack.c.bf16 %v8989, %v8988
        %v8999 = vpack.c.bf16 %v8991, %v8990
        %v9000 = vld [vmem:[%s760] sm:$0xff]
        %v9001 = vld [vmem:[%s760 + $0x8] sm:$0xff]
        %v9002 = vld [vmem:[%s760 + $0x10] sm:$0xff]
        %v9003 = vld [vmem:[%s760 + $0x18] sm:$0xff]
        %v9004 = vld [vmem:[%s760 + $0x20] sm:$0xff]
        %v9005 = vld [vmem:[%s760 + $0x28] sm:$0xff]
        %v9006 = vld [vmem:[%s760 + $0x30] sm:$0xff]
        %v9007 = vld [vmem:[%s760 + $0x38] sm:$0xff]
        %v9008 = vld [vmem:[%s760 + $0x40] sm:$0xff]
        %v9009 = vld [vmem:[%s760 + $0x48] sm:$0xff]
        %v9010 = vld [vmem:[%s760 + $0x50] sm:$0xff]
        %v9011 = vld [vmem:[%s760 + $0x58] sm:$0xff]
        %v9012 = vld [vmem:[%s760 + $0x60] sm:$0xff]
        %v9013 = vld [vmem:[%s760 + $0x68] sm:$0xff]
        %v9014 = vld [vmem:[%s760 + $0x70] sm:$0xff]
        %v9015 = vld [vmem:[%s760 + $0x78] sm:$0xff]
        %v9016 = vld [vmem:[%s901] sm:$0x3]
        %v9018 = vlaneseq
        %v9019 = vshrl.u32 %v9018, 7
        %v9020 = vsub.s32 0, %v9019
        %v9021 = vrot.slane %v9016, %v9020
        %v9022 = vlaneseq
        %v9023 = vshrl.u32 %v9022, 7
        %v9024 = vsub.s32 1, %v9023
        %v9025 = vrot.slane %v9016, %v9024
        %v9044 = vunpack.c.l.b16 %v9000
        %v9045 = vunpack.c.h.b16 %v9000
        %v9046 = vunpack.c.l.b16 %v9001
        %v9047 = vunpack.c.h.b16 %v9001
        %v9048 = vunpack.c.l.b16 %v9002
        %v9049 = vunpack.c.h.b16 %v9002
        %v9050 = vunpack.c.l.b16 %v9003
        %v9051 = vunpack.c.h.b16 %v9003
        %v9052 = vunpack.c.l.b16 %v9004
        %v9053 = vunpack.c.h.b16 %v9004
        %v9054 = vunpack.c.l.b16 %v9005
        %v9055 = vunpack.c.h.b16 %v9005
        %v9056 = vunpack.c.l.b16 %v9006
        %v9057 = vunpack.c.h.b16 %v9006
        %v9058 = vunpack.c.l.b16 %v9007
        %v9059 = vunpack.c.h.b16 %v9007
        %v9060 = vunpack.c.l.b16 %v9008
        %v9061 = vunpack.c.h.b16 %v9008
        %v9062 = vunpack.c.l.b16 %v9009
        %v9063 = vunpack.c.h.b16 %v9009
        %v9064 = vunpack.c.l.b16 %v9010
        %v9065 = vunpack.c.h.b16 %v9010
        %v9066 = vunpack.c.l.b16 %v9011
        %v9067 = vunpack.c.h.b16 %v9011
        %v9068 = vunpack.c.l.b16 %v9012
        %v9069 = vunpack.c.h.b16 %v9012
        %v9070 = vunpack.c.l.b16 %v9013
        %v9071 = vunpack.c.h.b16 %v9013
        %v9072 = vunpack.c.l.b16 %v9014
        %v9073 = vunpack.c.h.b16 %v9014
        %v9074 = vunpack.c.l.b16 %v9015
        %v9075 = vunpack.c.h.b16 %v9015
        %v9076 = vpack.c.b16 %v9046, %v9044
        %v9077 = vpack.c.b16 %v9047, %v9045
        %v9078 = vpack.c.b16 %v9050, %v9048
        %v9079 = vpack.c.b16 %v9051, %v9049
        %v9080 = vpack.c.b16 %v9054, %v9052
        %v9081 = vpack.c.b16 %v9055, %v9053
        %v9082 = vpack.c.b16 %v9058, %v9056
        %v9083 = vpack.c.b16 %v9059, %v9057
        %v9084 = vpack.c.b16 %v9062, %v9060
        %v9085 = vpack.c.b16 %v9063, %v9061
        %v9086 = vpack.c.b16 %v9066, %v9064
        %v9087 = vpack.c.b16 %v9067, %v9065
        %v9088 = vpack.c.b16 %v9070, %v9068
        %v9089 = vpack.c.b16 %v9071, %v9069
        %v9090 = vpack.c.b16 %v9074, %v9072
        %v9091 = vpack.c.b16 %v9075, %v9073
        %9108 = vmatprep.subr.bf16.mxu0 %v9077
        %9109 = vmatpush1.bf16.msra.mxu0 %v9076
        %9110 = vmatprep.subr.bf16.mxu0 %v9079
        %9111 = vmatpush1.bf16.msra.mxu0 %v9078
        %9112 = vmatprep.subr.bf16.mxu0 %v9081
        %9113 = vmatpush1.bf16.msra.mxu0 %v9080
        %9114 = vmatprep.subr.bf16.mxu0 %v9083
        %9115 = vmatpush1.bf16.msra.mxu0 %v9082
        %9116 = vmatprep.subr.bf16.mxu0 %v9085
        %9117 = vmatpush1.bf16.msra.mxu0 %v9084
        %9118 = vmatprep.subr.bf16.mxu0 %v9087
        %9119 = vmatpush1.bf16.msra.mxu0 %v9086
        %9120 = vmatprep.subr.bf16.mxu0 %v9089
        %9121 = vmatpush1.bf16.msra.mxu0 %v9088
        %9122 = vmatprep.subr.bf16.mxu0 %v9091
        %9123 = vmatpush1.bf16.msra.mxu0 %v9090
        %9124 = vmatprep.subr.bf16.mxu0 0
        %9125 = vmatpush1.bf16.msra.mxu0 0
        %9126 = vmatprep.subr.bf16.mxu0 0
        %9127 = vmatpush1.bf16.msra.mxu0 0
        %9128 = vmatprep.subr.bf16.mxu0 0
        %9129 = vmatpush1.bf16.msra.mxu0 0
        %9130 = vmatprep.subr.bf16.mxu0 0
        %9131 = vmatpush1.bf16.msra.mxu0 0
        %9132 = vmatprep.subr.bf16.mxu0 0
        %9133 = vmatpush1.bf16.msra.mxu0 0
        %9134 = vmatprep.subr.bf16.mxu0 0
        %9135 = vmatpush1.bf16.msra.mxu0 0
        %9136 = vmatprep.subr.bf16.mxu0 0
        %9137 = vmatpush1.bf16.msra.mxu0 0
        %9138 = vmatprep.subr.bf16.mxu0 0
        %9139 = vmatpush1.bf16.msra.mxu0 0
        %9140 = vmatprep.mubr.bf16.mxu0 0
        %9141 = vmatmul.mubr.bf16.gmra.mrb[0].mxu0 %v8992
        %v9142 = vpop.f32.mrb[0].mxu0
        %v9143 = vadd.f32 %v9021, %v9142
        %v9144 = vpop.f32.mrb[0].mxu0
        %v9145 = vadd.f32 %v9025, %v9144
        %v9146 = vpop.f32.mrb[0].mxu0
        %v9147 = vadd.f32 %v9021, %v9146
        %v9148 = vpop.f32.mrb[0].mxu0
        %v9149 = vadd.f32 %v9025, %v9148
        %9150 = vmatprep.mubr.bf16.mxu0 0
        %9151 = vmatmul.mubr.bf16.gmra.mrb[0].mxu0 %v8993
        %v9152 = vpop.f32.mrb[0].mxu0
        %v9153 = vadd.f32 %v9021, %v9152
        %v9154 = vpop.f32.mrb[0].mxu0
        %v9155 = vadd.f32 %v9025, %v9154
        %v9156 = vpop.f32.mrb[0].mxu0
        %v9157 = vadd.f32 %v9021, %v9156
        %v9158 = vpop.f32.mrb[0].mxu0
        %v9159 = vadd.f32 %v9025, %v9158
        %9160 = vmatprep.mubr.bf16.mxu0 0
        %9161 = vmatmul.mubr.bf16.gmra.mrb[0].mxu0 %v8994
        %v9162 = vpop.f32.mrb[0].mxu0
        %v9163 = vadd.f32 %v9021, %v9162
        %v9164 = vpop.f32.mrb[0].mxu0
        %v9165 = vadd.f32 %v9025, %v9164
        %v9166 = vpop.f32.mrb[0].mxu0
        %v9167 = vadd.f32 %v9021, %v9166
        %v9168 = vpop.f32.mrb[0].mxu0
        %v9169 = vadd.f32 %v9025, %v9168
        %9170 = vmatprep.mubr.bf16.mxu0 0
        %9171 = vmatmul.mubr.bf16.gmra.mrb[0].mxu0 %v8995
        %v9172 = vpop.f32.mrb[0].mxu0
        %v9173 = vadd.f32 %v9021, %v9172
        %v9174 = vpop.f32.mrb[0].mxu0
        %v9175 = vadd.f32 %v9025, %v9174
        %v9176 = vpop.f32.mrb[0].mxu0
        %v9177 = vadd.f32 %v9021, %v9176
        %v9178 = vpop.f32.mrb[0].mxu0
        %v9179 = vadd.f32 %v9025, %v9178
        %9180 = vmatprep.mubr.bf16.mxu0 0
        %9181 = vmatmul.mubr.bf16.gmra.mrb[0].mxu0 %v8996
        %v9182 = vpop.f32.mrb[0].mxu0
        %v9183 = vadd.f32 %v9021, %v9182
        %v9184 = vpop.f32.mrb[0].mxu0
        %v9185 = vadd.f32 %v9025, %v9184
        %v9186 = vpop.f32.mrb[0].mxu0
        %v9187 = vadd.f32 %v9021, %v9186
        %v9188 = vpop.f32.mrb[0].mxu0
        %v9189 = vadd.f32 %v9025, %v9188
        %9190 = vmatprep.mubr.bf16.mxu0 0
        %9191 = vmatmul.mubr.bf16.gmra.mrb[0].mxu0 %v8997
        %v9192 = vpop.f32.mrb[0].mxu0
        %v9193 = vadd.f32 %v9021, %v9192
        %v9194 = vpop.f32.mrb[0].mxu0
        %v9195 = vadd.f32 %v9025, %v9194
        %v9196 = vpop.f32.mrb[0].mxu0
        %v9197 = vadd.f32 %v9021, %v9196
        %v9198 = vpop.f32.mrb[0].mxu0
        %v9199 = vadd.f32 %v9025, %v9198
        %9200 = vmatprep.mubr.bf16.mxu0 0
        %9201 = vmatmul.mubr.bf16.gmra.mrb[0].mxu0 %v8998
        %v9202 = vpop.f32.mrb[0].mxu0
        %v9203 = vadd.f32 %v9021, %v9202
        %v9204 = vpop.f32.mrb[0].mxu0
        %v9205 = vadd.f32 %v9025, %v9204
        %v9206 = vpop.f32.mrb[0].mxu0
        %v9207 = vadd.f32 %v9021, %v9206
        %v9208 = vpop.f32.mrb[0].mxu0
        %v9209 = vadd.f32 %v9025, %v9208
        %9210 = vmatprep.mubr.bf16.mxu0 0
        %9211 = vmatmul.mubr.bf16.gmra.mrb[0].mxu0 %v8999
        %v9212 = vpop.f32.mrb[0].mxu0
        %v9213 = vadd.f32 %v9021, %v9212
        %v9214 = vpop.f32.mrb[0].mxu0
        %v9215 = vadd.f32 %v9025, %v9214
        %v9216 = vpop.f32.mrb[0].mxu0
        %v9217 = vadd.f32 %v9021, %v9216
        %v9218 = vpop.f32.mrb[0].mxu0
        %v9219 = vadd.f32 %v9025, %v9218
        %9220 = vdwg.mxu0
        %v9221 = vxor.u32 %v9143, 2147483648
        %v9222 = vxor.u32 %v9145, 2147483648
        %v9223 = vxor.u32 %v9147, 2147483648
        %v9224 = vxor.u32 %v9149, 2147483648
        %v9225 = vxor.u32 %v9153, 2147483648
        %v9226 = vxor.u32 %v9155, 2147483648
        %v9227 = vxor.u32 %v9157, 2147483648
        %v9228 = vxor.u32 %v9159, 2147483648
        %v9229 = vxor.u32 %v9163, 2147483648
        %v9230 = vxor.u32 %v9165, 2147483648
        %v9231 = vxor.u32 %v9167, 2147483648
        %v9232 = vxor.u32 %v9169, 2147483648
        %v9233 = vxor.u32 %v9173, 2147483648
        %v9234 = vxor.u32 %v9175, 2147483648
        %v9235 = vxor.u32 %v9177, 2147483648
        %v9236 = vxor.u32 %v9179, 2147483648
        %v9237 = vxor.u32 %v9183, 2147483648
        %v9238 = vxor.u32 %v9185, 2147483648
        %v9239 = vxor.u32 %v9187, 2147483648
        %v9240 = vxor.u32 %v9189, 2147483648
        %v9241 = vxor.u32 %v9193, 2147483648
        %v9242 = vxor.u32 %v9195, 2147483648
        %v9243 = vxor.u32 %v9197, 2147483648
        %v9244 = vxor.u32 %v9199, 2147483648
        %v9245 = vxor.u32 %v9203, 2147483648
        %v9246 = vxor.u32 %v9205, 2147483648
        %v9247 = vxor.u32 %v9207, 2147483648
        %v9248 = vxor.u32 %v9209, 2147483648
        %v9249 = vxor.u32 %v9213, 2147483648
        %v9250 = vxor.u32 %v9215, 2147483648
        %v9251 = vxor.u32 %v9217, 2147483648
        %v9252 = vxor.u32 %v9219, 2147483648
        %v9253 = vmul.f32 %v9221, 1.442695
        %v9254 = vpow.pop %v9253
        %v9255 = vmul.f32 %v9222, 1.442695
        %v9256 = vpow.pop %v9255
        %v9257 = vmul.f32 %v9223, 1.442695
        %v9258 = vpow.pop %v9257
        %v9259 = vmul.f32 %v9224, 1.442695
        %v9260 = vpow.pop %v9259
        %v9261 = vmul.f32 %v9225, 1.442695
        %v9262 = vpow.pop %v9261
        %v9263 = vmul.f32 %v9226, 1.442695
        %v9264 = vpow.pop %v9263
        %v9265 = vmul.f32 %v9227, 1.442695
        %v9266 = vpow.pop %v9265
        %v9267 = vmul.f32 %v9228, 1.442695
        %v9268 = vpow.pop %v9267
        %v9269 = vmul.f32 %v9229, 1.442695
        %v9270 = vpow.pop %v9269
        %v9271 = vmul.f32 %v9230, 1.442695
        %v9272 = vpow.pop %v9271
        %v9273 = vmul.f32 %v9231, 1.442695
        %v9274 = vpow.pop %v9273
        %v9275 = vmul.f32 %v9232, 1.442695
        %v9276 = vpow.pop %v9275
        %v9277 = vmul.f32 %v9233, 1.442695
        %v9278 = vpow.pop %v9277
        %v9279 = vmul.f32 %v9234, 1.442695
        %v9280 = vpow.pop %v9279
        %v9281 = vmul.f32 %v9235, 1.442695
        %v9282 = vpow.pop %v9281
        %v9283 = vmul.f32 %v9236, 1.442695
        %v9284 = vpow.pop %v9283
        %v9285 = vmul.f32 %v9237, 1.442695
        %v9286 = vpow.pop %v9285
        %v9287 = vmul.f32 %v9238, 1.442695
        %v9288 = vpow.pop %v9287
        %v9289 = vmul.f32 %v9239, 1.442695
        %v9290 = vpow.pop %v9289
        %v9291 = vmul.f32 %v9240, 1.442695
        %v9292 = vpow.pop %v9291
        %v9293 = vmul.f32 %v9241, 1.442695
        %v9294 = vpow.pop %v9293
        %v9295 = vmul.f32 %v9242, 1.442695
        %v9296 = vpow.pop %v9295
        %v9297 = vmul.f32 %v9243, 1.442695
        %v9298 = vpow.pop %v9297
        %v9299 = vmul.f32 %v9244, 1.442695
        %v9300 = vpow.pop %v9299
        %v9301 = vmul.f32 %v9245, 1.442695
        %v9302 = vpow.pop %v9301
        %v9303 = vmul.f32 %v9246, 1.442695
        %v9304 = vpow.pop %v9303
        %v9305 = vmul.f32 %v9247, 1.442695
        %v9306 = vpow.pop %v9305
        %v9307 = vmul.f32 %v9248, 1.442695
        %v9308 = vpow.pop %v9307
        %v9309 = vmul.f32 %v9249, 1.442695
        %v9310 = vpow.pop %v9309
        %v9311 = vmul.f32 %v9250, 1.442695
        %v9312 = vpow.pop %v9311
        %v9313 = vmul.f32 %v9251, 1.442695
        %v9314 = vpow.pop %v9313
        %v9315 = vmul.f32 %v9252, 1.442695
        %v9316 = vpow.pop %v9315
        %v9317 = vadd.f32 %v9254, 1.0
        %v9318 = vadd.f32 %v9256, 1.0
        %v9319 = vadd.f32 %v9258, 1.0
        %v9320 = vadd.f32 %v9260, 1.0
        %v9321 = vadd.f32 %v9262, 1.0
        %v9322 = vadd.f32 %v9264, 1.0
        %v9323 = vadd.f32 %v9266, 1.0
        %v9324 = vadd.f32 %v9268, 1.0
        %v9325 = vadd.f32 %v9270, 1.0
        %v9326 = vadd.f32 %v9272, 1.0
        %v9327 = vadd.f32 %v9274, 1.0
        %v9328 = vadd.f32 %v9276, 1.0
        %v9329 = vadd.f32 %v9278, 1.0
        %v9330 = vadd.f32 %v9280, 1.0
        %v9331 = vadd.f32 %v9282, 1.0
        %v9332 = vadd.f32 %v9284, 1.0
        %v9333 = vadd.f32 %v9286, 1.0
        %v9334 = vadd.f32 %v9288, 1.0
        %v9335 = vadd.f32 %v9290, 1.0
        %v9336 = vadd.f32 %v9292, 1.0
        %v9337 = vadd.f32 %v9294, 1.0
        %v9338 = vadd.f32 %v9296, 1.0
        %v9339 = vadd.f32 %v9298, 1.0
        %v9340 = vadd.f32 %v9300, 1.0
        %v9341 = vadd.f32 %v9302, 1.0
        %v9342 = vadd.f32 %v9304, 1.0
        %v9343 = vadd.f32 %v9306, 1.0
        %v9344 = vadd.f32 %v9308, 1.0
        %v9345 = vadd.f32 %v9310, 1.0
        %v9346 = vadd.f32 %v9312, 1.0
        %v9347 = vadd.f32 %v9314, 1.0
        %v9348 = vadd.f32 %v9316, 1.0
        %v9349 = vrcp.pop %v9317
        %v9350 = vmul.f32 1.0, %v9349
        %v9351 = vrcp.pop %v9318
        %v9352 = vmul.f32 1.0, %v9351
        %v9353 = vrcp.pop %v9319
        %v9354 = vmul.f32 1.0, %v9353
        %v9355 = vrcp.pop %v9320
        %v9356 = vmul.f32 1.0, %v9355
        %v9357 = vrcp.pop %v9321
        %v9358 = vmul.f32 1.0, %v9357
        %v9359 = vrcp.pop %v9322
        %v9360 = vmul.f32 1.0, %v9359
        %v9361 = vrcp.pop %v9323
        %v9362 = vmul.f32 1.0, %v9361
        %v9363 = vrcp.pop %v9324
        %v9364 = vmul.f32 1.0, %v9363
        %v9365 = vrcp.pop %v9325
        %v9366 = vmul.f32 1.0, %v9365
        %v9367 = vrcp.pop %v9326
        %v9368 = vmul.f32 1.0, %v9367
        %v9369 = vrcp.pop %v9327
        %v9370 = vmul.f32 1.0, %v9369
        %v9371 = vrcp.pop %v9328
        %v9372 = vmul.f32 1.0, %v9371
        %v9373 = vrcp.pop %v9329
        %v9374 = vmul.f32 1.0, %v9373
        %v9375 = vrcp.pop %v9330
        %v9376 = vmul.f32 1.0, %v9375
        %v9377 = vrcp.pop %v9331
        %v9378 = vmul.f32 1.0, %v9377
        %v9379 = vrcp.pop %v9332
        %v9380 = vmul.f32 1.0, %v9379
        %v9381 = vrcp.pop %v9333
        %v9382 = vmul.f32 1.0, %v9381
        %v9383 = vrcp.pop %v9334
        %v9384 = vmul.f32 1.0, %v9383
        %v9385 = vrcp.pop %v9335
        %v9386 = vmul.f32 1.0, %v9385
        %v9387 = vrcp.pop %v9336
        %v9388 = vmul.f32 1.0, %v9387
        %v9389 = vrcp.pop %v9337
        %v9390 = vmul.f32 1.0, %v9389
        %v9391 = vrcp.pop %v9338
        %v9392 = vmul.f32 1.0, %v9391
        %v9393 = vrcp.pop %v9339
        %v9394 = vmul.f32 1.0, %v9393
        %v9395 = vrcp.pop %v9340
        %v9396 = vmul.f32 1.0, %v9395
        %v9397 = vrcp.pop %v9341
        %v9398 = vmul.f32 1.0, %v9397
        %v9399 = vrcp.pop %v9342
        %v9400 = vmul.f32 1.0, %v9399
        %v9401 = vrcp.pop %v9343
        %v9402 = vmul.f32 1.0, %v9401
        %v9403 = vrcp.pop %v9344
        %v9404 = vmul.f32 1.0, %v9403
        %v9405 = vrcp.pop %v9345
        %v9406 = vmul.f32 1.0, %v9405
        %v9407 = vrcp.pop %v9346
        %v9408 = vmul.f32 1.0, %v9407
        %v9409 = vrcp.pop %v9347
        %v9410 = vmul.f32 1.0, %v9409
        %v9411 = vrcp.pop %v9348
        %v9412 = vmul.f32 1.0, %v9411
        %v9413 = vmul.f32 %v9143, %v9350
        %v9414 = vmul.f32 %v9145, %v9352
        %v9415 = vmul.f32 %v9147, %v9354
        %v9416 = vmul.f32 %v9149, %v9356
        %v9417 = vmul.f32 %v9153, %v9358
        %v9418 = vmul.f32 %v9155, %v9360
        %v9419 = vmul.f32 %v9157, %v9362
        %v9420 = vmul.f32 %v9159, %v9364
        %v9421 = vmul.f32 %v9163, %v9366
        %v9422 = vmul.f32 %v9165, %v9368
        %v9423 = vmul.f32 %v9167, %v9370
        %v9424 = vmul.f32 %v9169, %v9372
        %v9425 = vmul.f32 %v9173, %v9374
        %v9426 = vmul.f32 %v9175, %v9376
        %v9427 = vmul.f32 %v9177, %v9378
        %v9428 = vmul.f32 %v9179, %v9380
        %v9429 = vmul.f32 %v9183, %v9382
        %v9430 = vmul.f32 %v9185, %v9384
        %v9431 = vmul.f32 %v9187, %v9386
        %v9432 = vmul.f32 %v9189, %v9388
        %v9433 = vmul.f32 %v9193, %v9390
        %v9434 = vmul.f32 %v9195, %v9392
        %v9435 = vmul.f32 %v9197, %v9394
        %v9436 = vmul.f32 %v9199, %v9396
        %v9437 = vmul.f32 %v9203, %v9398
        %v9438 = vmul.f32 %v9205, %v9400
        %v9439 = vmul.f32 %v9207, %v9402
        %v9440 = vmul.f32 %v9209, %v9404
        %v9441 = vmul.f32 %v9213, %v9406
        %v9442 = vmul.f32 %v9215, %v9408
        %v9443 = vmul.f32 %v9217, %v9410
        %v9444 = vmul.f32 %v9219, %v9412
        %v9445 = vpack.c.bf16 %v9415, %v9413
        %v9446 = vpack.c.bf16 %v9416, %v9414
        %v9447 = vpack.c.bf16 %v9419, %v9417
        %v9448 = vpack.c.bf16 %v9420, %v9418
        %v9449 = vpack.c.bf16 %v9423, %v9421
        %v9450 = vpack.c.bf16 %v9424, %v9422
        %v9451 = vpack.c.bf16 %v9427, %v9425
        %v9452 = vpack.c.bf16 %v9428, %v9426
        %v9453 = vpack.c.bf16 %v9431, %v9429
        %v9454 = vpack.c.bf16 %v9432, %v9430
        %v9455 = vpack.c.bf16 %v9435, %v9433
        %v9456 = vpack.c.bf16 %v9436, %v9434
        %v9457 = vpack.c.bf16 %v9439, %v9437
        %v9458 = vpack.c.bf16 %v9440, %v9438
        %v9459 = vpack.c.bf16 %v9443, %v9441
        %v9460 = vpack.c.bf16 %v9444, %v9442
        %v9461 = vld [vmem:[%s769] sm:$0xf]
        %v9462 = vld [vmem:[%s769 + $0x4] sm:$0xf]
        %v9463 = vld [vmem:[%s769 + $0x8] sm:$0xf]
        %v9464 = vld [vmem:[%s769 + $0xc] sm:$0xf]
        %v9465 = vld [vmem:[%s769 + $0x10] sm:$0xf]
        %v9466 = vld [vmem:[%s769 + $0x14] sm:$0xf]
        %v9467 = vld [vmem:[%s769 + $0x18] sm:$0xf]
        %v9468 = vld [vmem:[%s769 + $0x1c] sm:$0xf]
        %v9469 = vld [vmem:[%s769 + $0x20] sm:$0xf]
        %v9470 = vld [vmem:[%s769 + $0x24] sm:$0xf]
        %v9471 = vld [vmem:[%s769 + $0x28] sm:$0xf]
        %v9472 = vld [vmem:[%s769 + $0x2c] sm:$0xf]
        %v9473 = vld [vmem:[%s769 + $0x30] sm:$0xf]
        %v9474 = vld [vmem:[%s769 + $0x34] sm:$0xf]
        %v9475 = vld [vmem:[%s769 + $0x38] sm:$0xf]
        %v9476 = vld [vmem:[%s769 + $0x3c] sm:$0xf]
        %v9477 = vld [vmem:[%s769 + $0x40] sm:$0xf]
        %v9478 = vld [vmem:[%s769 + $0x44] sm:$0xf]
        %v9479 = vld [vmem:[%s769 + $0x48] sm:$0xf]
        %v9480 = vld [vmem:[%s769 + $0x4c] sm:$0xf]
        %v9481 = vld [vmem:[%s769 + $0x50] sm:$0xf]
        %v9482 = vld [vmem:[%s769 + $0x54] sm:$0xf]
        %v9483 = vld [vmem:[%s769 + $0x58] sm:$0xf]
        %v9484 = vld [vmem:[%s769 + $0x5c] sm:$0xf]
        %v9485 = vld [vmem:[%s769 + $0x60] sm:$0xf]
        %v9486 = vld [vmem:[%s769 + $0x64] sm:$0xf]
        %v9487 = vld [vmem:[%s769 + $0x68] sm:$0xf]
        %v9488 = vld [vmem:[%s769 + $0x6c] sm:$0xf]
        %v9489 = vld [vmem:[%s769 + $0x70] sm:$0xf]
        %v9490 = vld [vmem:[%s769 + $0x74] sm:$0xf]
        %v9491 = vld [vmem:[%s769 + $0x78] sm:$0xf]
        %v9492 = vld [vmem:[%s769 + $0x7c] sm:$0xf]
        %v9493 = vld [vmem:[%s904] sm:$0x1]
        %v9495 = vlaneseq
        %v9496 = vshrl.u32 %v9495, 7
        %v9497 = vsub.s32 0, %v9496
        %v9498 = vrot.slane %v9493, %v9497
        %v9532 = vunpack.c.l.b16 %v9461
        %v9533 = vunpack.c.l.b16 %v9462
        %v9534 = vunpack.c.l.b16 %v9463
        %v9535 = vunpack.c.l.b16 %v9464
        %v9536 = vunpack.c.l.b16 %v9465
        %v9537 = vunpack.c.l.b16 %v9466
        %v9538 = vunpack.c.l.b16 %v9467
        %v9539 = vunpack.c.l.b16 %v9468
        %v9540 = vunpack.c.l.b16 %v9469
        %v9541 = vunpack.c.l.b16 %v9470
        %v9542 = vunpack.c.l.b16 %v9471
        %v9543 = vunpack.c.l.b16 %v9472
        %v9544 = vunpack.c.l.b16 %v9473
        %v9545 = vunpack.c.l.b16 %v9474
        %v9546 = vunpack.c.l.b16 %v9475
        %v9547 = vunpack.c.l.b16 %v9476
        %v9548 = vunpack.c.l.b16 %v9477
        %v9549 = vunpack.c.l.b16 %v9478
        %v9550 = vunpack.c.l.b16 %v9479
        %v9551 = vunpack.c.l.b16 %v9480
        %v9552 = vunpack.c.l.b16 %v9481
        %v9553 = vunpack.c.l.b16 %v9482
        %v9554 = vunpack.c.l.b16 %v9483
        %v9555 = vunpack.c.l.b16 %v9484
        %v9556 = vunpack.c.l.b16 %v9485
        %v9557 = vunpack.c.l.b16 %v9486
        %v9558 = vunpack.c.l.b16 %v9487
        %v9559 = vunpack.c.l.b16 %v9488
        %v9560 = vunpack.c.l.b16 %v9489
        %v9561 = vunpack.c.l.b16 %v9490
        %v9562 = vunpack.c.l.b16 %v9491
        %v9563 = vunpack.c.l.b16 %v9492
        %v9564 = vpack.c.b16 %v9533, %v9532
        %v9565 = vpack.c.b16 %v9535, %v9534
        %v9566 = vpack.c.b16 %v9537, %v9536
        %v9567 = vpack.c.b16 %v9539, %v9538
        %v9568 = vpack.c.b16 %v9541, %v9540
        %v9569 = vpack.c.b16 %v9543, %v9542
        %v9570 = vpack.c.b16 %v9545, %v9544
        %v9571 = vpack.c.b16 %v9547, %v9546
        %v9572 = vpack.c.b16 %v9549, %v9548
        %v9573 = vpack.c.b16 %v9551, %v9550
        %v9574 = vpack.c.b16 %v9553, %v9552
        %v9575 = vpack.c.b16 %v9555, %v9554
        %v9576 = vpack.c.b16 %v9557, %v9556
        %v9577 = vpack.c.b16 %v9559, %v9558
        %v9578 = vpack.c.b16 %v9561, %v9560
        %v9579 = vpack.c.b16 %v9563, %v9562
        %9596 = vmatprep.subr.bf16.mxu0 0
        %9597 = vmatpush1.bf16.msra.mxu0 %v9564
        %9598 = vmatprep.subr.bf16.mxu0 0
        %9599 = vmatpush1.bf16.msra.mxu0 %v9565
        %9600 = vmatprep.subr.bf16.mxu0 0
        %9601 = vmatpush1.bf16.msra.mxu0 %v9566
        %9602 = vmatprep.subr.bf16.mxu0 0
        %9603 = vmatpush1.bf16.msra.mxu0 %v9567
        %9604 = vmatprep.subr.bf16.mxu0 0
        %9605 = vmatpush1.bf16.msra.mxu0 %v9568
        %9606 = vmatprep.subr.bf16.mxu0 0
        %9607 = vmatpush1.bf16.msra.mxu0 %v9569
        %9608 = vmatprep.subr.bf16.mxu0 0
        %9609 = vmatpush1.bf16.msra.mxu0 %v9570
        %9610 = vmatprep.subr.bf16.mxu0 0
        %9611 = vmatpush1.bf16.msra.mxu0 %v9571
        %9612 = vmatprep.subr.bf16.mxu0 0
        %9613 = vmatpush1.bf16.msra.mxu0 %v9572
        %9614 = vmatprep.subr.bf16.mxu0 0
        %9615 = vmatpush1.bf16.msra.mxu0 %v9573
        %9616 = vmatprep.subr.bf16.mxu0 0
        %9617 = vmatpush1.bf16.msra.mxu0 %v9574
        %9618 = vmatprep.subr.bf16.mxu0 0
        %9619 = vmatpush1.bf16.msra.mxu0 %v9575
        %9620 = vmatprep.subr.bf16.mxu0 0
        %9621 = vmatpush1.bf16.msra.mxu0 %v9576
        %9622 = vmatprep.subr.bf16.mxu0 0
        %9623 = vmatpush1.bf16.msra.mxu0 %v9577
        %9624 = vmatprep.subr.bf16.mxu0 0
        %9625 = vmatpush1.bf16.msra.mxu0 %v9578
        %9626 = vmatprep.subr.bf16.mxu0 0
        %9627 = vmatpush1.bf16.msra.mxu0 %v9579
        %9628 = vmatprep.mubr.bf16.mxu0 %v9446
        %9629 = vmatmul.mubr.bf16.gmra.mrb[0].mxu0 %v9445
        %v9630 = vpop.f32.mrb[0].mxu0
        %v9631 = vadd.f32 %v9498, %v9630
        %v9632 = vpop.f32.mrb[0].mxu0
        %v9633 = vpop.f32.mrb[0].mxu0
        %v9634 = vadd.f32 %v9498, %v9633
        %v9635 = vpop.f32.mrb[0].mxu0
        %9636 = vmatprep.mubr.bf16.mxu0 %v9448
        %9637 = vmatmul.mubr.bf16.gmra.mrb[0].mxu0 %v9447
        %v9638 = vpop.f32.mrb[0].mxu0
        %v9639 = vadd.f32 %v9498, %v9638
        %v9640 = vpop.f32.mrb[0].mxu0
        %v9641 = vpop.f32.mrb[0].mxu0
        %v9642 = vadd.f32 %v9498, %v9641
        %v9643 = vpop.f32.mrb[0].mxu0
        %9644 = vmatprep.mubr.bf16.mxu0 %v9450
        %9645 = vmatmul.mubr.bf16.gmra.mrb[0].mxu0 %v9449
        %v9646 = vpop.f32.mrb[0].mxu0
        %v9647 = vadd.f32 %v9498, %v9646
        %v9648 = vpop.f32.mrb[0].mxu0
        %v9649 = vpop.f32.mrb[0].mxu0
        %v9650 = vadd.f32 %v9498, %v9649
        %v9651 = vpop.f32.mrb[0].mxu0
        %9652 = vmatprep.mubr.bf16.mxu0 %v9452
        %9653 = vmatmul.mubr.bf16.gmra.mrb[0].mxu0 %v9451
        %v9654 = vpop.f32.mrb[0].mxu0
        %v9655 = vadd.f32 %v9498, %v9654
        %v9656 = vpop.f32.mrb[0].mxu0
        %v9657 = vpop.f32.mrb[0].mxu0
        %v9658 = vadd.f32 %v9498, %v9657
        %v9659 = vpop.f32.mrb[0].mxu0
        %9660 = vmatprep.mubr.bf16.mxu0 %v9454
        %9661 = vmatmul.mubr.bf16.gmra.mrb[0].mxu0 %v9453
        %v9662 = vpop.f32.mrb[0].mxu0
        %v9663 = vadd.f32 %v9498, %v9662
        %v9664 = vpop.f32.mrb[0].mxu0
        %v9665 = vpop.f32.mrb[0].mxu0
        %v9666 = vadd.f32 %v9498, %v9665
        %v9667 = vpop.f32.mrb[0].mxu0
        %9668 = vmatprep.mubr.bf16.mxu0 %v9456
        %9669 = vmatmul.mubr.bf16.gmra.mrb[0].mxu0 %v9455
        %v9670 = vpop.f32.mrb[0].mxu0
        %v9671 = vadd.f32 %v9498, %v9670
        %v9672 = vpop.f32.mrb[0].mxu0
        %v9673 = vpop.f32.mrb[0].mxu0
        %v9674 = vadd.f32 %v9498, %v9673
        %v9675 = vpop.f32.mrb[0].mxu0
        %9676 = vmatprep.mubr.bf16.mxu0 %v9458
        %9677 = vmatmul.mubr.bf16.gmra.mrb[0].mxu0 %v9457
        %v9678 = vpop.f32.mrb[0].mxu0
        %v9679 = vadd.f32 %v9498, %v9678
        %v9680 = vpop.f32.mrb[0].mxu0
        %v9681 = vpop.f32.mrb[0].mxu0
        %v9682 = vadd.f32 %v9498, %v9681
        %v9683 = vpop.f32.mrb[0].mxu0
        %9684 = vmatprep.mubr.bf16.mxu0 %v9460
        %9685 = vmatmul.mubr.bf16.gmra.mrb[0].mxu0 %v9459
        %v9686 = vpop.f32.mrb[0].mxu0
        %v9687 = vadd.f32 %v9498, %v9686
        %v9688 = vpop.f32.mrb[0].mxu0
        %v9689 = vpop.f32.mrb[0].mxu0
        %v9690 = vadd.f32 %v9498, %v9689
        %v9691 = vpop.f32.mrb[0].mxu0
        %9692 = vdwg.mxu0
        %v9693 = vadd.f32 %v8754, %v9631
        %v9694 = vadd.f32 %v8755, %v9634
        %v9695 = vadd.f32 %v8756, %v9639
        %v9696 = vadd.f32 %v8757, %v9642
        %v9697 = vadd.f32 %v8758, %v9647
        %v9698 = vadd.f32 %v8759, %v9650
        %v9699 = vadd.f32 %v8760, %v9655
        %v9700 = vadd.f32 %v8761, %v9658
        %v9701 = vadd.f32 %v8762, %v9663
        %v9702 = vadd.f32 %v8763, %v9666
        %v9703 = vadd.f32 %v8764, %v9671
        %v9704 = vadd.f32 %v8765, %v9674
        %v9705 = vadd.f32 %v8766, %v9679
        %v9706 = vadd.f32 %v8767, %v9682
        %v9707 = vadd.f32 %v8768, %v9687
        %v9708 = vadd.f32 %v8769, %v9690
        %9709 = vst [vmem:[%s874] sm:$0xff] %v9693
        %9710 = vst [vmem:[%s874 + $0x8] sm:$0xff] %v9694
        %9711 = vst [vmem:[%s874 + $0x10] sm:$0xff] %v9695
        %9712 = vst [vmem:[%s874 + $0x18] sm:$0xff] %v9696
        %9713 = vst [vmem:[%s874 + $0x20] sm:$0xff] %v9697
        %9714 = vst [vmem:[%s874 + $0x28] sm:$0xff] %v9698
        %9715 = vst [vmem:[%s874 + $0x30] sm:$0xff] %v9699
        %9716 = vst [vmem:[%s874 + $0x38] sm:$0xff] %v9700
        %9717 = vst [vmem:[%s874 + $0x40] sm:$0xff] %v9701
        %9718 = vst [vmem:[%s874 + $0x48] sm:$0xff] %v9702
        %9719 = vst [vmem:[%s874 + $0x50] sm:$0xff] %v9703
        %9720 = vst [vmem:[%s874 + $0x58] sm:$0xff] %v9704
        %9721 = vst [vmem:[%s874 + $0x60] sm:$0xff] %v9705
        %9722 = vst [vmem:[%s874 + $0x68] sm:$0xff] %v9706
        %9723 = vst [vmem:[%s874 + $0x70] sm:$0xff] %v9707
        %9724 = vst [vmem:[%s874 + $0x78] sm:$0xff] %v9708
        %s9725 = sand.u32 %s478, 1
        %s9726 = scalar_lea.sflag [#allocation4], %s9725
        %s9727 = sand.u32 %s478, 1
        %s9728 = smul.addr %s9727, 128
        %s9729 = scalar_lea.vmem [#allocation14], %s9728
        // Predicated region
        $region117: #{tpu_custom_call.1} parent=83 // pred_check
          %p9730 = pneg %p488
        $region118: #{tpu_custom_call.1} parent=83 // pred_check_branch
          %9732 = sbr.rel (%p9730) target = $region120
        $region119: #{tpu_custom_call.1} parent=83 // pred_region
          %s9733 = smul.u32 8, %s46
          %s9735 = ssub.s32 2048, 2048
          %9736 = vsyncadd %s9726, %s9735
          %s9737 = smul.addr %s9733, 2
          %s9738 = smul.addr %s9737, 128
          %s9739 = scalar_lea.hbm %s16, %s9738
          %s9740 = sshll.u32 %s9729, 4
          %s9741 = int_to_ptr.vmem [resolvable:$true] %s9740
          %9746 = dma.vmem_to_hbm [thread:$0]  %s9741, 2048, %s9739, %s9726, 128, 128, 8
        $region120: #{tpu_custom_call.1} parent=83 // pred_fallthru
          _
      $region84: #{tpu_custom_call.1} parent=5 // pred_fallthru
        _
      %p9747 = scmp.le.s32.totalorder 2, %s37
      // Predicated region
      $region121: #{tpu_custom_call.1} parent=5 // pred_check
        %p9748 = pneg %p9747
      $region122: #{tpu_custom_call.1} parent=5 // pred_check_branch
        %9750 = sbr.rel (%p9748) target = $region124
      $region123: #{tpu_custom_call.1} parent=5 // pred_region
        %s9751 = ssub.s32 %s37, 2
        // Predicated region
        $region125: #{tpu_custom_call.1} parent=123 // pred_check
          %p9752 = pneg %p494
        $region126: #{tpu_custom_call.1} parent=123 // pred_check_branch
          %9754 = sbr.rel (%p9752) target = $region128
        $region127: #{tpu_custom_call.1} parent=123 // pred_region
          %s9755 = sand.u32 %s479, 1
          %s9756 = scalar_lea.sflag [#allocation4], %s9755
          %s9757 = sand.u32 %s479, 1
          %s9758 = smul.addr %s9757, 128
          %s9759 = scalar_lea.vmem [#allocation14], %s9758
          %9760 = dma.done %s9756, 2048
        $region128: #{tpu_custom_call.1} parent=123 // pred_fallthru
          _
      $region124: #{tpu_custom_call.1} parent=5 // pred_fallthru
        _
    $region6: #{tpu_custom_call.1} parent=1 // loop_footer
      %s41 = sadd.s32 1, %s37
    $region7: #{tpu_custom_call.1} parent=1 // loop_footer_branch
      %36 = sbr.rel target = $region3
    $region8: #{tpu_custom_call.1} parent=1 // loop_exit
      _
    %9761 = vsyncpa [#allocation3], 1
    %s9762 = scalar_lea.sflag [#allocation3], 1
    %9763 = vsyncpa %s9762, 1
    %9764 = vsyncpa [#allocation6], 1
    %s9765 = scalar_lea.sflag [#allocation6], 1
    %9766 = vsyncpa %s9765, 1
    %9767 = vsyncpa [#allocation9], 1
    %s9768 = scalar_lea.sflag [#allocation9], 1
    %9769 = vsyncpa %s9768, 1
    %9770 = vsyncpa [#allocation12], 1
    %s9771 = scalar_lea.sflag [#allocation12], 1
    %9772 = vsyncpa %s9771, 1
    %9773 = vsyncpa [#allocation4], 1
    %s9774 = scalar_lea.sflag [#allocation4], 1
    %9775 = vsyncpa %s9774, 1

</llo_original>
